<compile_context>
chip_gen: v7x
topology: tpu7x:2x2x1
jax: 0.10.0
libtpu: 0.0.40
codegen_flags: <defaults>
</compile_context>

<pallas_src>
import jax
import jax.numpy as jnp
from jax.experimental import pallas as pl
from jax.experimental.pallas import tpu as pltpu

INPUT_SIZE = 28 * 28   # 784
HIDDEN_SIZE = 600
OUTPUT_SIZE = 10
NEG_SLOPE = 0.01       # nn.LeakyReLU() default


def _leaky_relu(x):
    # Valid for 0 < NEG_SLOPE < 1: max(x, a*x) == leaky_relu(x).
    return jnp.maximum(x, NEG_SLOPE * x)


def mlp_kernel(x_ref,
               w1_ref, b1_ref,
               w2_ref, b2_ref,
               w3_ref, b3_ref,
               w4_ref, b4_ref,
               o_ref):
    # Whole hot path (4 matmuls + biases + LeakyReLU) fused in one kernel.
    # x read as f32 and cast to bf16 in-vreg; weights already bf16; MXU
    # accumulates in f32, bias + activation in f32, bf16 cast is the last op
    # before each subsequent dot (no extra f32<->bf16 round trips).
    xb = x_ref[...].astype(jnp.bfloat16)

    h = jnp.dot(xb, w1_ref[...],
                preferred_element_type=jnp.float32) + b1_ref[...]
    h = _leaky_relu(h).astype(jnp.bfloat16)

    h = jnp.dot(h, w2_ref[...],
                preferred_element_type=jnp.float32) + b2_ref[...]
    h = _leaky_relu(h).astype(jnp.bfloat16)

    h = jnp.dot(h, w3_ref[...],
                preferred_element_type=jnp.float32) + b3_ref[...]
    h = _leaky_relu(h).astype(jnp.bfloat16)

    out = jnp.dot(h, w4_ref[...],
                  preferred_element_type=jnp.float32) + b4_ref[...]
    o_ref[...] = out.astype(o_ref.dtype)


def _choose_tile(B, tile_b):
    """Batch tile: MXU-aligned, and >= 2 grid steps when the batch allows."""
    if B <= 128:
        # Single grid step; round the (padded) batch up to a multiple of 16
        # so the bf16 cast of the x tile packs cleanly (16 sublanes / vreg).
        return 16 * pl.cdiv(B, 16)
    # Multiple of 128 (MXU M dimension), capped at ceil(B/2) rounded to 128 so
    # the grid has >= 2 steps -> both v7x TensorCores get work.
    tile_b = max(128, (tile_b // 128) * 128)
    half = 128 * pl.cdiv(pl.cdiv(B, 2), 128)
    return min(tile_b, half)


def prepare_params(params):
    """One-time conversion: bf16 matmul weights, f32 biases.

    Call once and reuse across forward calls so the f32->bf16 weight cast is
    not re-done (and its HBM traffic not re-paid) on every inference.
    """
    out = {}
    for i in range(1, 5):
        out[f"w{i}"] = params[f"w{i}"].astype(jnp.bfloat16)
        out[f"b{i}"] = params[f"b{i}"].astype(jnp.float32)
    return out


def neural_network_forward(x, prepared_params, *, tile_b=512):
    """x: (B, 784) float32.  prepared_params: output of prepare_params()."""
    B, D_in = x.shape
    assert D_in == INPUT_SIZE

    tile = _choose_tile(B, tile_b)
    n_steps = pl.cdiv(B, tile)
    Bp = n_steps * tile
    if Bp != B:
        # Padded rows (< one tile) flow through and are sliced off below.
        x = jnp.pad(x, ((0, Bp - B), (0, 0)))

    p = prepared_params
    w1, b1 = p["w1"], p["b1"]
    w2, b2 = p["w2"], p["b2"]
    w3, b3 = p["w3"], p["b3"]
    w4, b4 = p["w4"], p["b4"]

    # Weights/biases as full VMEM-resident blocks (bf16 weights ~2.4 MB total);
    # only the batch dim is tiled by the grid.
    def full(arr):
        return pl.BlockSpec(arr.shape, lambda i: (0, 0))

    flops = 2 * Bp * (INPUT_SIZE * HIDDEN_SIZE
                      + 2 * HIDDEN_SIZE * HIDDEN_SIZE
                      + HIDDEN_SIZE * OUTPUT_SIZE)
    bytes_accessed = (
        Bp * INPUT_SIZE * 4                              # x read as f32
        + sum(w.size * 2 for w in (w1, w2, w3, w4))      # bf16 weights
        + sum(b.size * 4 for b in (b1, b2, b3, b4))      # f32 biases
        + Bp * OUTPUT_SIZE * 4)                          # f32 output

    out = pl.pallas_call(
        mlp_kernel,
        out_shape=jax.ShapeDtypeStruct((Bp, OUTPUT_SIZE), jnp.float32),
        grid_spec=pltpu.PrefetchScalarGridSpec(
            num_scalar_prefetch=0,
            grid=(n_steps,),
            in_specs=[
                pl.BlockSpec((tile, D_in), lambda i: (i, 0)),
                full(w1), full(b1),
                full(w2), full(b2),
                full(w3), full(b3),
                full(w4), full(b4),
            ],
            out_specs=pl.BlockSpec((tile, OUTPUT_SIZE), lambda i: (i, 0)),
        ),
        compiler_params=pltpu.CompilerParams(
            dimension_semantics=("parallel",),   # batch steps shard across TCs
            vmem_limit_bytes=32 << 20,           # real footprint < 10 MB
        ),
        cost_estimate=pl.CostEstimate(
            flops=flops, transcendentals=0, bytes_accessed=bytes_accessed),
    )(x, w1, b1, w2, b2, w3, b3, w4, b4)

    return out[:B] if Bp != B else out


def init_params(key):
    """Deterministic init matching the shapes of the PyTorch module.

    nn.Linear(in, out) weight is (out, in); we store the transpose (in, out).
    Uses PyTorch-style uniform(-1/sqrt(in), 1/sqrt(in)) bounds.
    """
    sizes = [
        (INPUT_SIZE, HIDDEN_SIZE),
        (HIDDEN_SIZE, HIDDEN_SIZE),
        (HIDDEN_SIZE, HIDDEN_SIZE),
        (HIDDEN_SIZE, OUTPUT_SIZE),
    ]
    params = {}
    for idx, (fan_in, fan_out) in enumerate(sizes, start=1):
        key, kw, kb = jax.random.split(key, 3)
        bound = 1.0 / jnp.sqrt(fan_in)
        params[f"w{idx}"] = jax.random.uniform(
            kw, (fan_in, fan_out), jnp.float32, -bound, bound)
        params[f"b{idx}"] = jax.random.uniform(
            kb, (1, fan_out), jnp.float32, -bound, bound)
    return params


def reference_forward(x, params):
    h = x @ params["w1"] + params["b1"]
    h = jnp.where(h >= 0, h, NEG_SLOPE * h)
    h = h @ params["w2"] + params["b2"]
    h = jnp.where(h >= 0, h, NEG_SLOPE * h)
    h = h @ params["w3"] + params["b3"]
    h = jnp.where(h >= 0, h, NEG_SLOPE * h)
    return h @ params["w4"] + params["b4"]


if __name__ == "__main__":
    key = jax.random.PRNGKey(0)
    key, kx = jax.random.split(key)

    # Small, deliberately ragged batch: exercises cdiv padding and a 2-step
    # grid (tile=128, so both v7x TensorCores get work). Feature size fixed
    # by the module.
    B = 200
    x = jax.random.normal(kx, (B, INPUT_SIZE), jnp.float32)
    params = init_params(key)
    prepared = prepare_params(params)   # bf16 weight cast done ONCE, reused

    out = neural_network_forward(x, prepared)
    out = jax.block_until_ready(out)

    ref = reference_forward(x, params)   # f32 reference
    assert out.shape == (B, OUTPUT_SIZE)
    # bf16 matmul operands (K=600-784) with f32 accumulation: deliberate
    # precision trade -> loosened tolerance vs the f32 reference.
    assert jnp.allclose(out, ref, atol=5e-2, rtol=5e-2), float(
        jnp.max(jnp.abs(out - ref)))

    print("KERNEL_OK")
</pallas_src>

<mosaic_0001>
module attributes {stable_mosaic.version = 11 : i64} {
  func.func @mlp_kernel(%arg0: i32, %arg1: memref<128x784xf32, #tpu.memory_space<vmem>>, %arg2: memref<784x600xbf16, #tpu.memory_space<vmem>>, %arg3: memref<1x600xf32, #tpu.memory_space<vmem>>, %arg4: memref<600x600xbf16, #tpu.memory_space<vmem>>, %arg5: memref<1x600xf32, #tpu.memory_space<vmem>>, %arg6: memref<600x600xbf16, #tpu.memory_space<vmem>>, %arg7: memref<1x600xf32, #tpu.memory_space<vmem>>, %arg8: memref<600x10xbf16, #tpu.memory_space<vmem>>, %arg9: memref<1x10xf32, #tpu.memory_space<vmem>>, %arg10: memref<128x10xf32, #tpu.memory_space<vmem>>) attributes {dimension_semantics = [#tpu.dimension_semantics<parallel>], iteration_bounds = array<i64: 2>, scalar_prefetch = 0 : i64, scratch_operands = 0 : i64, tpu.core_type = #tpu.core_type<tc>, window_params = [{transform_indices = @transform_0, window_bounds = array<i64: 128, 784>}, {pipeline_mode = #tpu.pipeline_mode<synchronous>, transform_indices = @transform_1, window_bounds = array<i64: 784, 600>}, {pipeline_mode = #tpu.pipeline_mode<synchronous>, transform_indices = @transform_2, window_bounds = array<i64: 1, 600>}, {pipeline_mode = #tpu.pipeline_mode<synchronous>, transform_indices = @transform_3, window_bounds = array<i64: 600, 600>}, {pipeline_mode = #tpu.pipeline_mode<synchronous>, transform_indices = @transform_4, window_bounds = array<i64: 1, 600>}, {pipeline_mode = #tpu.pipeline_mode<synchronous>, transform_indices = @transform_5, window_bounds = array<i64: 600, 600>}, {pipeline_mode = #tpu.pipeline_mode<synchronous>, transform_indices = @transform_6, window_bounds = array<i64: 1, 600>}, {pipeline_mode = #tpu.pipeline_mode<synchronous>, transform_indices = @transform_7, window_bounds = array<i64: 600, 10>}, {pipeline_mode = #tpu.pipeline_mode<synchronous>, transform_indices = @transform_8, window_bounds = array<i64: 1, 10>}, {transform_indices = @transform_9, window_bounds = array<i64: 128, 10>}]} {
    %c0 = arith.constant 0 : index
    %c0_0 = arith.constant 0 : index
    %0 = vector.load %arg1[%c0, %c0_0] : memref<128x784xf32, #tpu.memory_space<vmem>>, vector<128x784xf32>
    %1 = arith.truncf %0 : vector<128x784xf32> to vector<128x784xbf16>
    %c0_1 = arith.constant 0 : index
    %c0_2 = arith.constant 0 : index
    %2 = vector.load %arg2[%c0_1, %c0_2] : memref<784x600xbf16, #tpu.memory_space<vmem>>, vector<784x600xbf16>
    %cst = arith.constant dense<0.000000e+00> : vector<128x600xf32>
    %3 = tpu.matmul %1, %2, %cst {dimension_numbers = #tpu.dot_dimension_numbers<[1], [0], [0], [1], [0, 0, 1, 1], [], []>} : vector<128x784xbf16>, vector<784x600xbf16>, vector<128x600xf32> -> vector<128x600xf32>
    %c0_3 = arith.constant 0 : index
    %c0_4 = arith.constant 0 : index
    %4 = vector.load %arg3[%c0_3, %c0_4] : memref<1x600xf32, #tpu.memory_space<vmem>>, vector<1x600xf32>
    %5 = vector.broadcast %4 : vector<1x600xf32> to vector<128x600xf32>
    %6 = arith.addf %3, %5 : vector<128x600xf32>
    %cst_5 = arith.constant 0.00999999977 : f32
    %7 = vector.broadcast %cst_5 : f32 to vector<128x600xf32>
    %8 = arith.mulf %7, %6 : vector<128x600xf32>
    %9 = arith.maximumf %6, %8 : vector<128x600xf32>
    %10 = arith.truncf %9 : vector<128x600xf32> to vector<128x600xbf16>
    %c0_6 = arith.constant 0 : index
    %c0_7 = arith.constant 0 : index
    %11 = vector.load %arg4[%c0_6, %c0_7] : memref<600x600xbf16, #tpu.memory_space<vmem>>, vector<600x600xbf16>
    %cst_8 = arith.constant dense<0.000000e+00> : vector<128x600xf32>
    %12 = tpu.matmul %10, %11, %cst_8 {dimension_numbers = #tpu.dot_dimension_numbers<[1], [0], [0], [1], [0, 0, 1, 1], [], []>} : vector<128x600xbf16>, vector<600x600xbf16>, vector<128x600xf32> -> vector<128x600xf32>
    %c0_9 = arith.constant 0 : index
    %c0_10 = arith.constant 0 : index
    %13 = vector.load %arg5[%c0_9, %c0_10] : memref<1x600xf32, #tpu.memory_space<vmem>>, vector<1x600xf32>
    %14 = vector.broadcast %13 : vector<1x600xf32> to vector<128x600xf32>
    %15 = arith.addf %12, %14 : vector<128x600xf32>
    %cst_11 = arith.constant 0.00999999977 : f32
    %16 = vector.broadcast %cst_11 : f32 to vector<128x600xf32>
    %17 = arith.mulf %16, %15 : vector<128x600xf32>
    %18 = arith.maximumf %15, %17 : vector<128x600xf32>
    %19 = arith.truncf %18 : vector<128x600xf32> to vector<128x600xbf16>
    %c0_12 = arith.constant 0 : index
    %c0_13 = arith.constant 0 : index
    %20 = vector.load %arg6[%c0_12, %c0_13] : memref<600x600xbf16, #tpu.memory_space<vmem>>, vector<600x600xbf16>
    %cst_14 = arith.constant dense<0.000000e+00> : vector<128x600xf32>
    %21 = tpu.matmul %19, %20, %cst_14 {dimension_numbers = #tpu.dot_dimension_numbers<[1], [0], [0], [1], [0, 0, 1, 1], [], []>} : vector<128x600xbf16>, vector<600x600xbf16>, vector<128x600xf32> -> vector<128x600xf32>
    %c0_15 = arith.constant 0 : index
    %c0_16 = arith.constant 0 : index
    %22 = vector.load %arg7[%c0_15, %c0_16] : memref<1x600xf32, #tpu.memory_space<vmem>>, vector<1x600xf32>
    %23 = vector.broadcast %22 : vector<1x600xf32> to vector<128x600xf32>
    %24 = arith.addf %21, %23 : vector<128x600xf32>
    %cst_17 = arith.constant 0.00999999977 : f32
    %25 = vector.broadcast %cst_17 : f32 to vector<128x600xf32>
    %26 = arith.mulf %25, %24 : vector<128x600xf32>
    %27 = arith.maximumf %24, %26 : vector<128x600xf32>
    %28 = arith.truncf %27 : vector<128x600xf32> to vector<128x600xbf16>
    %c0_18 = arith.constant 0 : index
    %c0_19 = arith.constant 0 : index
    %29 = vector.load %arg8[%c0_18, %c0_19] : memref<600x10xbf16, #tpu.memory_space<vmem>>, vector<600x10xbf16>
    %cst_20 = arith.constant dense<0.000000e+00> : vector<128x10xf32>
    %30 = tpu.matmul %28, %29, %cst_20 {dimension_numbers = #tpu.dot_dimension_numbers<[1], [0], [0], [1], [0, 0, 1, 1], [], []>} : vector<128x600xbf16>, vector<600x10xbf16>, vector<128x10xf32> -> vector<128x10xf32>
    %c0_21 = arith.constant 0 : index
    %c0_22 = arith.constant 0 : index
    %31 = vector.load %arg9[%c0_21, %c0_22] : memref<1x10xf32, #tpu.memory_space<vmem>>, vector<1x10xf32>
    %32 = vector.broadcast %31 : vector<1x10xf32> to vector<128x10xf32>
    %33 = arith.addf %30, %32 : vector<128x10xf32>
    %c0_23 = arith.constant 0 : index
    %c0_24 = arith.constant 0 : index
    %34 = vector.load %arg10[%c0_23, %c0_24] : memref<128x10xf32, #tpu.memory_space<vmem>>, vector<128x10xf32>
    tpu.vector_store %arg10[%c0_23, %c0_24], %33 {strides = array<i32>} : memref<128x10xf32, #tpu.memory_space<vmem>>, vector<128x10xf32>,
    return
  }
  func.func @transform_0(%arg0: i32) -> (i32, i32) {
    %c0_i32 = arith.constant 0 : i32
    %c0_i32_0 = arith.constant 0 : i32
    return %arg0, %c0_i32 : i32, i32
  }
  func.func @transform_1(%arg0: i32) -> (i32, i32) {
    %c0_i32 = arith.constant 0 : i32
    %c0_i32_0 = arith.constant 0 : i32
    %c0_i32_1 = arith.constant 0 : i32
    return %c0_i32, %c0_i32_0 : i32, i32
  }
  func.func @transform_2(%arg0: i32) -> (i32, i32) {
    %c0_i32 = arith.constant 0 : i32
    %c0_i32_0 = arith.constant 0 : i32
    %c0_i32_1 = arith.constant 0 : i32
    return %c0_i32, %c0_i32_0 : i32, i32
  }
  func.func @transform_3(%arg0: i32) -> (i32, i32) {
    %c0_i32 = arith.constant 0 : i32
    %c0_i32_0 = arith.constant 0 : i32
    %c0_i32_1 = arith.constant 0 : i32
    return %c0_i32, %c0_i32_0 : i32, i32
  }
  func.func @transform_4(%arg0: i32) -> (i32, i32) {
    %c0_i32 = arith.constant 0 : i32
    %c0_i32_0 = arith.constant 0 : i32
    %c0_i32_1 = arith.constant 0 : i32
    return %c0_i32, %c0_i32_0 : i32, i32
  }
  func.func @transform_5(%arg0: i32) -> (i32, i32) {
    %c0_i32 = arith.constant 0 : i32
    %c0_i32_0 = arith.constant 0 : i32
    %c0_i32_1 = arith.constant 0 : i32
    return %c0_i32, %c0_i32_0 : i32, i32
  }
  func.func @transform_6(%arg0: i32) -> (i32, i32) {
    %c0_i32 = arith.constant 0 : i32
    %c0_i32_0 = arith.constant 0 : i32
    %c0_i32_1 = arith.constant 0 : i32
    return %c0_i32, %c0_i32_0 : i32, i32
  }
  func.func @transform_7(%arg0: i32) -> (i32, i32) {
    %c0_i32 = arith.constant 0 : i32
    %c0_i32_0 = arith.constant 0 : i32
    %c0_i32_1 = arith.constant 0 : i32
    return %c0_i32, %c0_i32_0 : i32, i32
  }
  func.func @transform_8(%arg0: i32) -> (i32, i32) {
    %c0_i32 = arith.constant 0 : i32
    %c0_i32_0 = arith.constant 0 : i32
    %c0_i32_1 = arith.constant 0 : i32
    return %c0_i32, %c0_i32_0 : i32, i32
  }
  func.func @transform_9(%arg0: i32) -> (i32, i32) {
    %c0_i32 = arith.constant 0 : i32
    %c0_i32_0 = arith.constant 0 : i32
    return %arg0, %c0_i32 : i32, i32
  }
}

</mosaic_0001>

<llo_original>
// kernel: tpu_custom_call.1
$region0: #{tpu_custom_call.1}
  #allocation0 [shape = 'u32[]', space=smem, size = 0x4, offset = 0x4, fixed_abs, tag = 'smem constant byte address 0x4 - core index']
  #allocation1 [shape = 'u32[144,128]{1,0:T(1,128)}', space=vmem, size = 0x12000, scoped, tag = 'internal scratch']
  %s0 = inlined_call_operand.vmem [shape: f32[256,784], index: 0, kind: input, shape index: {}]
  %s1 = inlined_call_operand.vmem [shape: bf16[784,600], index: 1, kind: input, shape index: {}]
  %s2 = inlined_call_operand.vmem [shape: f32[1,600], index: 2, kind: input, shape index: {}]
  %s3 = inlined_call_operand.vmem [shape: bf16[600,600], index: 3, kind: input, shape index: {}]
  %s4 = inlined_call_operand.vmem [shape: f32[1,600], index: 4, kind: input, shape index: {}]
  %s5 = inlined_call_operand.hbm [shape: bf16[600,600], index: 5, kind: input, shape index: {}]
  %s6 = inlined_call_operand.vmem [shape: f32[1,600], index: 6, kind: input, shape index: {}]
  %s7 = inlined_call_operand.vmem [shape: bf16[600,10], index: 7, kind: input, shape index: {}]
  %s8 = inlined_call_operand.vmem [shape: f32[1,10], index: 8, kind: input, shape index: {}]
  %s9 = inlined_call_operand.vmem [shape: f32[256,10], index: 9, kind: output, shape index: {}]
  %s10 = sld [smem:[#allocation0]]
  $region73: #{tpu_custom_call.1} parent=0
    _
  %s12 = ssub.s32 1, %s10
  %s13 = scalar_select 0, %s12, %s10
  $region1: #{tpu_custom_call.1} parent=0
    #allocation2 [shape = 'u8[768000]{0}', space=vmem, size = 0xbb800, scoped, tag = 'input window, operand 5, single buffered']
    #allocation3 [shape = 's32[2]{0}', space=sflag, size = 0x8, scoped, tag = 'scoped memory for tpu_custom_call.1']
    %14 = vsyncpa [#allocation3], 0
    loop: start=0, step=1, limit=4
    $region2: #{tpu_custom_call.1} parent=1 // loop_pre_header
      _
    $region3: #{tpu_custom_call.1} parent=1 // loop_header
      %s16 = sphi 0, %s20
      %p17 = scmp.ge.s32.totalorder %s16, 4
      %s26 = sphi 0, %s28
      %s29 = sphi 0, %s26
      %s30 = sphi 0, %s29
      %s46 = sphi 0, %s30
      %s50 = sphi 0, %s50
      %s52 = sphi 0, %s50
      %s53 = sphi 0, %s52
      %s67 = sphi 0, %s53
      %s71 = sphi 0, %s71
      %s73 = sphi 0, %s71
      %s74 = sphi 0, %s73
      %s88 = sphi 0, %s74
      %s92 = sphi 0, %s92
      %s94 = sphi 0, %s92
      %s95 = sphi 0, %s94
      %s109 = sphi 0, %s95
      %s113 = sphi 0, %s113
      %s115 = sphi 0, %s113
      %s116 = sphi 0, %s115
      %s130 = sphi 0, %s116
      %s134 = sphi 0, %s134
      %s136 = sphi 0, %s134
      %s137 = sphi 0, %s136
      %s151 = sphi 0, %s137
      %s155 = sphi 0, %s155
      %s157 = sphi 0, %s155
      %s158 = sphi 0, %s157
      %s172 = sphi 0, %s158
      %s176 = sphi 0, %s176
      %s178 = sphi 0, %s176
      %s179 = sphi 0, %s178
      %s193 = sphi 0, %s179
      %s197 = sphi 0, %s197
      %s199 = sphi 0, %s197
      %s200 = sphi 0, %s199
      %s214 = sphi 0, %s200
      %s220 = sphi 0, %s222
      %s223 = sphi 0, %s220
      %s224 = sphi 0, %s223
      %s240 = sphi 0, %s224
    $region4: #{tpu_custom_call.1} parent=1 // loop_header_branch
      %19 = sbr.rel (%p17) target = $region8
    $region5: #{tpu_custom_call.1} parent=1 // loop_body
      %s21 = ssub.s32 %s16, 1
      %s22 = ssub.s32 %s16, 2
      %s23 = sadd.s32 %s16, 1
      %s24 = ssub.s32 %s16, %s23
      %p25 = scmp.eq.s32.totalorder %s24, 0
      %s27 = sadd.s32 %s26, 1
      %s28 = scalar_select %p25, %s26, %s27
      %p31 = pneg %p25
      %p32 = scmp.eq.s32.totalorder %s16, 1
      %p33 = por %p31, %p32
      %p34 = scmp.ne.s32.totalorder %s26, %s29
      %p35 = scmp.eq.s32.totalorder %s16, 0
      %p36 = por %p34, %p35
      %p37 = scmp.ne.s32.totalorder %s26, %s29
      %p38 = scmp.eq.s32.totalorder %s21, 1
      %p39 = por %p37, %p38
      %p40 = scmp.ne.s32.totalorder %s29, %s30
      %p41 = scmp.eq.s32.totalorder %s21, 0
      %p42 = por %p40, %p41
      %p43 = scmp.ne.s32.totalorder %s29, %s30
      %p44 = scmp.eq.s32.totalorder %s22, 1
      %p45 = por %p43, %p44
      %p47 = scmp.ne.s32.totalorder %s30, %s46
      %p48 = scmp.eq.s32.totalorder %s22, 0
      %p49 = por %p47, %p48
      %s51 = sadd.s32 %s50, 1
      %p54 = scmp.eq.s32.totalorder %s16, 1
      %p55 = scmp.ne.s32.totalorder %s50, %s52
      %p56 = scmp.eq.s32.totalorder %s16, 0
      %p57 = por %p55, %p56
      %p58 = scmp.ne.s32.totalorder %s50, %s52
      %p59 = scmp.eq.s32.totalorder %s21, 1
      %p60 = por %p58, %p59
      %p61 = scmp.ne.s32.totalorder %s52, %s53
      %p62 = scmp.eq.s32.totalorder %s21, 0
      %p63 = por %p61, %p62
      %p64 = scmp.ne.s32.totalorder %s52, %s53
      %p65 = scmp.eq.s32.totalorder %s22, 1
      %p66 = por %p64, %p65
      %p68 = scmp.ne.s32.totalorder %s53, %s67
      %p69 = scmp.eq.s32.totalorder %s22, 0
      %p70 = por %p68, %p69
      %s72 = sadd.s32 %s71, 1
      %p75 = scmp.eq.s32.totalorder %s16, 1
      %p76 = scmp.ne.s32.totalorder %s71, %s73
      %p77 = scmp.eq.s32.totalorder %s16, 0
      %p78 = por %p76, %p77
      %p79 = scmp.ne.s32.totalorder %s71, %s73
      %p80 = scmp.eq.s32.totalorder %s21, 1
      %p81 = por %p79, %p80
      %p82 = scmp.ne.s32.totalorder %s73, %s74
      %p83 = scmp.eq.s32.totalorder %s21, 0
      %p84 = por %p82, %p83
      %p85 = scmp.ne.s32.totalorder %s73, %s74
      %p86 = scmp.eq.s32.totalorder %s22, 1
      %p87 = por %p85, %p86
      %p89 = scmp.ne.s32.totalorder %s74, %s88
      %p90 = scmp.eq.s32.totalorder %s22, 0
      %p91 = por %p89, %p90
      %s93 = sadd.s32 %s92, 1
      %p96 = scmp.eq.s32.totalorder %s16, 1
      %p97 = scmp.ne.s32.totalorder %s92, %s94
      %p98 = scmp.eq.s32.totalorder %s16, 0
      %p99 = por %p97, %p98
      %p100 = scmp.ne.s32.totalorder %s92, %s94
      %p101 = scmp.eq.s32.totalorder %s21, 1
      %p102 = por %p100, %p101
      %p103 = scmp.ne.s32.totalorder %s94, %s95
      %p104 = scmp.eq.s32.totalorder %s21, 0
      %p105 = por %p103, %p104
      %p106 = scmp.ne.s32.totalorder %s94, %s95
      %p107 = scmp.eq.s32.totalorder %s22, 1
      %p108 = por %p106, %p107
      %p110 = scmp.ne.s32.totalorder %s95, %s109
      %p111 = scmp.eq.s32.totalorder %s22, 0
      %p112 = por %p110, %p111
      %s114 = sadd.s32 %s113, 1
      %p117 = scmp.eq.s32.totalorder %s16, 1
      %p118 = scmp.ne.s32.totalorder %s113, %s115
      %p119 = scmp.eq.s32.totalorder %s16, 0
      %p120 = por %p118, %p119
      %p121 = scmp.ne.s32.totalorder %s113, %s115
      %p122 = scmp.eq.s32.totalorder %s21, 1
      %p123 = por %p121, %p122
      %p124 = scmp.ne.s32.totalorder %s115, %s116
      %p125 = scmp.eq.s32.totalorder %s21, 0
      %p126 = por %p124, %p125
      %p127 = scmp.ne.s32.totalorder %s115, %s116
      %p128 = scmp.eq.s32.totalorder %s22, 1
      %p129 = por %p127, %p128
      %p131 = scmp.ne.s32.totalorder %s116, %s130
      %p132 = scmp.eq.s32.totalorder %s22, 0
      %p133 = por %p131, %p132
      %s135 = sadd.s32 %s134, 1
      %p138 = scmp.eq.s32.totalorder %s16, 1
      %p139 = scmp.ne.s32.totalorder %s134, %s136
      %p140 = scmp.eq.s32.totalorder %s16, 0
      %p141 = por %p139, %p140
      %p142 = scmp.ne.s32.totalorder %s134, %s136
      %p143 = scmp.eq.s32.totalorder %s21, 1
      %p144 = por %p142, %p143
      %p145 = scmp.ne.s32.totalorder %s136, %s137
      %p146 = scmp.eq.s32.totalorder %s21, 0
      %p147 = por %p145, %p146
      %p148 = scmp.ne.s32.totalorder %s136, %s137
      %p149 = scmp.eq.s32.totalorder %s22, 1
      %p150 = por %p148, %p149
      %p152 = scmp.ne.s32.totalorder %s137, %s151
      %p153 = scmp.eq.s32.totalorder %s22, 0
      %p154 = por %p152, %p153
      %s156 = sadd.s32 %s155, 1
      %p159 = scmp.eq.s32.totalorder %s16, 1
      %p160 = scmp.ne.s32.totalorder %s155, %s157
      %p161 = scmp.eq.s32.totalorder %s16, 0
      %p162 = por %p160, %p161
      %p163 = scmp.ne.s32.totalorder %s155, %s157
      %p164 = scmp.eq.s32.totalorder %s21, 1
      %p165 = por %p163, %p164
      %p166 = scmp.ne.s32.totalorder %s157, %s158
      %p167 = scmp.eq.s32.totalorder %s21, 0
      %p168 = por %p166, %p167
      %p169 = scmp.ne.s32.totalorder %s157, %s158
      %p170 = scmp.eq.s32.totalorder %s22, 1
      %p171 = por %p169, %p170
      %p173 = scmp.ne.s32.totalorder %s158, %s172
      %p174 = scmp.eq.s32.totalorder %s22, 0
      %p175 = por %p173, %p174
      %s177 = sadd.s32 %s176, 1
      %p180 = scmp.eq.s32.totalorder %s16, 1
      %p181 = scmp.ne.s32.totalorder %s176, %s178
      %p182 = scmp.eq.s32.totalorder %s16, 0
      %p183 = por %p181, %p182
      %p184 = scmp.ne.s32.totalorder %s176, %s178
      %p185 = scmp.eq.s32.totalorder %s21, 1
      %p186 = por %p184, %p185
      %p187 = scmp.ne.s32.totalorder %s178, %s179
      %p188 = scmp.eq.s32.totalorder %s21, 0
      %p189 = por %p187, %p188
      %p190 = scmp.ne.s32.totalorder %s178, %s179
      %p191 = scmp.eq.s32.totalorder %s22, 1
      %p192 = por %p190, %p191
      %p194 = scmp.ne.s32.totalorder %s179, %s193
      %p195 = scmp.eq.s32.totalorder %s22, 0
      %p196 = por %p194, %p195
      %s198 = sadd.s32 %s197, 1
      %p201 = scmp.eq.s32.totalorder %s16, 1
      %p202 = scmp.ne.s32.totalorder %s197, %s199
      %p203 = scmp.eq.s32.totalorder %s16, 0
      %p204 = por %p202, %p203
      %p205 = scmp.ne.s32.totalorder %s197, %s199
      %p206 = scmp.eq.s32.totalorder %s21, 1
      %p207 = por %p205, %p206
      %p208 = scmp.ne.s32.totalorder %s199, %s200
      %p209 = scmp.eq.s32.totalorder %s21, 0
      %p210 = por %p208, %p209
      %p211 = scmp.ne.s32.totalorder %s199, %s200
      %p212 = scmp.eq.s32.totalorder %s22, 1
      %p213 = por %p211, %p212
      %p215 = scmp.ne.s32.totalorder %s200, %s214
      %p216 = scmp.eq.s32.totalorder %s22, 0
      %p217 = por %p215, %p216
      %s218 = ssub.s32 %s16, %s23
      %p219 = scmp.eq.s32.totalorder %s218, 0
      %s221 = sadd.s32 %s220, 1
      %s222 = scalar_select %p219, %s220, %s221
      %p225 = pneg %p219
      %p226 = scmp.eq.s32.totalorder %s16, 1
      %p227 = por %p225, %p226
      %p228 = scmp.ne.s32.totalorder %s220, %s223
      %p229 = scmp.eq.s32.totalorder %s16, 0
      %p230 = por %p228, %p229
      %p231 = scmp.ne.s32.totalorder %s220, %s223
      %p232 = scmp.eq.s32.totalorder %s21, 1
      %p233 = por %p231, %p232
      %p234 = scmp.ne.s32.totalorder %s223, %s224
      %p235 = scmp.eq.s32.totalorder %s21, 0
      %p236 = por %p234, %p235
      %p237 = scmp.ne.s32.totalorder %s223, %s224
      %p238 = scmp.eq.s32.totalorder %s22, 1
      %p239 = por %p237, %p238
      %p241 = scmp.ne.s32.totalorder %s224, %s240
      %p242 = scmp.eq.s32.totalorder %s22, 0
      %p243 = por %p241, %p242
      %p244 = scmp.le.s32.totalorder 1, %s16
      %p245 = scmp.lt.s32.totalorder %s16, 3
      %p246 = pnand %p244, %p245
      %p247 = pneg %p246
      // Predicated region
      $region9: #{tpu_custom_call.1} parent=5 // pred_check
        _
      $region10: #{tpu_custom_call.1} parent=5 // pred_check_branch
        %249 = sbr.rel (%p246) target = $region12
      $region11: #{tpu_custom_call.1} parent=5 // pred_region
        %s250 = ssub.s32 %s16, 1
        // Predicated region
        $region13: #{tpu_custom_call.1} parent=11 // pred_check
          %p251 = pneg %p63
        $region14: #{tpu_custom_call.1} parent=11 // pred_check_branch
          %253 = sbr.rel (%p251) target = $region16
        $region15: #{tpu_custom_call.1} parent=11 // pred_region
          _
        $region16: #{tpu_custom_call.1} parent=11 // pred_fallthru
          _
        // Predicated region
        $region17: #{tpu_custom_call.1} parent=11 // pred_check
          %p254 = pneg %p84
        $region18: #{tpu_custom_call.1} parent=11 // pred_check_branch
          %256 = sbr.rel (%p254) target = $region20
        $region19: #{tpu_custom_call.1} parent=11 // pred_region
          _
        $region20: #{tpu_custom_call.1} parent=11 // pred_fallthru
          _
        // Predicated region
        $region21: #{tpu_custom_call.1} parent=11 // pred_check
          %p257 = pneg %p105
        $region22: #{tpu_custom_call.1} parent=11 // pred_check_branch
          %259 = sbr.rel (%p257) target = $region24
        $region23: #{tpu_custom_call.1} parent=11 // pred_region
          _
        $region24: #{tpu_custom_call.1} parent=11 // pred_fallthru
          _
        // Predicated region
        $region25: #{tpu_custom_call.1} parent=11 // pred_check
          %p260 = pneg %p126
        $region26: #{tpu_custom_call.1} parent=11 // pred_check_branch
          %262 = sbr.rel (%p260) target = $region28
        $region27: #{tpu_custom_call.1} parent=11 // pred_region
          _
        $region28: #{tpu_custom_call.1} parent=11 // pred_fallthru
          _
        // Predicated region
        $region29: #{tpu_custom_call.1} parent=11 // pred_check
          %p263 = pneg %p147
        $region30: #{tpu_custom_call.1} parent=11 // pred_check_branch
          %265 = sbr.rel (%p263) target = $region32
        $region31: #{tpu_custom_call.1} parent=11 // pred_region
          %s267 = ssub.s32 24000, 24000
          %268 = vsyncadd [#allocation3], %s267
          %s269 = sshll.u32 [#allocation2], 4
          %s270 = int_to_ptr.vmem [resolvable:$true] %s269
          %275 = dma.hbm_to_vmem [thread:$0]  %s5, 24000, %s270, [#allocation3], 320, 320, 20
        $region32: #{tpu_custom_call.1} parent=11 // pred_fallthru
          _
        // Predicated region
        $region33: #{tpu_custom_call.1} parent=11 // pred_check
          %p276 = pneg %p168
        $region34: #{tpu_custom_call.1} parent=11 // pred_check_branch
          %278 = sbr.rel (%p276) target = $region36
        $region35: #{tpu_custom_call.1} parent=11 // pred_region
          _
        $region36: #{tpu_custom_call.1} parent=11 // pred_fallthru
          _
        // Predicated region
        $region37: #{tpu_custom_call.1} parent=11 // pred_check
          %p279 = pneg %p189
        $region38: #{tpu_custom_call.1} parent=11 // pred_check_branch
          %281 = sbr.rel (%p279) target = $region40
        $region39: #{tpu_custom_call.1} parent=11 // pred_region
          _
        $region40: #{tpu_custom_call.1} parent=11 // pred_fallthru
          _
        // Predicated region
        $region41: #{tpu_custom_call.1} parent=11 // pred_check
          %p282 = pneg %p210
        $region42: #{tpu_custom_call.1} parent=11 // pred_check_branch
          %284 = sbr.rel (%p282) target = $region44
        $region43: #{tpu_custom_call.1} parent=11 // pred_region
          _
        $region44: #{tpu_custom_call.1} parent=11 // pred_fallthru
          _
      $region12: #{tpu_custom_call.1} parent=5 // pred_fallthru
        _
      %p285 = scmp.lt.s32.totalorder %s16, 2
      // Predicated region
      $region45: #{tpu_custom_call.1} parent=5 // pred_check
        %p286 = pneg %p285
      $region46: #{tpu_custom_call.1} parent=5 // pred_check_branch
        %288 = sbr.rel (%p286) target = $region48
      $region47: #{tpu_custom_call.1} parent=5 // pred_region
        // Predicated region
        $region49: #{tpu_custom_call.1} parent=47 // pred_check
          %p289 = pneg %p36
        $region50: #{tpu_custom_call.1} parent=47 // pred_check_branch
          %291 = sbr.rel (%p289) target = $region52
        $region51: #{tpu_custom_call.1} parent=47 // pred_region
          %s292 = smul.u32 16, %s16
          %p293 = scmp.lt.s32.totalorder %s292, 31
          %s294 = scalar_select %p293, %s292, 31
          %s295 = smul.addr %s294, 7
          %s296 = smul.addr %s295, 8
          %s297 = scalar_lea.vmem %s0, %s296
          %s298 = smul.u32 16, %s16
        $region52: #{tpu_custom_call.1} parent=47 // pred_fallthru
          _
      $region48: #{tpu_custom_call.1} parent=5 // pred_fallthru
        _
      %p299 = scmp.le.s32.totalorder 1, %s16
      %p300 = scmp.lt.s32.totalorder %s16, 3
      %p301 = pnand %p299, %p300
      %p302 = pneg %p301
      // Predicated region
      $region53: #{tpu_custom_call.1} parent=5 // pred_check
        _
      $region54: #{tpu_custom_call.1} parent=5 // pred_check_branch
        %304 = sbr.rel (%p301) target = $region56
      $region55: #{tpu_custom_call.1} parent=5 // pred_region
        %s305 = ssub.s32 %s16, 1
        // Predicated region
        $region57: #{tpu_custom_call.1} parent=55 // pred_check
          %p306 = pneg %p147
        $region58: #{tpu_custom_call.1} parent=55 // pred_check_branch
          %308 = sbr.rel (%p306) target = $region60
        $region59: #{tpu_custom_call.1} parent=55 // pred_region
          %309 = dma.done [#allocation3], 24000
        $region60: #{tpu_custom_call.1} parent=55 // pred_fallthru
          _
        %s310 = smul.u32 16, %s21
        %p311 = scmp.lt.s32.totalorder %s310, 31
        %s312 = scalar_select %p311, %s310, 31
        %s313 = smul.addr %s312, 7
        %s314 = smul.addr %s313, 8
        %s315 = scalar_lea.vmem %s0, %s314
        %p316 = pneg %p42
        %p317 = pneg %p39
        %p318 = pneg %p63
        %p319 = pneg %p60
        %p320 = pneg %p84
        %p321 = pneg %p81
        %p322 = pneg %p105
        %p323 = pneg %p102
        %p324 = pneg %p126
        %p325 = pneg %p123
        %p326 = pneg %p147
        %p327 = pneg %p144
        %p328 = pneg %p168
        %p329 = pneg %p165
        %p330 = pneg %p189
        %p331 = pneg %p186
        %p332 = pneg %p210
        %p333 = pneg %p207
        %p334 = pneg %p236
        %p335 = pneg %p233
        %s336 = smul.u32 16, %s21
        %p337 = scmp.lt.s32.totalorder %s336, 31
        %s338 = scalar_select %p337, %s336, 31
        %s339 = smul.addr %s338, 8
        %s340 = scalar_lea.vmem %s9, %s339
        %s341 = smul.u32 16, %s21
        %p342 = scmp.lt.s32.totalorder %s341, 31
        %s343 = scalar_select %p342, %s341, 31
        %s344 = smul.addr %s343, 7
        %s345 = smul.addr %s344, 8
        %s346 = scalar_lea.vmem %s0, %s345
        %s347 = smul.u32 16, %s21
        %s348 = smul.u32 16, %s21
        %p349 = scmp.lt.s32.totalorder %s348, 31
        %s350 = scalar_select %p349, %s348, 31
        %s351 = smul.addr %s350, 8
        %s352 = scalar_lea.vmem %s9, %s351
        %s353 = smul.u32 16, %s21
        %v355 = vld [vmem:[%s346] sm:$0xff]
        %v356 = vld [vmem:[%s346 + $0x8] sm:$0xff]
        %v357 = vld [vmem:[%s346 + $0x10] sm:$0xff]
        %v358 = vld [vmem:[%s346 + $0x18] sm:$0xff]
        %v359 = vld [vmem:[%s346 + $0x20] sm:$0xff]
        %v360 = vld [vmem:[%s346 + $0x28] sm:$0xff]
        %v361 = vld [vmem:[%s346 + $0x30] sm:$0xff]
        %v362 = vld [vmem:[%s346 + $0x38] sm:$0xff]
        %v363 = vld [vmem:[%s346 + $0x40] sm:$0xff]
        %v364 = vld [vmem:[%s346 + $0x48] sm:$0xff]
        %v365 = vld [vmem:[%s346 + $0x50] sm:$0xff]
        %v366 = vld [vmem:[%s346 + $0x58] sm:$0xff]
        %v367 = vld [vmem:[%s346 + $0x60] sm:$0xff]
        %v368 = vld [vmem:[%s346 + $0x68] sm:$0xff]
        %v369 = vld [vmem:[%s346 + $0x70] sm:$0xff]
        %v370 = vld [vmem:[%s346 + $0x78] sm:$0xff]
        %v371 = vld [vmem:[%s346 + $0x80] sm:$0xff]
        %v372 = vld [vmem:[%s346 + $0x88] sm:$0xff]
        %v373 = vld [vmem:[%s346 + $0x90] sm:$0xff]
        %v374 = vld [vmem:[%s346 + $0x98] sm:$0xff]
        %v375 = vld [vmem:[%s346 + $0xa0] sm:$0xff]
        %v376 = vld [vmem:[%s346 + $0xa8] sm:$0xff]
        %v377 = vld [vmem:[%s346 + $0xb0] sm:$0xff]
        %v378 = vld [vmem:[%s346 + $0xb8] sm:$0xff]
        %v379 = vld [vmem:[%s346 + $0xc0] sm:$0xff]
        %v380 = vld [vmem:[%s346 + $0xc8] sm:$0xff]
        %v381 = vld [vmem:[%s346 + $0xd0] sm:$0xff]
        %v382 = vld [vmem:[%s346 + $0xd8] sm:$0xff]
        %v383 = vld [vmem:[%s346 + $0xe0] sm:$0xff]
        %v384 = vld [vmem:[%s346 + $0xe8] sm:$0xff]
        %v385 = vld [vmem:[%s346 + $0xf0] sm:$0xff]
        %v386 = vld [vmem:[%s346 + $0xf8] sm:$0xff]
        %v387 = vld [vmem:[%s346 + $0x100] sm:$0xff]
        %v388 = vld [vmem:[%s346 + $0x108] sm:$0xff]
        %v389 = vld [vmem:[%s346 + $0x110] sm:$0xff]
        %v390 = vld [vmem:[%s346 + $0x118] sm:$0xff]
        %v391 = vld [vmem:[%s346 + $0x120] sm:$0xff]
        %v392 = vld [vmem:[%s346 + $0x128] sm:$0xff]
        %v393 = vld [vmem:[%s346 + $0x130] sm:$0xff]
        %v394 = vld [vmem:[%s346 + $0x138] sm:$0xff]
        %v395 = vld [vmem:[%s346 + $0x140] sm:$0xff]
        %v396 = vld [vmem:[%s346 + $0x148] sm:$0xff]
        %v397 = vld [vmem:[%s346 + $0x150] sm:$0xff]
        %v398 = vld [vmem:[%s346 + $0x158] sm:$0xff]
        %v399 = vld [vmem:[%s346 + $0x160] sm:$0xff]
        %v400 = vld [vmem:[%s346 + $0x168] sm:$0xff]
        %v401 = vld [vmem:[%s346 + $0x170] sm:$0xff]
        %v402 = vld [vmem:[%s346 + $0x178] sm:$0xff]
        %v403 = vld [vmem:[%s346 + $0x180] sm:$0xff]
        %v404 = vld [vmem:[%s346 + $0x188] sm:$0xff]
        %v405 = vld [vmem:[%s346 + $0x190] sm:$0xff]
        %v406 = vld [vmem:[%s346 + $0x198] sm:$0xff]
        %v407 = vld [vmem:[%s346 + $0x1a0] sm:$0xff]
        %v408 = vld [vmem:[%s346 + $0x1a8] sm:$0xff]
        %v409 = vld [vmem:[%s346 + $0x1b0] sm:$0xff]
        %v410 = vld [vmem:[%s346 + $0x1b8] sm:$0xff]
        %v411 = vld [vmem:[%s346 + $0x1c0] sm:$0xff]
        %v412 = vld [vmem:[%s346 + $0x1c8] sm:$0xff]
        %v413 = vld [vmem:[%s346 + $0x1d0] sm:$0xff]
        %v414 = vld [vmem:[%s346 + $0x1d8] sm:$0xff]
        %v415 = vld [vmem:[%s346 + $0x1e0] sm:$0xff]
        %v416 = vld [vmem:[%s346 + $0x1e8] sm:$0xff]
        %v417 = vld [vmem:[%s346 + $0x1f0] sm:$0xff]
        %v418 = vld [vmem:[%s346 + $0x1f8] sm:$0xff]
        %v419 = vld [vmem:[%s346 + $0x200] sm:$0xff]
        %v420 = vld [vmem:[%s346 + $0x208] sm:$0xff]
        %v421 = vld [vmem:[%s346 + $0x210] sm:$0xff]
        %v422 = vld [vmem:[%s346 + $0x218] sm:$0xff]
        %v423 = vld [vmem:[%s346 + $0x220] sm:$0xff]
        %v424 = vld [vmem:[%s346 + $0x228] sm:$0xff]
        %v425 = vld [vmem:[%s346 + $0x230] sm:$0xff]
        %v426 = vld [vmem:[%s346 + $0x238] sm:$0xff]
        %v427 = vld [vmem:[%s346 + $0x240] sm:$0xff]
        %v428 = vld [vmem:[%s346 + $0x248] sm:$0xff]
        %v429 = vld [vmem:[%s346 + $0x250] sm:$0xff]
        %v430 = vld [vmem:[%s346 + $0x258] sm:$0xff]
        %v431 = vld [vmem:[%s346 + $0x260] sm:$0xff]
        %v432 = vld [vmem:[%s346 + $0x268] sm:$0xff]
        %v433 = vld [vmem:[%s346 + $0x270] sm:$0xff]
        %v434 = vld [vmem:[%s346 + $0x278] sm:$0xff]
        %v435 = vld [vmem:[%s346 + $0x280] sm:$0xff]
        %v436 = vld [vmem:[%s346 + $0x288] sm:$0xff]
        %v437 = vld [vmem:[%s346 + $0x290] sm:$0xff]
        %v438 = vld [vmem:[%s346 + $0x298] sm:$0xff]
        %v439 = vld [vmem:[%s346 + $0x2a0] sm:$0xff]
        %v440 = vld [vmem:[%s346 + $0x2a8] sm:$0xff]
        %v441 = vld [vmem:[%s346 + $0x2b0] sm:$0xff]
        %v442 = vld [vmem:[%s346 + $0x2b8] sm:$0xff]
        %v443 = vld [vmem:[%s346 + $0x2c0] sm:$0xff]
        %v444 = vld [vmem:[%s346 + $0x2c8] sm:$0xff]
        %v445 = vld [vmem:[%s346 + $0x2d0] sm:$0xff]
        %v446 = vld [vmem:[%s346 + $0x2d8] sm:$0xff]
        %v447 = vld [vmem:[%s346 + $0x2e0] sm:$0xff]
        %v448 = vld [vmem:[%s346 + $0x2e8] sm:$0xff]
        %v449 = vld [vmem:[%s346 + $0x2f0] sm:$0xff]
        %v450 = vld [vmem:[%s346 + $0x2f8] sm:$0xff]
        %v451 = vld [vmem:[%s346 + $0x300] sm:$0xff]
        %v452 = vld [vmem:[%s346 + $0x308] sm:$0xff]
        %v453 = vld [vmem:[%s346 + $0x310] sm:$0xff]
        %v454 = vld [vmem:[%s346 + $0x318] sm:$0xff]
        %v455 = vld [vmem:[%s346 + $0x320] sm:$0xff]
        %v456 = vld [vmem:[%s346 + $0x328] sm:$0xff]
        %v457 = vld [vmem:[%s346 + $0x330] sm:$0xff]
        %v458 = vld [vmem:[%s346 + $0x338] sm:$0xff]
        %v459 = vld [vmem:[%s346 + $0x340] sm:$0xff]
        %v460 = vld [vmem:[%s346 + $0x348] sm:$0xff]
        %v461 = vld [vmem:[%s346 + $0x350] sm:$0xff]
        %v462 = vld [vmem:[%s346 + $0x358] sm:$0xff]
        %v463 = vld [vmem:[%s346 + $0x360] sm:$0xff]
        %v464 = vld [vmem:[%s346 + $0x368] sm:$0xff]
        %v465 = vld [vmem:[%s346 + $0x370] sm:$0xff]
        %v466 = vld [vmem:[%s346 + $0x378] sm:$0xff]
        %v467 = vpack.c.bf16 %v362, %v355
        %v468 = vpack.c.bf16 %v363, %v356
        %v469 = vpack.c.bf16 %v364, %v357
        %v470 = vpack.c.bf16 %v365, %v358
        %v471 = vpack.c.bf16 %v366, %v359
        %v472 = vpack.c.bf16 %v367, %v360
        %v473 = vpack.c.bf16 %v368, %v361
        %v474 = vpack.c.bf16 %v376, %v369
        %v475 = vpack.c.bf16 %v377, %v370
        %v476 = vpack.c.bf16 %v378, %v371
        %v477 = vpack.c.bf16 %v379, %v372
        %v478 = vpack.c.bf16 %v380, %v373
        %v479 = vpack.c.bf16 %v381, %v374
        %v480 = vpack.c.bf16 %v382, %v375
        %v481 = vpack.c.bf16 %v390, %v383
        %v482 = vpack.c.bf16 %v391, %v384
        %v483 = vpack.c.bf16 %v392, %v385
        %v484 = vpack.c.bf16 %v393, %v386
        %v485 = vpack.c.bf16 %v394, %v387
        %v486 = vpack.c.bf16 %v395, %v388
        %v487 = vpack.c.bf16 %v396, %v389
        %v488 = vpack.c.bf16 %v404, %v397
        %v489 = vpack.c.bf16 %v405, %v398
        %v490 = vpack.c.bf16 %v406, %v399
        %v491 = vpack.c.bf16 %v407, %v400
        %v492 = vpack.c.bf16 %v408, %v401
        %v493 = vpack.c.bf16 %v409, %v402
        %v494 = vpack.c.bf16 %v410, %v403
        %v495 = vpack.c.bf16 %v418, %v411
        %v496 = vpack.c.bf16 %v419, %v412
        %v497 = vpack.c.bf16 %v420, %v413
        %v498 = vpack.c.bf16 %v421, %v414
        %v499 = vpack.c.bf16 %v422, %v415
        %v500 = vpack.c.bf16 %v423, %v416
        %v501 = vpack.c.bf16 %v424, %v417
        %v502 = vpack.c.bf16 %v432, %v425
        %v503 = vpack.c.bf16 %v433, %v426
        %v504 = vpack.c.bf16 %v434, %v427
        %v505 = vpack.c.bf16 %v435, %v428
        %v506 = vpack.c.bf16 %v436, %v429
        %v507 = vpack.c.bf16 %v437, %v430
        %v508 = vpack.c.bf16 %v438, %v431
        %v509 = vpack.c.bf16 %v446, %v439
        %v510 = vpack.c.bf16 %v447, %v440
        %v511 = vpack.c.bf16 %v448, %v441
        %v512 = vpack.c.bf16 %v449, %v442
        %v513 = vpack.c.bf16 %v450, %v443
        %v514 = vpack.c.bf16 %v451, %v444
        %v515 = vpack.c.bf16 %v452, %v445
        %v516 = vpack.c.bf16 %v460, %v453
        %v517 = vpack.c.bf16 %v461, %v454
        %v518 = vpack.c.bf16 %v462, %v455
        %v519 = vpack.c.bf16 %v463, %v456
        %v520 = vpack.c.bf16 %v464, %v457
        %v521 = vpack.c.bf16 %v465, %v458
        %v522 = vpack.c.bf16 %v466, %v459
        %v523 = vld [vmem:[%s1] sm:$0xff]
        %v524 = vld [vmem:[%s1 + $0x8] sm:$0xff]
        %v525 = vld [vmem:[%s1 + $0x10] sm:$0xf]
        %v526 = vld [vmem:[%s1 + $0x14] sm:$0xff]
        %v527 = vld [vmem:[%s1 + $0x1c] sm:$0xff]
        %v528 = vld [vmem:[%s1 + $0x24] sm:$0xf]
        %v529 = vld [vmem:[%s1 + $0x28] sm:$0xff]
        %v530 = vld [vmem:[%s1 + $0x30] sm:$0xff]
        %v531 = vld [vmem:[%s1 + $0x38] sm:$0xf]
        %v532 = vld [vmem:[%s1 + $0x3c] sm:$0xff]
        %v533 = vld [vmem:[%s1 + $0x44] sm:$0xff]
        %v534 = vld [vmem:[%s1 + $0x4c] sm:$0xf]
        %v535 = vld [vmem:[%s1 + $0x50] sm:$0xff]
        %v536 = vld [vmem:[%s1 + $0x58] sm:$0xff]
        %v537 = vld [vmem:[%s1 + $0x60] sm:$0xf]
        %v538 = vld [vmem:[%s1 + $0x64] sm:$0xff]
        %v539 = vld [vmem:[%s1 + $0x6c] sm:$0xff]
        %v540 = vld [vmem:[%s1 + $0x74] sm:$0xf]
        %v541 = vld [vmem:[%s1 + $0x78] sm:$0xff]
        %v542 = vld [vmem:[%s1 + $0x80] sm:$0xff]
        %v543 = vld [vmem:[%s1 + $0x88] sm:$0xf]
        %v544 = vld [vmem:[%s1 + $0x8c] sm:$0xff]
        %v545 = vld [vmem:[%s1 + $0x94] sm:$0xff]
        %v546 = vld [vmem:[%s1 + $0x9c] sm:$0xf]
        %v547 = vld [vmem:[%s1 + $0xa0] sm:$0xff]
        %v548 = vld [vmem:[%s1 + $0xa8] sm:$0xff]
        %v549 = vld [vmem:[%s1 + $0xb0] sm:$0xf]
        %v550 = vld [vmem:[%s1 + $0xb4] sm:$0xff]
        %v551 = vld [vmem:[%s1 + $0xbc] sm:$0xff]
        %v552 = vld [vmem:[%s1 + $0xc4] sm:$0xf]
        %v553 = vld [vmem:[%s1 + $0xc8] sm:$0xff]
        %v554 = vld [vmem:[%s1 + $0xd0] sm:$0xff]
        %v555 = vld [vmem:[%s1 + $0xd8] sm:$0xf]
        %v556 = vld [vmem:[%s1 + $0xdc] sm:$0xff]
        %v557 = vld [vmem:[%s1 + $0xe4] sm:$0xff]
        %v558 = vld [vmem:[%s1 + $0xec] sm:$0xf]
        %v559 = vld [vmem:[%s1 + $0xf0] sm:$0xff]
        %v560 = vld [vmem:[%s1 + $0xf8] sm:$0xff]
        %v561 = vld [vmem:[%s1 + $0x100] sm:$0xf]
        %v562 = vld [vmem:[%s1 + $0x104] sm:$0xff]
        %v563 = vld [vmem:[%s1 + $0x10c] sm:$0xff]
        %v564 = vld [vmem:[%s1 + $0x114] sm:$0xf]
        %v565 = vld [vmem:[%s1 + $0x118] sm:$0xff]
        %v566 = vld [vmem:[%s1 + $0x120] sm:$0xff]
        %v567 = vld [vmem:[%s1 + $0x128] sm:$0xf]
        %v568 = vld [vmem:[%s1 + $0x12c] sm:$0xff]
        %v569 = vld [vmem:[%s1 + $0x134] sm:$0xff]
        %v570 = vld [vmem:[%s1 + $0x13c] sm:$0xf]
        %v571 = vld [vmem:[%s1 + $0x140] sm:$0xff]
        %v572 = vld [vmem:[%s1 + $0x148] sm:$0xff]
        %v573 = vld [vmem:[%s1 + $0x150] sm:$0xf]
        %v574 = vld [vmem:[%s1 + $0x154] sm:$0xff]
        %v575 = vld [vmem:[%s1 + $0x15c] sm:$0xff]
        %v576 = vld [vmem:[%s1 + $0x164] sm:$0xf]
        %v577 = vld [vmem:[%s1 + $0x168] sm:$0xff]
        %v578 = vld [vmem:[%s1 + $0x170] sm:$0xff]
        %v579 = vld [vmem:[%s1 + $0x178] sm:$0xf]
        %v580 = vld [vmem:[%s1 + $0x17c] sm:$0xff]
        %v581 = vld [vmem:[%s1 + $0x184] sm:$0xff]
        %v582 = vld [vmem:[%s1 + $0x18c] sm:$0xf]
        %v583 = vld [vmem:[%s1 + $0x190] sm:$0xff]
        %v584 = vld [vmem:[%s1 + $0x198] sm:$0xff]
        %v585 = vld [vmem:[%s1 + $0x1a0] sm:$0xf]
        %v586 = vld [vmem:[%s1 + $0x1a4] sm:$0xff]
        %v587 = vld [vmem:[%s1 + $0x1ac] sm:$0xff]
        %v588 = vld [vmem:[%s1 + $0x1b4] sm:$0xf]
        %v589 = vld [vmem:[%s1 + $0x1b8] sm:$0xff]
        %v590 = vld [vmem:[%s1 + $0x1c0] sm:$0xff]
        %v591 = vld [vmem:[%s1 + $0x1c8] sm:$0xf]
        %v592 = vld [vmem:[%s1 + $0x1cc] sm:$0xff]
        %v593 = vld [vmem:[%s1 + $0x1d4] sm:$0xff]
        %v594 = vld [vmem:[%s1 + $0x1dc] sm:$0xf]
        %v595 = vld [vmem:[%s1 + $0x1e0] sm:$0xff]
        %v596 = vld [vmem:[%s1 + $0x1e8] sm:$0xff]
        %v597 = vld [vmem:[%s1 + $0x1f0] sm:$0xf]
        %v598 = vld [vmem:[%s1 + $0x1f4] sm:$0xff]
        %v599 = vld [vmem:[%s1 + $0x1fc] sm:$0xff]
        %v600 = vld [vmem:[%s1 + $0x204] sm:$0xf]
        %v601 = vld [vmem:[%s1 + $0x208] sm:$0xff]
        %v602 = vld [vmem:[%s1 + $0x210] sm:$0xff]
        %v603 = vld [vmem:[%s1 + $0x218] sm:$0xf]
        %v604 = vld [vmem:[%s1 + $0x21c] sm:$0xff]
        %v605 = vld [vmem:[%s1 + $0x224] sm:$0xff]
        %v606 = vld [vmem:[%s1 + $0x22c] sm:$0xf]
        %v607 = vld [vmem:[%s1 + $0x230] sm:$0xff]
        %v608 = vld [vmem:[%s1 + $0x238] sm:$0xff]
        %v609 = vld [vmem:[%s1 + $0x240] sm:$0xf]
        %v610 = vld [vmem:[%s1 + $0x244] sm:$0xff]
        %v611 = vld [vmem:[%s1 + $0x24c] sm:$0xff]
        %v612 = vld [vmem:[%s1 + $0x254] sm:$0xf]
        %v613 = vld [vmem:[%s1 + $0x258] sm:$0xff]
        %v614 = vld [vmem:[%s1 + $0x260] sm:$0xff]
        %v615 = vld [vmem:[%s1 + $0x268] sm:$0xf]
        %v616 = vld [vmem:[%s1 + $0x26c] sm:$0xff]
        %v617 = vld [vmem:[%s1 + $0x274] sm:$0xff]
        %v618 = vld [vmem:[%s1 + $0x27c] sm:$0xf]
        %v619 = vld [vmem:[%s1 + $0x280] sm:$0xff]
        %v620 = vld [vmem:[%s1 + $0x288] sm:$0xff]
        %v621 = vld [vmem:[%s1 + $0x290] sm:$0xf]
        %v622 = vld [vmem:[%s1 + $0x294] sm:$0xff]
        %v623 = vld [vmem:[%s1 + $0x29c] sm:$0xff]
        %v624 = vld [vmem:[%s1 + $0x2a4] sm:$0xf]
        %v625 = vld [vmem:[%s1 + $0x2a8] sm:$0xff]
        %v626 = vld [vmem:[%s1 + $0x2b0] sm:$0xff]
        %v627 = vld [vmem:[%s1 + $0x2b8] sm:$0xf]
        %v628 = vld [vmem:[%s1 + $0x2bc] sm:$0xff]
        %v629 = vld [vmem:[%s1 + $0x2c4] sm:$0xff]
        %v630 = vld [vmem:[%s1 + $0x2cc] sm:$0xf]
        %v631 = vld [vmem:[%s1 + $0x2d0] sm:$0xff]
        %v632 = vld [vmem:[%s1 + $0x2d8] sm:$0xff]
        %v633 = vld [vmem:[%s1 + $0x2e0] sm:$0xf]
        %v634 = vld [vmem:[%s1 + $0x2e4] sm:$0xff]
        %v635 = vld [vmem:[%s1 + $0x2ec] sm:$0xff]
        %v636 = vld [vmem:[%s1 + $0x2f4] sm:$0xf]
        %v637 = vld [vmem:[%s1 + $0x2f8] sm:$0xff]
        %v638 = vld [vmem:[%s1 + $0x300] sm:$0xff]
        %v639 = vld [vmem:[%s1 + $0x308] sm:$0xf]
        %v640 = vld [vmem:[%s1 + $0x30c] sm:$0xff]
        %v641 = vld [vmem:[%s1 + $0x314] sm:$0xff]
        %v642 = vld [vmem:[%s1 + $0x31c] sm:$0xf]
        %v643 = vld [vmem:[%s1 + $0x320] sm:$0xff]
        %v644 = vld [vmem:[%s1 + $0x328] sm:$0xff]
        %v645 = vld [vmem:[%s1 + $0x330] sm:$0xf]
        %v646 = vld [vmem:[%s1 + $0x334] sm:$0xff]
        %v647 = vld [vmem:[%s1 + $0x33c] sm:$0xff]
        %v648 = vld [vmem:[%s1 + $0x344] sm:$0xf]
        %v649 = vld [vmem:[%s1 + $0x348] sm:$0xff]
        %v650 = vld [vmem:[%s1 + $0x350] sm:$0xff]
        %v651 = vld [vmem:[%s1 + $0x358] sm:$0xf]
        %v652 = vld [vmem:[%s1 + $0x35c] sm:$0xff]
        %v653 = vld [vmem:[%s1 + $0x364] sm:$0xff]
        %v654 = vld [vmem:[%s1 + $0x36c] sm:$0xf]
        %v655 = vld [vmem:[%s1 + $0x370] sm:$0xff]
        %v656 = vld [vmem:[%s1 + $0x378] sm:$0xff]
        %v657 = vld [vmem:[%s1 + $0x380] sm:$0xf]
        %v658 = vld [vmem:[%s1 + $0x384] sm:$0xff]
        %v659 = vld [vmem:[%s1 + $0x38c] sm:$0xff]
        %v660 = vld [vmem:[%s1 + $0x394] sm:$0xf]
        %v661 = vld [vmem:[%s1 + $0x398] sm:$0xff]
        %v662 = vld [vmem:[%s1 + $0x3a0] sm:$0xff]
        %v663 = vld [vmem:[%s1 + $0x3a8] sm:$0xf]
        %v664 = vld [vmem:[%s1 + $0x3ac] sm:$0xff]
        %v665 = vld [vmem:[%s1 + $0x3b4] sm:$0xff]
        %v666 = vld [vmem:[%s1 + $0x3bc] sm:$0xf]
        %v667 = vld [vmem:[%s1 + $0x3c0] sm:$0xff]
        %v668 = vld [vmem:[%s1 + $0x3c8] sm:$0xff]
        %v669 = vld [vmem:[%s1 + $0x3d0] sm:$0xf]
        %v670 = vld [vmem:[%s1 + $0x3d4] sm:$0xff]
        %v671 = vld [vmem:[%s1 + $0x3dc] sm:$0xff]
        %v672 = vld [vmem:[%s1 + $0x3e4] sm:$0xf]
        %v673 = vld [vmem:[%s1 + $0x3e8] sm:$0xff]
        %v674 = vld [vmem:[%s1 + $0x3f0] sm:$0xff]
        %v675 = vld [vmem:[%s1 + $0x3f8] sm:$0xf]
        %v676 = vld [vmem:[%s1 + $0x3fc] sm:$0xff]
        %v677 = vld [vmem:[%s1 + $0x404] sm:$0xff]
        %v678 = vld [vmem:[%s1 + $0x40c] sm:$0xf]
        %v679 = vld [vmem:[%s1 + $0x410] sm:$0xff]
        %v680 = vld [vmem:[%s1 + $0x418] sm:$0xff]
        %v681 = vld [vmem:[%s1 + $0x420] sm:$0xf]
        %v682 = vld [vmem:[%s1 + $0x424] sm:$0xff]
        %v683 = vld [vmem:[%s1 + $0x42c] sm:$0xff]
        %v684 = vld [vmem:[%s1 + $0x434] sm:$0xf]
        %v685 = vld [vmem:[%s1 + $0x438] sm:$0xff]
        %v686 = vld [vmem:[%s1 + $0x440] sm:$0xff]
        %v687 = vld [vmem:[%s1 + $0x448] sm:$0xf]
        %v688 = vld [vmem:[%s1 + $0x44c] sm:$0xff]
        %v689 = vld [vmem:[%s1 + $0x454] sm:$0xff]
        %v690 = vld [vmem:[%s1 + $0x45c] sm:$0xf]
        %v691 = vld [vmem:[%s1 + $0x460] sm:$0xff]
        %v692 = vld [vmem:[%s1 + $0x468] sm:$0xff]
        %v693 = vld [vmem:[%s1 + $0x470] sm:$0xf]
        %v694 = vld [vmem:[%s1 + $0x474] sm:$0xff]
        %v695 = vld [vmem:[%s1 + $0x47c] sm:$0xff]
        %v696 = vld [vmem:[%s1 + $0x484] sm:$0xf]
        %v697 = vld [vmem:[%s1 + $0x488] sm:$0xff]
        %v698 = vld [vmem:[%s1 + $0x490] sm:$0xff]
        %v699 = vld [vmem:[%s1 + $0x498] sm:$0xf]
        %v700 = vld [vmem:[%s1 + $0x49c] sm:$0xff]
        %v701 = vld [vmem:[%s1 + $0x4a4] sm:$0xff]
        %v702 = vld [vmem:[%s1 + $0x4ac] sm:$0xf]
        %v703 = vld [vmem:[%s1 + $0x4b0] sm:$0xff]
        %v704 = vld [vmem:[%s1 + $0x4b8] sm:$0xff]
        %v705 = vld [vmem:[%s1 + $0x4c0] sm:$0xf]
        %v706 = vld [vmem:[%s1 + $0x4c4] sm:$0xff]
        %v707 = vld [vmem:[%s1 + $0x4cc] sm:$0xff]
        %v708 = vld [vmem:[%s1 + $0x4d4] sm:$0xf]
        %v709 = vld [vmem:[%s1 + $0x4d8] sm:$0xff]
        %v710 = vld [vmem:[%s1 + $0x4e0] sm:$0xff]
        %v711 = vld [vmem:[%s1 + $0x4e8] sm:$0xf]
        %v712 = vld [vmem:[%s1 + $0x4ec] sm:$0xff]
        %v713 = vld [vmem:[%s1 + $0x4f4] sm:$0xff]
        %v714 = vld [vmem:[%s1 + $0x4fc] sm:$0xf]
        %v715 = vld [vmem:[%s1 + $0x500] sm:$0xff]
        %v716 = vld [vmem:[%s1 + $0x508] sm:$0xff]
        %v717 = vld [vmem:[%s1 + $0x510] sm:$0xf]
        %v718 = vld [vmem:[%s1 + $0x514] sm:$0xff]
        %v719 = vld [vmem:[%s1 + $0x51c] sm:$0xff]
        %v720 = vld [vmem:[%s1 + $0x524] sm:$0xf]
        %v721 = vld [vmem:[%s1 + $0x528] sm:$0xff]
        %v722 = vld [vmem:[%s1 + $0x530] sm:$0xff]
        %v723 = vld [vmem:[%s1 + $0x538] sm:$0xf]
        %v724 = vld [vmem:[%s1 + $0x53c] sm:$0xff]
        %v725 = vld [vmem:[%s1 + $0x544] sm:$0xff]
        %v726 = vld [vmem:[%s1 + $0x54c] sm:$0xf]
        %v727 = vld [vmem:[%s1 + $0x550] sm:$0xff]
        %v728 = vld [vmem:[%s1 + $0x558] sm:$0xff]
        %v729 = vld [vmem:[%s1 + $0x560] sm:$0xf]
        %v730 = vld [vmem:[%s1 + $0x564] sm:$0xff]
        %v731 = vld [vmem:[%s1 + $0x56c] sm:$0xff]
        %v732 = vld [vmem:[%s1 + $0x574] sm:$0xf]
        %v733 = vld [vmem:[%s1 + $0x578] sm:$0xff]
        %v734 = vld [vmem:[%s1 + $0x580] sm:$0xff]
        %v735 = vld [vmem:[%s1 + $0x588] sm:$0xf]
        %v736 = vld [vmem:[%s1 + $0x58c] sm:$0xff]
        %v737 = vld [vmem:[%s1 + $0x594] sm:$0xff]
        %v738 = vld [vmem:[%s1 + $0x59c] sm:$0xf]
        %v739 = vld [vmem:[%s1 + $0x5a0] sm:$0xff]
        %v740 = vld [vmem:[%s1 + $0x5a8] sm:$0xff]
        %v741 = vld [vmem:[%s1 + $0x5b0] sm:$0xf]
        %v742 = vld [vmem:[%s1 + $0x5b4] sm:$0xff]
        %v743 = vld [vmem:[%s1 + $0x5bc] sm:$0xff]
        %v744 = vld [vmem:[%s1 + $0x5c4] sm:$0xf]
        %v745 = vld [vmem:[%s1 + $0x5c8] sm:$0xff]
        %v746 = vld [vmem:[%s1 + $0x5d0] sm:$0xff]
        %v747 = vld [vmem:[%s1 + $0x5d8] sm:$0xf]
        %v748 = vld [vmem:[%s1 + $0x5dc] sm:$0xff]
        %v749 = vld [vmem:[%s1 + $0x5e4] sm:$0xff]
        %v750 = vld [vmem:[%s1 + $0x5ec] sm:$0xf]
        %v751 = vld [vmem:[%s1 + $0x5f0] sm:$0xff]
        %v752 = vld [vmem:[%s1 + $0x5f8] sm:$0xff]
        %v753 = vld [vmem:[%s1 + $0x600] sm:$0xf]
        %v754 = vld [vmem:[%s1 + $0x604] sm:$0xff]
        %v755 = vld [vmem:[%s1 + $0x60c] sm:$0xff]
        %v756 = vld [vmem:[%s1 + $0x614] sm:$0xf]
        %v757 = vld [vmem:[%s1 + $0x618] sm:$0xff]
        %v758 = vld [vmem:[%s1 + $0x620] sm:$0xff]
        %v759 = vld [vmem:[%s1 + $0x628] sm:$0xf]
        %v760 = vld [vmem:[%s1 + $0x62c] sm:$0xff]
        %v761 = vld [vmem:[%s1 + $0x634] sm:$0xff]
        %v762 = vld [vmem:[%s1 + $0x63c] sm:$0xf]
        %v763 = vld [vmem:[%s1 + $0x640] sm:$0xff]
        %v764 = vld [vmem:[%s1 + $0x648] sm:$0xff]
        %v765 = vld [vmem:[%s1 + $0x650] sm:$0xf]
        %v766 = vld [vmem:[%s1 + $0x654] sm:$0xff]
        %v767 = vld [vmem:[%s1 + $0x65c] sm:$0xff]
        %v768 = vld [vmem:[%s1 + $0x664] sm:$0xf]
        %v769 = vld [vmem:[%s1 + $0x668] sm:$0xff]
        %v770 = vld [vmem:[%s1 + $0x670] sm:$0xff]
        %v771 = vld [vmem:[%s1 + $0x678] sm:$0xf]
        %v772 = vld [vmem:[%s1 + $0x67c] sm:$0xff]
        %v773 = vld [vmem:[%s1 + $0x684] sm:$0xff]
        %v774 = vld [vmem:[%s1 + $0x68c] sm:$0xf]
        %v775 = vld [vmem:[%s1 + $0x690] sm:$0xff]
        %v776 = vld [vmem:[%s1 + $0x698] sm:$0xff]
        %v777 = vld [vmem:[%s1 + $0x6a0] sm:$0xf]
        %v778 = vld [vmem:[%s1 + $0x6a4] sm:$0xff]
        %v779 = vld [vmem:[%s1 + $0x6ac] sm:$0xff]
        %v780 = vld [vmem:[%s1 + $0x6b4] sm:$0xf]
        %v781 = vld [vmem:[%s1 + $0x6b8] sm:$0xff]
        %v782 = vld [vmem:[%s1 + $0x6c0] sm:$0xff]
        %v783 = vld [vmem:[%s1 + $0x6c8] sm:$0xf]
        %v784 = vld [vmem:[%s1 + $0x6cc] sm:$0xff]
        %v785 = vld [vmem:[%s1 + $0x6d4] sm:$0xff]
        %v786 = vld [vmem:[%s1 + $0x6dc] sm:$0xf]
        %v787 = vld [vmem:[%s1 + $0x6e0] sm:$0xff]
        %v788 = vld [vmem:[%s1 + $0x6e8] sm:$0xff]
        %v789 = vld [vmem:[%s1 + $0x6f0] sm:$0xf]
        %v790 = vld [vmem:[%s1 + $0x6f4] sm:$0xff]
        %v791 = vld [vmem:[%s1 + $0x6fc] sm:$0xff]
        %v792 = vld [vmem:[%s1 + $0x704] sm:$0xf]
        %v793 = vld [vmem:[%s1 + $0x708] sm:$0xff]
        %v794 = vld [vmem:[%s1 + $0x710] sm:$0xff]
        %v795 = vld [vmem:[%s1 + $0x718] sm:$0xf]
        %v796 = vld [vmem:[%s1 + $0x71c] sm:$0xff]
        %v797 = vld [vmem:[%s1 + $0x724] sm:$0xff]
        %v798 = vld [vmem:[%s1 + $0x72c] sm:$0xf]
        %v799 = vld [vmem:[%s1 + $0x730] sm:$0xff]
        %v800 = vld [vmem:[%s1 + $0x738] sm:$0xff]
        %v801 = vld [vmem:[%s1 + $0x740] sm:$0xf]
        %v802 = vld [vmem:[%s1 + $0x744] sm:$0xff]
        %v803 = vld [vmem:[%s1 + $0x74c] sm:$0xff]
        %v804 = vld [vmem:[%s1 + $0x754] sm:$0xf]
        %v805 = vld [vmem:[%s1 + $0x758] sm:$0xff]
        %v806 = vld [vmem:[%s1 + $0x760] sm:$0xff]
        %v807 = vld [vmem:[%s1 + $0x768] sm:$0xf]
        %v808 = vld [vmem:[%s1 + $0x76c] sm:$0xff]
        %v809 = vld [vmem:[%s1 + $0x774] sm:$0xff]
        %v810 = vld [vmem:[%s1 + $0x77c] sm:$0xf]
        %v811 = vld [vmem:[%s1 + $0x780] sm:$0xff]
        %v812 = vld [vmem:[%s1 + $0x788] sm:$0xff]
        %v813 = vld [vmem:[%s1 + $0x790] sm:$0xf]
        %v814 = vld [vmem:[%s1 + $0x794] sm:$0xff]
        %v815 = vld [vmem:[%s1 + $0x79c] sm:$0xff]
        %v816 = vld [vmem:[%s1 + $0x7a4] sm:$0xf]
        %v817 = vld [vmem:[%s2] sm:$0x1f]
        %v819 = vlaneseq
        %v820 = vshrl.u32 %v819, 7
        %v821 = vsub.s32 0, %v820
        %v822 = vrot.slane %v817, %v821
        %v823 = vlaneseq
        %v824 = vshrl.u32 %v823, 7
        %v825 = vsub.s32 1, %v824
        %v826 = vrot.slane %v817, %v825
        %v827 = vlaneseq
        %v828 = vshrl.u32 %v827, 7
        %v829 = vsub.s32 2, %v828
        %v830 = vrot.slane %v817, %v829
        %v831 = vlaneseq
        %v832 = vshrl.u32 %v831, 7
        %v833 = vsub.s32 3, %v832
        %v834 = vrot.slane %v817, %v833
        %v835 = vlaneseq
        %v836 = vshrl.u32 %v835, 7
        %v837 = vsub.s32 4, %v836
        %v838 = vrot.slane %v817, %v837
        %v1138 = vunpack.c.l.b16 %v523
        %v1139 = vunpack.c.h.b16 %v523
        %v1140 = vunpack.c.l.b16 %v524
        %v1141 = vunpack.c.h.b16 %v524
        %v1142 = vunpack.c.l.b16 %v525
        %v1143 = vunpack.c.l.b16 %v526
        %v1144 = vunpack.c.h.b16 %v526
        %v1145 = vunpack.c.l.b16 %v527
        %v1146 = vunpack.c.h.b16 %v527
        %v1147 = vunpack.c.l.b16 %v528
        %v1148 = vunpack.c.l.b16 %v529
        %v1149 = vunpack.c.h.b16 %v529
        %v1150 = vunpack.c.l.b16 %v530
        %v1151 = vunpack.c.h.b16 %v530
        %v1152 = vunpack.c.l.b16 %v531
        %v1153 = vunpack.c.l.b16 %v532
        %v1154 = vunpack.c.h.b16 %v532
        %v1155 = vunpack.c.l.b16 %v533
        %v1156 = vunpack.c.h.b16 %v533
        %v1157 = vunpack.c.l.b16 %v534
        %v1158 = vunpack.c.l.b16 %v535
        %v1159 = vunpack.c.h.b16 %v535
        %v1160 = vunpack.c.l.b16 %v536
        %v1161 = vunpack.c.h.b16 %v536
        %v1162 = vunpack.c.l.b16 %v537
        %v1163 = vunpack.c.l.b16 %v538
        %v1164 = vunpack.c.h.b16 %v538
        %v1165 = vunpack.c.l.b16 %v539
        %v1166 = vunpack.c.h.b16 %v539
        %v1167 = vunpack.c.l.b16 %v540
        %v1168 = vunpack.c.l.b16 %v541
        %v1169 = vunpack.c.h.b16 %v541
        %v1170 = vunpack.c.l.b16 %v542
        %v1171 = vunpack.c.h.b16 %v542
        %v1172 = vunpack.c.l.b16 %v543
        %v1173 = vunpack.c.l.b16 %v544
        %v1174 = vunpack.c.h.b16 %v544
        %v1175 = vunpack.c.l.b16 %v545
        %v1176 = vunpack.c.h.b16 %v545
        %v1177 = vunpack.c.l.b16 %v546
        %v1178 = vunpack.c.l.b16 %v547
        %v1179 = vunpack.c.h.b16 %v547
        %v1180 = vunpack.c.l.b16 %v548
        %v1181 = vunpack.c.h.b16 %v548
        %v1182 = vunpack.c.l.b16 %v549
        %v1183 = vunpack.c.l.b16 %v550
        %v1184 = vunpack.c.h.b16 %v550
        %v1185 = vunpack.c.l.b16 %v551
        %v1186 = vunpack.c.h.b16 %v551
        %v1187 = vunpack.c.l.b16 %v552
        %v1188 = vunpack.c.l.b16 %v553
        %v1189 = vunpack.c.h.b16 %v553
        %v1190 = vunpack.c.l.b16 %v554
        %v1191 = vunpack.c.h.b16 %v554
        %v1192 = vunpack.c.l.b16 %v555
        %v1193 = vunpack.c.l.b16 %v556
        %v1194 = vunpack.c.h.b16 %v556
        %v1195 = vunpack.c.l.b16 %v557
        %v1196 = vunpack.c.h.b16 %v557
        %v1197 = vunpack.c.l.b16 %v558
        %v1198 = vunpack.c.l.b16 %v559
        %v1199 = vunpack.c.h.b16 %v559
        %v1200 = vunpack.c.l.b16 %v560
        %v1201 = vunpack.c.h.b16 %v560
        %v1202 = vunpack.c.l.b16 %v561
        %v1203 = vunpack.c.l.b16 %v562
        %v1204 = vunpack.c.h.b16 %v562
        %v1205 = vunpack.c.l.b16 %v563
        %v1206 = vunpack.c.h.b16 %v563
        %v1207 = vunpack.c.l.b16 %v564
        %v1208 = vunpack.c.l.b16 %v565
        %v1209 = vunpack.c.h.b16 %v565
        %v1210 = vunpack.c.l.b16 %v566
        %v1211 = vunpack.c.h.b16 %v566
        %v1212 = vunpack.c.l.b16 %v567
        %v1213 = vunpack.c.l.b16 %v568
        %v1214 = vunpack.c.h.b16 %v568
        %v1215 = vunpack.c.l.b16 %v569
        %v1216 = vunpack.c.h.b16 %v569
        %v1217 = vunpack.c.l.b16 %v570
        %v1218 = vunpack.c.l.b16 %v571
        %v1219 = vunpack.c.h.b16 %v571
        %v1220 = vunpack.c.l.b16 %v572
        %v1221 = vunpack.c.h.b16 %v572
        %v1222 = vunpack.c.l.b16 %v573
        %v1223 = vunpack.c.l.b16 %v574
        %v1224 = vunpack.c.h.b16 %v574
        %v1225 = vunpack.c.l.b16 %v575
        %v1226 = vunpack.c.h.b16 %v575
        %v1227 = vunpack.c.l.b16 %v576
        %v1228 = vunpack.c.l.b16 %v577
        %v1229 = vunpack.c.h.b16 %v577
        %v1230 = vunpack.c.l.b16 %v578
        %v1231 = vunpack.c.h.b16 %v578
        %v1232 = vunpack.c.l.b16 %v579
        %v1233 = vunpack.c.l.b16 %v580
        %v1234 = vunpack.c.h.b16 %v580
        %v1235 = vunpack.c.l.b16 %v581
        %v1236 = vunpack.c.h.b16 %v581
        %v1237 = vunpack.c.l.b16 %v582
        %v1238 = vunpack.c.l.b16 %v583
        %v1239 = vunpack.c.h.b16 %v583
        %v1240 = vunpack.c.l.b16 %v584
        %v1241 = vunpack.c.h.b16 %v584
        %v1242 = vunpack.c.l.b16 %v585
        %v1243 = vunpack.c.l.b16 %v586
        %v1244 = vunpack.c.h.b16 %v586
        %v1245 = vunpack.c.l.b16 %v587
        %v1246 = vunpack.c.h.b16 %v587
        %v1247 = vunpack.c.l.b16 %v588
        %v1248 = vunpack.c.l.b16 %v589
        %v1249 = vunpack.c.h.b16 %v589
        %v1250 = vunpack.c.l.b16 %v590
        %v1251 = vunpack.c.h.b16 %v590
        %v1252 = vunpack.c.l.b16 %v591
        %v1253 = vunpack.c.l.b16 %v592
        %v1254 = vunpack.c.h.b16 %v592
        %v1255 = vunpack.c.l.b16 %v593
        %v1256 = vunpack.c.h.b16 %v593
        %v1257 = vunpack.c.l.b16 %v594
        %v1258 = vunpack.c.l.b16 %v595
        %v1259 = vunpack.c.h.b16 %v595
        %v1260 = vunpack.c.l.b16 %v596
        %v1261 = vunpack.c.h.b16 %v596
        %v1262 = vunpack.c.l.b16 %v597
        %v1263 = vunpack.c.l.b16 %v598
        %v1264 = vunpack.c.h.b16 %v598
        %v1265 = vunpack.c.l.b16 %v599
        %v1266 = vunpack.c.h.b16 %v599
        %v1267 = vunpack.c.l.b16 %v600
        %v1268 = vunpack.c.l.b16 %v601
        %v1269 = vunpack.c.h.b16 %v601
        %v1270 = vunpack.c.l.b16 %v602
        %v1271 = vunpack.c.h.b16 %v602
        %v1272 = vunpack.c.l.b16 %v603
        %v1273 = vunpack.c.l.b16 %v604
        %v1274 = vunpack.c.h.b16 %v604
        %v1275 = vunpack.c.l.b16 %v605
        %v1276 = vunpack.c.h.b16 %v605
        %v1277 = vunpack.c.l.b16 %v606
        %v1278 = vunpack.c.l.b16 %v607
        %v1279 = vunpack.c.h.b16 %v607
        %v1280 = vunpack.c.l.b16 %v608
        %v1281 = vunpack.c.h.b16 %v608
        %v1282 = vunpack.c.l.b16 %v609
        %v1283 = vunpack.c.l.b16 %v610
        %v1284 = vunpack.c.h.b16 %v610
        %v1285 = vunpack.c.l.b16 %v611
        %v1286 = vunpack.c.h.b16 %v611
        %v1287 = vunpack.c.l.b16 %v612
        %v1288 = vunpack.c.l.b16 %v613
        %v1289 = vunpack.c.h.b16 %v613
        %v1290 = vunpack.c.l.b16 %v614
        %v1291 = vunpack.c.h.b16 %v614
        %v1292 = vunpack.c.l.b16 %v615
        %v1293 = vunpack.c.l.b16 %v616
        %v1294 = vunpack.c.h.b16 %v616
        %v1295 = vunpack.c.l.b16 %v617
        %v1296 = vunpack.c.h.b16 %v617
        %v1297 = vunpack.c.l.b16 %v618
        %v1298 = vunpack.c.l.b16 %v619
        %v1299 = vunpack.c.h.b16 %v619
        %v1300 = vunpack.c.l.b16 %v620
        %v1301 = vunpack.c.h.b16 %v620
        %v1302 = vunpack.c.l.b16 %v621
        %v1303 = vunpack.c.l.b16 %v622
        %v1304 = vunpack.c.h.b16 %v622
        %v1305 = vunpack.c.l.b16 %v623
        %v1306 = vunpack.c.h.b16 %v623
        %v1307 = vunpack.c.l.b16 %v624
        %v1308 = vunpack.c.l.b16 %v625
        %v1309 = vunpack.c.h.b16 %v625
        %v1310 = vunpack.c.l.b16 %v626
        %v1311 = vunpack.c.h.b16 %v626
        %v1312 = vunpack.c.l.b16 %v627
        %v1313 = vunpack.c.l.b16 %v628
        %v1314 = vunpack.c.h.b16 %v628
        %v1315 = vunpack.c.l.b16 %v629
        %v1316 = vunpack.c.h.b16 %v629
        %v1317 = vunpack.c.l.b16 %v630
        %v1318 = vunpack.c.l.b16 %v631
        %v1319 = vunpack.c.h.b16 %v631
        %v1320 = vunpack.c.l.b16 %v632
        %v1321 = vunpack.c.h.b16 %v632
        %v1322 = vunpack.c.l.b16 %v633
        %v1323 = vunpack.c.l.b16 %v634
        %v1324 = vunpack.c.h.b16 %v634
        %v1325 = vunpack.c.l.b16 %v635
        %v1326 = vunpack.c.h.b16 %v635
        %v1327 = vunpack.c.l.b16 %v636
        %v1328 = vunpack.c.l.b16 %v637
        %v1329 = vunpack.c.h.b16 %v637
        %v1330 = vunpack.c.l.b16 %v638
        %v1331 = vunpack.c.h.b16 %v638
        %v1332 = vunpack.c.l.b16 %v639
        %v1333 = vunpack.c.l.b16 %v640
        %v1334 = vunpack.c.h.b16 %v640
        %v1335 = vunpack.c.l.b16 %v641
        %v1336 = vunpack.c.h.b16 %v641
        %v1337 = vunpack.c.l.b16 %v642
        %v1338 = vunpack.c.l.b16 %v643
        %v1339 = vunpack.c.h.b16 %v643
        %v1340 = vunpack.c.l.b16 %v644
        %v1341 = vunpack.c.h.b16 %v644
        %v1342 = vunpack.c.l.b16 %v645
        %v1343 = vunpack.c.l.b16 %v646
        %v1344 = vunpack.c.h.b16 %v646
        %v1345 = vunpack.c.l.b16 %v647
        %v1346 = vunpack.c.h.b16 %v647
        %v1347 = vunpack.c.l.b16 %v648
        %v1348 = vunpack.c.l.b16 %v649
        %v1349 = vunpack.c.h.b16 %v649
        %v1350 = vunpack.c.l.b16 %v650
        %v1351 = vunpack.c.h.b16 %v650
        %v1352 = vunpack.c.l.b16 %v651
        %v1353 = vunpack.c.l.b16 %v652
        %v1354 = vunpack.c.h.b16 %v652
        %v1355 = vunpack.c.l.b16 %v653
        %v1356 = vunpack.c.h.b16 %v653
        %v1357 = vunpack.c.l.b16 %v654
        %v1358 = vunpack.c.l.b16 %v655
        %v1359 = vunpack.c.h.b16 %v655
        %v1360 = vunpack.c.l.b16 %v656
        %v1361 = vunpack.c.h.b16 %v656
        %v1362 = vunpack.c.l.b16 %v657
        %v1363 = vunpack.c.l.b16 %v658
        %v1364 = vunpack.c.h.b16 %v658
        %v1365 = vunpack.c.l.b16 %v659
        %v1366 = vunpack.c.h.b16 %v659
        %v1367 = vunpack.c.l.b16 %v660
        %v1368 = vunpack.c.l.b16 %v661
        %v1369 = vunpack.c.h.b16 %v661
        %v1370 = vunpack.c.l.b16 %v662
        %v1371 = vunpack.c.h.b16 %v662
        %v1372 = vunpack.c.l.b16 %v663
        %v1373 = vunpack.c.l.b16 %v664
        %v1374 = vunpack.c.h.b16 %v664
        %v1375 = vunpack.c.l.b16 %v665
        %v1376 = vunpack.c.h.b16 %v665
        %v1377 = vunpack.c.l.b16 %v666
        %v1378 = vunpack.c.l.b16 %v667
        %v1379 = vunpack.c.h.b16 %v667
        %v1380 = vunpack.c.l.b16 %v668
        %v1381 = vunpack.c.h.b16 %v668
        %v1382 = vunpack.c.l.b16 %v669
        %v1383 = vunpack.c.l.b16 %v670
        %v1384 = vunpack.c.h.b16 %v670
        %v1385 = vunpack.c.l.b16 %v671
        %v1386 = vunpack.c.h.b16 %v671
        %v1387 = vunpack.c.l.b16 %v672
        %v1388 = vunpack.c.l.b16 %v673
        %v1389 = vunpack.c.h.b16 %v673
        %v1390 = vunpack.c.l.b16 %v674
        %v1391 = vunpack.c.h.b16 %v674
        %v1392 = vunpack.c.l.b16 %v675
        %v1393 = vunpack.c.l.b16 %v676
        %v1394 = vunpack.c.h.b16 %v676
        %v1395 = vunpack.c.l.b16 %v677
        %v1396 = vunpack.c.h.b16 %v677
        %v1397 = vunpack.c.l.b16 %v678
        %v1398 = vunpack.c.l.b16 %v679
        %v1399 = vunpack.c.h.b16 %v679
        %v1400 = vunpack.c.l.b16 %v680
        %v1401 = vunpack.c.h.b16 %v680
        %v1402 = vunpack.c.l.b16 %v681
        %v1403 = vunpack.c.l.b16 %v682
        %v1404 = vunpack.c.h.b16 %v682
        %v1405 = vunpack.c.l.b16 %v683
        %v1406 = vunpack.c.h.b16 %v683
        %v1407 = vunpack.c.l.b16 %v684
        %v1408 = vunpack.c.l.b16 %v685
        %v1409 = vunpack.c.h.b16 %v685
        %v1410 = vunpack.c.l.b16 %v686
        %v1411 = vunpack.c.h.b16 %v686
        %v1412 = vunpack.c.l.b16 %v687
        %v1413 = vunpack.c.l.b16 %v688
        %v1414 = vunpack.c.h.b16 %v688
        %v1415 = vunpack.c.l.b16 %v689
        %v1416 = vunpack.c.h.b16 %v689
        %v1417 = vunpack.c.l.b16 %v690
        %v1418 = vunpack.c.l.b16 %v691
        %v1419 = vunpack.c.h.b16 %v691
        %v1420 = vunpack.c.l.b16 %v692
        %v1421 = vunpack.c.h.b16 %v692
        %v1422 = vunpack.c.l.b16 %v693
        %v1423 = vunpack.c.l.b16 %v694
        %v1424 = vunpack.c.h.b16 %v694
        %v1425 = vunpack.c.l.b16 %v695
        %v1426 = vunpack.c.h.b16 %v695
        %v1427 = vunpack.c.l.b16 %v696
        %v1428 = vunpack.c.l.b16 %v697
        %v1429 = vunpack.c.h.b16 %v697
        %v1430 = vunpack.c.l.b16 %v698
        %v1431 = vunpack.c.h.b16 %v698
        %v1432 = vunpack.c.l.b16 %v699
        %v1433 = vunpack.c.l.b16 %v700
        %v1434 = vunpack.c.h.b16 %v700
        %v1435 = vunpack.c.l.b16 %v701
        %v1436 = vunpack.c.h.b16 %v701
        %v1437 = vunpack.c.l.b16 %v702
        %v1438 = vunpack.c.l.b16 %v703
        %v1439 = vunpack.c.h.b16 %v703
        %v1440 = vunpack.c.l.b16 %v704
        %v1441 = vunpack.c.h.b16 %v704
        %v1442 = vunpack.c.l.b16 %v705
        %v1443 = vunpack.c.l.b16 %v706
        %v1444 = vunpack.c.h.b16 %v706
        %v1445 = vunpack.c.l.b16 %v707
        %v1446 = vunpack.c.h.b16 %v707
        %v1447 = vunpack.c.l.b16 %v708
        %v1448 = vunpack.c.l.b16 %v709
        %v1449 = vunpack.c.h.b16 %v709
        %v1450 = vunpack.c.l.b16 %v710
        %v1451 = vunpack.c.h.b16 %v710
        %v1452 = vunpack.c.l.b16 %v711
        %v1453 = vunpack.c.l.b16 %v712
        %v1454 = vunpack.c.h.b16 %v712
        %v1455 = vunpack.c.l.b16 %v713
        %v1456 = vunpack.c.h.b16 %v713
        %v1457 = vunpack.c.l.b16 %v714
        %v1458 = vunpack.c.l.b16 %v715
        %v1459 = vunpack.c.h.b16 %v715
        %v1460 = vunpack.c.l.b16 %v716
        %v1461 = vunpack.c.h.b16 %v716
        %v1462 = vunpack.c.l.b16 %v717
        %v1463 = vunpack.c.l.b16 %v718
        %v1464 = vunpack.c.h.b16 %v718
        %v1465 = vunpack.c.l.b16 %v719
        %v1466 = vunpack.c.h.b16 %v719
        %v1467 = vunpack.c.l.b16 %v720
        %v1468 = vunpack.c.l.b16 %v721
        %v1469 = vunpack.c.h.b16 %v721
        %v1470 = vunpack.c.l.b16 %v722
        %v1471 = vunpack.c.h.b16 %v722
        %v1472 = vunpack.c.l.b16 %v723
        %v1473 = vunpack.c.l.b16 %v724
        %v1474 = vunpack.c.h.b16 %v724
        %v1475 = vunpack.c.l.b16 %v725
        %v1476 = vunpack.c.h.b16 %v725
        %v1477 = vunpack.c.l.b16 %v726
        %v1478 = vunpack.c.l.b16 %v727
        %v1479 = vunpack.c.h.b16 %v727
        %v1480 = vunpack.c.l.b16 %v728
        %v1481 = vunpack.c.h.b16 %v728
        %v1482 = vunpack.c.l.b16 %v729
        %v1483 = vunpack.c.l.b16 %v730
        %v1484 = vunpack.c.h.b16 %v730
        %v1485 = vunpack.c.l.b16 %v731
        %v1486 = vunpack.c.h.b16 %v731
        %v1487 = vunpack.c.l.b16 %v732
        %v1488 = vunpack.c.l.b16 %v733
        %v1489 = vunpack.c.h.b16 %v733
        %v1490 = vunpack.c.l.b16 %v734
        %v1491 = vunpack.c.h.b16 %v734
        %v1492 = vunpack.c.l.b16 %v735
        %v1493 = vunpack.c.l.b16 %v736
        %v1494 = vunpack.c.h.b16 %v736
        %v1495 = vunpack.c.l.b16 %v737
        %v1496 = vunpack.c.h.b16 %v737
        %v1497 = vunpack.c.l.b16 %v738
        %v1498 = vunpack.c.l.b16 %v739
        %v1499 = vunpack.c.h.b16 %v739
        %v1500 = vunpack.c.l.b16 %v740
        %v1501 = vunpack.c.h.b16 %v740
        %v1502 = vunpack.c.l.b16 %v741
        %v1503 = vunpack.c.l.b16 %v742
        %v1504 = vunpack.c.h.b16 %v742
        %v1505 = vunpack.c.l.b16 %v743
        %v1506 = vunpack.c.h.b16 %v743
        %v1507 = vunpack.c.l.b16 %v744
        %v1508 = vunpack.c.l.b16 %v745
        %v1509 = vunpack.c.h.b16 %v745
        %v1510 = vunpack.c.l.b16 %v746
        %v1511 = vunpack.c.h.b16 %v746
        %v1512 = vunpack.c.l.b16 %v747
        %v1513 = vunpack.c.l.b16 %v748
        %v1514 = vunpack.c.h.b16 %v748
        %v1515 = vunpack.c.l.b16 %v749
        %v1516 = vunpack.c.h.b16 %v749
        %v1517 = vunpack.c.l.b16 %v750
        %v1518 = vunpack.c.l.b16 %v751
        %v1519 = vunpack.c.h.b16 %v751
        %v1520 = vunpack.c.l.b16 %v752
        %v1521 = vunpack.c.h.b16 %v752
        %v1522 = vunpack.c.l.b16 %v753
        %v1523 = vunpack.c.l.b16 %v754
        %v1524 = vunpack.c.h.b16 %v754
        %v1525 = vunpack.c.l.b16 %v755
        %v1526 = vunpack.c.h.b16 %v755
        %v1527 = vunpack.c.l.b16 %v756
        %v1528 = vunpack.c.l.b16 %v757
        %v1529 = vunpack.c.h.b16 %v757
        %v1530 = vunpack.c.l.b16 %v758
        %v1531 = vunpack.c.h.b16 %v758
        %v1532 = vunpack.c.l.b16 %v759
        %v1533 = vunpack.c.l.b16 %v760
        %v1534 = vunpack.c.h.b16 %v760
        %v1535 = vunpack.c.l.b16 %v761
        %v1536 = vunpack.c.h.b16 %v761
        %v1537 = vunpack.c.l.b16 %v762
        %v1538 = vunpack.c.l.b16 %v763
        %v1539 = vunpack.c.h.b16 %v763
        %v1540 = vunpack.c.l.b16 %v764
        %v1541 = vunpack.c.h.b16 %v764
        %v1542 = vunpack.c.l.b16 %v765
        %v1543 = vunpack.c.l.b16 %v766
        %v1544 = vunpack.c.h.b16 %v766
        %v1545 = vunpack.c.l.b16 %v767
        %v1546 = vunpack.c.h.b16 %v767
        %v1547 = vunpack.c.l.b16 %v768
        %v1548 = vunpack.c.l.b16 %v769
        %v1549 = vunpack.c.h.b16 %v769
        %v1550 = vunpack.c.l.b16 %v770
        %v1551 = vunpack.c.h.b16 %v770
        %v1552 = vunpack.c.l.b16 %v771
        %v1553 = vunpack.c.l.b16 %v772
        %v1554 = vunpack.c.h.b16 %v772
        %v1555 = vunpack.c.l.b16 %v773
        %v1556 = vunpack.c.h.b16 %v773
        %v1557 = vunpack.c.l.b16 %v774
        %v1558 = vunpack.c.l.b16 %v775
        %v1559 = vunpack.c.h.b16 %v775
        %v1560 = vunpack.c.l.b16 %v776
        %v1561 = vunpack.c.h.b16 %v776
        %v1562 = vunpack.c.l.b16 %v777
        %v1563 = vunpack.c.l.b16 %v778
        %v1564 = vunpack.c.h.b16 %v778
        %v1565 = vunpack.c.l.b16 %v779
        %v1566 = vunpack.c.h.b16 %v779
        %v1567 = vunpack.c.l.b16 %v780
        %v1568 = vunpack.c.l.b16 %v781
        %v1569 = vunpack.c.h.b16 %v781
        %v1570 = vunpack.c.l.b16 %v782
        %v1571 = vunpack.c.h.b16 %v782
        %v1572 = vunpack.c.l.b16 %v783
        %v1573 = vunpack.c.l.b16 %v784
        %v1574 = vunpack.c.h.b16 %v784
        %v1575 = vunpack.c.l.b16 %v785
        %v1576 = vunpack.c.h.b16 %v785
        %v1577 = vunpack.c.l.b16 %v786
        %v1578 = vunpack.c.l.b16 %v787
        %v1579 = vunpack.c.h.b16 %v787
        %v1580 = vunpack.c.l.b16 %v788
        %v1581 = vunpack.c.h.b16 %v788
        %v1582 = vunpack.c.l.b16 %v789
        %v1583 = vunpack.c.l.b16 %v790
        %v1584 = vunpack.c.h.b16 %v790
        %v1585 = vunpack.c.l.b16 %v791
        %v1586 = vunpack.c.h.b16 %v791
        %v1587 = vunpack.c.l.b16 %v792
        %v1588 = vunpack.c.l.b16 %v793
        %v1589 = vunpack.c.h.b16 %v793
        %v1590 = vunpack.c.l.b16 %v794
        %v1591 = vunpack.c.h.b16 %v794
        %v1592 = vunpack.c.l.b16 %v795
        %v1593 = vunpack.c.l.b16 %v796
        %v1594 = vunpack.c.h.b16 %v796
        %v1595 = vunpack.c.l.b16 %v797
        %v1596 = vunpack.c.h.b16 %v797
        %v1597 = vunpack.c.l.b16 %v798
        %v1598 = vunpack.c.l.b16 %v799
        %v1599 = vunpack.c.h.b16 %v799
        %v1600 = vunpack.c.l.b16 %v800
        %v1601 = vunpack.c.h.b16 %v800
        %v1602 = vunpack.c.l.b16 %v801
        %v1603 = vunpack.c.l.b16 %v802
        %v1604 = vunpack.c.h.b16 %v802
        %v1605 = vunpack.c.l.b16 %v803
        %v1606 = vunpack.c.h.b16 %v803
        %v1607 = vunpack.c.l.b16 %v804
        %v1608 = vunpack.c.l.b16 %v805
        %v1609 = vunpack.c.h.b16 %v805
        %v1610 = vunpack.c.l.b16 %v806
        %v1611 = vunpack.c.h.b16 %v806
        %v1612 = vunpack.c.l.b16 %v807
        %v1613 = vunpack.c.l.b16 %v808
        %v1614 = vunpack.c.h.b16 %v808
        %v1615 = vunpack.c.l.b16 %v809
        %v1616 = vunpack.c.h.b16 %v809
        %v1617 = vunpack.c.l.b16 %v810
        %v1618 = vunpack.c.l.b16 %v811
        %v1619 = vunpack.c.h.b16 %v811
        %v1620 = vunpack.c.l.b16 %v812
        %v1621 = vunpack.c.h.b16 %v812
        %v1622 = vunpack.c.l.b16 %v813
        %v1623 = vunpack.c.l.b16 %v814
        %v1624 = vunpack.c.h.b16 %v814
        %v1625 = vunpack.c.l.b16 %v815
        %v1626 = vunpack.c.h.b16 %v815
        %v1627 = vunpack.c.l.b16 %v816
        %v1628 = vpack.c.b16 %v1143, %v1138
        %v1629 = vpack.c.b16 %v1144, %v1139
        %v1630 = vpack.c.b16 %v1145, %v1140
        %v1631 = vpack.c.b16 %v1146, %v1141
        %v1632 = vpack.c.b16 %v1147, %v1142
        %v1633 = vpack.c.b16 %v1153, %v1148
        %v1634 = vpack.c.b16 %v1154, %v1149
        %v1635 = vpack.c.b16 %v1155, %v1150
        %v1636 = vpack.c.b16 %v1156, %v1151
        %v1637 = vpack.c.b16 %v1157, %v1152
        %v1638 = vpack.c.b16 %v1163, %v1158
        %v1639 = vpack.c.b16 %v1164, %v1159
        %v1640 = vpack.c.b16 %v1165, %v1160
        %v1641 = vpack.c.b16 %v1166, %v1161
        %v1642 = vpack.c.b16 %v1167, %v1162
        %v1643 = vpack.c.b16 %v1173, %v1168
        %v1644 = vpack.c.b16 %v1174, %v1169
        %v1645 = vpack.c.b16 %v1175, %v1170
        %v1646 = vpack.c.b16 %v1176, %v1171
        %v1647 = vpack.c.b16 %v1177, %v1172
        %v1648 = vpack.c.b16 %v1183, %v1178
        %v1649 = vpack.c.b16 %v1184, %v1179
        %v1650 = vpack.c.b16 %v1185, %v1180
        %v1651 = vpack.c.b16 %v1186, %v1181
        %v1652 = vpack.c.b16 %v1187, %v1182
        %v1653 = vpack.c.b16 %v1193, %v1188
        %v1654 = vpack.c.b16 %v1194, %v1189
        %v1655 = vpack.c.b16 %v1195, %v1190
        %v1656 = vpack.c.b16 %v1196, %v1191
        %v1657 = vpack.c.b16 %v1197, %v1192
        %v1658 = vpack.c.b16 %v1203, %v1198
        %v1659 = vpack.c.b16 %v1204, %v1199
        %v1660 = vpack.c.b16 %v1205, %v1200
        %v1661 = vpack.c.b16 %v1206, %v1201
        %v1662 = vpack.c.b16 %v1207, %v1202
        %v1663 = vpack.c.b16 %v1213, %v1208
        %v1664 = vpack.c.b16 %v1214, %v1209
        %v1665 = vpack.c.b16 %v1215, %v1210
        %v1666 = vpack.c.b16 %v1216, %v1211
        %v1667 = vpack.c.b16 %v1217, %v1212
        %v1668 = vpack.c.b16 %v1223, %v1218
        %v1669 = vpack.c.b16 %v1224, %v1219
        %v1670 = vpack.c.b16 %v1225, %v1220
        %v1671 = vpack.c.b16 %v1226, %v1221
        %v1672 = vpack.c.b16 %v1227, %v1222
        %v1673 = vpack.c.b16 %v1233, %v1228
        %v1674 = vpack.c.b16 %v1234, %v1229
        %v1675 = vpack.c.b16 %v1235, %v1230
        %v1676 = vpack.c.b16 %v1236, %v1231
        %v1677 = vpack.c.b16 %v1237, %v1232
        %v1678 = vpack.c.b16 %v1243, %v1238
        %v1679 = vpack.c.b16 %v1244, %v1239
        %v1680 = vpack.c.b16 %v1245, %v1240
        %v1681 = vpack.c.b16 %v1246, %v1241
        %v1682 = vpack.c.b16 %v1247, %v1242
        %v1683 = vpack.c.b16 %v1253, %v1248
        %v1684 = vpack.c.b16 %v1254, %v1249
        %v1685 = vpack.c.b16 %v1255, %v1250
        %v1686 = vpack.c.b16 %v1256, %v1251
        %v1687 = vpack.c.b16 %v1257, %v1252
        %v1688 = vpack.c.b16 %v1263, %v1258
        %v1689 = vpack.c.b16 %v1264, %v1259
        %v1690 = vpack.c.b16 %v1265, %v1260
        %v1691 = vpack.c.b16 %v1266, %v1261
        %v1692 = vpack.c.b16 %v1267, %v1262
        %v1693 = vpack.c.b16 %v1273, %v1268
        %v1694 = vpack.c.b16 %v1274, %v1269
        %v1695 = vpack.c.b16 %v1275, %v1270
        %v1696 = vpack.c.b16 %v1276, %v1271
        %v1697 = vpack.c.b16 %v1277, %v1272
        %v1698 = vpack.c.b16 %v1283, %v1278
        %v1699 = vpack.c.b16 %v1284, %v1279
        %v1700 = vpack.c.b16 %v1285, %v1280
        %v1701 = vpack.c.b16 %v1286, %v1281
        %v1702 = vpack.c.b16 %v1287, %v1282
        %v1703 = vpack.c.b16 %v1293, %v1288
        %v1704 = vpack.c.b16 %v1294, %v1289
        %v1705 = vpack.c.b16 %v1295, %v1290
        %v1706 = vpack.c.b16 %v1296, %v1291
        %v1707 = vpack.c.b16 %v1297, %v1292
        %v1708 = vpack.c.b16 %v1303, %v1298
        %v1709 = vpack.c.b16 %v1304, %v1299
        %v1710 = vpack.c.b16 %v1305, %v1300
        %v1711 = vpack.c.b16 %v1306, %v1301
        %v1712 = vpack.c.b16 %v1307, %v1302
        %v1713 = vpack.c.b16 %v1313, %v1308
        %v1714 = vpack.c.b16 %v1314, %v1309
        %v1715 = vpack.c.b16 %v1315, %v1310
        %v1716 = vpack.c.b16 %v1316, %v1311
        %v1717 = vpack.c.b16 %v1317, %v1312
        %v1718 = vpack.c.b16 %v1323, %v1318
        %v1719 = vpack.c.b16 %v1324, %v1319
        %v1720 = vpack.c.b16 %v1325, %v1320
        %v1721 = vpack.c.b16 %v1326, %v1321
        %v1722 = vpack.c.b16 %v1327, %v1322
        %v1723 = vpack.c.b16 %v1333, %v1328
        %v1724 = vpack.c.b16 %v1334, %v1329
        %v1725 = vpack.c.b16 %v1335, %v1330
        %v1726 = vpack.c.b16 %v1336, %v1331
        %v1727 = vpack.c.b16 %v1337, %v1332
        %v1728 = vpack.c.b16 %v1343, %v1338
        %v1729 = vpack.c.b16 %v1344, %v1339
        %v1730 = vpack.c.b16 %v1345, %v1340
        %v1731 = vpack.c.b16 %v1346, %v1341
        %v1732 = vpack.c.b16 %v1347, %v1342
        %v1733 = vpack.c.b16 %v1353, %v1348
        %v1734 = vpack.c.b16 %v1354, %v1349
        %v1735 = vpack.c.b16 %v1355, %v1350
        %v1736 = vpack.c.b16 %v1356, %v1351
        %v1737 = vpack.c.b16 %v1357, %v1352
        %v1738 = vpack.c.b16 %v1363, %v1358
        %v1739 = vpack.c.b16 %v1364, %v1359
        %v1740 = vpack.c.b16 %v1365, %v1360
        %v1741 = vpack.c.b16 %v1366, %v1361
        %v1742 = vpack.c.b16 %v1367, %v1362
        %v1743 = vpack.c.b16 %v1373, %v1368
        %v1744 = vpack.c.b16 %v1374, %v1369
        %v1745 = vpack.c.b16 %v1375, %v1370
        %v1746 = vpack.c.b16 %v1376, %v1371
        %v1747 = vpack.c.b16 %v1377, %v1372
        %v1748 = vpack.c.b16 %v1383, %v1378
        %v1749 = vpack.c.b16 %v1384, %v1379
        %v1750 = vpack.c.b16 %v1385, %v1380
        %v1751 = vpack.c.b16 %v1386, %v1381
        %v1752 = vpack.c.b16 %v1387, %v1382
        %v1753 = vpack.c.b16 %v1393, %v1388
        %v1754 = vpack.c.b16 %v1394, %v1389
        %v1755 = vpack.c.b16 %v1395, %v1390
        %v1756 = vpack.c.b16 %v1396, %v1391
        %v1757 = vpack.c.b16 %v1397, %v1392
        %v1758 = vpack.c.b16 %v1403, %v1398
        %v1759 = vpack.c.b16 %v1404, %v1399
        %v1760 = vpack.c.b16 %v1405, %v1400
        %v1761 = vpack.c.b16 %v1406, %v1401
        %v1762 = vpack.c.b16 %v1407, %v1402
        %v1763 = vpack.c.b16 %v1413, %v1408
        %v1764 = vpack.c.b16 %v1414, %v1409
        %v1765 = vpack.c.b16 %v1415, %v1410
        %v1766 = vpack.c.b16 %v1416, %v1411
        %v1767 = vpack.c.b16 %v1417, %v1412
        %v1768 = vpack.c.b16 %v1423, %v1418
        %v1769 = vpack.c.b16 %v1424, %v1419
        %v1770 = vpack.c.b16 %v1425, %v1420
        %v1771 = vpack.c.b16 %v1426, %v1421
        %v1772 = vpack.c.b16 %v1427, %v1422
        %v1773 = vpack.c.b16 %v1433, %v1428
        %v1774 = vpack.c.b16 %v1434, %v1429
        %v1775 = vpack.c.b16 %v1435, %v1430
        %v1776 = vpack.c.b16 %v1436, %v1431
        %v1777 = vpack.c.b16 %v1437, %v1432
        %v1778 = vpack.c.b16 %v1443, %v1438
        %v1779 = vpack.c.b16 %v1444, %v1439
        %v1780 = vpack.c.b16 %v1445, %v1440
        %v1781 = vpack.c.b16 %v1446, %v1441
        %v1782 = vpack.c.b16 %v1447, %v1442
        %v1783 = vpack.c.b16 %v1453, %v1448
        %v1784 = vpack.c.b16 %v1454, %v1449
        %v1785 = vpack.c.b16 %v1455, %v1450
        %v1786 = vpack.c.b16 %v1456, %v1451
        %v1787 = vpack.c.b16 %v1457, %v1452
        %v1788 = vpack.c.b16 %v1463, %v1458
        %v1789 = vpack.c.b16 %v1464, %v1459
        %v1790 = vpack.c.b16 %v1465, %v1460
        %v1791 = vpack.c.b16 %v1466, %v1461
        %v1792 = vpack.c.b16 %v1467, %v1462
        %v1793 = vpack.c.b16 %v1473, %v1468
        %v1794 = vpack.c.b16 %v1474, %v1469
        %v1795 = vpack.c.b16 %v1475, %v1470
        %v1796 = vpack.c.b16 %v1476, %v1471
        %v1797 = vpack.c.b16 %v1477, %v1472
        %v1798 = vpack.c.b16 %v1483, %v1478
        %v1799 = vpack.c.b16 %v1484, %v1479
        %v1800 = vpack.c.b16 %v1485, %v1480
        %v1801 = vpack.c.b16 %v1486, %v1481
        %v1802 = vpack.c.b16 %v1487, %v1482
        %v1803 = vpack.c.b16 %v1493, %v1488
        %v1804 = vpack.c.b16 %v1494, %v1489
        %v1805 = vpack.c.b16 %v1495, %v1490
        %v1806 = vpack.c.b16 %v1496, %v1491
        %v1807 = vpack.c.b16 %v1497, %v1492
        %v1808 = vpack.c.b16 %v1503, %v1498
        %v1809 = vpack.c.b16 %v1504, %v1499
        %v1810 = vpack.c.b16 %v1505, %v1500
        %v1811 = vpack.c.b16 %v1506, %v1501
        %v1812 = vpack.c.b16 %v1507, %v1502
        %v1813 = vpack.c.b16 %v1513, %v1508
        %v1814 = vpack.c.b16 %v1514, %v1509
        %v1815 = vpack.c.b16 %v1515, %v1510
        %v1816 = vpack.c.b16 %v1516, %v1511
        %v1817 = vpack.c.b16 %v1517, %v1512
        %v1818 = vpack.c.b16 %v1523, %v1518
        %v1819 = vpack.c.b16 %v1524, %v1519
        %v1820 = vpack.c.b16 %v1525, %v1520
        %v1821 = vpack.c.b16 %v1526, %v1521
        %v1822 = vpack.c.b16 %v1527, %v1522
        %v1823 = vpack.c.b16 %v1533, %v1528
        %v1824 = vpack.c.b16 %v1534, %v1529
        %v1825 = vpack.c.b16 %v1535, %v1530
        %v1826 = vpack.c.b16 %v1536, %v1531
        %v1827 = vpack.c.b16 %v1537, %v1532
        %v1828 = vpack.c.b16 %v1543, %v1538
        %v1829 = vpack.c.b16 %v1544, %v1539
        %v1830 = vpack.c.b16 %v1545, %v1540
        %v1831 = vpack.c.b16 %v1546, %v1541
        %v1832 = vpack.c.b16 %v1547, %v1542
        %v1833 = vpack.c.b16 %v1553, %v1548
        %v1834 = vpack.c.b16 %v1554, %v1549
        %v1835 = vpack.c.b16 %v1555, %v1550
        %v1836 = vpack.c.b16 %v1556, %v1551
        %v1837 = vpack.c.b16 %v1557, %v1552
        %v1838 = vpack.c.b16 %v1563, %v1558
        %v1839 = vpack.c.b16 %v1564, %v1559
        %v1840 = vpack.c.b16 %v1565, %v1560
        %v1841 = vpack.c.b16 %v1566, %v1561
        %v1842 = vpack.c.b16 %v1567, %v1562
        %v1843 = vpack.c.b16 %v1573, %v1568
        %v1844 = vpack.c.b16 %v1574, %v1569
        %v1845 = vpack.c.b16 %v1575, %v1570
        %v1846 = vpack.c.b16 %v1576, %v1571
        %v1847 = vpack.c.b16 %v1577, %v1572
        %v1848 = vpack.c.b16 %v1583, %v1578
        %v1849 = vpack.c.b16 %v1584, %v1579
        %v1850 = vpack.c.b16 %v1585, %v1580
        %v1851 = vpack.c.b16 %v1586, %v1581
        %v1852 = vpack.c.b16 %v1587, %v1582
        %v1853 = vpack.c.b16 %v1593, %v1588
        %v1854 = vpack.c.b16 %v1594, %v1589
        %v1855 = vpack.c.b16 %v1595, %v1590
        %v1856 = vpack.c.b16 %v1596, %v1591
        %v1857 = vpack.c.b16 %v1597, %v1592
        %v1858 = vpack.c.b16 %v1603, %v1598
        %v1859 = vpack.c.b16 %v1604, %v1599
        %v1860 = vpack.c.b16 %v1605, %v1600
        %v1861 = vpack.c.b16 %v1606, %v1601
        %v1862 = vpack.c.b16 %v1607, %v1602
        %v1863 = vpack.c.b16 %v1613, %v1608
        %v1864 = vpack.c.b16 %v1614, %v1609
        %v1865 = vpack.c.b16 %v1615, %v1610
        %v1866 = vpack.c.b16 %v1616, %v1611
        %v1867 = vpack.c.b16 %v1617, %v1612
        %v1868 = vpack.c.b16 %v1623, %v1618
        %v1869 = vpack.c.b16 %v1624, %v1619
        %v1870 = vpack.c.b16 %v1625, %v1620
        %v1871 = vpack.c.b16 %v1626, %v1621
        %v1872 = vpack.c.b16 %v1627, %v1622
        %vm2118 = vcmask 130048
        %v2120 = vsel %vm2118, %v473, 0
        %v2123 = vsel %vm2118, %v480, 0
        %v2126 = vsel %vm2118, %v487, 0
        %v2129 = vsel %vm2118, %v494, 0
        %v2132 = vsel %vm2118, %v501, 0
        %v2135 = vsel %vm2118, %v508, 0
        %v2138 = vsel %vm2118, %v515, 0
        %v2141 = vsel %vm2118, %v522, 0
        %2143 = vmatprep.subr.bf16.mxu0 %v1629
        %2144 = vmatpush1.bf16.msra.mxu0 %v1628
        %2145 = vmatprep.subr.bf16.mxu0 %v1634
        %2146 = vmatpush1.bf16.msra.mxu0 %v1633
        %2147 = vmatprep.subr.bf16.mxu0 %v1639
        %2148 = vmatpush1.bf16.msra.mxu0 %v1638
        %2149 = vmatprep.subr.bf16.mxu0 %v1644
        %2150 = vmatpush1.bf16.msra.mxu0 %v1643
        %2151 = vmatprep.subr.bf16.mxu0 %v1649
        %2152 = vmatpush1.bf16.msra.mxu0 %v1648
        %2153 = vmatprep.subr.bf16.mxu0 %v1654
        %2154 = vmatpush1.bf16.msra.mxu0 %v1653
        %2155 = vmatprep.subr.bf16.mxu0 %v1659
        %2156 = vmatpush1.bf16.msra.mxu0 %v1658
        %2157 = vmatprep.subr.bf16.mxu0 %v1664
        %2158 = vmatpush1.bf16.msra.mxu0 %v1663
        %2159 = vmatprep.subr.bf16.mxu0 %v1669
        %2160 = vmatpush1.bf16.msra.mxu0 %v1668
        %2161 = vmatprep.subr.bf16.mxu0 %v1674
        %2162 = vmatpush1.bf16.msra.mxu0 %v1673
        %2163 = vmatprep.subr.bf16.mxu0 %v1679
        %2164 = vmatpush1.bf16.msra.mxu0 %v1678
        %2165 = vmatprep.subr.bf16.mxu0 %v1684
        %2166 = vmatpush1.bf16.msra.mxu0 %v1683
        %2167 = vmatprep.subr.bf16.mxu0 %v1689
        %2168 = vmatpush1.bf16.msra.mxu0 %v1688
        %2169 = vmatprep.subr.bf16.mxu0 %v1694
        %2170 = vmatpush1.bf16.msra.mxu0 %v1693
        %2171 = vmatprep.subr.bf16.mxu0 %v1699
        %2172 = vmatpush1.bf16.msra.mxu0 %v1698
        %2173 = vmatprep.subr.bf16.mxu0 %v1704
        %2174 = vmatpush1.bf16.msra.mxu0 %v1703
        %2175 = vmatprep.mubr.bf16.mxu0 %v468
        %2176 = vmatmul.mubr.bf16.gmra.mrb[0].mxu0 %v467
        %v2177 = vpop.f32.mrb[0].mxu0
        %v2178 = vadd.f32 %v822, %v2177
        %v2179 = vpop.f32.mrb[0].mxu0
        %v2180 = vadd.f32 %v826, %v2179
        %v2181 = vpop.f32.mrb[0].mxu0
        %v2182 = vadd.f32 %v822, %v2181
        %v2183 = vpop.f32.mrb[0].mxu0
        %v2184 = vadd.f32 %v826, %v2183
        %2185 = vmatprep.mubr.bf16.mxu0 %v475
        %2186 = vmatmul.mubr.bf16.gmra.mrb[0].mxu0 %v474
        %v2187 = vpop.f32.mrb[0].mxu0
        %v2188 = vadd.f32 %v822, %v2187
        %v2189 = vpop.f32.mrb[0].mxu0
        %v2190 = vadd.f32 %v826, %v2189
        %v2191 = vpop.f32.mrb[0].mxu0
        %v2192 = vadd.f32 %v822, %v2191
        %v2193 = vpop.f32.mrb[0].mxu0
        %v2194 = vadd.f32 %v826, %v2193
        %2195 = vmatprep.mubr.bf16.mxu0 %v482
        %2196 = vmatmul.mubr.bf16.gmra.mrb[0].mxu0 %v481
        %v2197 = vpop.f32.mrb[0].mxu0
        %v2198 = vadd.f32 %v822, %v2197
        %v2199 = vpop.f32.mrb[0].mxu0
        %v2200 = vadd.f32 %v826, %v2199
        %v2201 = vpop.f32.mrb[0].mxu0
        %v2202 = vadd.f32 %v822, %v2201
        %v2203 = vpop.f32.mrb[0].mxu0
        %v2204 = vadd.f32 %v826, %v2203
        %2205 = vmatprep.mubr.bf16.mxu0 %v489
        %2206 = vmatmul.mubr.bf16.gmra.mrb[0].mxu0 %v488
        %v2207 = vpop.f32.mrb[0].mxu0
        %v2208 = vadd.f32 %v822, %v2207
        %v2209 = vpop.f32.mrb[0].mxu0
        %v2210 = vadd.f32 %v826, %v2209
        %v2211 = vpop.f32.mrb[0].mxu0
        %v2212 = vadd.f32 %v822, %v2211
        %v2213 = vpop.f32.mrb[0].mxu0
        %v2214 = vadd.f32 %v826, %v2213
        %2215 = vmatprep.mubr.bf16.mxu0 %v496
        %2216 = vmatmul.mubr.bf16.gmra.mrb[0].mxu0 %v495
        %v2217 = vpop.f32.mrb[0].mxu0
        %v2218 = vadd.f32 %v822, %v2217
        %v2219 = vpop.f32.mrb[0].mxu0
        %v2220 = vadd.f32 %v826, %v2219
        %v2221 = vpop.f32.mrb[0].mxu0
        %v2222 = vadd.f32 %v822, %v2221
        %v2223 = vpop.f32.mrb[0].mxu0
        %v2224 = vadd.f32 %v826, %v2223
        %2225 = vmatprep.mubr.bf16.mxu0 %v503
        %2226 = vmatmul.mubr.bf16.gmra.mrb[0].mxu0 %v502
        %v2227 = vpop.f32.mrb[0].mxu0
        %v2228 = vadd.f32 %v822, %v2227
        %v2229 = vpop.f32.mrb[0].mxu0
        %v2230 = vadd.f32 %v826, %v2229
        %v2231 = vpop.f32.mrb[0].mxu0
        %v2232 = vadd.f32 %v822, %v2231
        %v2233 = vpop.f32.mrb[0].mxu0
        %v2234 = vadd.f32 %v826, %v2233
        %2235 = vmatprep.mubr.bf16.mxu0 %v510
        %2236 = vmatmul.mubr.bf16.gmra.mrb[0].mxu0 %v509
        %v2237 = vpop.f32.mrb[0].mxu0
        %v2238 = vadd.f32 %v822, %v2237
        %v2239 = vpop.f32.mrb[0].mxu0
        %v2240 = vadd.f32 %v826, %v2239
        %v2241 = vpop.f32.mrb[0].mxu0
        %v2242 = vadd.f32 %v822, %v2241
        %v2243 = vpop.f32.mrb[0].mxu0
        %v2244 = vadd.f32 %v826, %v2243
        %2245 = vmatprep.mubr.bf16.mxu0 %v517
        %2246 = vmatmul.mubr.bf16.gmra.mrb[0].mxu0 %v516
        %v2247 = vpop.f32.mrb[0].mxu0
        %v2248 = vadd.f32 %v822, %v2247
        %v2249 = vpop.f32.mrb[0].mxu0
        %v2250 = vadd.f32 %v826, %v2249
        %v2251 = vpop.f32.mrb[0].mxu0
        %v2252 = vadd.f32 %v822, %v2251
        %v2253 = vpop.f32.mrb[0].mxu0
        %v2254 = vadd.f32 %v826, %v2253
        %2255 = vdwg.mxu0
        %2256 = vmatprep.subr.bf16.mxu0 %v1709
        %2257 = vmatpush1.bf16.msra.mxu0 %v1708
        %2258 = vmatprep.subr.bf16.mxu0 %v1714
        %2259 = vmatpush1.bf16.msra.mxu0 %v1713
        %2260 = vmatprep.subr.bf16.mxu0 %v1719
        %2261 = vmatpush1.bf16.msra.mxu0 %v1718
        %2262 = vmatprep.subr.bf16.mxu0 %v1724
        %2263 = vmatpush1.bf16.msra.mxu0 %v1723
        %2264 = vmatprep.subr.bf16.mxu0 %v1729
        %2265 = vmatpush1.bf16.msra.mxu0 %v1728
        %2266 = vmatprep.subr.bf16.mxu0 %v1734
        %2267 = vmatpush1.bf16.msra.mxu0 %v1733
        %2268 = vmatprep.subr.bf16.mxu0 %v1739
        %2269 = vmatpush1.bf16.msra.mxu0 %v1738
        %2270 = vmatprep.subr.bf16.mxu0 %v1744
        %2271 = vmatpush1.bf16.msra.mxu0 %v1743
        %2272 = vmatprep.subr.bf16.mxu0 %v1749
        %2273 = vmatpush1.bf16.msra.mxu0 %v1748
        %2274 = vmatprep.subr.bf16.mxu0 %v1754
        %2275 = vmatpush1.bf16.msra.mxu0 %v1753
        %2276 = vmatprep.subr.bf16.mxu0 %v1759
        %2277 = vmatpush1.bf16.msra.mxu0 %v1758
        %2278 = vmatprep.subr.bf16.mxu0 %v1764
        %2279 = vmatpush1.bf16.msra.mxu0 %v1763
        %2280 = vmatprep.subr.bf16.mxu0 %v1769
        %2281 = vmatpush1.bf16.msra.mxu0 %v1768
        %2282 = vmatprep.subr.bf16.mxu0 %v1774
        %2283 = vmatpush1.bf16.msra.mxu0 %v1773
        %2284 = vmatprep.subr.bf16.mxu0 %v1779
        %2285 = vmatpush1.bf16.msra.mxu0 %v1778
        %2286 = vmatprep.subr.bf16.mxu0 %v1784
        %2287 = vmatpush1.bf16.msra.mxu0 %v1783
        %2288 = vmatprep.mubr.bf16.mxu0 %v470
        %2289 = vmatmul.mubr.bf16.gmra.mrb[0].mxu0 %v469
        %v2290 = vpop.f32.mrb[0].mxu0
        %v2291 = vadd.f32 %v2178, %v2290
        %v2292 = vpop.f32.mrb[0].mxu0
        %v2293 = vadd.f32 %v2180, %v2292
        %v2294 = vpop.f32.mrb[0].mxu0
        %v2295 = vadd.f32 %v2182, %v2294
        %v2296 = vpop.f32.mrb[0].mxu0
        %v2297 = vadd.f32 %v2184, %v2296
        %2298 = vmatprep.mubr.bf16.mxu0 %v477
        %2299 = vmatmul.mubr.bf16.gmra.mrb[0].mxu0 %v476
        %v2300 = vpop.f32.mrb[0].mxu0
        %v2301 = vadd.f32 %v2188, %v2300
        %v2302 = vpop.f32.mrb[0].mxu0
        %v2303 = vadd.f32 %v2190, %v2302
        %v2304 = vpop.f32.mrb[0].mxu0
        %v2305 = vadd.f32 %v2192, %v2304
        %v2306 = vpop.f32.mrb[0].mxu0
        %v2307 = vadd.f32 %v2194, %v2306
        %2308 = vmatprep.mubr.bf16.mxu0 %v484
        %2309 = vmatmul.mubr.bf16.gmra.mrb[0].mxu0 %v483
        %v2310 = vpop.f32.mrb[0].mxu0
        %v2311 = vadd.f32 %v2198, %v2310
        %v2312 = vpop.f32.mrb[0].mxu0
        %v2313 = vadd.f32 %v2200, %v2312
        %v2314 = vpop.f32.mrb[0].mxu0
        %v2315 = vadd.f32 %v2202, %v2314
        %v2316 = vpop.f32.mrb[0].mxu0
        %v2317 = vadd.f32 %v2204, %v2316
        %2318 = vmatprep.mubr.bf16.mxu0 %v491
        %2319 = vmatmul.mubr.bf16.gmra.mrb[0].mxu0 %v490
        %v2320 = vpop.f32.mrb[0].mxu0
        %v2321 = vadd.f32 %v2208, %v2320
        %v2322 = vpop.f32.mrb[0].mxu0
        %v2323 = vadd.f32 %v2210, %v2322
        %v2324 = vpop.f32.mrb[0].mxu0
        %v2325 = vadd.f32 %v2212, %v2324
        %v2326 = vpop.f32.mrb[0].mxu0
        %v2327 = vadd.f32 %v2214, %v2326
        %2328 = vmatprep.mubr.bf16.mxu0 %v498
        %2329 = vmatmul.mubr.bf16.gmra.mrb[0].mxu0 %v497
        %v2330 = vpop.f32.mrb[0].mxu0
        %v2331 = vadd.f32 %v2218, %v2330
        %v2332 = vpop.f32.mrb[0].mxu0
        %v2333 = vadd.f32 %v2220, %v2332
        %v2334 = vpop.f32.mrb[0].mxu0
        %v2335 = vadd.f32 %v2222, %v2334
        %v2336 = vpop.f32.mrb[0].mxu0
        %v2337 = vadd.f32 %v2224, %v2336
        %2338 = vmatprep.mubr.bf16.mxu0 %v505
        %2339 = vmatmul.mubr.bf16.gmra.mrb[0].mxu0 %v504
        %v2340 = vpop.f32.mrb[0].mxu0
        %v2341 = vadd.f32 %v2228, %v2340
        %v2342 = vpop.f32.mrb[0].mxu0
        %v2343 = vadd.f32 %v2230, %v2342
        %v2344 = vpop.f32.mrb[0].mxu0
        %v2345 = vadd.f32 %v2232, %v2344
        %v2346 = vpop.f32.mrb[0].mxu0
        %v2347 = vadd.f32 %v2234, %v2346
        %2348 = vmatprep.mubr.bf16.mxu0 %v512
        %2349 = vmatmul.mubr.bf16.gmra.mrb[0].mxu0 %v511
        %v2350 = vpop.f32.mrb[0].mxu0
        %v2351 = vadd.f32 %v2238, %v2350
        %v2352 = vpop.f32.mrb[0].mxu0
        %v2353 = vadd.f32 %v2240, %v2352
        %v2354 = vpop.f32.mrb[0].mxu0
        %v2355 = vadd.f32 %v2242, %v2354
        %v2356 = vpop.f32.mrb[0].mxu0
        %v2357 = vadd.f32 %v2244, %v2356
        %2358 = vmatprep.mubr.bf16.mxu0 %v519
        %2359 = vmatmul.mubr.bf16.gmra.mrb[0].mxu0 %v518
        %v2360 = vpop.f32.mrb[0].mxu0
        %v2361 = vadd.f32 %v2248, %v2360
        %v2362 = vpop.f32.mrb[0].mxu0
        %v2363 = vadd.f32 %v2250, %v2362
        %v2364 = vpop.f32.mrb[0].mxu0
        %v2365 = vadd.f32 %v2252, %v2364
        %v2366 = vpop.f32.mrb[0].mxu0
        %v2367 = vadd.f32 %v2254, %v2366
        %2368 = vdwg.mxu0
        %2369 = vmatprep.subr.bf16.mxu0 %v1789
        %2370 = vmatpush1.bf16.msra.mxu0 %v1788
        %2371 = vmatprep.subr.bf16.mxu0 %v1794
        %2372 = vmatpush1.bf16.msra.mxu0 %v1793
        %2373 = vmatprep.subr.bf16.mxu0 %v1799
        %2374 = vmatpush1.bf16.msra.mxu0 %v1798
        %2375 = vmatprep.subr.bf16.mxu0 %v1804
        %2376 = vmatpush1.bf16.msra.mxu0 %v1803
        %2377 = vmatprep.subr.bf16.mxu0 %v1809
        %2378 = vmatpush1.bf16.msra.mxu0 %v1808
        %2379 = vmatprep.subr.bf16.mxu0 %v1814
        %2380 = vmatpush1.bf16.msra.mxu0 %v1813
        %2381 = vmatprep.subr.bf16.mxu0 %v1819
        %2382 = vmatpush1.bf16.msra.mxu0 %v1818
        %2383 = vmatprep.subr.bf16.mxu0 %v1824
        %2384 = vmatpush1.bf16.msra.mxu0 %v1823
        %2385 = vmatprep.subr.bf16.mxu0 %v1829
        %2386 = vmatpush1.bf16.msra.mxu0 %v1828
        %2387 = vmatprep.subr.bf16.mxu0 %v1834
        %2388 = vmatpush1.bf16.msra.mxu0 %v1833
        %2389 = vmatprep.subr.bf16.mxu0 %v1839
        %2390 = vmatpush1.bf16.msra.mxu0 %v1838
        %2391 = vmatprep.subr.bf16.mxu0 %v1844
        %2392 = vmatpush1.bf16.msra.mxu0 %v1843
        %2393 = vmatprep.subr.bf16.mxu0 %v1849
        %2394 = vmatpush1.bf16.msra.mxu0 %v1848
        %2395 = vmatprep.subr.bf16.mxu0 %v1854
        %2396 = vmatpush1.bf16.msra.mxu0 %v1853
        %2397 = vmatprep.subr.bf16.mxu0 %v1859
        %2398 = vmatpush1.bf16.msra.mxu0 %v1858
        %2399 = vmatprep.subr.bf16.mxu0 %v1864
        %2400 = vmatpush1.bf16.msra.mxu0 %v1863
        %2401 = vmatprep.mubr.bf16.mxu0 %v472
        %2402 = vmatmul.mubr.bf16.gmra.mrb[0].mxu0 %v471
        %v2403 = vpop.f32.mrb[0].mxu0
        %v2404 = vadd.f32 %v2291, %v2403
        %v2405 = vpop.f32.mrb[0].mxu0
        %v2406 = vadd.f32 %v2293, %v2405
        %v2407 = vpop.f32.mrb[0].mxu0
        %v2408 = vadd.f32 %v2295, %v2407
        %v2409 = vpop.f32.mrb[0].mxu0
        %v2410 = vadd.f32 %v2297, %v2409
        %2411 = vmatprep.mubr.bf16.mxu0 %v479
        %2412 = vmatmul.mubr.bf16.gmra.mrb[0].mxu0 %v478
        %v2413 = vpop.f32.mrb[0].mxu0
        %v2414 = vadd.f32 %v2301, %v2413
        %v2415 = vpop.f32.mrb[0].mxu0
        %v2416 = vadd.f32 %v2303, %v2415
        %v2417 = vpop.f32.mrb[0].mxu0
        %v2418 = vadd.f32 %v2305, %v2417
        %v2419 = vpop.f32.mrb[0].mxu0
        %v2420 = vadd.f32 %v2307, %v2419
        %2421 = vmatprep.mubr.bf16.mxu0 %v486
        %2422 = vmatmul.mubr.bf16.gmra.mrb[0].mxu0 %v485
        %v2423 = vpop.f32.mrb[0].mxu0
        %v2424 = vadd.f32 %v2311, %v2423
        %v2425 = vpop.f32.mrb[0].mxu0
        %v2426 = vadd.f32 %v2313, %v2425
        %v2427 = vpop.f32.mrb[0].mxu0
        %v2428 = vadd.f32 %v2315, %v2427
        %v2429 = vpop.f32.mrb[0].mxu0
        %v2430 = vadd.f32 %v2317, %v2429
        %2431 = vmatprep.mubr.bf16.mxu0 %v493
        %2432 = vmatmul.mubr.bf16.gmra.mrb[0].mxu0 %v492
        %v2433 = vpop.f32.mrb[0].mxu0
        %v2434 = vadd.f32 %v2321, %v2433
        %v2435 = vpop.f32.mrb[0].mxu0
        %v2436 = vadd.f32 %v2323, %v2435
        %v2437 = vpop.f32.mrb[0].mxu0
        %v2438 = vadd.f32 %v2325, %v2437
        %v2439 = vpop.f32.mrb[0].mxu0
        %v2440 = vadd.f32 %v2327, %v2439
        %2441 = vmatprep.mubr.bf16.mxu0 %v500
        %2442 = vmatmul.mubr.bf16.gmra.mrb[0].mxu0 %v499
        %v2443 = vpop.f32.mrb[0].mxu0
        %v2444 = vadd.f32 %v2331, %v2443
        %v2445 = vpop.f32.mrb[0].mxu0
        %v2446 = vadd.f32 %v2333, %v2445
        %v2447 = vpop.f32.mrb[0].mxu0
        %v2448 = vadd.f32 %v2335, %v2447
        %v2449 = vpop.f32.mrb[0].mxu0
        %v2450 = vadd.f32 %v2337, %v2449
        %2451 = vmatprep.mubr.bf16.mxu0 %v507
        %2452 = vmatmul.mubr.bf16.gmra.mrb[0].mxu0 %v506
        %v2453 = vpop.f32.mrb[0].mxu0
        %v2454 = vadd.f32 %v2341, %v2453
        %v2455 = vpop.f32.mrb[0].mxu0
        %v2456 = vadd.f32 %v2343, %v2455
        %v2457 = vpop.f32.mrb[0].mxu0
        %v2458 = vadd.f32 %v2345, %v2457
        %v2459 = vpop.f32.mrb[0].mxu0
        %v2460 = vadd.f32 %v2347, %v2459
        %2461 = vmatprep.mubr.bf16.mxu0 %v514
        %2462 = vmatmul.mubr.bf16.gmra.mrb[0].mxu0 %v513
        %v2463 = vpop.f32.mrb[0].mxu0
        %v2464 = vadd.f32 %v2351, %v2463
        %v2465 = vpop.f32.mrb[0].mxu0
        %v2466 = vadd.f32 %v2353, %v2465
        %v2467 = vpop.f32.mrb[0].mxu0
        %v2468 = vadd.f32 %v2355, %v2467
        %v2469 = vpop.f32.mrb[0].mxu0
        %v2470 = vadd.f32 %v2357, %v2469
        %2471 = vmatprep.mubr.bf16.mxu0 %v521
        %2472 = vmatmul.mubr.bf16.gmra.mrb[0].mxu0 %v520
        %v2473 = vpop.f32.mrb[0].mxu0
        %v2474 = vadd.f32 %v2361, %v2473
        %v2475 = vpop.f32.mrb[0].mxu0
        %v2476 = vadd.f32 %v2363, %v2475
        %v2477 = vpop.f32.mrb[0].mxu0
        %v2478 = vadd.f32 %v2365, %v2477
        %v2479 = vpop.f32.mrb[0].mxu0
        %v2480 = vadd.f32 %v2367, %v2479
        %2481 = vdwg.mxu0
        %2482 = vmatprep.subr.bf16.mxu0 %v1869
        %2483 = vmatpush1.bf16.msra.mxu0 %v1868
        %2484 = vmatprep.subr.bf16.mxu0 0
        %2485 = vmatpush1.bf16.msra.mxu0 0
        %2486 = vmatprep.subr.bf16.mxu0 0
        %2487 = vmatpush1.bf16.msra.mxu0 0
        %2488 = vmatprep.subr.bf16.mxu0 0
        %2489 = vmatpush1.bf16.msra.mxu0 0
        %2490 = vmatprep.subr.bf16.mxu0 0
        %2491 = vmatpush1.bf16.msra.mxu0 0
        %2492 = vmatprep.subr.bf16.mxu0 0
        %2493 = vmatpush1.bf16.msra.mxu0 0
        %2494 = vmatprep.subr.bf16.mxu0 0
        %2495 = vmatpush1.bf16.msra.mxu0 0
        %2496 = vmatprep.subr.bf16.mxu0 0
        %2497 = vmatpush1.bf16.msra.mxu0 0
        %2498 = vmatprep.subr.bf16.mxu0 0
        %2499 = vmatpush1.bf16.msra.mxu0 0
        %2500 = vmatprep.subr.bf16.mxu0 0
        %2501 = vmatpush1.bf16.msra.mxu0 0
        %2502 = vmatprep.subr.bf16.mxu0 0
        %2503 = vmatpush1.bf16.msra.mxu0 0
        %2504 = vmatprep.subr.bf16.mxu0 0
        %2505 = vmatpush1.bf16.msra.mxu0 0
        %2506 = vmatprep.subr.bf16.mxu0 0
        %2507 = vmatpush1.bf16.msra.mxu0 0
        %2508 = vmatprep.subr.bf16.mxu0 0
        %2509 = vmatpush1.bf16.msra.mxu0 0
        %2510 = vmatprep.subr.bf16.mxu0 0
        %2511 = vmatpush1.bf16.msra.mxu0 0
        %2512 = vmatprep.subr.bf16.mxu0 0
        %2513 = vmatpush1.bf16.msra.mxu0 0
        %2514 = vmatprep.mubr.bf16.mxu0 0
        %2515 = vmatmul.mubr.bf16.gmra.mrb[0].mxu0 %v2120
        %v2516 = vpop.f32.mrb[0].mxu0
        %v2517 = vadd.f32 %v2404, %v2516
        %v2518 = vpop.f32.mrb[0].mxu0
        %v2519 = vadd.f32 %v2406, %v2518
        %v2520 = vpop.f32.mrb[0].mxu0
        %v2521 = vadd.f32 %v2408, %v2520
        %v2522 = vpop.f32.mrb[0].mxu0
        %v2523 = vadd.f32 %v2410, %v2522
        %2524 = vmatprep.mubr.bf16.mxu0 0
        %2525 = vmatmul.mubr.bf16.gmra.mrb[0].mxu0 %v2123
        %v2526 = vpop.f32.mrb[0].mxu0
        %v2527 = vadd.f32 %v2414, %v2526
        %v2528 = vpop.f32.mrb[0].mxu0
        %v2529 = vadd.f32 %v2416, %v2528
        %v2530 = vpop.f32.mrb[0].mxu0
        %v2531 = vadd.f32 %v2418, %v2530
        %v2532 = vpop.f32.mrb[0].mxu0
        %v2533 = vadd.f32 %v2420, %v2532
        %2534 = vmatprep.mubr.bf16.mxu0 0
        %2535 = vmatmul.mubr.bf16.gmra.mrb[0].mxu0 %v2126
        %v2536 = vpop.f32.mrb[0].mxu0
        %v2537 = vadd.f32 %v2424, %v2536
        %v2538 = vpop.f32.mrb[0].mxu0
        %v2539 = vadd.f32 %v2426, %v2538
        %v2540 = vpop.f32.mrb[0].mxu0
        %v2541 = vadd.f32 %v2428, %v2540
        %v2542 = vpop.f32.mrb[0].mxu0
        %v2543 = vadd.f32 %v2430, %v2542
        %2544 = vmatprep.mubr.bf16.mxu0 0
        %2545 = vmatmul.mubr.bf16.gmra.mrb[0].mxu0 %v2129
        %v2546 = vpop.f32.mrb[0].mxu0
        %v2547 = vadd.f32 %v2434, %v2546
        %v2548 = vpop.f32.mrb[0].mxu0
        %v2549 = vadd.f32 %v2436, %v2548
        %v2550 = vpop.f32.mrb[0].mxu0
        %v2551 = vadd.f32 %v2438, %v2550
        %v2552 = vpop.f32.mrb[0].mxu0
        %v2553 = vadd.f32 %v2440, %v2552
        %2554 = vmatprep.mubr.bf16.mxu0 0
        %2555 = vmatmul.mubr.bf16.gmra.mrb[0].mxu0 %v2132
        %v2556 = vpop.f32.mrb[0].mxu0
        %v2557 = vadd.f32 %v2444, %v2556
        %v2558 = vpop.f32.mrb[0].mxu0
        %v2559 = vadd.f32 %v2446, %v2558
        %v2560 = vpop.f32.mrb[0].mxu0
        %v2561 = vadd.f32 %v2448, %v2560
        %v2562 = vpop.f32.mrb[0].mxu0
        %v2563 = vadd.f32 %v2450, %v2562
        %2564 = vmatprep.mubr.bf16.mxu0 0
        %2565 = vmatmul.mubr.bf16.gmra.mrb[0].mxu0 %v2135
        %v2566 = vpop.f32.mrb[0].mxu0
        %v2567 = vadd.f32 %v2454, %v2566
        %v2568 = vpop.f32.mrb[0].mxu0
        %v2569 = vadd.f32 %v2456, %v2568
        %v2570 = vpop.f32.mrb[0].mxu0
        %v2571 = vadd.f32 %v2458, %v2570
        %v2572 = vpop.f32.mrb[0].mxu0
        %v2573 = vadd.f32 %v2460, %v2572
        %2574 = vmatprep.mubr.bf16.mxu0 0
        %2575 = vmatmul.mubr.bf16.gmra.mrb[0].mxu0 %v2138
        %v2576 = vpop.f32.mrb[0].mxu0
        %v2577 = vadd.f32 %v2464, %v2576
        %v2578 = vpop.f32.mrb[0].mxu0
        %v2579 = vadd.f32 %v2466, %v2578
        %v2580 = vpop.f32.mrb[0].mxu0
        %v2581 = vadd.f32 %v2468, %v2580
        %v2582 = vpop.f32.mrb[0].mxu0
        %v2583 = vadd.f32 %v2470, %v2582
        %2584 = vmatprep.mubr.bf16.mxu0 0
        %2585 = vmatmul.mubr.bf16.gmra.mrb[0].mxu0 %v2141
        %v2586 = vpop.f32.mrb[0].mxu0
        %v2587 = vadd.f32 %v2474, %v2586
        %v2588 = vpop.f32.mrb[0].mxu0
        %v2589 = vadd.f32 %v2476, %v2588
        %v2590 = vpop.f32.mrb[0].mxu0
        %v2591 = vadd.f32 %v2478, %v2590
        %v2592 = vpop.f32.mrb[0].mxu0
        %v2593 = vadd.f32 %v2480, %v2592
        %2594 = vdwg.mxu0
        %2595 = vmatprep.subr.bf16.mxu0 %v1631
        %2596 = vmatpush1.bf16.msra.mxu0 %v1630
        %2597 = vmatprep.subr.bf16.mxu0 %v1636
        %2598 = vmatpush1.bf16.msra.mxu0 %v1635
        %2599 = vmatprep.subr.bf16.mxu0 %v1641
        %2600 = vmatpush1.bf16.msra.mxu0 %v1640
        %2601 = vmatprep.subr.bf16.mxu0 %v1646
        %2602 = vmatpush1.bf16.msra.mxu0 %v1645
        %2603 = vmatprep.subr.bf16.mxu0 %v1651
        %2604 = vmatpush1.bf16.msra.mxu0 %v1650
        %2605 = vmatprep.subr.bf16.mxu0 %v1656
        %2606 = vmatpush1.bf16.msra.mxu0 %v1655
        %2607 = vmatprep.subr.bf16.mxu0 %v1661
        %2608 = vmatpush1.bf16.msra.mxu0 %v1660
        %2609 = vmatprep.subr.bf16.mxu0 %v1666
        %2610 = vmatpush1.bf16.msra.mxu0 %v1665
        %2611 = vmatprep.subr.bf16.mxu0 %v1671
        %2612 = vmatpush1.bf16.msra.mxu0 %v1670
        %2613 = vmatprep.subr.bf16.mxu0 %v1676
        %2614 = vmatpush1.bf16.msra.mxu0 %v1675
        %2615 = vmatprep.subr.bf16.mxu0 %v1681
        %2616 = vmatpush1.bf16.msra.mxu0 %v1680
        %2617 = vmatprep.subr.bf16.mxu0 %v1686
        %2618 = vmatpush1.bf16.msra.mxu0 %v1685
        %2619 = vmatprep.subr.bf16.mxu0 %v1691
        %2620 = vmatpush1.bf16.msra.mxu0 %v1690
        %2621 = vmatprep.subr.bf16.mxu0 %v1696
        %2622 = vmatpush1.bf16.msra.mxu0 %v1695
        %2623 = vmatprep.subr.bf16.mxu0 %v1701
        %2624 = vmatpush1.bf16.msra.mxu0 %v1700
        %2625 = vmatprep.subr.bf16.mxu0 %v1706
        %2626 = vmatpush1.bf16.msra.mxu0 %v1705
        %2627 = vmatprep.mubr.bf16.mxu0 %v468
        %2628 = vmatmul.mubr.bf16.gmra.mrb[0].mxu0 %v467
        %v2629 = vpop.f32.mrb[0].mxu0
        %v2630 = vadd.f32 %v830, %v2629
        %v2631 = vpop.f32.mrb[0].mxu0
        %v2632 = vadd.f32 %v834, %v2631
        %v2633 = vpop.f32.mrb[0].mxu0
        %v2634 = vadd.f32 %v830, %v2633
        %v2635 = vpop.f32.mrb[0].mxu0
        %v2636 = vadd.f32 %v834, %v2635
        %2637 = vmatprep.mubr.bf16.mxu0 %v475
        %2638 = vmatmul.mubr.bf16.gmra.mrb[0].mxu0 %v474
        %v2639 = vpop.f32.mrb[0].mxu0
        %v2640 = vadd.f32 %v830, %v2639
        %v2641 = vpop.f32.mrb[0].mxu0
        %v2642 = vadd.f32 %v834, %v2641
        %v2643 = vpop.f32.mrb[0].mxu0
        %v2644 = vadd.f32 %v830, %v2643
        %v2645 = vpop.f32.mrb[0].mxu0
        %v2646 = vadd.f32 %v834, %v2645
        %2647 = vmatprep.mubr.bf16.mxu0 %v482
        %2648 = vmatmul.mubr.bf16.gmra.mrb[0].mxu0 %v481
        %v2649 = vpop.f32.mrb[0].mxu0
        %v2650 = vadd.f32 %v830, %v2649
        %v2651 = vpop.f32.mrb[0].mxu0
        %v2652 = vadd.f32 %v834, %v2651
        %v2653 = vpop.f32.mrb[0].mxu0
        %v2654 = vadd.f32 %v830, %v2653
        %v2655 = vpop.f32.mrb[0].mxu0
        %v2656 = vadd.f32 %v834, %v2655
        %2657 = vmatprep.mubr.bf16.mxu0 %v489
        %2658 = vmatmul.mubr.bf16.gmra.mrb[0].mxu0 %v488
        %v2659 = vpop.f32.mrb[0].mxu0
        %v2660 = vadd.f32 %v830, %v2659
        %v2661 = vpop.f32.mrb[0].mxu0
        %v2662 = vadd.f32 %v834, %v2661
        %v2663 = vpop.f32.mrb[0].mxu0
        %v2664 = vadd.f32 %v830, %v2663
        %v2665 = vpop.f32.mrb[0].mxu0
        %v2666 = vadd.f32 %v834, %v2665
        %2667 = vmatprep.mubr.bf16.mxu0 %v496
        %2668 = vmatmul.mubr.bf16.gmra.mrb[0].mxu0 %v495
        %v2669 = vpop.f32.mrb[0].mxu0
        %v2670 = vadd.f32 %v830, %v2669
        %v2671 = vpop.f32.mrb[0].mxu0
        %v2672 = vadd.f32 %v834, %v2671
        %v2673 = vpop.f32.mrb[0].mxu0
        %v2674 = vadd.f32 %v830, %v2673
        %v2675 = vpop.f32.mrb[0].mxu0
        %v2676 = vadd.f32 %v834, %v2675
        %2677 = vmatprep.mubr.bf16.mxu0 %v503
        %2678 = vmatmul.mubr.bf16.gmra.mrb[0].mxu0 %v502
        %v2679 = vpop.f32.mrb[0].mxu0
        %v2680 = vadd.f32 %v830, %v2679
        %v2681 = vpop.f32.mrb[0].mxu0
        %v2682 = vadd.f32 %v834, %v2681
        %v2683 = vpop.f32.mrb[0].mxu0
        %v2684 = vadd.f32 %v830, %v2683
        %v2685 = vpop.f32.mrb[0].mxu0
        %v2686 = vadd.f32 %v834, %v2685
        %2687 = vmatprep.mubr.bf16.mxu0 %v510
        %2688 = vmatmul.mubr.bf16.gmra.mrb[0].mxu0 %v509
        %v2689 = vpop.f32.mrb[0].mxu0
        %v2690 = vadd.f32 %v830, %v2689
        %v2691 = vpop.f32.mrb[0].mxu0
        %v2692 = vadd.f32 %v834, %v2691
        %v2693 = vpop.f32.mrb[0].mxu0
        %v2694 = vadd.f32 %v830, %v2693
        %v2695 = vpop.f32.mrb[0].mxu0
        %v2696 = vadd.f32 %v834, %v2695
        %2697 = vmatprep.mubr.bf16.mxu0 %v517
        %2698 = vmatmul.mubr.bf16.gmra.mrb[0].mxu0 %v516
        %v2699 = vpop.f32.mrb[0].mxu0
        %v2700 = vadd.f32 %v830, %v2699
        %v2701 = vpop.f32.mrb[0].mxu0
        %v2702 = vadd.f32 %v834, %v2701
        %v2703 = vpop.f32.mrb[0].mxu0
        %v2704 = vadd.f32 %v830, %v2703
        %v2705 = vpop.f32.mrb[0].mxu0
        %v2706 = vadd.f32 %v834, %v2705
        %2707 = vdwg.mxu0
        %2708 = vmatprep.subr.bf16.mxu0 %v1711
        %2709 = vmatpush1.bf16.msra.mxu0 %v1710
        %2710 = vmatprep.subr.bf16.mxu0 %v1716
        %2711 = vmatpush1.bf16.msra.mxu0 %v1715
        %2712 = vmatprep.subr.bf16.mxu0 %v1721
        %2713 = vmatpush1.bf16.msra.mxu0 %v1720
        %2714 = vmatprep.subr.bf16.mxu0 %v1726
        %2715 = vmatpush1.bf16.msra.mxu0 %v1725
        %2716 = vmatprep.subr.bf16.mxu0 %v1731
        %2717 = vmatpush1.bf16.msra.mxu0 %v1730
        %2718 = vmatprep.subr.bf16.mxu0 %v1736
        %2719 = vmatpush1.bf16.msra.mxu0 %v1735
        %2720 = vmatprep.subr.bf16.mxu0 %v1741
        %2721 = vmatpush1.bf16.msra.mxu0 %v1740
        %2722 = vmatprep.subr.bf16.mxu0 %v1746
        %2723 = vmatpush1.bf16.msra.mxu0 %v1745
        %2724 = vmatprep.subr.bf16.mxu0 %v1751
        %2725 = vmatpush1.bf16.msra.mxu0 %v1750
        %2726 = vmatprep.subr.bf16.mxu0 %v1756
        %2727 = vmatpush1.bf16.msra.mxu0 %v1755
        %2728 = vmatprep.subr.bf16.mxu0 %v1761
        %2729 = vmatpush1.bf16.msra.mxu0 %v1760
        %2730 = vmatprep.subr.bf16.mxu0 %v1766
        %2731 = vmatpush1.bf16.msra.mxu0 %v1765
        %2732 = vmatprep.subr.bf16.mxu0 %v1771
        %2733 = vmatpush1.bf16.msra.mxu0 %v1770
        %2734 = vmatprep.subr.bf16.mxu0 %v1776
        %2735 = vmatpush1.bf16.msra.mxu0 %v1775
        %2736 = vmatprep.subr.bf16.mxu0 %v1781
        %2737 = vmatpush1.bf16.msra.mxu0 %v1780
        %2738 = vmatprep.subr.bf16.mxu0 %v1786
        %2739 = vmatpush1.bf16.msra.mxu0 %v1785
        %2740 = vmatprep.mubr.bf16.mxu0 %v470
        %2741 = vmatmul.mubr.bf16.gmra.mrb[0].mxu0 %v469
        %v2742 = vpop.f32.mrb[0].mxu0
        %v2743 = vadd.f32 %v2630, %v2742
        %v2744 = vpop.f32.mrb[0].mxu0
        %v2745 = vadd.f32 %v2632, %v2744
        %v2746 = vpop.f32.mrb[0].mxu0
        %v2747 = vadd.f32 %v2634, %v2746
        %v2748 = vpop.f32.mrb[0].mxu0
        %v2749 = vadd.f32 %v2636, %v2748
        %2750 = vmatprep.mubr.bf16.mxu0 %v477
        %2751 = vmatmul.mubr.bf16.gmra.mrb[0].mxu0 %v476
        %v2752 = vpop.f32.mrb[0].mxu0
        %v2753 = vadd.f32 %v2640, %v2752
        %v2754 = vpop.f32.mrb[0].mxu0
        %v2755 = vadd.f32 %v2642, %v2754
        %v2756 = vpop.f32.mrb[0].mxu0
        %v2757 = vadd.f32 %v2644, %v2756
        %v2758 = vpop.f32.mrb[0].mxu0
        %v2759 = vadd.f32 %v2646, %v2758
        %2760 = vmatprep.mubr.bf16.mxu0 %v484
        %2761 = vmatmul.mubr.bf16.gmra.mrb[0].mxu0 %v483
        %v2762 = vpop.f32.mrb[0].mxu0
        %v2763 = vadd.f32 %v2650, %v2762
        %v2764 = vpop.f32.mrb[0].mxu0
        %v2765 = vadd.f32 %v2652, %v2764
        %v2766 = vpop.f32.mrb[0].mxu0
        %v2767 = vadd.f32 %v2654, %v2766
        %v2768 = vpop.f32.mrb[0].mxu0
        %v2769 = vadd.f32 %v2656, %v2768
        %2770 = vmatprep.mubr.bf16.mxu0 %v491
        %2771 = vmatmul.mubr.bf16.gmra.mrb[0].mxu0 %v490
        %v2772 = vpop.f32.mrb[0].mxu0
        %v2773 = vadd.f32 %v2660, %v2772
        %v2774 = vpop.f32.mrb[0].mxu0
        %v2775 = vadd.f32 %v2662, %v2774
        %v2776 = vpop.f32.mrb[0].mxu0
        %v2777 = vadd.f32 %v2664, %v2776
        %v2778 = vpop.f32.mrb[0].mxu0
        %v2779 = vadd.f32 %v2666, %v2778
        %2780 = vmatprep.mubr.bf16.mxu0 %v498
        %2781 = vmatmul.mubr.bf16.gmra.mrb[0].mxu0 %v497
        %v2782 = vpop.f32.mrb[0].mxu0
        %v2783 = vadd.f32 %v2670, %v2782
        %v2784 = vpop.f32.mrb[0].mxu0
        %v2785 = vadd.f32 %v2672, %v2784
        %v2786 = vpop.f32.mrb[0].mxu0
        %v2787 = vadd.f32 %v2674, %v2786
        %v2788 = vpop.f32.mrb[0].mxu0
        %v2789 = vadd.f32 %v2676, %v2788
        %2790 = vmatprep.mubr.bf16.mxu0 %v505
        %2791 = vmatmul.mubr.bf16.gmra.mrb[0].mxu0 %v504
        %v2792 = vpop.f32.mrb[0].mxu0
        %v2793 = vadd.f32 %v2680, %v2792
        %v2794 = vpop.f32.mrb[0].mxu0
        %v2795 = vadd.f32 %v2682, %v2794
        %v2796 = vpop.f32.mrb[0].mxu0
        %v2797 = vadd.f32 %v2684, %v2796
        %v2798 = vpop.f32.mrb[0].mxu0
        %v2799 = vadd.f32 %v2686, %v2798
        %2800 = vmatprep.mubr.bf16.mxu0 %v512
        %2801 = vmatmul.mubr.bf16.gmra.mrb[0].mxu0 %v511
        %v2802 = vpop.f32.mrb[0].mxu0
        %v2803 = vadd.f32 %v2690, %v2802
        %v2804 = vpop.f32.mrb[0].mxu0
        %v2805 = vadd.f32 %v2692, %v2804
        %v2806 = vpop.f32.mrb[0].mxu0
        %v2807 = vadd.f32 %v2694, %v2806
        %v2808 = vpop.f32.mrb[0].mxu0
        %v2809 = vadd.f32 %v2696, %v2808
        %2810 = vmatprep.mubr.bf16.mxu0 %v519
        %2811 = vmatmul.mubr.bf16.gmra.mrb[0].mxu0 %v518
        %v2812 = vpop.f32.mrb[0].mxu0
        %v2813 = vadd.f32 %v2700, %v2812
        %v2814 = vpop.f32.mrb[0].mxu0
        %v2815 = vadd.f32 %v2702, %v2814
        %v2816 = vpop.f32.mrb[0].mxu0
        %v2817 = vadd.f32 %v2704, %v2816
        %v2818 = vpop.f32.mrb[0].mxu0
        %v2819 = vadd.f32 %v2706, %v2818
        %2820 = vdwg.mxu0
        %2821 = vmatprep.subr.bf16.mxu0 %v1791
        %2822 = vmatpush1.bf16.msra.mxu0 %v1790
        %2823 = vmatprep.subr.bf16.mxu0 %v1796
        %2824 = vmatpush1.bf16.msra.mxu0 %v1795
        %2825 = vmatprep.subr.bf16.mxu0 %v1801
        %2826 = vmatpush1.bf16.msra.mxu0 %v1800
        %2827 = vmatprep.subr.bf16.mxu0 %v1806
        %2828 = vmatpush1.bf16.msra.mxu0 %v1805
        %2829 = vmatprep.subr.bf16.mxu0 %v1811
        %2830 = vmatpush1.bf16.msra.mxu0 %v1810
        %2831 = vmatprep.subr.bf16.mxu0 %v1816
        %2832 = vmatpush1.bf16.msra.mxu0 %v1815
        %2833 = vmatprep.subr.bf16.mxu0 %v1821
        %2834 = vmatpush1.bf16.msra.mxu0 %v1820
        %2835 = vmatprep.subr.bf16.mxu0 %v1826
        %2836 = vmatpush1.bf16.msra.mxu0 %v1825
        %2837 = vmatprep.subr.bf16.mxu0 %v1831
        %2838 = vmatpush1.bf16.msra.mxu0 %v1830
        %2839 = vmatprep.subr.bf16.mxu0 %v1836
        %2840 = vmatpush1.bf16.msra.mxu0 %v1835
        %2841 = vmatprep.subr.bf16.mxu0 %v1841
        %2842 = vmatpush1.bf16.msra.mxu0 %v1840
        %2843 = vmatprep.subr.bf16.mxu0 %v1846
        %2844 = vmatpush1.bf16.msra.mxu0 %v1845
        %2845 = vmatprep.subr.bf16.mxu0 %v1851
        %2846 = vmatpush1.bf16.msra.mxu0 %v1850
        %2847 = vmatprep.subr.bf16.mxu0 %v1856
        %2848 = vmatpush1.bf16.msra.mxu0 %v1855
        %2849 = vmatprep.subr.bf16.mxu0 %v1861
        %2850 = vmatpush1.bf16.msra.mxu0 %v1860
        %2851 = vmatprep.subr.bf16.mxu0 %v1866
        %2852 = vmatpush1.bf16.msra.mxu0 %v1865
        %2853 = vmatprep.mubr.bf16.mxu0 %v472
        %2854 = vmatmul.mubr.bf16.gmra.mrb[0].mxu0 %v471
        %v2855 = vpop.f32.mrb[0].mxu0
        %v2856 = vadd.f32 %v2743, %v2855
        %v2857 = vpop.f32.mrb[0].mxu0
        %v2858 = vadd.f32 %v2745, %v2857
        %v2859 = vpop.f32.mrb[0].mxu0
        %v2860 = vadd.f32 %v2747, %v2859
        %v2861 = vpop.f32.mrb[0].mxu0
        %v2862 = vadd.f32 %v2749, %v2861
        %2863 = vmatprep.mubr.bf16.mxu0 %v479
        %2864 = vmatmul.mubr.bf16.gmra.mrb[0].mxu0 %v478
        %v2865 = vpop.f32.mrb[0].mxu0
        %v2866 = vadd.f32 %v2753, %v2865
        %v2867 = vpop.f32.mrb[0].mxu0
        %v2868 = vadd.f32 %v2755, %v2867
        %v2869 = vpop.f32.mrb[0].mxu0
        %v2870 = vadd.f32 %v2757, %v2869
        %v2871 = vpop.f32.mrb[0].mxu0
        %v2872 = vadd.f32 %v2759, %v2871
        %2873 = vmatprep.mubr.bf16.mxu0 %v486
        %2874 = vmatmul.mubr.bf16.gmra.mrb[0].mxu0 %v485
        %v2875 = vpop.f32.mrb[0].mxu0
        %v2876 = vadd.f32 %v2763, %v2875
        %v2877 = vpop.f32.mrb[0].mxu0
        %v2878 = vadd.f32 %v2765, %v2877
        %v2879 = vpop.f32.mrb[0].mxu0
        %v2880 = vadd.f32 %v2767, %v2879
        %v2881 = vpop.f32.mrb[0].mxu0
        %v2882 = vadd.f32 %v2769, %v2881
        %2883 = vmatprep.mubr.bf16.mxu0 %v493
        %2884 = vmatmul.mubr.bf16.gmra.mrb[0].mxu0 %v492
        %v2885 = vpop.f32.mrb[0].mxu0
        %v2886 = vadd.f32 %v2773, %v2885
        %v2887 = vpop.f32.mrb[0].mxu0
        %v2888 = vadd.f32 %v2775, %v2887
        %v2889 = vpop.f32.mrb[0].mxu0
        %v2890 = vadd.f32 %v2777, %v2889
        %v2891 = vpop.f32.mrb[0].mxu0
        %v2892 = vadd.f32 %v2779, %v2891
        %2893 = vmatprep.mubr.bf16.mxu0 %v500
        %2894 = vmatmul.mubr.bf16.gmra.mrb[0].mxu0 %v499
        %v2895 = vpop.f32.mrb[0].mxu0
        %v2896 = vadd.f32 %v2783, %v2895
        %v2897 = vpop.f32.mrb[0].mxu0
        %v2898 = vadd.f32 %v2785, %v2897
        %v2899 = vpop.f32.mrb[0].mxu0
        %v2900 = vadd.f32 %v2787, %v2899
        %v2901 = vpop.f32.mrb[0].mxu0
        %v2902 = vadd.f32 %v2789, %v2901
        %2903 = vmatprep.mubr.bf16.mxu0 %v507
        %2904 = vmatmul.mubr.bf16.gmra.mrb[0].mxu0 %v506
        %v2905 = vpop.f32.mrb[0].mxu0
        %v2906 = vadd.f32 %v2793, %v2905
        %v2907 = vpop.f32.mrb[0].mxu0
        %v2908 = vadd.f32 %v2795, %v2907
        %v2909 = vpop.f32.mrb[0].mxu0
        %v2910 = vadd.f32 %v2797, %v2909
        %v2911 = vpop.f32.mrb[0].mxu0
        %v2912 = vadd.f32 %v2799, %v2911
        %2913 = vmatprep.mubr.bf16.mxu0 %v514
        %2914 = vmatmul.mubr.bf16.gmra.mrb[0].mxu0 %v513
        %v2915 = vpop.f32.mrb[0].mxu0
        %v2916 = vadd.f32 %v2803, %v2915
        %v2917 = vpop.f32.mrb[0].mxu0
        %v2918 = vadd.f32 %v2805, %v2917
        %v2919 = vpop.f32.mrb[0].mxu0
        %v2920 = vadd.f32 %v2807, %v2919
        %v2921 = vpop.f32.mrb[0].mxu0
        %v2922 = vadd.f32 %v2809, %v2921
        %2923 = vmatprep.mubr.bf16.mxu0 %v521
        %2924 = vmatmul.mubr.bf16.gmra.mrb[0].mxu0 %v520
        %v2925 = vpop.f32.mrb[0].mxu0
        %v2926 = vadd.f32 %v2813, %v2925
        %v2927 = vpop.f32.mrb[0].mxu0
        %v2928 = vadd.f32 %v2815, %v2927
        %v2929 = vpop.f32.mrb[0].mxu0
        %v2930 = vadd.f32 %v2817, %v2929
        %v2931 = vpop.f32.mrb[0].mxu0
        %v2932 = vadd.f32 %v2819, %v2931
        %2933 = vdwg.mxu0
        %2934 = vmatprep.subr.bf16.mxu0 %v1871
        %2935 = vmatpush1.bf16.msra.mxu0 %v1870
        %2936 = vmatprep.subr.bf16.mxu0 0
        %2937 = vmatpush1.bf16.msra.mxu0 0
        %2938 = vmatprep.subr.bf16.mxu0 0
        %2939 = vmatpush1.bf16.msra.mxu0 0
        %2940 = vmatprep.subr.bf16.mxu0 0
        %2941 = vmatpush1.bf16.msra.mxu0 0
        %2942 = vmatprep.subr.bf16.mxu0 0
        %2943 = vmatpush1.bf16.msra.mxu0 0
        %2944 = vmatprep.subr.bf16.mxu0 0
        %2945 = vmatpush1.bf16.msra.mxu0 0
        %2946 = vmatprep.subr.bf16.mxu0 0
        %2947 = vmatpush1.bf16.msra.mxu0 0
        %2948 = vmatprep.subr.bf16.mxu0 0
        %2949 = vmatpush1.bf16.msra.mxu0 0
        %2950 = vmatprep.subr.bf16.mxu0 0
        %2951 = vmatpush1.bf16.msra.mxu0 0
        %2952 = vmatprep.subr.bf16.mxu0 0
        %2953 = vmatpush1.bf16.msra.mxu0 0
        %2954 = vmatprep.subr.bf16.mxu0 0
        %2955 = vmatpush1.bf16.msra.mxu0 0
        %2956 = vmatprep.subr.bf16.mxu0 0
        %2957 = vmatpush1.bf16.msra.mxu0 0
        %2958 = vmatprep.subr.bf16.mxu0 0
        %2959 = vmatpush1.bf16.msra.mxu0 0
        %2960 = vmatprep.subr.bf16.mxu0 0
        %2961 = vmatpush1.bf16.msra.mxu0 0
        %2962 = vmatprep.subr.bf16.mxu0 0
        %2963 = vmatpush1.bf16.msra.mxu0 0
        %2964 = vmatprep.subr.bf16.mxu0 0
        %2965 = vmatpush1.bf16.msra.mxu0 0
        %2966 = vmatprep.mubr.bf16.mxu0 0
        %2967 = vmatmul.mubr.bf16.gmra.mrb[0].mxu0 %v2120
        %v2968 = vpop.f32.mrb[0].mxu0
        %v2969 = vadd.f32 %v2856, %v2968
        %v2970 = vpop.f32.mrb[0].mxu0
        %v2971 = vadd.f32 %v2858, %v2970
        %v2972 = vpop.f32.mrb[0].mxu0
        %v2973 = vadd.f32 %v2860, %v2972
        %v2974 = vpop.f32.mrb[0].mxu0
        %v2975 = vadd.f32 %v2862, %v2974
        %2976 = vmatprep.mubr.bf16.mxu0 0
        %2977 = vmatmul.mubr.bf16.gmra.mrb[0].mxu0 %v2123
        %v2978 = vpop.f32.mrb[0].mxu0
        %v2979 = vadd.f32 %v2866, %v2978
        %v2980 = vpop.f32.mrb[0].mxu0
        %v2981 = vadd.f32 %v2868, %v2980
        %v2982 = vpop.f32.mrb[0].mxu0
        %v2983 = vadd.f32 %v2870, %v2982
        %v2984 = vpop.f32.mrb[0].mxu0
        %v2985 = vadd.f32 %v2872, %v2984
        %2986 = vmatprep.mubr.bf16.mxu0 0
        %2987 = vmatmul.mubr.bf16.gmra.mrb[0].mxu0 %v2126
        %v2988 = vpop.f32.mrb[0].mxu0
        %v2989 = vadd.f32 %v2876, %v2988
        %v2990 = vpop.f32.mrb[0].mxu0
        %v2991 = vadd.f32 %v2878, %v2990
        %v2992 = vpop.f32.mrb[0].mxu0
        %v2993 = vadd.f32 %v2880, %v2992
        %v2994 = vpop.f32.mrb[0].mxu0
        %v2995 = vadd.f32 %v2882, %v2994
        %2996 = vmatprep.mubr.bf16.mxu0 0
        %2997 = vmatmul.mubr.bf16.gmra.mrb[0].mxu0 %v2129
        %v2998 = vpop.f32.mrb[0].mxu0
        %v2999 = vadd.f32 %v2886, %v2998
        %v3000 = vpop.f32.mrb[0].mxu0
        %v3001 = vadd.f32 %v2888, %v3000
        %v3002 = vpop.f32.mrb[0].mxu0
        %v3003 = vadd.f32 %v2890, %v3002
        %v3004 = vpop.f32.mrb[0].mxu0
        %v3005 = vadd.f32 %v2892, %v3004
        %3006 = vmatprep.mubr.bf16.mxu0 0
        %3007 = vmatmul.mubr.bf16.gmra.mrb[0].mxu0 %v2132
        %v3008 = vpop.f32.mrb[0].mxu0
        %v3009 = vadd.f32 %v2896, %v3008
        %v3010 = vpop.f32.mrb[0].mxu0
        %v3011 = vadd.f32 %v2898, %v3010
        %v3012 = vpop.f32.mrb[0].mxu0
        %v3013 = vadd.f32 %v2900, %v3012
        %v3014 = vpop.f32.mrb[0].mxu0
        %v3015 = vadd.f32 %v2902, %v3014
        %3016 = vmatprep.mubr.bf16.mxu0 0
        %3017 = vmatmul.mubr.bf16.gmra.mrb[0].mxu0 %v2135
        %v3018 = vpop.f32.mrb[0].mxu0
        %v3019 = vadd.f32 %v2906, %v3018
        %v3020 = vpop.f32.mrb[0].mxu0
        %v3021 = vadd.f32 %v2908, %v3020
        %v3022 = vpop.f32.mrb[0].mxu0
        %v3023 = vadd.f32 %v2910, %v3022
        %v3024 = vpop.f32.mrb[0].mxu0
        %v3025 = vadd.f32 %v2912, %v3024
        %3026 = vmatprep.mubr.bf16.mxu0 0
        %3027 = vmatmul.mubr.bf16.gmra.mrb[0].mxu0 %v2138
        %v3028 = vpop.f32.mrb[0].mxu0
        %v3029 = vadd.f32 %v2916, %v3028
        %v3030 = vpop.f32.mrb[0].mxu0
        %v3031 = vadd.f32 %v2918, %v3030
        %v3032 = vpop.f32.mrb[0].mxu0
        %v3033 = vadd.f32 %v2920, %v3032
        %v3034 = vpop.f32.mrb[0].mxu0
        %v3035 = vadd.f32 %v2922, %v3034
        %3036 = vmatprep.mubr.bf16.mxu0 0
        %3037 = vmatmul.mubr.bf16.gmra.mrb[0].mxu0 %v2141
        %v3038 = vpop.f32.mrb[0].mxu0
        %v3039 = vadd.f32 %v2926, %v3038
        %v3040 = vpop.f32.mrb[0].mxu0
        %v3041 = vadd.f32 %v2928, %v3040
        %v3042 = vpop.f32.mrb[0].mxu0
        %v3043 = vadd.f32 %v2930, %v3042
        %v3044 = vpop.f32.mrb[0].mxu0
        %v3045 = vadd.f32 %v2932, %v3044
        %3046 = vdwg.mxu0
        %3047 = vmatprep.subr.bf16.mxu0 0
        %3048 = vmatpush1.bf16.msra.mxu0 %v1632
        %3049 = vmatprep.subr.bf16.mxu0 0
        %3050 = vmatpush1.bf16.msra.mxu0 %v1637
        %3051 = vmatprep.subr.bf16.mxu0 0
        %3052 = vmatpush1.bf16.msra.mxu0 %v1642
        %3053 = vmatprep.subr.bf16.mxu0 0
        %3054 = vmatpush1.bf16.msra.mxu0 %v1647
        %3055 = vmatprep.subr.bf16.mxu0 0
        %3056 = vmatpush1.bf16.msra.mxu0 %v1652
        %3057 = vmatprep.subr.bf16.mxu0 0
        %3058 = vmatpush1.bf16.msra.mxu0 %v1657
        %3059 = vmatprep.subr.bf16.mxu0 0
        %3060 = vmatpush1.bf16.msra.mxu0 %v1662
        %3061 = vmatprep.subr.bf16.mxu0 0
        %3062 = vmatpush1.bf16.msra.mxu0 %v1667
        %3063 = vmatprep.subr.bf16.mxu0 0
        %3064 = vmatpush1.bf16.msra.mxu0 %v1672
        %3065 = vmatprep.subr.bf16.mxu0 0
        %3066 = vmatpush1.bf16.msra.mxu0 %v1677
        %3067 = vmatprep.subr.bf16.mxu0 0
        %3068 = vmatpush1.bf16.msra.mxu0 %v1682
        %3069 = vmatprep.subr.bf16.mxu0 0
        %3070 = vmatpush1.bf16.msra.mxu0 %v1687
        %3071 = vmatprep.subr.bf16.mxu0 0
        %3072 = vmatpush1.bf16.msra.mxu0 %v1692
        %3073 = vmatprep.subr.bf16.mxu0 0
        %3074 = vmatpush1.bf16.msra.mxu0 %v1697
        %3075 = vmatprep.subr.bf16.mxu0 0
        %3076 = vmatpush1.bf16.msra.mxu0 %v1702
        %3077 = vmatprep.subr.bf16.mxu0 0
        %3078 = vmatpush1.bf16.msra.mxu0 %v1707
        %3079 = vmatprep.mubr.bf16.mxu0 %v468
        %3080 = vmatmul.mubr.bf16.gmra.mrb[0].mxu0 %v467
        %v3081 = vpop.f32.mrb[0].mxu0
        %v3082 = vadd.f32 %v838, %v3081
        %v3083 = vpop.f32.mrb[0].mxu0
        %v3084 = vpop.f32.mrb[0].mxu0
        %v3085 = vadd.f32 %v838, %v3084
        %v3086 = vpop.f32.mrb[0].mxu0
        %3087 = vmatprep.mubr.bf16.mxu0 %v475
        %3088 = vmatmul.mubr.bf16.gmra.mrb[0].mxu0 %v474
        %v3089 = vpop.f32.mrb[0].mxu0
        %v3090 = vadd.f32 %v838, %v3089
        %v3091 = vpop.f32.mrb[0].mxu0
        %v3092 = vpop.f32.mrb[0].mxu0
        %v3093 = vadd.f32 %v838, %v3092
        %v3094 = vpop.f32.mrb[0].mxu0
        %3095 = vmatprep.mubr.bf16.mxu0 %v482
        %3096 = vmatmul.mubr.bf16.gmra.mrb[0].mxu0 %v481
        %v3097 = vpop.f32.mrb[0].mxu0
        %v3098 = vadd.f32 %v838, %v3097
        %v3099 = vpop.f32.mrb[0].mxu0
        %v3100 = vpop.f32.mrb[0].mxu0
        %v3101 = vadd.f32 %v838, %v3100
        %v3102 = vpop.f32.mrb[0].mxu0
        %3103 = vmatprep.mubr.bf16.mxu0 %v489
        %3104 = vmatmul.mubr.bf16.gmra.mrb[0].mxu0 %v488
        %v3105 = vpop.f32.mrb[0].mxu0
        %v3106 = vadd.f32 %v838, %v3105
        %v3107 = vpop.f32.mrb[0].mxu0
        %v3108 = vpop.f32.mrb[0].mxu0
        %v3109 = vadd.f32 %v838, %v3108
        %v3110 = vpop.f32.mrb[0].mxu0
        %3111 = vmatprep.mubr.bf16.mxu0 %v496
        %3112 = vmatmul.mubr.bf16.gmra.mrb[0].mxu0 %v495
        %v3113 = vpop.f32.mrb[0].mxu0
        %v3114 = vadd.f32 %v838, %v3113
        %v3115 = vpop.f32.mrb[0].mxu0
        %v3116 = vpop.f32.mrb[0].mxu0
        %v3117 = vadd.f32 %v838, %v3116
        %v3118 = vpop.f32.mrb[0].mxu0
        %3119 = vmatprep.mubr.bf16.mxu0 %v503
        %3120 = vmatmul.mubr.bf16.gmra.mrb[0].mxu0 %v502
        %v3121 = vpop.f32.mrb[0].mxu0
        %v3122 = vadd.f32 %v838, %v3121
        %v3123 = vpop.f32.mrb[0].mxu0
        %v3124 = vpop.f32.mrb[0].mxu0
        %v3125 = vadd.f32 %v838, %v3124
        %v3126 = vpop.f32.mrb[0].mxu0
        %3127 = vmatprep.mubr.bf16.mxu0 %v510
        %3128 = vmatmul.mubr.bf16.gmra.mrb[0].mxu0 %v509
        %v3129 = vpop.f32.mrb[0].mxu0
        %v3130 = vadd.f32 %v838, %v3129
        %v3131 = vpop.f32.mrb[0].mxu0
        %v3132 = vpop.f32.mrb[0].mxu0
        %v3133 = vadd.f32 %v838, %v3132
        %v3134 = vpop.f32.mrb[0].mxu0
        %3135 = vmatprep.mubr.bf16.mxu0 %v517
        %3136 = vmatmul.mubr.bf16.gmra.mrb[0].mxu0 %v516
        %v3137 = vpop.f32.mrb[0].mxu0
        %v3138 = vadd.f32 %v838, %v3137
        %v3139 = vpop.f32.mrb[0].mxu0
        %v3140 = vpop.f32.mrb[0].mxu0
        %v3141 = vadd.f32 %v838, %v3140
        %v3142 = vpop.f32.mrb[0].mxu0
        %3143 = vdwg.mxu0
        %3144 = vmatprep.subr.bf16.mxu0 0
        %3145 = vmatpush1.bf16.msra.mxu0 %v1712
        %3146 = vmatprep.subr.bf16.mxu0 0
        %3147 = vmatpush1.bf16.msra.mxu0 %v1717
        %3148 = vmatprep.subr.bf16.mxu0 0
        %3149 = vmatpush1.bf16.msra.mxu0 %v1722
        %3150 = vmatprep.subr.bf16.mxu0 0
        %3151 = vmatpush1.bf16.msra.mxu0 %v1727
        %3152 = vmatprep.subr.bf16.mxu0 0
        %3153 = vmatpush1.bf16.msra.mxu0 %v1732
        %3154 = vmatprep.subr.bf16.mxu0 0
        %3155 = vmatpush1.bf16.msra.mxu0 %v1737
        %3156 = vmatprep.subr.bf16.mxu0 0
        %3157 = vmatpush1.bf16.msra.mxu0 %v1742
        %3158 = vmatprep.subr.bf16.mxu0 0
        %3159 = vmatpush1.bf16.msra.mxu0 %v1747
        %3160 = vmatprep.subr.bf16.mxu0 0
        %3161 = vmatpush1.bf16.msra.mxu0 %v1752
        %3162 = vmatprep.subr.bf16.mxu0 0
        %3163 = vmatpush1.bf16.msra.mxu0 %v1757
        %3164 = vmatprep.subr.bf16.mxu0 0
        %3165 = vmatpush1.bf16.msra.mxu0 %v1762
        %3166 = vmatprep.subr.bf16.mxu0 0
        %3167 = vmatpush1.bf16.msra.mxu0 %v1767
        %3168 = vmatprep.subr.bf16.mxu0 0
        %3169 = vmatpush1.bf16.msra.mxu0 %v1772
        %3170 = vmatprep.subr.bf16.mxu0 0
        %3171 = vmatpush1.bf16.msra.mxu0 %v1777
        %3172 = vmatprep.subr.bf16.mxu0 0
        %3173 = vmatpush1.bf16.msra.mxu0 %v1782
        %3174 = vmatprep.subr.bf16.mxu0 0
        %3175 = vmatpush1.bf16.msra.mxu0 %v1787
        %3176 = vmatprep.mubr.bf16.mxu0 %v470
        %3177 = vmatmul.mubr.bf16.gmra.mrb[0].mxu0 %v469
        %v3178 = vpop.f32.mrb[0].mxu0
        %v3179 = vadd.f32 %v3082, %v3178
        %v3180 = vpop.f32.mrb[0].mxu0
        %v3181 = vpop.f32.mrb[0].mxu0
        %v3182 = vadd.f32 %v3085, %v3181
        %v3183 = vpop.f32.mrb[0].mxu0
        %3184 = vmatprep.mubr.bf16.mxu0 %v477
        %3185 = vmatmul.mubr.bf16.gmra.mrb[0].mxu0 %v476
        %v3186 = vpop.f32.mrb[0].mxu0
        %v3187 = vadd.f32 %v3090, %v3186
        %v3188 = vpop.f32.mrb[0].mxu0
        %v3189 = vpop.f32.mrb[0].mxu0
        %v3190 = vadd.f32 %v3093, %v3189
        %v3191 = vpop.f32.mrb[0].mxu0
        %3192 = vmatprep.mubr.bf16.mxu0 %v484
        %3193 = vmatmul.mubr.bf16.gmra.mrb[0].mxu0 %v483
        %v3194 = vpop.f32.mrb[0].mxu0
        %v3195 = vadd.f32 %v3098, %v3194
        %v3196 = vpop.f32.mrb[0].mxu0
        %v3197 = vpop.f32.mrb[0].mxu0
        %v3198 = vadd.f32 %v3101, %v3197
        %v3199 = vpop.f32.mrb[0].mxu0
        %3200 = vmatprep.mubr.bf16.mxu0 %v491
        %3201 = vmatmul.mubr.bf16.gmra.mrb[0].mxu0 %v490
        %v3202 = vpop.f32.mrb[0].mxu0
        %v3203 = vadd.f32 %v3106, %v3202
        %v3204 = vpop.f32.mrb[0].mxu0
        %v3205 = vpop.f32.mrb[0].mxu0
        %v3206 = vadd.f32 %v3109, %v3205
        %v3207 = vpop.f32.mrb[0].mxu0
        %3208 = vmatprep.mubr.bf16.mxu0 %v498
        %3209 = vmatmul.mubr.bf16.gmra.mrb[0].mxu0 %v497
        %v3210 = vpop.f32.mrb[0].mxu0
        %v3211 = vadd.f32 %v3114, %v3210
        %v3212 = vpop.f32.mrb[0].mxu0
        %v3213 = vpop.f32.mrb[0].mxu0
        %v3214 = vadd.f32 %v3117, %v3213
        %v3215 = vpop.f32.mrb[0].mxu0
        %3216 = vmatprep.mubr.bf16.mxu0 %v505
        %3217 = vmatmul.mubr.bf16.gmra.mrb[0].mxu0 %v504
        %v3218 = vpop.f32.mrb[0].mxu0
        %v3219 = vadd.f32 %v3122, %v3218
        %v3220 = vpop.f32.mrb[0].mxu0
        %v3221 = vpop.f32.mrb[0].mxu0
        %v3222 = vadd.f32 %v3125, %v3221
        %v3223 = vpop.f32.mrb[0].mxu0
        %3224 = vmatprep.mubr.bf16.mxu0 %v512
        %3225 = vmatmul.mubr.bf16.gmra.mrb[0].mxu0 %v511
        %v3226 = vpop.f32.mrb[0].mxu0
        %v3227 = vadd.f32 %v3130, %v3226
        %v3228 = vpop.f32.mrb[0].mxu0
        %v3229 = vpop.f32.mrb[0].mxu0
        %v3230 = vadd.f32 %v3133, %v3229
        %v3231 = vpop.f32.mrb[0].mxu0
        %3232 = vmatprep.mubr.bf16.mxu0 %v519
        %3233 = vmatmul.mubr.bf16.gmra.mrb[0].mxu0 %v518
        %v3234 = vpop.f32.mrb[0].mxu0
        %v3235 = vadd.f32 %v3138, %v3234
        %v3236 = vpop.f32.mrb[0].mxu0
        %v3237 = vpop.f32.mrb[0].mxu0
        %v3238 = vadd.f32 %v3141, %v3237
        %v3239 = vpop.f32.mrb[0].mxu0
        %3240 = vdwg.mxu0
        %3241 = vmatprep.subr.bf16.mxu0 0
        %3242 = vmatpush1.bf16.msra.mxu0 %v1792
        %3243 = vmatprep.subr.bf16.mxu0 0
        %3244 = vmatpush1.bf16.msra.mxu0 %v1797
        %3245 = vmatprep.subr.bf16.mxu0 0
        %3246 = vmatpush1.bf16.msra.mxu0 %v1802
        %3247 = vmatprep.subr.bf16.mxu0 0
        %3248 = vmatpush1.bf16.msra.mxu0 %v1807
        %3249 = vmatprep.subr.bf16.mxu0 0
        %3250 = vmatpush1.bf16.msra.mxu0 %v1812
        %3251 = vmatprep.subr.bf16.mxu0 0
        %3252 = vmatpush1.bf16.msra.mxu0 %v1817
        %3253 = vmatprep.subr.bf16.mxu0 0
        %3254 = vmatpush1.bf16.msra.mxu0 %v1822
        %3255 = vmatprep.subr.bf16.mxu0 0
        %3256 = vmatpush1.bf16.msra.mxu0 %v1827
        %3257 = vmatprep.subr.bf16.mxu0 0
        %3258 = vmatpush1.bf16.msra.mxu0 %v1832
        %3259 = vmatprep.subr.bf16.mxu0 0
        %3260 = vmatpush1.bf16.msra.mxu0 %v1837
        %3261 = vmatprep.subr.bf16.mxu0 0
        %3262 = vmatpush1.bf16.msra.mxu0 %v1842
        %3263 = vmatprep.subr.bf16.mxu0 0
        %3264 = vmatpush1.bf16.msra.mxu0 %v1847
        %3265 = vmatprep.subr.bf16.mxu0 0
        %3266 = vmatpush1.bf16.msra.mxu0 %v1852
        %3267 = vmatprep.subr.bf16.mxu0 0
        %3268 = vmatpush1.bf16.msra.mxu0 %v1857
        %3269 = vmatprep.subr.bf16.mxu0 0
        %3270 = vmatpush1.bf16.msra.mxu0 %v1862
        %3271 = vmatprep.subr.bf16.mxu0 0
        %3272 = vmatpush1.bf16.msra.mxu0 %v1867
        %3273 = vmatprep.mubr.bf16.mxu0 %v472
        %3274 = vmatmul.mubr.bf16.gmra.mrb[0].mxu0 %v471
        %v3275 = vpop.f32.mrb[0].mxu0
        %v3276 = vadd.f32 %v3179, %v3275
        %v3277 = vpop.f32.mrb[0].mxu0
        %v3278 = vpop.f32.mrb[0].mxu0
        %v3279 = vadd.f32 %v3182, %v3278
        %v3280 = vpop.f32.mrb[0].mxu0
        %3281 = vmatprep.mubr.bf16.mxu0 %v479
        %3282 = vmatmul.mubr.bf16.gmra.mrb[0].mxu0 %v478
        %v3283 = vpop.f32.mrb[0].mxu0
        %v3284 = vadd.f32 %v3187, %v3283
        %v3285 = vpop.f32.mrb[0].mxu0
        %v3286 = vpop.f32.mrb[0].mxu0
        %v3287 = vadd.f32 %v3190, %v3286
        %v3288 = vpop.f32.mrb[0].mxu0
        %3289 = vmatprep.mubr.bf16.mxu0 %v486
        %3290 = vmatmul.mubr.bf16.gmra.mrb[0].mxu0 %v485
        %v3291 = vpop.f32.mrb[0].mxu0
        %v3292 = vadd.f32 %v3195, %v3291
        %v3293 = vpop.f32.mrb[0].mxu0
        %v3294 = vpop.f32.mrb[0].mxu0
        %v3295 = vadd.f32 %v3198, %v3294
        %v3296 = vpop.f32.mrb[0].mxu0
        %3297 = vmatprep.mubr.bf16.mxu0 %v493
        %3298 = vmatmul.mubr.bf16.gmra.mrb[0].mxu0 %v492
        %v3299 = vpop.f32.mrb[0].mxu0
        %v3300 = vadd.f32 %v3203, %v3299
        %v3301 = vpop.f32.mrb[0].mxu0
        %v3302 = vpop.f32.mrb[0].mxu0
        %v3303 = vadd.f32 %v3206, %v3302
        %v3304 = vpop.f32.mrb[0].mxu0
        %3305 = vmatprep.mubr.bf16.mxu0 %v500
        %3306 = vmatmul.mubr.bf16.gmra.mrb[0].mxu0 %v499
        %v3307 = vpop.f32.mrb[0].mxu0
        %v3308 = vadd.f32 %v3211, %v3307
        %v3309 = vpop.f32.mrb[0].mxu0
        %v3310 = vpop.f32.mrb[0].mxu0
        %v3311 = vadd.f32 %v3214, %v3310
        %v3312 = vpop.f32.mrb[0].mxu0
        %3313 = vmatprep.mubr.bf16.mxu0 %v507
        %3314 = vmatmul.mubr.bf16.gmra.mrb[0].mxu0 %v506
        %v3315 = vpop.f32.mrb[0].mxu0
        %v3316 = vadd.f32 %v3219, %v3315
        %v3317 = vpop.f32.mrb[0].mxu0
        %v3318 = vpop.f32.mrb[0].mxu0
        %v3319 = vadd.f32 %v3222, %v3318
        %v3320 = vpop.f32.mrb[0].mxu0
        %3321 = vmatprep.mubr.bf16.mxu0 %v514
        %3322 = vmatmul.mubr.bf16.gmra.mrb[0].mxu0 %v513
        %v3323 = vpop.f32.mrb[0].mxu0
        %v3324 = vadd.f32 %v3227, %v3323
        %v3325 = vpop.f32.mrb[0].mxu0
        %v3326 = vpop.f32.mrb[0].mxu0
        %v3327 = vadd.f32 %v3230, %v3326
        %v3328 = vpop.f32.mrb[0].mxu0
        %3329 = vmatprep.mubr.bf16.mxu0 %v521
        %3330 = vmatmul.mubr.bf16.gmra.mrb[0].mxu0 %v520
        %v3331 = vpop.f32.mrb[0].mxu0
        %v3332 = vadd.f32 %v3235, %v3331
        %v3333 = vpop.f32.mrb[0].mxu0
        %v3334 = vpop.f32.mrb[0].mxu0
        %v3335 = vadd.f32 %v3238, %v3334
        %v3336 = vpop.f32.mrb[0].mxu0
        %3337 = vdwg.mxu0
        %3338 = vmatprep.subr.bf16.mxu0 0
        %3339 = vmatpush1.bf16.msra.mxu0 %v1872
        %3340 = vmatprep.subr.bf16.mxu0 0
        %3341 = vmatpush1.bf16.msra.mxu0 0
        %3342 = vmatprep.subr.bf16.mxu0 0
        %3343 = vmatpush1.bf16.msra.mxu0 0
        %3344 = vmatprep.subr.bf16.mxu0 0
        %3345 = vmatpush1.bf16.msra.mxu0 0
        %3346 = vmatprep.subr.bf16.mxu0 0
        %3347 = vmatpush1.bf16.msra.mxu0 0
        %3348 = vmatprep.subr.bf16.mxu0 0
        %3349 = vmatpush1.bf16.msra.mxu0 0
        %3350 = vmatprep.subr.bf16.mxu0 0
        %3351 = vmatpush1.bf16.msra.mxu0 0
        %3352 = vmatprep.subr.bf16.mxu0 0
        %3353 = vmatpush1.bf16.msra.mxu0 0
        %3354 = vmatprep.subr.bf16.mxu0 0
        %3355 = vmatpush1.bf16.msra.mxu0 0
        %3356 = vmatprep.subr.bf16.mxu0 0
        %3357 = vmatpush1.bf16.msra.mxu0 0
        %3358 = vmatprep.subr.bf16.mxu0 0
        %3359 = vmatpush1.bf16.msra.mxu0 0
        %3360 = vmatprep.subr.bf16.mxu0 0
        %3361 = vmatpush1.bf16.msra.mxu0 0
        %3362 = vmatprep.subr.bf16.mxu0 0
        %3363 = vmatpush1.bf16.msra.mxu0 0
        %3364 = vmatprep.subr.bf16.mxu0 0
        %3365 = vmatpush1.bf16.msra.mxu0 0
        %3366 = vmatprep.subr.bf16.mxu0 0
        %3367 = vmatpush1.bf16.msra.mxu0 0
        %3368 = vmatprep.subr.bf16.mxu0 0
        %3369 = vmatpush1.bf16.msra.mxu0 0
        %3370 = vmatprep.mubr.bf16.mxu0 0
        %3371 = vmatmul.mubr.bf16.gmra.mrb[0].mxu0 %v2120
        %v3372 = vpop.f32.mrb[0].mxu0
        %v3373 = vadd.f32 %v3276, %v3372
        %v3374 = vpop.f32.mrb[0].mxu0
        %v3375 = vpop.f32.mrb[0].mxu0
        %v3376 = vadd.f32 %v3279, %v3375
        %v3377 = vpop.f32.mrb[0].mxu0
        %3378 = vmatprep.mubr.bf16.mxu0 0
        %3379 = vmatmul.mubr.bf16.gmra.mrb[0].mxu0 %v2123
        %v3380 = vpop.f32.mrb[0].mxu0
        %v3381 = vadd.f32 %v3284, %v3380
        %v3382 = vpop.f32.mrb[0].mxu0
        %v3383 = vpop.f32.mrb[0].mxu0
        %v3384 = vadd.f32 %v3287, %v3383
        %v3385 = vpop.f32.mrb[0].mxu0
        %3386 = vmatprep.mubr.bf16.mxu0 0
        %3387 = vmatmul.mubr.bf16.gmra.mrb[0].mxu0 %v2126
        %v3388 = vpop.f32.mrb[0].mxu0
        %v3389 = vadd.f32 %v3292, %v3388
        %v3390 = vpop.f32.mrb[0].mxu0
        %v3391 = vpop.f32.mrb[0].mxu0
        %v3392 = vadd.f32 %v3295, %v3391
        %v3393 = vpop.f32.mrb[0].mxu0
        %3394 = vmatprep.mubr.bf16.mxu0 0
        %3395 = vmatmul.mubr.bf16.gmra.mrb[0].mxu0 %v2129
        %v3396 = vpop.f32.mrb[0].mxu0
        %v3397 = vadd.f32 %v3300, %v3396
        %v3398 = vpop.f32.mrb[0].mxu0
        %v3399 = vpop.f32.mrb[0].mxu0
        %v3400 = vadd.f32 %v3303, %v3399
        %v3401 = vpop.f32.mrb[0].mxu0
        %3402 = vmatprep.mubr.bf16.mxu0 0
        %3403 = vmatmul.mubr.bf16.gmra.mrb[0].mxu0 %v2132
        %v3404 = vpop.f32.mrb[0].mxu0
        %v3405 = vadd.f32 %v3308, %v3404
        %v3406 = vpop.f32.mrb[0].mxu0
        %v3407 = vpop.f32.mrb[0].mxu0
        %v3408 = vadd.f32 %v3311, %v3407
        %v3409 = vpop.f32.mrb[0].mxu0
        %3410 = vmatprep.mubr.bf16.mxu0 0
        %3411 = vmatmul.mubr.bf16.gmra.mrb[0].mxu0 %v2135
        %v3412 = vpop.f32.mrb[0].mxu0
        %v3413 = vadd.f32 %v3316, %v3412
        %v3414 = vpop.f32.mrb[0].mxu0
        %v3415 = vpop.f32.mrb[0].mxu0
        %v3416 = vadd.f32 %v3319, %v3415
        %v3417 = vpop.f32.mrb[0].mxu0
        %3418 = vmatprep.mubr.bf16.mxu0 0
        %3419 = vmatmul.mubr.bf16.gmra.mrb[0].mxu0 %v2138
        %v3420 = vpop.f32.mrb[0].mxu0
        %v3421 = vadd.f32 %v3324, %v3420
        %v3422 = vpop.f32.mrb[0].mxu0
        %v3423 = vpop.f32.mrb[0].mxu0
        %v3424 = vadd.f32 %v3327, %v3423
        %v3425 = vpop.f32.mrb[0].mxu0
        %3426 = vmatprep.mubr.bf16.mxu0 0
        %3427 = vmatmul.mubr.bf16.gmra.mrb[0].mxu0 %v2141
        %v3428 = vpop.f32.mrb[0].mxu0
        %v3429 = vadd.f32 %v3332, %v3428
        %v3430 = vpop.f32.mrb[0].mxu0
        %v3431 = vpop.f32.mrb[0].mxu0
        %v3432 = vadd.f32 %v3335, %v3431
        %v3433 = vpop.f32.mrb[0].mxu0
        %3434 = vdwg.mxu0
        %v3435 = vmul.f32 %v2517, 0.01
        %v3436 = vmul.f32 %v2519, 0.01
        %v3437 = vmul.f32 %v2969, 0.01
        %v3438 = vmul.f32 %v2971, 0.01
        %v3439 = vmul.f32 %v3373, 0.01
        %v3440 = vmul.f32 %v2521, 0.01
        %v3441 = vmul.f32 %v2523, 0.01
        %v3442 = vmul.f32 %v2973, 0.01
        %v3443 = vmul.f32 %v2975, 0.01
        %v3444 = vmul.f32 %v3376, 0.01
        %v3445 = vmul.f32 %v2527, 0.01
        %v3446 = vmul.f32 %v2529, 0.01
        %v3447 = vmul.f32 %v2979, 0.01
        %v3448 = vmul.f32 %v2981, 0.01
        %v3449 = vmul.f32 %v3381, 0.01
        %v3450 = vmul.f32 %v2531, 0.01
        %v3451 = vmul.f32 %v2533, 0.01
        %v3452 = vmul.f32 %v2983, 0.01
        %v3453 = vmul.f32 %v2985, 0.01
        %v3454 = vmul.f32 %v3384, 0.01
        %v3455 = vmul.f32 %v2537, 0.01
        %v3456 = vmul.f32 %v2539, 0.01
        %v3457 = vmul.f32 %v2989, 0.01
        %v3458 = vmul.f32 %v2991, 0.01
        %v3459 = vmul.f32 %v3389, 0.01
        %v3460 = vmul.f32 %v2541, 0.01
        %v3461 = vmul.f32 %v2543, 0.01
        %v3462 = vmul.f32 %v2993, 0.01
        %v3463 = vmul.f32 %v2995, 0.01
        %v3464 = vmul.f32 %v3392, 0.01
        %v3465 = vmul.f32 %v2547, 0.01
        %v3466 = vmul.f32 %v2549, 0.01
        %v3467 = vmul.f32 %v2999, 0.01
        %v3468 = vmul.f32 %v3001, 0.01
        %v3469 = vmul.f32 %v3397, 0.01
        %v3470 = vmul.f32 %v2551, 0.01
        %v3471 = vmul.f32 %v2553, 0.01
        %v3472 = vmul.f32 %v3003, 0.01
        %v3473 = vmul.f32 %v3005, 0.01
        %v3474 = vmul.f32 %v3400, 0.01
        %v3475 = vmul.f32 %v2557, 0.01
        %v3476 = vmul.f32 %v2559, 0.01
        %v3477 = vmul.f32 %v3009, 0.01
        %v3478 = vmul.f32 %v3011, 0.01
        %v3479 = vmul.f32 %v3405, 0.01
        %v3480 = vmul.f32 %v2561, 0.01
        %v3481 = vmul.f32 %v2563, 0.01
        %v3482 = vmul.f32 %v3013, 0.01
        %v3483 = vmul.f32 %v3015, 0.01
        %v3484 = vmul.f32 %v3408, 0.01
        %v3485 = vmul.f32 %v2567, 0.01
        %v3486 = vmul.f32 %v2569, 0.01
        %v3487 = vmul.f32 %v3019, 0.01
        %v3488 = vmul.f32 %v3021, 0.01
        %v3489 = vmul.f32 %v3413, 0.01
        %v3490 = vmul.f32 %v2571, 0.01
        %v3491 = vmul.f32 %v2573, 0.01
        %v3492 = vmul.f32 %v3023, 0.01
        %v3493 = vmul.f32 %v3025, 0.01
        %v3494 = vmul.f32 %v3416, 0.01
        %v3495 = vmul.f32 %v2577, 0.01
        %v3496 = vmul.f32 %v2579, 0.01
        %v3497 = vmul.f32 %v3029, 0.01
        %v3498 = vmul.f32 %v3031, 0.01
        %v3499 = vmul.f32 %v3421, 0.01
        %v3500 = vmul.f32 %v2581, 0.01
        %v3501 = vmul.f32 %v2583, 0.01
        %v3502 = vmul.f32 %v3033, 0.01
        %v3503 = vmul.f32 %v3035, 0.01
        %v3504 = vmul.f32 %v3424, 0.01
        %v3505 = vmul.f32 %v2587, 0.01
        %v3506 = vmul.f32 %v2589, 0.01
        %v3507 = vmul.f32 %v3039, 0.01
        %v3508 = vmul.f32 %v3041, 0.01
        %v3509 = vmul.f32 %v3429, 0.01
        %v3510 = vmul.f32 %v2591, 0.01
        %v3511 = vmul.f32 %v2593, 0.01
        %v3512 = vmul.f32 %v3043, 0.01
        %v3513 = vmul.f32 %v3045, 0.01
        %v3514 = vmul.f32 %v3432, 0.01
        %v3515 = vmax.f32 %v2517, %v3435
        %v3516 = vmax.f32 %v2519, %v3436
        %v3517 = vmax.f32 %v2969, %v3437
        %v3518 = vmax.f32 %v2971, %v3438
        %v3519 = vmax.f32 %v3373, %v3439
        %v3520 = vmax.f32 %v2521, %v3440
        %v3521 = vmax.f32 %v2523, %v3441
        %v3522 = vmax.f32 %v2973, %v3442
        %v3523 = vmax.f32 %v2975, %v3443
        %v3524 = vmax.f32 %v3376, %v3444
        %v3525 = vmax.f32 %v2527, %v3445
        %v3526 = vmax.f32 %v2529, %v3446
        %v3527 = vmax.f32 %v2979, %v3447
        %v3528 = vmax.f32 %v2981, %v3448
        %v3529 = vmax.f32 %v3381, %v3449
        %v3530 = vmax.f32 %v2531, %v3450
        %v3531 = vmax.f32 %v2533, %v3451
        %v3532 = vmax.f32 %v2983, %v3452
        %v3533 = vmax.f32 %v2985, %v3453
        %v3534 = vmax.f32 %v3384, %v3454
        %v3535 = vmax.f32 %v2537, %v3455
        %v3536 = vmax.f32 %v2539, %v3456
        %v3537 = vmax.f32 %v2989, %v3457
        %v3538 = vmax.f32 %v2991, %v3458
        %v3539 = vmax.f32 %v3389, %v3459
        %v3540 = vmax.f32 %v2541, %v3460
        %v3541 = vmax.f32 %v2543, %v3461
        %v3542 = vmax.f32 %v2993, %v3462
        %v3543 = vmax.f32 %v2995, %v3463
        %v3544 = vmax.f32 %v3392, %v3464
        %v3545 = vmax.f32 %v2547, %v3465
        %v3546 = vmax.f32 %v2549, %v3466
        %v3547 = vmax.f32 %v2999, %v3467
        %v3548 = vmax.f32 %v3001, %v3468
        %v3549 = vmax.f32 %v3397, %v3469
        %v3550 = vmax.f32 %v2551, %v3470
        %v3551 = vmax.f32 %v2553, %v3471
        %v3552 = vmax.f32 %v3003, %v3472
        %v3553 = vmax.f32 %v3005, %v3473
        %v3554 = vmax.f32 %v3400, %v3474
        %v3555 = vmax.f32 %v2557, %v3475
        %v3556 = vmax.f32 %v2559, %v3476
        %v3557 = vmax.f32 %v3009, %v3477
        %v3558 = vmax.f32 %v3011, %v3478
        %v3559 = vmax.f32 %v3405, %v3479
        %v3560 = vmax.f32 %v2561, %v3480
        %v3561 = vmax.f32 %v2563, %v3481
        %v3562 = vmax.f32 %v3013, %v3482
        %v3563 = vmax.f32 %v3015, %v3483
        %v3564 = vmax.f32 %v3408, %v3484
        %v3565 = vmax.f32 %v2567, %v3485
        %v3566 = vmax.f32 %v2569, %v3486
        %v3567 = vmax.f32 %v3019, %v3487
        %v3568 = vmax.f32 %v3021, %v3488
        %v3569 = vmax.f32 %v3413, %v3489
        %v3570 = vmax.f32 %v2571, %v3490
        %v3571 = vmax.f32 %v2573, %v3491
        %v3572 = vmax.f32 %v3023, %v3492
        %v3573 = vmax.f32 %v3025, %v3493
        %v3574 = vmax.f32 %v3416, %v3494
        %v3575 = vmax.f32 %v2577, %v3495
        %v3576 = vmax.f32 %v2579, %v3496
        %v3577 = vmax.f32 %v3029, %v3497
        %v3578 = vmax.f32 %v3031, %v3498
        %v3579 = vmax.f32 %v3421, %v3499
        %v3580 = vmax.f32 %v2581, %v3500
        %v3581 = vmax.f32 %v2583, %v3501
        %v3582 = vmax.f32 %v3033, %v3502
        %v3583 = vmax.f32 %v3035, %v3503
        %v3584 = vmax.f32 %v3424, %v3504
        %v3585 = vmax.f32 %v2587, %v3505
        %v3586 = vmax.f32 %v2589, %v3506
        %v3587 = vmax.f32 %v3039, %v3507
        %v3588 = vmax.f32 %v3041, %v3508
        %v3589 = vmax.f32 %v3429, %v3509
        %v3590 = vmax.f32 %v2591, %v3510
        %v3591 = vmax.f32 %v2593, %v3511
        %v3592 = vmax.f32 %v3043, %v3512
        %v3593 = vmax.f32 %v3045, %v3513
        %v3594 = vmax.f32 %v3432, %v3514
        %v3595 = vpack.c.bf16 %v3520, %v3515
        %v3596 = vpack.c.bf16 %v3521, %v3516
        %v3597 = vpack.c.bf16 %v3522, %v3517
        %v3598 = vpack.c.bf16 %v3523, %v3518
        %v3599 = vpack.c.bf16 %v3524, %v3519
        %v3600 = vpack.c.bf16 %v3530, %v3525
        %v3601 = vpack.c.bf16 %v3531, %v3526
        %v3602 = vpack.c.bf16 %v3532, %v3527
        %v3603 = vpack.c.bf16 %v3533, %v3528
        %v3604 = vpack.c.bf16 %v3534, %v3529
        %v3605 = vpack.c.bf16 %v3540, %v3535
        %v3606 = vpack.c.bf16 %v3541, %v3536
        %v3607 = vpack.c.bf16 %v3542, %v3537
        %v3608 = vpack.c.bf16 %v3543, %v3538
        %v3609 = vpack.c.bf16 %v3544, %v3539
        %v3610 = vpack.c.bf16 %v3550, %v3545
        %v3611 = vpack.c.bf16 %v3551, %v3546
        %v3612 = vpack.c.bf16 %v3552, %v3547
        %v3613 = vpack.c.bf16 %v3553, %v3548
        %v3614 = vpack.c.bf16 %v3554, %v3549
        %v3615 = vpack.c.bf16 %v3560, %v3555
        %v3616 = vpack.c.bf16 %v3561, %v3556
        %v3617 = vpack.c.bf16 %v3562, %v3557
        %v3618 = vpack.c.bf16 %v3563, %v3558
        %v3619 = vpack.c.bf16 %v3564, %v3559
        %v3620 = vpack.c.bf16 %v3570, %v3565
        %v3621 = vpack.c.bf16 %v3571, %v3566
        %v3622 = vpack.c.bf16 %v3572, %v3567
        %v3623 = vpack.c.bf16 %v3573, %v3568
        %v3624 = vpack.c.bf16 %v3574, %v3569
        %v3625 = vpack.c.bf16 %v3580, %v3575
        %v3626 = vpack.c.bf16 %v3581, %v3576
        %v3627 = vpack.c.bf16 %v3582, %v3577
        %v3628 = vpack.c.bf16 %v3583, %v3578
        %v3629 = vpack.c.bf16 %v3584, %v3579
        %v3630 = vpack.c.bf16 %v3590, %v3585
        %v3631 = vpack.c.bf16 %v3591, %v3586
        %v3632 = vpack.c.bf16 %v3592, %v3587
        %v3633 = vpack.c.bf16 %v3593, %v3588
        %v3634 = vpack.c.bf16 %v3594, %v3589
        %v3635 = vld [vmem:[%s3] sm:$0xff]
        %v3636 = vld [vmem:[%s3 + $0x8] sm:$0xff]
        %v3637 = vld [vmem:[%s3 + $0x10] sm:$0xf]
        %v3638 = vld [vmem:[%s3 + $0x14] sm:$0xff]
        %v3639 = vld [vmem:[%s3 + $0x1c] sm:$0xff]
        %v3640 = vld [vmem:[%s3 + $0x24] sm:$0xf]
        %v3641 = vld [vmem:[%s3 + $0x28] sm:$0xff]
        %v3642 = vld [vmem:[%s3 + $0x30] sm:$0xff]
        %v3643 = vld [vmem:[%s3 + $0x38] sm:$0xf]
        %v3644 = vld [vmem:[%s3 + $0x3c] sm:$0xff]
        %v3645 = vld [vmem:[%s3 + $0x44] sm:$0xff]
        %v3646 = vld [vmem:[%s3 + $0x4c] sm:$0xf]
        %v3647 = vld [vmem:[%s3 + $0x50] sm:$0xff]
        %v3648 = vld [vmem:[%s3 + $0x58] sm:$0xff]
        %v3649 = vld [vmem:[%s3 + $0x60] sm:$0xf]
        %v3650 = vld [vmem:[%s3 + $0x64] sm:$0xff]
        %v3651 = vld [vmem:[%s3 + $0x6c] sm:$0xff]
        %v3652 = vld [vmem:[%s3 + $0x74] sm:$0xf]
        %v3653 = vld [vmem:[%s3 + $0x78] sm:$0xff]
        %v3654 = vld [vmem:[%s3 + $0x80] sm:$0xff]
        %v3655 = vld [vmem:[%s3 + $0x88] sm:$0xf]
        %v3656 = vld [vmem:[%s3 + $0x8c] sm:$0xff]
        %v3657 = vld [vmem:[%s3 + $0x94] sm:$0xff]
        %v3658 = vld [vmem:[%s3 + $0x9c] sm:$0xf]
        %v3659 = vld [vmem:[%s3 + $0xa0] sm:$0xff]
        %v3660 = vld [vmem:[%s3 + $0xa8] sm:$0xff]
        %v3661 = vld [vmem:[%s3 + $0xb0] sm:$0xf]
        %v3662 = vld [vmem:[%s3 + $0xb4] sm:$0xff]
        %v3663 = vld [vmem:[%s3 + $0xbc] sm:$0xff]
        %v3664 = vld [vmem:[%s3 + $0xc4] sm:$0xf]
        %v3665 = vld [vmem:[%s3 + $0xc8] sm:$0xff]
        %v3666 = vld [vmem:[%s3 + $0xd0] sm:$0xff]
        %v3667 = vld [vmem:[%s3 + $0xd8] sm:$0xf]
        %v3668 = vld [vmem:[%s3 + $0xdc] sm:$0xff]
        %v3669 = vld [vmem:[%s3 + $0xe4] sm:$0xff]
        %v3670 = vld [vmem:[%s3 + $0xec] sm:$0xf]
        %v3671 = vld [vmem:[%s3 + $0xf0] sm:$0xff]
        %v3672 = vld [vmem:[%s3 + $0xf8] sm:$0xff]
        %v3673 = vld [vmem:[%s3 + $0x100] sm:$0xf]
        %v3674 = vld [vmem:[%s3 + $0x104] sm:$0xff]
        %v3675 = vld [vmem:[%s3 + $0x10c] sm:$0xff]
        %v3676 = vld [vmem:[%s3 + $0x114] sm:$0xf]
        %v3677 = vld [vmem:[%s3 + $0x118] sm:$0xff]
        %v3678 = vld [vmem:[%s3 + $0x120] sm:$0xff]
        %v3679 = vld [vmem:[%s3 + $0x128] sm:$0xf]
        %v3680 = vld [vmem:[%s3 + $0x12c] sm:$0xff]
        %v3681 = vld [vmem:[%s3 + $0x134] sm:$0xff]
        %v3682 = vld [vmem:[%s3 + $0x13c] sm:$0xf]
        %v3683 = vld [vmem:[%s3 + $0x140] sm:$0xff]
        %v3684 = vld [vmem:[%s3 + $0x148] sm:$0xff]
        %v3685 = vld [vmem:[%s3 + $0x150] sm:$0xf]
        %v3686 = vld [vmem:[%s3 + $0x154] sm:$0xff]
        %v3687 = vld [vmem:[%s3 + $0x15c] sm:$0xff]
        %v3688 = vld [vmem:[%s3 + $0x164] sm:$0xf]
        %v3689 = vld [vmem:[%s3 + $0x168] sm:$0xff]
        %v3690 = vld [vmem:[%s3 + $0x170] sm:$0xff]
        %v3691 = vld [vmem:[%s3 + $0x178] sm:$0xf]
        %v3692 = vld [vmem:[%s3 + $0x17c] sm:$0xff]
        %v3693 = vld [vmem:[%s3 + $0x184] sm:$0xff]
        %v3694 = vld [vmem:[%s3 + $0x18c] sm:$0xf]
        %v3695 = vld [vmem:[%s3 + $0x190] sm:$0xff]
        %v3696 = vld [vmem:[%s3 + $0x198] sm:$0xff]
        %v3697 = vld [vmem:[%s3 + $0x1a0] sm:$0xf]
        %v3698 = vld [vmem:[%s3 + $0x1a4] sm:$0xff]
        %v3699 = vld [vmem:[%s3 + $0x1ac] sm:$0xff]
        %v3700 = vld [vmem:[%s3 + $0x1b4] sm:$0xf]
        %v3701 = vld [vmem:[%s3 + $0x1b8] sm:$0xff]
        %v3702 = vld [vmem:[%s3 + $0x1c0] sm:$0xff]
        %v3703 = vld [vmem:[%s3 + $0x1c8] sm:$0xf]
        %v3704 = vld [vmem:[%s3 + $0x1cc] sm:$0xff]
        %v3705 = vld [vmem:[%s3 + $0x1d4] sm:$0xff]
        %v3706 = vld [vmem:[%s3 + $0x1dc] sm:$0xf]
        %v3707 = vld [vmem:[%s3 + $0x1e0] sm:$0xff]
        %v3708 = vld [vmem:[%s3 + $0x1e8] sm:$0xff]
        %v3709 = vld [vmem:[%s3 + $0x1f0] sm:$0xf]
        %v3710 = vld [vmem:[%s3 + $0x1f4] sm:$0xff]
        %v3711 = vld [vmem:[%s3 + $0x1fc] sm:$0xff]
        %v3712 = vld [vmem:[%s3 + $0x204] sm:$0xf]
        %v3713 = vld [vmem:[%s3 + $0x208] sm:$0xff]
        %v3714 = vld [vmem:[%s3 + $0x210] sm:$0xff]
        %v3715 = vld [vmem:[%s3 + $0x218] sm:$0xf]
        %v3716 = vld [vmem:[%s3 + $0x21c] sm:$0xff]
        %v3717 = vld [vmem:[%s3 + $0x224] sm:$0xff]
        %v3718 = vld [vmem:[%s3 + $0x22c] sm:$0xf]
        %v3719 = vld [vmem:[%s3 + $0x230] sm:$0xff]
        %v3720 = vld [vmem:[%s3 + $0x238] sm:$0xff]
        %v3721 = vld [vmem:[%s3 + $0x240] sm:$0xf]
        %v3722 = vld [vmem:[%s3 + $0x244] sm:$0xff]
        %v3723 = vld [vmem:[%s3 + $0x24c] sm:$0xff]
        %v3724 = vld [vmem:[%s3 + $0x254] sm:$0xf]
        %v3725 = vld [vmem:[%s3 + $0x258] sm:$0xff]
        %v3726 = vld [vmem:[%s3 + $0x260] sm:$0xff]
        %v3727 = vld [vmem:[%s3 + $0x268] sm:$0xf]
        %v3728 = vld [vmem:[%s3 + $0x26c] sm:$0xff]
        %v3729 = vld [vmem:[%s3 + $0x274] sm:$0xff]
        %v3730 = vld [vmem:[%s3 + $0x27c] sm:$0xf]
        %v3731 = vld [vmem:[%s3 + $0x280] sm:$0xff]
        %v3732 = vld [vmem:[%s3 + $0x288] sm:$0xff]
        %v3733 = vld [vmem:[%s3 + $0x290] sm:$0xf]
        %v3734 = vld [vmem:[%s3 + $0x294] sm:$0xff]
        %v3735 = vld [vmem:[%s3 + $0x29c] sm:$0xff]
        %v3736 = vld [vmem:[%s3 + $0x2a4] sm:$0xf]
        %v3737 = vld [vmem:[%s3 + $0x2a8] sm:$0xff]
        %v3738 = vld [vmem:[%s3 + $0x2b0] sm:$0xff]
        %v3739 = vld [vmem:[%s3 + $0x2b8] sm:$0xf]
        %v3740 = vld [vmem:[%s3 + $0x2bc] sm:$0xff]
        %v3741 = vld [vmem:[%s3 + $0x2c4] sm:$0xff]
        %v3742 = vld [vmem:[%s3 + $0x2cc] sm:$0xf]
        %v3743 = vld [vmem:[%s3 + $0x2d0] sm:$0xff]
        %v3744 = vld [vmem:[%s3 + $0x2d8] sm:$0xff]
        %v3745 = vld [vmem:[%s3 + $0x2e0] sm:$0xf]
        %v3746 = vld [vmem:[%s3 + $0x2e4] sm:$0xff]
        %v3747 = vld [vmem:[%s3 + $0x2ec] sm:$0xff]
        %v3748 = vld [vmem:[%s3 + $0x2f4] sm:$0xf]
        %v3749 = vld [vmem:[%s3 + $0x2f8] sm:$0xff]
        %v3750 = vld [vmem:[%s3 + $0x300] sm:$0xff]
        %v3751 = vld [vmem:[%s3 + $0x308] sm:$0xf]
        %v3752 = vld [vmem:[%s3 + $0x30c] sm:$0xff]
        %v3753 = vld [vmem:[%s3 + $0x314] sm:$0xff]
        %v3754 = vld [vmem:[%s3 + $0x31c] sm:$0xf]
        %v3755 = vld [vmem:[%s3 + $0x320] sm:$0xff]
        %v3756 = vld [vmem:[%s3 + $0x328] sm:$0xff]
        %v3757 = vld [vmem:[%s3 + $0x330] sm:$0xf]
        %v3758 = vld [vmem:[%s3 + $0x334] sm:$0xff]
        %v3759 = vld [vmem:[%s3 + $0x33c] sm:$0xff]
        %v3760 = vld [vmem:[%s3 + $0x344] sm:$0xf]
        %v3761 = vld [vmem:[%s3 + $0x348] sm:$0xff]
        %v3762 = vld [vmem:[%s3 + $0x350] sm:$0xff]
        %v3763 = vld [vmem:[%s3 + $0x358] sm:$0xf]
        %v3764 = vld [vmem:[%s3 + $0x35c] sm:$0xff]
        %v3765 = vld [vmem:[%s3 + $0x364] sm:$0xff]
        %v3766 = vld [vmem:[%s3 + $0x36c] sm:$0xf]
        %v3767 = vld [vmem:[%s3 + $0x370] sm:$0xff]
        %v3768 = vld [vmem:[%s3 + $0x378] sm:$0xff]
        %v3769 = vld [vmem:[%s3 + $0x380] sm:$0xf]
        %v3770 = vld [vmem:[%s3 + $0x384] sm:$0xff]
        %v3771 = vld [vmem:[%s3 + $0x38c] sm:$0xff]
        %v3772 = vld [vmem:[%s3 + $0x394] sm:$0xf]
        %v3773 = vld [vmem:[%s3 + $0x398] sm:$0xff]
        %v3774 = vld [vmem:[%s3 + $0x3a0] sm:$0xff]
        %v3775 = vld [vmem:[%s3 + $0x3a8] sm:$0xf]
        %v3776 = vld [vmem:[%s3 + $0x3ac] sm:$0xff]
        %v3777 = vld [vmem:[%s3 + $0x3b4] sm:$0xff]
        %v3778 = vld [vmem:[%s3 + $0x3bc] sm:$0xf]
        %v3779 = vld [vmem:[%s3 + $0x3c0] sm:$0xff]
        %v3780 = vld [vmem:[%s3 + $0x3c8] sm:$0xff]
        %v3781 = vld [vmem:[%s3 + $0x3d0] sm:$0xf]
        %v3782 = vld [vmem:[%s3 + $0x3d4] sm:$0xff]
        %v3783 = vld [vmem:[%s3 + $0x3dc] sm:$0xff]
        %v3784 = vld [vmem:[%s3 + $0x3e4] sm:$0xf]
        %v3785 = vld [vmem:[%s3 + $0x3e8] sm:$0xff]
        %v3786 = vld [vmem:[%s3 + $0x3f0] sm:$0xff]
        %v3787 = vld [vmem:[%s3 + $0x3f8] sm:$0xf]
        %v3788 = vld [vmem:[%s3 + $0x3fc] sm:$0xff]
        %v3789 = vld [vmem:[%s3 + $0x404] sm:$0xff]
        %v3790 = vld [vmem:[%s3 + $0x40c] sm:$0xf]
        %v3791 = vld [vmem:[%s3 + $0x410] sm:$0xff]
        %v3792 = vld [vmem:[%s3 + $0x418] sm:$0xff]
        %v3793 = vld [vmem:[%s3 + $0x420] sm:$0xf]
        %v3794 = vld [vmem:[%s3 + $0x424] sm:$0xff]
        %v3795 = vld [vmem:[%s3 + $0x42c] sm:$0xff]
        %v3796 = vld [vmem:[%s3 + $0x434] sm:$0xf]
        %v3797 = vld [vmem:[%s3 + $0x438] sm:$0xff]
        %v3798 = vld [vmem:[%s3 + $0x440] sm:$0xff]
        %v3799 = vld [vmem:[%s3 + $0x448] sm:$0xf]
        %v3800 = vld [vmem:[%s3 + $0x44c] sm:$0xff]
        %v3801 = vld [vmem:[%s3 + $0x454] sm:$0xff]
        %v3802 = vld [vmem:[%s3 + $0x45c] sm:$0xf]
        %v3803 = vld [vmem:[%s3 + $0x460] sm:$0xff]
        %v3804 = vld [vmem:[%s3 + $0x468] sm:$0xff]
        %v3805 = vld [vmem:[%s3 + $0x470] sm:$0xf]
        %v3806 = vld [vmem:[%s3 + $0x474] sm:$0xff]
        %v3807 = vld [vmem:[%s3 + $0x47c] sm:$0xff]
        %v3808 = vld [vmem:[%s3 + $0x484] sm:$0xf]
        %v3809 = vld [vmem:[%s3 + $0x488] sm:$0xff]
        %v3810 = vld [vmem:[%s3 + $0x490] sm:$0xff]
        %v3811 = vld [vmem:[%s3 + $0x498] sm:$0xf]
        %v3812 = vld [vmem:[%s3 + $0x49c] sm:$0xff]
        %v3813 = vld [vmem:[%s3 + $0x4a4] sm:$0xff]
        %v3814 = vld [vmem:[%s3 + $0x4ac] sm:$0xf]
        %v3815 = vld [vmem:[%s3 + $0x4b0] sm:$0xff]
        %v3816 = vld [vmem:[%s3 + $0x4b8] sm:$0xff]
        %v3817 = vld [vmem:[%s3 + $0x4c0] sm:$0xf]
        %v3818 = vld [vmem:[%s3 + $0x4c4] sm:$0xff]
        %v3819 = vld [vmem:[%s3 + $0x4cc] sm:$0xff]
        %v3820 = vld [vmem:[%s3 + $0x4d4] sm:$0xf]
        %v3821 = vld [vmem:[%s3 + $0x4d8] sm:$0xff]
        %v3822 = vld [vmem:[%s3 + $0x4e0] sm:$0xff]
        %v3823 = vld [vmem:[%s3 + $0x4e8] sm:$0xf]
        %v3824 = vld [vmem:[%s3 + $0x4ec] sm:$0xff]
        %v3825 = vld [vmem:[%s3 + $0x4f4] sm:$0xff]
        %v3826 = vld [vmem:[%s3 + $0x4fc] sm:$0xf]
        %v3827 = vld [vmem:[%s3 + $0x500] sm:$0xff]
        %v3828 = vld [vmem:[%s3 + $0x508] sm:$0xff]
        %v3829 = vld [vmem:[%s3 + $0x510] sm:$0xf]
        %v3830 = vld [vmem:[%s3 + $0x514] sm:$0xff]
        %v3831 = vld [vmem:[%s3 + $0x51c] sm:$0xff]
        %v3832 = vld [vmem:[%s3 + $0x524] sm:$0xf]
        %v3833 = vld [vmem:[%s3 + $0x528] sm:$0xff]
        %v3834 = vld [vmem:[%s3 + $0x530] sm:$0xff]
        %v3835 = vld [vmem:[%s3 + $0x538] sm:$0xf]
        %v3836 = vld [vmem:[%s3 + $0x53c] sm:$0xff]
        %v3837 = vld [vmem:[%s3 + $0x544] sm:$0xff]
        %v3838 = vld [vmem:[%s3 + $0x54c] sm:$0xf]
        %v3839 = vld [vmem:[%s3 + $0x550] sm:$0xff]
        %v3840 = vld [vmem:[%s3 + $0x558] sm:$0xff]
        %v3841 = vld [vmem:[%s3 + $0x560] sm:$0xf]
        %v3842 = vld [vmem:[%s3 + $0x564] sm:$0xff]
        %v3843 = vld [vmem:[%s3 + $0x56c] sm:$0xff]
        %v3844 = vld [vmem:[%s3 + $0x574] sm:$0xf]
        %v3845 = vld [vmem:[%s3 + $0x578] sm:$0xff]
        %v3846 = vld [vmem:[%s3 + $0x580] sm:$0xff]
        %v3847 = vld [vmem:[%s3 + $0x588] sm:$0xf]
        %v3848 = vld [vmem:[%s3 + $0x58c] sm:$0xff]
        %v3849 = vld [vmem:[%s3 + $0x594] sm:$0xff]
        %v3850 = vld [vmem:[%s3 + $0x59c] sm:$0xf]
        %v3851 = vld [vmem:[%s3 + $0x5a0] sm:$0xff]
        %v3852 = vld [vmem:[%s3 + $0x5a8] sm:$0xff]
        %v3853 = vld [vmem:[%s3 + $0x5b0] sm:$0xf]
        %v3854 = vld [vmem:[%s3 + $0x5b4] sm:$0xff]
        %v3855 = vld [vmem:[%s3 + $0x5bc] sm:$0xff]
        %v3856 = vld [vmem:[%s3 + $0x5c4] sm:$0xf]
        %v3857 = vld [vmem:[%s3 + $0x5c8] sm:$0xff]
        %v3858 = vld [vmem:[%s3 + $0x5d0] sm:$0xff]
        %v3859 = vld [vmem:[%s3 + $0x5d8] sm:$0xf]
        %v3860 = vld [vmem:[%s4] sm:$0x1f]
        %v3862 = vlaneseq
        %v3863 = vshrl.u32 %v3862, 7
        %v3864 = vsub.s32 0, %v3863
        %v3865 = vrot.slane %v3860, %v3864
        %v3866 = vlaneseq
        %v3867 = vshrl.u32 %v3866, 7
        %v3868 = vsub.s32 1, %v3867
        %v3869 = vrot.slane %v3860, %v3868
        %v3870 = vlaneseq
        %v3871 = vshrl.u32 %v3870, 7
        %v3872 = vsub.s32 2, %v3871
        %v3873 = vrot.slane %v3860, %v3872
        %v3874 = vlaneseq
        %v3875 = vshrl.u32 %v3874, 7
        %v3876 = vsub.s32 3, %v3875
        %v3877 = vrot.slane %v3860, %v3876
        %v3878 = vlaneseq
        %v3879 = vshrl.u32 %v3878, 7
        %v3880 = vsub.s32 4, %v3879
        %v3881 = vrot.slane %v3860, %v3880
        %v4112 = vunpack.c.l.b16 %v3635
        %v4113 = vunpack.c.h.b16 %v3635
        %v4114 = vunpack.c.l.b16 %v3636
        %v4115 = vunpack.c.h.b16 %v3636
        %v4116 = vunpack.c.l.b16 %v3637
        %v4117 = vunpack.c.l.b16 %v3638
        %v4118 = vunpack.c.h.b16 %v3638
        %v4119 = vunpack.c.l.b16 %v3639
        %v4120 = vunpack.c.h.b16 %v3639
        %v4121 = vunpack.c.l.b16 %v3640
        %v4122 = vunpack.c.l.b16 %v3641
        %v4123 = vunpack.c.h.b16 %v3641
        %v4124 = vunpack.c.l.b16 %v3642
        %v4125 = vunpack.c.h.b16 %v3642
        %v4126 = vunpack.c.l.b16 %v3643
        %v4127 = vunpack.c.l.b16 %v3644
        %v4128 = vunpack.c.h.b16 %v3644
        %v4129 = vunpack.c.l.b16 %v3645
        %v4130 = vunpack.c.h.b16 %v3645
        %v4131 = vunpack.c.l.b16 %v3646
        %v4132 = vunpack.c.l.b16 %v3647
        %v4133 = vunpack.c.h.b16 %v3647
        %v4134 = vunpack.c.l.b16 %v3648
        %v4135 = vunpack.c.h.b16 %v3648
        %v4136 = vunpack.c.l.b16 %v3649
        %v4137 = vunpack.c.l.b16 %v3650
        %v4138 = vunpack.c.h.b16 %v3650
        %v4139 = vunpack.c.l.b16 %v3651
        %v4140 = vunpack.c.h.b16 %v3651
        %v4141 = vunpack.c.l.b16 %v3652
        %v4142 = vunpack.c.l.b16 %v3653
        %v4143 = vunpack.c.h.b16 %v3653
        %v4144 = vunpack.c.l.b16 %v3654
        %v4145 = vunpack.c.h.b16 %v3654
        %v4146 = vunpack.c.l.b16 %v3655
        %v4147 = vunpack.c.l.b16 %v3656
        %v4148 = vunpack.c.h.b16 %v3656
        %v4149 = vunpack.c.l.b16 %v3657
        %v4150 = vunpack.c.h.b16 %v3657
        %v4151 = vunpack.c.l.b16 %v3658
        %v4152 = vunpack.c.l.b16 %v3659
        %v4153 = vunpack.c.h.b16 %v3659
        %v4154 = vunpack.c.l.b16 %v3660
        %v4155 = vunpack.c.h.b16 %v3660
        %v4156 = vunpack.c.l.b16 %v3661
        %v4157 = vunpack.c.l.b16 %v3662
        %v4158 = vunpack.c.h.b16 %v3662
        %v4159 = vunpack.c.l.b16 %v3663
        %v4160 = vunpack.c.h.b16 %v3663
        %v4161 = vunpack.c.l.b16 %v3664
        %v4162 = vunpack.c.l.b16 %v3665
        %v4163 = vunpack.c.h.b16 %v3665
        %v4164 = vunpack.c.l.b16 %v3666
        %v4165 = vunpack.c.h.b16 %v3666
        %v4166 = vunpack.c.l.b16 %v3667
        %v4167 = vunpack.c.l.b16 %v3668
        %v4168 = vunpack.c.h.b16 %v3668
        %v4169 = vunpack.c.l.b16 %v3669
        %v4170 = vunpack.c.h.b16 %v3669
        %v4171 = vunpack.c.l.b16 %v3670
        %v4172 = vunpack.c.l.b16 %v3671
        %v4173 = vunpack.c.h.b16 %v3671
        %v4174 = vunpack.c.l.b16 %v3672
        %v4175 = vunpack.c.h.b16 %v3672
        %v4176 = vunpack.c.l.b16 %v3673
        %v4177 = vunpack.c.l.b16 %v3674
        %v4178 = vunpack.c.h.b16 %v3674
        %v4179 = vunpack.c.l.b16 %v3675
        %v4180 = vunpack.c.h.b16 %v3675
        %v4181 = vunpack.c.l.b16 %v3676
        %v4182 = vunpack.c.l.b16 %v3677
        %v4183 = vunpack.c.h.b16 %v3677
        %v4184 = vunpack.c.l.b16 %v3678
        %v4185 = vunpack.c.h.b16 %v3678
        %v4186 = vunpack.c.l.b16 %v3679
        %v4187 = vunpack.c.l.b16 %v3680
        %v4188 = vunpack.c.h.b16 %v3680
        %v4189 = vunpack.c.l.b16 %v3681
        %v4190 = vunpack.c.h.b16 %v3681
        %v4191 = vunpack.c.l.b16 %v3682
        %v4192 = vunpack.c.l.b16 %v3683
        %v4193 = vunpack.c.h.b16 %v3683
        %v4194 = vunpack.c.l.b16 %v3684
        %v4195 = vunpack.c.h.b16 %v3684
        %v4196 = vunpack.c.l.b16 %v3685
        %v4197 = vunpack.c.l.b16 %v3686
        %v4198 = vunpack.c.h.b16 %v3686
        %v4199 = vunpack.c.l.b16 %v3687
        %v4200 = vunpack.c.h.b16 %v3687
        %v4201 = vunpack.c.l.b16 %v3688
        %v4202 = vunpack.c.l.b16 %v3689
        %v4203 = vunpack.c.h.b16 %v3689
        %v4204 = vunpack.c.l.b16 %v3690
        %v4205 = vunpack.c.h.b16 %v3690
        %v4206 = vunpack.c.l.b16 %v3691
        %v4207 = vunpack.c.l.b16 %v3692
        %v4208 = vunpack.c.h.b16 %v3692
        %v4209 = vunpack.c.l.b16 %v3693
        %v4210 = vunpack.c.h.b16 %v3693
        %v4211 = vunpack.c.l.b16 %v3694
        %v4212 = vunpack.c.l.b16 %v3695
        %v4213 = vunpack.c.h.b16 %v3695
        %v4214 = vunpack.c.l.b16 %v3696
        %v4215 = vunpack.c.h.b16 %v3696
        %v4216 = vunpack.c.l.b16 %v3697
        %v4217 = vunpack.c.l.b16 %v3698
        %v4218 = vunpack.c.h.b16 %v3698
        %v4219 = vunpack.c.l.b16 %v3699
        %v4220 = vunpack.c.h.b16 %v3699
        %v4221 = vunpack.c.l.b16 %v3700
        %v4222 = vunpack.c.l.b16 %v3701
        %v4223 = vunpack.c.h.b16 %v3701
        %v4224 = vunpack.c.l.b16 %v3702
        %v4225 = vunpack.c.h.b16 %v3702
        %v4226 = vunpack.c.l.b16 %v3703
        %v4227 = vunpack.c.l.b16 %v3704
        %v4228 = vunpack.c.h.b16 %v3704
        %v4229 = vunpack.c.l.b16 %v3705
        %v4230 = vunpack.c.h.b16 %v3705
        %v4231 = vunpack.c.l.b16 %v3706
        %v4232 = vunpack.c.l.b16 %v3707
        %v4233 = vunpack.c.h.b16 %v3707
        %v4234 = vunpack.c.l.b16 %v3708
        %v4235 = vunpack.c.h.b16 %v3708
        %v4236 = vunpack.c.l.b16 %v3709
        %v4237 = vunpack.c.l.b16 %v3710
        %v4238 = vunpack.c.h.b16 %v3710
        %v4239 = vunpack.c.l.b16 %v3711
        %v4240 = vunpack.c.h.b16 %v3711
        %v4241 = vunpack.c.l.b16 %v3712
        %v4242 = vunpack.c.l.b16 %v3713
        %v4243 = vunpack.c.h.b16 %v3713
        %v4244 = vunpack.c.l.b16 %v3714
        %v4245 = vunpack.c.h.b16 %v3714
        %v4246 = vunpack.c.l.b16 %v3715
        %v4247 = vunpack.c.l.b16 %v3716
        %v4248 = vunpack.c.h.b16 %v3716
        %v4249 = vunpack.c.l.b16 %v3717
        %v4250 = vunpack.c.h.b16 %v3717
        %v4251 = vunpack.c.l.b16 %v3718
        %v4252 = vunpack.c.l.b16 %v3719
        %v4253 = vunpack.c.h.b16 %v3719
        %v4254 = vunpack.c.l.b16 %v3720
        %v4255 = vunpack.c.h.b16 %v3720
        %v4256 = vunpack.c.l.b16 %v3721
        %v4257 = vunpack.c.l.b16 %v3722
        %v4258 = vunpack.c.h.b16 %v3722
        %v4259 = vunpack.c.l.b16 %v3723
        %v4260 = vunpack.c.h.b16 %v3723
        %v4261 = vunpack.c.l.b16 %v3724
        %v4262 = vunpack.c.l.b16 %v3725
        %v4263 = vunpack.c.h.b16 %v3725
        %v4264 = vunpack.c.l.b16 %v3726
        %v4265 = vunpack.c.h.b16 %v3726
        %v4266 = vunpack.c.l.b16 %v3727
        %v4267 = vunpack.c.l.b16 %v3728
        %v4268 = vunpack.c.h.b16 %v3728
        %v4269 = vunpack.c.l.b16 %v3729
        %v4270 = vunpack.c.h.b16 %v3729
        %v4271 = vunpack.c.l.b16 %v3730
        %v4272 = vunpack.c.l.b16 %v3731
        %v4273 = vunpack.c.h.b16 %v3731
        %v4274 = vunpack.c.l.b16 %v3732
        %v4275 = vunpack.c.h.b16 %v3732
        %v4276 = vunpack.c.l.b16 %v3733
        %v4277 = vunpack.c.l.b16 %v3734
        %v4278 = vunpack.c.h.b16 %v3734
        %v4279 = vunpack.c.l.b16 %v3735
        %v4280 = vunpack.c.h.b16 %v3735
        %v4281 = vunpack.c.l.b16 %v3736
        %v4282 = vunpack.c.l.b16 %v3737
        %v4283 = vunpack.c.h.b16 %v3737
        %v4284 = vunpack.c.l.b16 %v3738
        %v4285 = vunpack.c.h.b16 %v3738
        %v4286 = vunpack.c.l.b16 %v3739
        %v4287 = vunpack.c.l.b16 %v3740
        %v4288 = vunpack.c.h.b16 %v3740
        %v4289 = vunpack.c.l.b16 %v3741
        %v4290 = vunpack.c.h.b16 %v3741
        %v4291 = vunpack.c.l.b16 %v3742
        %v4292 = vunpack.c.l.b16 %v3743
        %v4293 = vunpack.c.h.b16 %v3743
        %v4294 = vunpack.c.l.b16 %v3744
        %v4295 = vunpack.c.h.b16 %v3744
        %v4296 = vunpack.c.l.b16 %v3745
        %v4297 = vunpack.c.l.b16 %v3746
        %v4298 = vunpack.c.h.b16 %v3746
        %v4299 = vunpack.c.l.b16 %v3747
        %v4300 = vunpack.c.h.b16 %v3747
        %v4301 = vunpack.c.l.b16 %v3748
        %v4302 = vunpack.c.l.b16 %v3749
        %v4303 = vunpack.c.h.b16 %v3749
        %v4304 = vunpack.c.l.b16 %v3750
        %v4305 = vunpack.c.h.b16 %v3750
        %v4306 = vunpack.c.l.b16 %v3751
        %v4307 = vunpack.c.l.b16 %v3752
        %v4308 = vunpack.c.h.b16 %v3752
        %v4309 = vunpack.c.l.b16 %v3753
        %v4310 = vunpack.c.h.b16 %v3753
        %v4311 = vunpack.c.l.b16 %v3754
        %v4312 = vunpack.c.l.b16 %v3755
        %v4313 = vunpack.c.h.b16 %v3755
        %v4314 = vunpack.c.l.b16 %v3756
        %v4315 = vunpack.c.h.b16 %v3756
        %v4316 = vunpack.c.l.b16 %v3757
        %v4317 = vunpack.c.l.b16 %v3758
        %v4318 = vunpack.c.h.b16 %v3758
        %v4319 = vunpack.c.l.b16 %v3759
        %v4320 = vunpack.c.h.b16 %v3759
        %v4321 = vunpack.c.l.b16 %v3760
        %v4322 = vunpack.c.l.b16 %v3761
        %v4323 = vunpack.c.h.b16 %v3761
        %v4324 = vunpack.c.l.b16 %v3762
        %v4325 = vunpack.c.h.b16 %v3762
        %v4326 = vunpack.c.l.b16 %v3763
        %v4327 = vunpack.c.l.b16 %v3764
        %v4328 = vunpack.c.h.b16 %v3764
        %v4329 = vunpack.c.l.b16 %v3765
        %v4330 = vunpack.c.h.b16 %v3765
        %v4331 = vunpack.c.l.b16 %v3766
        %v4332 = vunpack.c.l.b16 %v3767
        %v4333 = vunpack.c.h.b16 %v3767
        %v4334 = vunpack.c.l.b16 %v3768
        %v4335 = vunpack.c.h.b16 %v3768
        %v4336 = vunpack.c.l.b16 %v3769
        %v4337 = vunpack.c.l.b16 %v3770
        %v4338 = vunpack.c.h.b16 %v3770
        %v4339 = vunpack.c.l.b16 %v3771
        %v4340 = vunpack.c.h.b16 %v3771
        %v4341 = vunpack.c.l.b16 %v3772
        %v4342 = vunpack.c.l.b16 %v3773
        %v4343 = vunpack.c.h.b16 %v3773
        %v4344 = vunpack.c.l.b16 %v3774
        %v4345 = vunpack.c.h.b16 %v3774
        %v4346 = vunpack.c.l.b16 %v3775
        %v4347 = vunpack.c.l.b16 %v3776
        %v4348 = vunpack.c.h.b16 %v3776
        %v4349 = vunpack.c.l.b16 %v3777
        %v4350 = vunpack.c.h.b16 %v3777
        %v4351 = vunpack.c.l.b16 %v3778
        %v4352 = vunpack.c.l.b16 %v3779
        %v4353 = vunpack.c.h.b16 %v3779
        %v4354 = vunpack.c.l.b16 %v3780
        %v4355 = vunpack.c.h.b16 %v3780
        %v4356 = vunpack.c.l.b16 %v3781
        %v4357 = vunpack.c.l.b16 %v3782
        %v4358 = vunpack.c.h.b16 %v3782
        %v4359 = vunpack.c.l.b16 %v3783
        %v4360 = vunpack.c.h.b16 %v3783
        %v4361 = vunpack.c.l.b16 %v3784
        %v4362 = vunpack.c.l.b16 %v3785
        %v4363 = vunpack.c.h.b16 %v3785
        %v4364 = vunpack.c.l.b16 %v3786
        %v4365 = vunpack.c.h.b16 %v3786
        %v4366 = vunpack.c.l.b16 %v3787
        %v4367 = vunpack.c.l.b16 %v3788
        %v4368 = vunpack.c.h.b16 %v3788
        %v4369 = vunpack.c.l.b16 %v3789
        %v4370 = vunpack.c.h.b16 %v3789
        %v4371 = vunpack.c.l.b16 %v3790
        %v4372 = vunpack.c.l.b16 %v3791
        %v4373 = vunpack.c.h.b16 %v3791
        %v4374 = vunpack.c.l.b16 %v3792
        %v4375 = vunpack.c.h.b16 %v3792
        %v4376 = vunpack.c.l.b16 %v3793
        %v4377 = vunpack.c.l.b16 %v3794
        %v4378 = vunpack.c.h.b16 %v3794
        %v4379 = vunpack.c.l.b16 %v3795
        %v4380 = vunpack.c.h.b16 %v3795
        %v4381 = vunpack.c.l.b16 %v3796
        %v4382 = vunpack.c.l.b16 %v3797
        %v4383 = vunpack.c.h.b16 %v3797
        %v4384 = vunpack.c.l.b16 %v3798
        %v4385 = vunpack.c.h.b16 %v3798
        %v4386 = vunpack.c.l.b16 %v3799
        %v4387 = vunpack.c.l.b16 %v3800
        %v4388 = vunpack.c.h.b16 %v3800
        %v4389 = vunpack.c.l.b16 %v3801
        %v4390 = vunpack.c.h.b16 %v3801
        %v4391 = vunpack.c.l.b16 %v3802
        %v4392 = vunpack.c.l.b16 %v3803
        %v4393 = vunpack.c.h.b16 %v3803
        %v4394 = vunpack.c.l.b16 %v3804
        %v4395 = vunpack.c.h.b16 %v3804
        %v4396 = vunpack.c.l.b16 %v3805
        %v4397 = vunpack.c.l.b16 %v3806
        %v4398 = vunpack.c.h.b16 %v3806
        %v4399 = vunpack.c.l.b16 %v3807
        %v4400 = vunpack.c.h.b16 %v3807
        %v4401 = vunpack.c.l.b16 %v3808
        %v4402 = vunpack.c.l.b16 %v3809
        %v4403 = vunpack.c.h.b16 %v3809
        %v4404 = vunpack.c.l.b16 %v3810
        %v4405 = vunpack.c.h.b16 %v3810
        %v4406 = vunpack.c.l.b16 %v3811
        %v4407 = vunpack.c.l.b16 %v3812
        %v4408 = vunpack.c.h.b16 %v3812
        %v4409 = vunpack.c.l.b16 %v3813
        %v4410 = vunpack.c.h.b16 %v3813
        %v4411 = vunpack.c.l.b16 %v3814
        %v4412 = vunpack.c.l.b16 %v3815
        %v4413 = vunpack.c.h.b16 %v3815
        %v4414 = vunpack.c.l.b16 %v3816
        %v4415 = vunpack.c.h.b16 %v3816
        %v4416 = vunpack.c.l.b16 %v3817
        %v4417 = vunpack.c.l.b16 %v3818
        %v4418 = vunpack.c.h.b16 %v3818
        %v4419 = vunpack.c.l.b16 %v3819
        %v4420 = vunpack.c.h.b16 %v3819
        %v4421 = vunpack.c.l.b16 %v3820
        %v4422 = vunpack.c.l.b16 %v3821
        %v4423 = vunpack.c.h.b16 %v3821
        %v4424 = vunpack.c.l.b16 %v3822
        %v4425 = vunpack.c.h.b16 %v3822
        %v4426 = vunpack.c.l.b16 %v3823
        %v4427 = vunpack.c.l.b16 %v3824
        %v4428 = vunpack.c.h.b16 %v3824
        %v4429 = vunpack.c.l.b16 %v3825
        %v4430 = vunpack.c.h.b16 %v3825
        %v4431 = vunpack.c.l.b16 %v3826
        %v4432 = vunpack.c.l.b16 %v3827
        %v4433 = vunpack.c.h.b16 %v3827
        %v4434 = vunpack.c.l.b16 %v3828
        %v4435 = vunpack.c.h.b16 %v3828
        %v4436 = vunpack.c.l.b16 %v3829
        %v4437 = vunpack.c.l.b16 %v3830
        %v4438 = vunpack.c.h.b16 %v3830
        %v4439 = vunpack.c.l.b16 %v3831
        %v4440 = vunpack.c.h.b16 %v3831
        %v4441 = vunpack.c.l.b16 %v3832
        %v4442 = vunpack.c.l.b16 %v3833
        %v4443 = vunpack.c.h.b16 %v3833
        %v4444 = vunpack.c.l.b16 %v3834
        %v4445 = vunpack.c.h.b16 %v3834
        %v4446 = vunpack.c.l.b16 %v3835
        %v4447 = vunpack.c.l.b16 %v3836
        %v4448 = vunpack.c.h.b16 %v3836
        %v4449 = vunpack.c.l.b16 %v3837
        %v4450 = vunpack.c.h.b16 %v3837
        %v4451 = vunpack.c.l.b16 %v3838
        %v4452 = vunpack.c.l.b16 %v3839
        %v4453 = vunpack.c.h.b16 %v3839
        %v4454 = vunpack.c.l.b16 %v3840
        %v4455 = vunpack.c.h.b16 %v3840
        %v4456 = vunpack.c.l.b16 %v3841
        %v4457 = vunpack.c.l.b16 %v3842
        %v4458 = vunpack.c.h.b16 %v3842
        %v4459 = vunpack.c.l.b16 %v3843
        %v4460 = vunpack.c.h.b16 %v3843
        %v4461 = vunpack.c.l.b16 %v3844
        %v4462 = vunpack.c.l.b16 %v3845
        %v4463 = vunpack.c.h.b16 %v3845
        %v4464 = vunpack.c.l.b16 %v3846
        %v4465 = vunpack.c.h.b16 %v3846
        %v4466 = vunpack.c.l.b16 %v3847
        %v4467 = vunpack.c.l.b16 %v3848
        %v4468 = vunpack.c.h.b16 %v3848
        %v4469 = vunpack.c.l.b16 %v3849
        %v4470 = vunpack.c.h.b16 %v3849
        %v4471 = vunpack.c.l.b16 %v3850
        %v4472 = vunpack.c.l.b16 %v3851
        %v4473 = vunpack.c.h.b16 %v3851
        %v4474 = vunpack.c.l.b16 %v3852
        %v4475 = vunpack.c.h.b16 %v3852
        %v4476 = vunpack.c.l.b16 %v3853
        %v4477 = vunpack.c.l.b16 %v3854
        %v4478 = vunpack.c.h.b16 %v3854
        %v4479 = vunpack.c.l.b16 %v3855
        %v4480 = vunpack.c.h.b16 %v3855
        %v4481 = vunpack.c.l.b16 %v3856
        %v4482 = vunpack.c.l.b16 %v3857
        %v4483 = vunpack.c.h.b16 %v3857
        %v4484 = vunpack.c.l.b16 %v3858
        %v4485 = vunpack.c.h.b16 %v3858
        %v4486 = vunpack.c.l.b16 %v3859
        %v4487 = vpack.c.b16 %v4117, %v4112
        %v4488 = vpack.c.b16 %v4118, %v4113
        %v4489 = vpack.c.b16 %v4119, %v4114
        %v4490 = vpack.c.b16 %v4120, %v4115
        %v4491 = vpack.c.b16 %v4121, %v4116
        %v4492 = vpack.c.b16 %v4127, %v4122
        %v4493 = vpack.c.b16 %v4128, %v4123
        %v4494 = vpack.c.b16 %v4129, %v4124
        %v4495 = vpack.c.b16 %v4130, %v4125
        %v4496 = vpack.c.b16 %v4131, %v4126
        %v4497 = vpack.c.b16 %v4137, %v4132
        %v4498 = vpack.c.b16 %v4138, %v4133
        %v4499 = vpack.c.b16 %v4139, %v4134
        %v4500 = vpack.c.b16 %v4140, %v4135
        %v4501 = vpack.c.b16 %v4141, %v4136
        %v4502 = vpack.c.b16 %v4147, %v4142
        %v4503 = vpack.c.b16 %v4148, %v4143
        %v4504 = vpack.c.b16 %v4149, %v4144
        %v4505 = vpack.c.b16 %v4150, %v4145
        %v4506 = vpack.c.b16 %v4151, %v4146
        %v4507 = vpack.c.b16 %v4157, %v4152
        %v4508 = vpack.c.b16 %v4158, %v4153
        %v4509 = vpack.c.b16 %v4159, %v4154
        %v4510 = vpack.c.b16 %v4160, %v4155
        %v4511 = vpack.c.b16 %v4161, %v4156
        %v4512 = vpack.c.b16 %v4167, %v4162
        %v4513 = vpack.c.b16 %v4168, %v4163
        %v4514 = vpack.c.b16 %v4169, %v4164
        %v4515 = vpack.c.b16 %v4170, %v4165
        %v4516 = vpack.c.b16 %v4171, %v4166
        %v4517 = vpack.c.b16 %v4177, %v4172
        %v4518 = vpack.c.b16 %v4178, %v4173
        %v4519 = vpack.c.b16 %v4179, %v4174
        %v4520 = vpack.c.b16 %v4180, %v4175
        %v4521 = vpack.c.b16 %v4181, %v4176
        %v4522 = vpack.c.b16 %v4187, %v4182
        %v4523 = vpack.c.b16 %v4188, %v4183
        %v4524 = vpack.c.b16 %v4189, %v4184
        %v4525 = vpack.c.b16 %v4190, %v4185
        %v4526 = vpack.c.b16 %v4191, %v4186
        %v4527 = vpack.c.b16 %v4197, %v4192
        %v4528 = vpack.c.b16 %v4198, %v4193
        %v4529 = vpack.c.b16 %v4199, %v4194
        %v4530 = vpack.c.b16 %v4200, %v4195
        %v4531 = vpack.c.b16 %v4201, %v4196
        %v4532 = vpack.c.b16 %v4207, %v4202
        %v4533 = vpack.c.b16 %v4208, %v4203
        %v4534 = vpack.c.b16 %v4209, %v4204
        %v4535 = vpack.c.b16 %v4210, %v4205
        %v4536 = vpack.c.b16 %v4211, %v4206
        %v4537 = vpack.c.b16 %v4217, %v4212
        %v4538 = vpack.c.b16 %v4218, %v4213
        %v4539 = vpack.c.b16 %v4219, %v4214
        %v4540 = vpack.c.b16 %v4220, %v4215
        %v4541 = vpack.c.b16 %v4221, %v4216
        %v4542 = vpack.c.b16 %v4227, %v4222
        %v4543 = vpack.c.b16 %v4228, %v4223
        %v4544 = vpack.c.b16 %v4229, %v4224
        %v4545 = vpack.c.b16 %v4230, %v4225
        %v4546 = vpack.c.b16 %v4231, %v4226
        %v4547 = vpack.c.b16 %v4237, %v4232
        %v4548 = vpack.c.b16 %v4238, %v4233
        %v4549 = vpack.c.b16 %v4239, %v4234
        %v4550 = vpack.c.b16 %v4240, %v4235
        %v4551 = vpack.c.b16 %v4241, %v4236
        %v4552 = vpack.c.b16 %v4247, %v4242
        %v4553 = vpack.c.b16 %v4248, %v4243
        %v4554 = vpack.c.b16 %v4249, %v4244
        %v4555 = vpack.c.b16 %v4250, %v4245
        %v4556 = vpack.c.b16 %v4251, %v4246
        %v4557 = vpack.c.b16 %v4257, %v4252
        %v4558 = vpack.c.b16 %v4258, %v4253
        %v4559 = vpack.c.b16 %v4259, %v4254
        %v4560 = vpack.c.b16 %v4260, %v4255
        %v4561 = vpack.c.b16 %v4261, %v4256
        %v4562 = vpack.c.b16 %v4267, %v4262
        %v4563 = vpack.c.b16 %v4268, %v4263
        %v4564 = vpack.c.b16 %v4269, %v4264
        %v4565 = vpack.c.b16 %v4270, %v4265
        %v4566 = vpack.c.b16 %v4271, %v4266
        %v4567 = vpack.c.b16 %v4277, %v4272
        %v4568 = vpack.c.b16 %v4278, %v4273
        %v4569 = vpack.c.b16 %v4279, %v4274
        %v4570 = vpack.c.b16 %v4280, %v4275
        %v4571 = vpack.c.b16 %v4281, %v4276
        %v4572 = vpack.c.b16 %v4287, %v4282
        %v4573 = vpack.c.b16 %v4288, %v4283
        %v4574 = vpack.c.b16 %v4289, %v4284
        %v4575 = vpack.c.b16 %v4290, %v4285
        %v4576 = vpack.c.b16 %v4291, %v4286
        %v4577 = vpack.c.b16 %v4297, %v4292
        %v4578 = vpack.c.b16 %v4298, %v4293
        %v4579 = vpack.c.b16 %v4299, %v4294
        %v4580 = vpack.c.b16 %v4300, %v4295
        %v4581 = vpack.c.b16 %v4301, %v4296
        %v4582 = vpack.c.b16 %v4307, %v4302
        %v4583 = vpack.c.b16 %v4308, %v4303
        %v4584 = vpack.c.b16 %v4309, %v4304
        %v4585 = vpack.c.b16 %v4310, %v4305
        %v4586 = vpack.c.b16 %v4311, %v4306
        %v4587 = vpack.c.b16 %v4317, %v4312
        %v4588 = vpack.c.b16 %v4318, %v4313
        %v4589 = vpack.c.b16 %v4319, %v4314
        %v4590 = vpack.c.b16 %v4320, %v4315
        %v4591 = vpack.c.b16 %v4321, %v4316
        %v4592 = vpack.c.b16 %v4327, %v4322
        %v4593 = vpack.c.b16 %v4328, %v4323
        %v4594 = vpack.c.b16 %v4329, %v4324
        %v4595 = vpack.c.b16 %v4330, %v4325
        %v4596 = vpack.c.b16 %v4331, %v4326
        %v4597 = vpack.c.b16 %v4337, %v4332
        %v4598 = vpack.c.b16 %v4338, %v4333
        %v4599 = vpack.c.b16 %v4339, %v4334
        %v4600 = vpack.c.b16 %v4340, %v4335
        %v4601 = vpack.c.b16 %v4341, %v4336
        %v4602 = vpack.c.b16 %v4347, %v4342
        %v4603 = vpack.c.b16 %v4348, %v4343
        %v4604 = vpack.c.b16 %v4349, %v4344
        %v4605 = vpack.c.b16 %v4350, %v4345
        %v4606 = vpack.c.b16 %v4351, %v4346
        %v4607 = vpack.c.b16 %v4357, %v4352
        %v4608 = vpack.c.b16 %v4358, %v4353
        %v4609 = vpack.c.b16 %v4359, %v4354
        %v4610 = vpack.c.b16 %v4360, %v4355
        %v4611 = vpack.c.b16 %v4361, %v4356
        %v4612 = vpack.c.b16 %v4367, %v4362
        %v4613 = vpack.c.b16 %v4368, %v4363
        %v4614 = vpack.c.b16 %v4369, %v4364
        %v4615 = vpack.c.b16 %v4370, %v4365
        %v4616 = vpack.c.b16 %v4371, %v4366
        %v4617 = vpack.c.b16 %v4377, %v4372
        %v4618 = vpack.c.b16 %v4378, %v4373
        %v4619 = vpack.c.b16 %v4379, %v4374
        %v4620 = vpack.c.b16 %v4380, %v4375
        %v4621 = vpack.c.b16 %v4381, %v4376
        %v4622 = vpack.c.b16 %v4387, %v4382
        %v4623 = vpack.c.b16 %v4388, %v4383
        %v4624 = vpack.c.b16 %v4389, %v4384
        %v4625 = vpack.c.b16 %v4390, %v4385
        %v4626 = vpack.c.b16 %v4391, %v4386
        %v4627 = vpack.c.b16 %v4397, %v4392
        %v4628 = vpack.c.b16 %v4398, %v4393
        %v4629 = vpack.c.b16 %v4399, %v4394
        %v4630 = vpack.c.b16 %v4400, %v4395
        %v4631 = vpack.c.b16 %v4401, %v4396
        %v4632 = vpack.c.b16 %v4407, %v4402
        %v4633 = vpack.c.b16 %v4408, %v4403
        %v4634 = vpack.c.b16 %v4409, %v4404
        %v4635 = vpack.c.b16 %v4410, %v4405
        %v4636 = vpack.c.b16 %v4411, %v4406
        %v4637 = vpack.c.b16 %v4417, %v4412
        %v4638 = vpack.c.b16 %v4418, %v4413
        %v4639 = vpack.c.b16 %v4419, %v4414
        %v4640 = vpack.c.b16 %v4420, %v4415
        %v4641 = vpack.c.b16 %v4421, %v4416
        %v4642 = vpack.c.b16 %v4427, %v4422
        %v4643 = vpack.c.b16 %v4428, %v4423
        %v4644 = vpack.c.b16 %v4429, %v4424
        %v4645 = vpack.c.b16 %v4430, %v4425
        %v4646 = vpack.c.b16 %v4431, %v4426
        %v4647 = vpack.c.b16 %v4437, %v4432
        %v4648 = vpack.c.b16 %v4438, %v4433
        %v4649 = vpack.c.b16 %v4439, %v4434
        %v4650 = vpack.c.b16 %v4440, %v4435
        %v4651 = vpack.c.b16 %v4441, %v4436
        %v4652 = vpack.c.b16 %v4447, %v4442
        %v4653 = vpack.c.b16 %v4448, %v4443
        %v4654 = vpack.c.b16 %v4449, %v4444
        %v4655 = vpack.c.b16 %v4450, %v4445
        %v4656 = vpack.c.b16 %v4451, %v4446
        %v4657 = vpack.c.b16 %v4457, %v4452
        %v4658 = vpack.c.b16 %v4458, %v4453
        %v4659 = vpack.c.b16 %v4459, %v4454
        %v4660 = vpack.c.b16 %v4460, %v4455
        %v4661 = vpack.c.b16 %v4461, %v4456
        %v4662 = vpack.c.b16 %v4467, %v4462
        %v4663 = vpack.c.b16 %v4468, %v4463
        %v4664 = vpack.c.b16 %v4469, %v4464
        %v4665 = vpack.c.b16 %v4470, %v4465
        %v4666 = vpack.c.b16 %v4471, %v4466
        %v4667 = vpack.c.b16 %v4477, %v4472
        %v4668 = vpack.c.b16 %v4478, %v4473
        %v4669 = vpack.c.b16 %v4479, %v4474
        %v4670 = vpack.c.b16 %v4480, %v4475
        %v4671 = vpack.c.b16 %v4481, %v4476
        %v4672 = vpack.c.b16 %v4482, %v4482
        %v4673 = vpack.c.b16 %v4483, %v4483
        %v4674 = vpack.c.b16 %v4484, %v4484
        %v4675 = vpack.c.b16 %v4485, %v4485
        %v4676 = vpack.c.b16 %v4486, %v4486
        %vm4862 = vcmask 719872
        %v4864 = vsel %vm4862, %v3599, 0
        %v4867 = vsel %vm4862, %v3604, 0
        %v4870 = vsel %vm4862, %v3609, 0
        %v4873 = vsel %vm4862, %v3614, 0
        %v4876 = vsel %vm4862, %v3619, 0
        %v4879 = vsel %vm4862, %v3624, 0
        %v4882 = vsel %vm4862, %v3629, 0
        %v4885 = vsel %vm4862, %v3634, 0
        %vm4887 = vcmask 1043456
        %v4889 = vsel %vm4887, %v4672, 0
        %v4892 = vsel %vm4887, %v4673, 0
        %v4895 = vsel %vm4887, %v4674, 0
        %v4898 = vsel %vm4887, %v4675, 0
        %v4901 = vsel %vm4887, %v4676, 0
        %4903 = vmatprep.subr.bf16.mxu0 %v4488
        %4904 = vmatpush1.bf16.msra.mxu0 %v4487
        %4905 = vmatprep.subr.bf16.mxu0 %v4493
        %4906 = vmatpush1.bf16.msra.mxu0 %v4492
        %4907 = vmatprep.subr.bf16.mxu0 %v4498
        %4908 = vmatpush1.bf16.msra.mxu0 %v4497
        %4909 = vmatprep.subr.bf16.mxu0 %v4503
        %4910 = vmatpush1.bf16.msra.mxu0 %v4502
        %4911 = vmatprep.subr.bf16.mxu0 %v4508
        %4912 = vmatpush1.bf16.msra.mxu0 %v4507
        %4913 = vmatprep.subr.bf16.mxu0 %v4513
        %4914 = vmatpush1.bf16.msra.mxu0 %v4512
        %4915 = vmatprep.subr.bf16.mxu0 %v4518
        %4916 = vmatpush1.bf16.msra.mxu0 %v4517
        %4917 = vmatprep.subr.bf16.mxu0 %v4523
        %4918 = vmatpush1.bf16.msra.mxu0 %v4522
        %4919 = vmatprep.subr.bf16.mxu0 %v4528
        %4920 = vmatpush1.bf16.msra.mxu0 %v4527
        %4921 = vmatprep.subr.bf16.mxu0 %v4533
        %4922 = vmatpush1.bf16.msra.mxu0 %v4532
        %4923 = vmatprep.subr.bf16.mxu0 %v4538
        %4924 = vmatpush1.bf16.msra.mxu0 %v4537
        %4925 = vmatprep.subr.bf16.mxu0 %v4543
        %4926 = vmatpush1.bf16.msra.mxu0 %v4542
        %4927 = vmatprep.subr.bf16.mxu0 %v4548
        %4928 = vmatpush1.bf16.msra.mxu0 %v4547
        %4929 = vmatprep.subr.bf16.mxu0 %v4553
        %4930 = vmatpush1.bf16.msra.mxu0 %v4552
        %4931 = vmatprep.subr.bf16.mxu0 %v4558
        %4932 = vmatpush1.bf16.msra.mxu0 %v4557
        %4933 = vmatprep.subr.bf16.mxu0 %v4563
        %4934 = vmatpush1.bf16.msra.mxu0 %v4562
        %4935 = vmatprep.mubr.bf16.mxu0 %v3596
        %4936 = vmatmul.mubr.bf16.gmra.mrb[0].mxu0 %v3595
        %v4937 = vpop.f32.mrb[0].mxu0
        %v4938 = vadd.f32 %v3865, %v4937
        %v4939 = vpop.f32.mrb[0].mxu0
        %v4940 = vadd.f32 %v3869, %v4939
        %v4941 = vpop.f32.mrb[0].mxu0
        %v4942 = vadd.f32 %v3865, %v4941
        %v4943 = vpop.f32.mrb[0].mxu0
        %v4944 = vadd.f32 %v3869, %v4943
        %4945 = vmatprep.mubr.bf16.mxu0 %v3601
        %4946 = vmatmul.mubr.bf16.gmra.mrb[0].mxu0 %v3600
        %v4947 = vpop.f32.mrb[0].mxu0
        %v4948 = vadd.f32 %v3865, %v4947
        %v4949 = vpop.f32.mrb[0].mxu0
        %v4950 = vadd.f32 %v3869, %v4949
        %v4951 = vpop.f32.mrb[0].mxu0
        %v4952 = vadd.f32 %v3865, %v4951
        %v4953 = vpop.f32.mrb[0].mxu0
        %v4954 = vadd.f32 %v3869, %v4953
        %4955 = vmatprep.mubr.bf16.mxu0 %v3606
        %4956 = vmatmul.mubr.bf16.gmra.mrb[0].mxu0 %v3605
        %v4957 = vpop.f32.mrb[0].mxu0
        %v4958 = vadd.f32 %v3865, %v4957
        %v4959 = vpop.f32.mrb[0].mxu0
        %v4960 = vadd.f32 %v3869, %v4959
        %v4961 = vpop.f32.mrb[0].mxu0
        %v4962 = vadd.f32 %v3865, %v4961
        %v4963 = vpop.f32.mrb[0].mxu0
        %v4964 = vadd.f32 %v3869, %v4963
        %4965 = vmatprep.mubr.bf16.mxu0 %v3611
        %4966 = vmatmul.mubr.bf16.gmra.mrb[0].mxu0 %v3610
        %v4967 = vpop.f32.mrb[0].mxu0
        %v4968 = vadd.f32 %v3865, %v4967
        %v4969 = vpop.f32.mrb[0].mxu0
        %v4970 = vadd.f32 %v3869, %v4969
        %v4971 = vpop.f32.mrb[0].mxu0
        %v4972 = vadd.f32 %v3865, %v4971
        %v4973 = vpop.f32.mrb[0].mxu0
        %v4974 = vadd.f32 %v3869, %v4973
        %4975 = vmatprep.mubr.bf16.mxu0 %v3616
        %4976 = vmatmul.mubr.bf16.gmra.mrb[0].mxu0 %v3615
        %v4977 = vpop.f32.mrb[0].mxu0
        %v4978 = vadd.f32 %v3865, %v4977
        %v4979 = vpop.f32.mrb[0].mxu0
        %v4980 = vadd.f32 %v3869, %v4979
        %v4981 = vpop.f32.mrb[0].mxu0
        %v4982 = vadd.f32 %v3865, %v4981
        %v4983 = vpop.f32.mrb[0].mxu0
        %v4984 = vadd.f32 %v3869, %v4983
        %4985 = vmatprep.mubr.bf16.mxu0 %v3621
        %4986 = vmatmul.mubr.bf16.gmra.mrb[0].mxu0 %v3620
        %v4987 = vpop.f32.mrb[0].mxu0
        %v4988 = vadd.f32 %v3865, %v4987
        %v4989 = vpop.f32.mrb[0].mxu0
        %v4990 = vadd.f32 %v3869, %v4989
        %v4991 = vpop.f32.mrb[0].mxu0
        %v4992 = vadd.f32 %v3865, %v4991
        %v4993 = vpop.f32.mrb[0].mxu0
        %v4994 = vadd.f32 %v3869, %v4993
        %4995 = vmatprep.mubr.bf16.mxu0 %v3626
        %4996 = vmatmul.mubr.bf16.gmra.mrb[0].mxu0 %v3625
        %v4997 = vpop.f32.mrb[0].mxu0
        %v4998 = vadd.f32 %v3865, %v4997
        %v4999 = vpop.f32.mrb[0].mxu0
        %v5000 = vadd.f32 %v3869, %v4999
        %v5001 = vpop.f32.mrb[0].mxu0
        %v5002 = vadd.f32 %v3865, %v5001
        %v5003 = vpop.f32.mrb[0].mxu0
        %v5004 = vadd.f32 %v3869, %v5003
        %5005 = vmatprep.mubr.bf16.mxu0 %v3631
        %5006 = vmatmul.mubr.bf16.gmra.mrb[0].mxu0 %v3630
        %v5007 = vpop.f32.mrb[0].mxu0
        %v5008 = vadd.f32 %v3865, %v5007
        %v5009 = vpop.f32.mrb[0].mxu0
        %v5010 = vadd.f32 %v3869, %v5009
        %v5011 = vpop.f32.mrb[0].mxu0
        %v5012 = vadd.f32 %v3865, %v5011
        %v5013 = vpop.f32.mrb[0].mxu0
        %v5014 = vadd.f32 %v3869, %v5013
        %5015 = vdwg.mxu0
        %5016 = vmatprep.subr.bf16.mxu0 %v4568
        %5017 = vmatpush1.bf16.msra.mxu0 %v4567
        %5018 = vmatprep.subr.bf16.mxu0 %v4573
        %5019 = vmatpush1.bf16.msra.mxu0 %v4572
        %5020 = vmatprep.subr.bf16.mxu0 %v4578
        %5021 = vmatpush1.bf16.msra.mxu0 %v4577
        %5022 = vmatprep.subr.bf16.mxu0 %v4583
        %5023 = vmatpush1.bf16.msra.mxu0 %v4582
        %5024 = vmatprep.subr.bf16.mxu0 %v4588
        %5025 = vmatpush1.bf16.msra.mxu0 %v4587
        %5026 = vmatprep.subr.bf16.mxu0 %v4593
        %5027 = vmatpush1.bf16.msra.mxu0 %v4592
        %5028 = vmatprep.subr.bf16.mxu0 %v4598
        %5029 = vmatpush1.bf16.msra.mxu0 %v4597
        %5030 = vmatprep.subr.bf16.mxu0 %v4603
        %5031 = vmatpush1.bf16.msra.mxu0 %v4602
        %5032 = vmatprep.subr.bf16.mxu0 %v4608
        %5033 = vmatpush1.bf16.msra.mxu0 %v4607
        %5034 = vmatprep.subr.bf16.mxu0 %v4613
        %5035 = vmatpush1.bf16.msra.mxu0 %v4612
        %5036 = vmatprep.subr.bf16.mxu0 %v4618
        %5037 = vmatpush1.bf16.msra.mxu0 %v4617
        %5038 = vmatprep.subr.bf16.mxu0 %v4623
        %5039 = vmatpush1.bf16.msra.mxu0 %v4622
        %5040 = vmatprep.subr.bf16.mxu0 %v4628
        %5041 = vmatpush1.bf16.msra.mxu0 %v4627
        %5042 = vmatprep.subr.bf16.mxu0 %v4633
        %5043 = vmatpush1.bf16.msra.mxu0 %v4632
        %5044 = vmatprep.subr.bf16.mxu0 %v4638
        %5045 = vmatpush1.bf16.msra.mxu0 %v4637
        %5046 = vmatprep.subr.bf16.mxu0 %v4643
        %5047 = vmatpush1.bf16.msra.mxu0 %v4642
        %5048 = vmatprep.mubr.bf16.mxu0 %v3598
        %5049 = vmatmul.mubr.bf16.gmra.mrb[0].mxu0 %v3597
        %v5050 = vpop.f32.mrb[0].mxu0
        %v5051 = vadd.f32 %v4938, %v5050
        %v5052 = vpop.f32.mrb[0].mxu0
        %v5053 = vadd.f32 %v4940, %v5052
        %v5054 = vpop.f32.mrb[0].mxu0
        %v5055 = vadd.f32 %v4942, %v5054
        %v5056 = vpop.f32.mrb[0].mxu0
        %v5057 = vadd.f32 %v4944, %v5056
        %5058 = vmatprep.mubr.bf16.mxu0 %v3603
        %5059 = vmatmul.mubr.bf16.gmra.mrb[0].mxu0 %v3602
        %v5060 = vpop.f32.mrb[0].mxu0
        %v5061 = vadd.f32 %v4948, %v5060
        %v5062 = vpop.f32.mrb[0].mxu0
        %v5063 = vadd.f32 %v4950, %v5062
        %v5064 = vpop.f32.mrb[0].mxu0
        %v5065 = vadd.f32 %v4952, %v5064
        %v5066 = vpop.f32.mrb[0].mxu0
        %v5067 = vadd.f32 %v4954, %v5066
        %5068 = vmatprep.mubr.bf16.mxu0 %v3608
        %5069 = vmatmul.mubr.bf16.gmra.mrb[0].mxu0 %v3607
        %v5070 = vpop.f32.mrb[0].mxu0
        %v5071 = vadd.f32 %v4958, %v5070
        %v5072 = vpop.f32.mrb[0].mxu0
        %v5073 = vadd.f32 %v4960, %v5072
        %v5074 = vpop.f32.mrb[0].mxu0
        %v5075 = vadd.f32 %v4962, %v5074
        %v5076 = vpop.f32.mrb[0].mxu0
        %v5077 = vadd.f32 %v4964, %v5076
        %5078 = vmatprep.mubr.bf16.mxu0 %v3613
        %5079 = vmatmul.mubr.bf16.gmra.mrb[0].mxu0 %v3612
        %v5080 = vpop.f32.mrb[0].mxu0
        %v5081 = vadd.f32 %v4968, %v5080
        %v5082 = vpop.f32.mrb[0].mxu0
        %v5083 = vadd.f32 %v4970, %v5082
        %v5084 = vpop.f32.mrb[0].mxu0
        %v5085 = vadd.f32 %v4972, %v5084
        %v5086 = vpop.f32.mrb[0].mxu0
        %v5087 = vadd.f32 %v4974, %v5086
        %5088 = vmatprep.mubr.bf16.mxu0 %v3618
        %5089 = vmatmul.mubr.bf16.gmra.mrb[0].mxu0 %v3617
        %v5090 = vpop.f32.mrb[0].mxu0
        %v5091 = vadd.f32 %v4978, %v5090
        %v5092 = vpop.f32.mrb[0].mxu0
        %v5093 = vadd.f32 %v4980, %v5092
        %v5094 = vpop.f32.mrb[0].mxu0
        %v5095 = vadd.f32 %v4982, %v5094
        %v5096 = vpop.f32.mrb[0].mxu0
        %v5097 = vadd.f32 %v4984, %v5096
        %5098 = vmatprep.mubr.bf16.mxu0 %v3623
        %5099 = vmatmul.mubr.bf16.gmra.mrb[0].mxu0 %v3622
        %v5100 = vpop.f32.mrb[0].mxu0
        %v5101 = vadd.f32 %v4988, %v5100
        %v5102 = vpop.f32.mrb[0].mxu0
        %v5103 = vadd.f32 %v4990, %v5102
        %v5104 = vpop.f32.mrb[0].mxu0
        %v5105 = vadd.f32 %v4992, %v5104
        %v5106 = vpop.f32.mrb[0].mxu0
        %v5107 = vadd.f32 %v4994, %v5106
        %5108 = vmatprep.mubr.bf16.mxu0 %v3628
        %5109 = vmatmul.mubr.bf16.gmra.mrb[0].mxu0 %v3627
        %v5110 = vpop.f32.mrb[0].mxu0
        %v5111 = vadd.f32 %v4998, %v5110
        %v5112 = vpop.f32.mrb[0].mxu0
        %v5113 = vadd.f32 %v5000, %v5112
        %v5114 = vpop.f32.mrb[0].mxu0
        %v5115 = vadd.f32 %v5002, %v5114
        %v5116 = vpop.f32.mrb[0].mxu0
        %v5117 = vadd.f32 %v5004, %v5116
        %5118 = vmatprep.mubr.bf16.mxu0 %v3633
        %5119 = vmatmul.mubr.bf16.gmra.mrb[0].mxu0 %v3632
        %v5120 = vpop.f32.mrb[0].mxu0
        %v5121 = vadd.f32 %v5008, %v5120
        %v5122 = vpop.f32.mrb[0].mxu0
        %v5123 = vadd.f32 %v5010, %v5122
        %v5124 = vpop.f32.mrb[0].mxu0
        %v5125 = vadd.f32 %v5012, %v5124
        %v5126 = vpop.f32.mrb[0].mxu0
        %v5127 = vadd.f32 %v5014, %v5126
        %5128 = vdwg.mxu0
        %5129 = vmatprep.subr.bf16.mxu0 %v4648
        %5130 = vmatpush1.bf16.msra.mxu0 %v4647
        %5131 = vmatprep.subr.bf16.mxu0 %v4653
        %5132 = vmatpush1.bf16.msra.mxu0 %v4652
        %5133 = vmatprep.subr.bf16.mxu0 %v4658
        %5134 = vmatpush1.bf16.msra.mxu0 %v4657
        %5135 = vmatprep.subr.bf16.mxu0 %v4663
        %5136 = vmatpush1.bf16.msra.mxu0 %v4662
        %5137 = vmatprep.subr.bf16.mxu0 %v4668
        %5138 = vmatpush1.bf16.msra.mxu0 %v4667
        %5139 = vmatprep.subr.bf16.mxu0 %v4892
        %5140 = vmatpush1.bf16.msra.mxu0 %v4889
        %5141 = vmatprep.subr.bf16.mxu0 0
        %5142 = vmatpush1.bf16.msra.mxu0 0
        %5143 = vmatprep.subr.bf16.mxu0 0
        %5144 = vmatpush1.bf16.msra.mxu0 0
        %5145 = vmatprep.subr.bf16.mxu0 0
        %5146 = vmatpush1.bf16.msra.mxu0 0
        %5147 = vmatprep.subr.bf16.mxu0 0
        %5148 = vmatpush1.bf16.msra.mxu0 0
        %5149 = vmatprep.subr.bf16.mxu0 0
        %5150 = vmatpush1.bf16.msra.mxu0 0
        %5151 = vmatprep.subr.bf16.mxu0 0
        %5152 = vmatpush1.bf16.msra.mxu0 0
        %5153 = vmatprep.subr.bf16.mxu0 0
        %5154 = vmatpush1.bf16.msra.mxu0 0
        %5155 = vmatprep.subr.bf16.mxu0 0
        %5156 = vmatpush1.bf16.msra.mxu0 0
        %5157 = vmatprep.subr.bf16.mxu0 0
        %5158 = vmatpush1.bf16.msra.mxu0 0
        %5159 = vmatprep.subr.bf16.mxu0 0
        %5160 = vmatpush1.bf16.msra.mxu0 0
        %5161 = vmatprep.mubr.bf16.mxu0 0
        %5162 = vmatmul.mubr.bf16.gmra.mrb[0].mxu0 %v4864
        %v5163 = vpop.f32.mrb[0].mxu0
        %v5164 = vadd.f32 %v5051, %v5163
        %v5165 = vpop.f32.mrb[0].mxu0
        %v5166 = vadd.f32 %v5053, %v5165
        %v5167 = vpop.f32.mrb[0].mxu0
        %v5168 = vadd.f32 %v5055, %v5167
        %v5169 = vpop.f32.mrb[0].mxu0
        %v5170 = vadd.f32 %v5057, %v5169
        %5171 = vmatprep.mubr.bf16.mxu0 0
        %5172 = vmatmul.mubr.bf16.gmra.mrb[0].mxu0 %v4867
        %v5173 = vpop.f32.mrb[0].mxu0
        %v5174 = vadd.f32 %v5061, %v5173
        %v5175 = vpop.f32.mrb[0].mxu0
        %v5176 = vadd.f32 %v5063, %v5175
        %v5177 = vpop.f32.mrb[0].mxu0
        %v5178 = vadd.f32 %v5065, %v5177
        %v5179 = vpop.f32.mrb[0].mxu0
        %v5180 = vadd.f32 %v5067, %v5179
        %5181 = vmatprep.mubr.bf16.mxu0 0
        %5182 = vmatmul.mubr.bf16.gmra.mrb[0].mxu0 %v4870
        %v5183 = vpop.f32.mrb[0].mxu0
        %v5184 = vadd.f32 %v5071, %v5183
        %v5185 = vpop.f32.mrb[0].mxu0
        %v5186 = vadd.f32 %v5073, %v5185
        %v5187 = vpop.f32.mrb[0].mxu0
        %v5188 = vadd.f32 %v5075, %v5187
        %v5189 = vpop.f32.mrb[0].mxu0
        %v5190 = vadd.f32 %v5077, %v5189
        %5191 = vmatprep.mubr.bf16.mxu0 0
        %5192 = vmatmul.mubr.bf16.gmra.mrb[0].mxu0 %v4873
        %v5193 = vpop.f32.mrb[0].mxu0
        %v5194 = vadd.f32 %v5081, %v5193
        %v5195 = vpop.f32.mrb[0].mxu0
        %v5196 = vadd.f32 %v5083, %v5195
        %v5197 = vpop.f32.mrb[0].mxu0
        %v5198 = vadd.f32 %v5085, %v5197
        %v5199 = vpop.f32.mrb[0].mxu0
        %v5200 = vadd.f32 %v5087, %v5199
        %5201 = vmatprep.mubr.bf16.mxu0 0
        %5202 = vmatmul.mubr.bf16.gmra.mrb[0].mxu0 %v4876
        %v5203 = vpop.f32.mrb[0].mxu0
        %v5204 = vadd.f32 %v5091, %v5203
        %v5205 = vpop.f32.mrb[0].mxu0
        %v5206 = vadd.f32 %v5093, %v5205
        %v5207 = vpop.f32.mrb[0].mxu0
        %v5208 = vadd.f32 %v5095, %v5207
        %v5209 = vpop.f32.mrb[0].mxu0
        %v5210 = vadd.f32 %v5097, %v5209
        %5211 = vmatprep.mubr.bf16.mxu0 0
        %5212 = vmatmul.mubr.bf16.gmra.mrb[0].mxu0 %v4879
        %v5213 = vpop.f32.mrb[0].mxu0
        %v5214 = vadd.f32 %v5101, %v5213
        %v5215 = vpop.f32.mrb[0].mxu0
        %v5216 = vadd.f32 %v5103, %v5215
        %v5217 = vpop.f32.mrb[0].mxu0
        %v5218 = vadd.f32 %v5105, %v5217
        %v5219 = vpop.f32.mrb[0].mxu0
        %v5220 = vadd.f32 %v5107, %v5219
        %5221 = vmatprep.mubr.bf16.mxu0 0
        %5222 = vmatmul.mubr.bf16.gmra.mrb[0].mxu0 %v4882
        %v5223 = vpop.f32.mrb[0].mxu0
        %v5224 = vadd.f32 %v5111, %v5223
        %v5225 = vpop.f32.mrb[0].mxu0
        %v5226 = vadd.f32 %v5113, %v5225
        %v5227 = vpop.f32.mrb[0].mxu0
        %v5228 = vadd.f32 %v5115, %v5227
        %v5229 = vpop.f32.mrb[0].mxu0
        %v5230 = vadd.f32 %v5117, %v5229
        %5231 = vmatprep.mubr.bf16.mxu0 0
        %5232 = vmatmul.mubr.bf16.gmra.mrb[0].mxu0 %v4885
        %v5233 = vpop.f32.mrb[0].mxu0
        %v5234 = vadd.f32 %v5121, %v5233
        %v5235 = vpop.f32.mrb[0].mxu0
        %v5236 = vadd.f32 %v5123, %v5235
        %v5237 = vpop.f32.mrb[0].mxu0
        %v5238 = vadd.f32 %v5125, %v5237
        %v5239 = vpop.f32.mrb[0].mxu0
        %v5240 = vadd.f32 %v5127, %v5239
        %5241 = vdwg.mxu0
        %5242 = vmatprep.subr.bf16.mxu0 %v4490
        %5243 = vmatpush1.bf16.msra.mxu0 %v4489
        %5244 = vmatprep.subr.bf16.mxu0 %v4495
        %5245 = vmatpush1.bf16.msra.mxu0 %v4494
        %5246 = vmatprep.subr.bf16.mxu0 %v4500
        %5247 = vmatpush1.bf16.msra.mxu0 %v4499
        %5248 = vmatprep.subr.bf16.mxu0 %v4505
        %5249 = vmatpush1.bf16.msra.mxu0 %v4504
        %5250 = vmatprep.subr.bf16.mxu0 %v4510
        %5251 = vmatpush1.bf16.msra.mxu0 %v4509
        %5252 = vmatprep.subr.bf16.mxu0 %v4515
        %5253 = vmatpush1.bf16.msra.mxu0 %v4514
        %5254 = vmatprep.subr.bf16.mxu0 %v4520
        %5255 = vmatpush1.bf16.msra.mxu0 %v4519
        %5256 = vmatprep.subr.bf16.mxu0 %v4525
        %5257 = vmatpush1.bf16.msra.mxu0 %v4524
        %5258 = vmatprep.subr.bf16.mxu0 %v4530
        %5259 = vmatpush1.bf16.msra.mxu0 %v4529
        %5260 = vmatprep.subr.bf16.mxu0 %v4535
        %5261 = vmatpush1.bf16.msra.mxu0 %v4534
        %5262 = vmatprep.subr.bf16.mxu0 %v4540
        %5263 = vmatpush1.bf16.msra.mxu0 %v4539
        %5264 = vmatprep.subr.bf16.mxu0 %v4545
        %5265 = vmatpush1.bf16.msra.mxu0 %v4544
        %5266 = vmatprep.subr.bf16.mxu0 %v4550
        %5267 = vmatpush1.bf16.msra.mxu0 %v4549
        %5268 = vmatprep.subr.bf16.mxu0 %v4555
        %5269 = vmatpush1.bf16.msra.mxu0 %v4554
        %5270 = vmatprep.subr.bf16.mxu0 %v4560
        %5271 = vmatpush1.bf16.msra.mxu0 %v4559
        %5272 = vmatprep.subr.bf16.mxu0 %v4565
        %5273 = vmatpush1.bf16.msra.mxu0 %v4564
        %5274 = vmatprep.mubr.bf16.mxu0 %v3596
        %5275 = vmatmul.mubr.bf16.gmra.mrb[0].mxu0 %v3595
        %v5276 = vpop.f32.mrb[0].mxu0
        %v5277 = vadd.f32 %v3873, %v5276
        %v5278 = vpop.f32.mrb[0].mxu0
        %v5279 = vadd.f32 %v3877, %v5278
        %v5280 = vpop.f32.mrb[0].mxu0
        %v5281 = vadd.f32 %v3873, %v5280
        %v5282 = vpop.f32.mrb[0].mxu0
        %v5283 = vadd.f32 %v3877, %v5282
        %5284 = vmatprep.mubr.bf16.mxu0 %v3601
        %5285 = vmatmul.mubr.bf16.gmra.mrb[0].mxu0 %v3600
        %v5286 = vpop.f32.mrb[0].mxu0
        %v5287 = vadd.f32 %v3873, %v5286
        %v5288 = vpop.f32.mrb[0].mxu0
        %v5289 = vadd.f32 %v3877, %v5288
        %v5290 = vpop.f32.mrb[0].mxu0
        %v5291 = vadd.f32 %v3873, %v5290
        %v5292 = vpop.f32.mrb[0].mxu0
        %v5293 = vadd.f32 %v3877, %v5292
        %5294 = vmatprep.mubr.bf16.mxu0 %v3606
        %5295 = vmatmul.mubr.bf16.gmra.mrb[0].mxu0 %v3605
        %v5296 = vpop.f32.mrb[0].mxu0
        %v5297 = vadd.f32 %v3873, %v5296
        %v5298 = vpop.f32.mrb[0].mxu0
        %v5299 = vadd.f32 %v3877, %v5298
        %v5300 = vpop.f32.mrb[0].mxu0
        %v5301 = vadd.f32 %v3873, %v5300
        %v5302 = vpop.f32.mrb[0].mxu0
        %v5303 = vadd.f32 %v3877, %v5302
        %5304 = vmatprep.mubr.bf16.mxu0 %v3611
        %5305 = vmatmul.mubr.bf16.gmra.mrb[0].mxu0 %v3610
        %v5306 = vpop.f32.mrb[0].mxu0
        %v5307 = vadd.f32 %v3873, %v5306
        %v5308 = vpop.f32.mrb[0].mxu0
        %v5309 = vadd.f32 %v3877, %v5308
        %v5310 = vpop.f32.mrb[0].mxu0
        %v5311 = vadd.f32 %v3873, %v5310
        %v5312 = vpop.f32.mrb[0].mxu0
        %v5313 = vadd.f32 %v3877, %v5312
        %5314 = vmatprep.mubr.bf16.mxu0 %v3616
        %5315 = vmatmul.mubr.bf16.gmra.mrb[0].mxu0 %v3615
        %v5316 = vpop.f32.mrb[0].mxu0
        %v5317 = vadd.f32 %v3873, %v5316
        %v5318 = vpop.f32.mrb[0].mxu0
        %v5319 = vadd.f32 %v3877, %v5318
        %v5320 = vpop.f32.mrb[0].mxu0
        %v5321 = vadd.f32 %v3873, %v5320
        %v5322 = vpop.f32.mrb[0].mxu0
        %v5323 = vadd.f32 %v3877, %v5322
        %5324 = vmatprep.mubr.bf16.mxu0 %v3621
        %5325 = vmatmul.mubr.bf16.gmra.mrb[0].mxu0 %v3620
        %v5326 = vpop.f32.mrb[0].mxu0
        %v5327 = vadd.f32 %v3873, %v5326
        %v5328 = vpop.f32.mrb[0].mxu0
        %v5329 = vadd.f32 %v3877, %v5328
        %v5330 = vpop.f32.mrb[0].mxu0
        %v5331 = vadd.f32 %v3873, %v5330
        %v5332 = vpop.f32.mrb[0].mxu0
        %v5333 = vadd.f32 %v3877, %v5332
        %5334 = vmatprep.mubr.bf16.mxu0 %v3626
        %5335 = vmatmul.mubr.bf16.gmra.mrb[0].mxu0 %v3625
        %v5336 = vpop.f32.mrb[0].mxu0
        %v5337 = vadd.f32 %v3873, %v5336
        %v5338 = vpop.f32.mrb[0].mxu0
        %v5339 = vadd.f32 %v3877, %v5338
        %v5340 = vpop.f32.mrb[0].mxu0
        %v5341 = vadd.f32 %v3873, %v5340
        %v5342 = vpop.f32.mrb[0].mxu0
        %v5343 = vadd.f32 %v3877, %v5342
        %5344 = vmatprep.mubr.bf16.mxu0 %v3631
        %5345 = vmatmul.mubr.bf16.gmra.mrb[0].mxu0 %v3630
        %v5346 = vpop.f32.mrb[0].mxu0
        %v5347 = vadd.f32 %v3873, %v5346
        %v5348 = vpop.f32.mrb[0].mxu0
        %v5349 = vadd.f32 %v3877, %v5348
        %v5350 = vpop.f32.mrb[0].mxu0
        %v5351 = vadd.f32 %v3873, %v5350
        %v5352 = vpop.f32.mrb[0].mxu0
        %v5353 = vadd.f32 %v3877, %v5352
        %5354 = vdwg.mxu0
        %5355 = vmatprep.subr.bf16.mxu0 %v4570
        %5356 = vmatpush1.bf16.msra.mxu0 %v4569
        %5357 = vmatprep.subr.bf16.mxu0 %v4575
        %5358 = vmatpush1.bf16.msra.mxu0 %v4574
        %5359 = vmatprep.subr.bf16.mxu0 %v4580
        %5360 = vmatpush1.bf16.msra.mxu0 %v4579
        %5361 = vmatprep.subr.bf16.mxu0 %v4585
        %5362 = vmatpush1.bf16.msra.mxu0 %v4584
        %5363 = vmatprep.subr.bf16.mxu0 %v4590
        %5364 = vmatpush1.bf16.msra.mxu0 %v4589
        %5365 = vmatprep.subr.bf16.mxu0 %v4595
        %5366 = vmatpush1.bf16.msra.mxu0 %v4594
        %5367 = vmatprep.subr.bf16.mxu0 %v4600
        %5368 = vmatpush1.bf16.msra.mxu0 %v4599
        %5369 = vmatprep.subr.bf16.mxu0 %v4605
        %5370 = vmatpush1.bf16.msra.mxu0 %v4604
        %5371 = vmatprep.subr.bf16.mxu0 %v4610
        %5372 = vmatpush1.bf16.msra.mxu0 %v4609
        %5373 = vmatprep.subr.bf16.mxu0 %v4615
        %5374 = vmatpush1.bf16.msra.mxu0 %v4614
        %5375 = vmatprep.subr.bf16.mxu0 %v4620
        %5376 = vmatpush1.bf16.msra.mxu0 %v4619
        %5377 = vmatprep.subr.bf16.mxu0 %v4625
        %5378 = vmatpush1.bf16.msra.mxu0 %v4624
        %5379 = vmatprep.subr.bf16.mxu0 %v4630
        %5380 = vmatpush1.bf16.msra.mxu0 %v4629
        %5381 = vmatprep.subr.bf16.mxu0 %v4635
        %5382 = vmatpush1.bf16.msra.mxu0 %v4634
        %5383 = vmatprep.subr.bf16.mxu0 %v4640
        %5384 = vmatpush1.bf16.msra.mxu0 %v4639
        %5385 = vmatprep.subr.bf16.mxu0 %v4645
        %5386 = vmatpush1.bf16.msra.mxu0 %v4644
        %5387 = vmatprep.mubr.bf16.mxu0 %v3598
        %5388 = vmatmul.mubr.bf16.gmra.mrb[0].mxu0 %v3597
        %v5389 = vpop.f32.mrb[0].mxu0
        %v5390 = vadd.f32 %v5277, %v5389
        %v5391 = vpop.f32.mrb[0].mxu0
        %v5392 = vadd.f32 %v5279, %v5391
        %v5393 = vpop.f32.mrb[0].mxu0
        %v5394 = vadd.f32 %v5281, %v5393
        %v5395 = vpop.f32.mrb[0].mxu0
        %v5396 = vadd.f32 %v5283, %v5395
        %5397 = vmatprep.mubr.bf16.mxu0 %v3603
        %5398 = vmatmul.mubr.bf16.gmra.mrb[0].mxu0 %v3602
        %v5399 = vpop.f32.mrb[0].mxu0
        %v5400 = vadd.f32 %v5287, %v5399
        %v5401 = vpop.f32.mrb[0].mxu0
        %v5402 = vadd.f32 %v5289, %v5401
        %v5403 = vpop.f32.mrb[0].mxu0
        %v5404 = vadd.f32 %v5291, %v5403
        %v5405 = vpop.f32.mrb[0].mxu0
        %v5406 = vadd.f32 %v5293, %v5405
        %5407 = vmatprep.mubr.bf16.mxu0 %v3608
        %5408 = vmatmul.mubr.bf16.gmra.mrb[0].mxu0 %v3607
        %v5409 = vpop.f32.mrb[0].mxu0
        %v5410 = vadd.f32 %v5297, %v5409
        %v5411 = vpop.f32.mrb[0].mxu0
        %v5412 = vadd.f32 %v5299, %v5411
        %v5413 = vpop.f32.mrb[0].mxu0
        %v5414 = vadd.f32 %v5301, %v5413
        %v5415 = vpop.f32.mrb[0].mxu0
        %v5416 = vadd.f32 %v5303, %v5415
        %5417 = vmatprep.mubr.bf16.mxu0 %v3613
        %5418 = vmatmul.mubr.bf16.gmra.mrb[0].mxu0 %v3612
        %v5419 = vpop.f32.mrb[0].mxu0
        %v5420 = vadd.f32 %v5307, %v5419
        %v5421 = vpop.f32.mrb[0].mxu0
        %v5422 = vadd.f32 %v5309, %v5421
        %v5423 = vpop.f32.mrb[0].mxu0
        %v5424 = vadd.f32 %v5311, %v5423
        %v5425 = vpop.f32.mrb[0].mxu0
        %v5426 = vadd.f32 %v5313, %v5425
        %5427 = vmatprep.mubr.bf16.mxu0 %v3618
        %5428 = vmatmul.mubr.bf16.gmra.mrb[0].mxu0 %v3617
        %v5429 = vpop.f32.mrb[0].mxu0
        %v5430 = vadd.f32 %v5317, %v5429
        %v5431 = vpop.f32.mrb[0].mxu0
        %v5432 = vadd.f32 %v5319, %v5431
        %v5433 = vpop.f32.mrb[0].mxu0
        %v5434 = vadd.f32 %v5321, %v5433
        %v5435 = vpop.f32.mrb[0].mxu0
        %v5436 = vadd.f32 %v5323, %v5435
        %5437 = vmatprep.mubr.bf16.mxu0 %v3623
        %5438 = vmatmul.mubr.bf16.gmra.mrb[0].mxu0 %v3622
        %v5439 = vpop.f32.mrb[0].mxu0
        %v5440 = vadd.f32 %v5327, %v5439
        %v5441 = vpop.f32.mrb[0].mxu0
        %v5442 = vadd.f32 %v5329, %v5441
        %v5443 = vpop.f32.mrb[0].mxu0
        %v5444 = vadd.f32 %v5331, %v5443
        %v5445 = vpop.f32.mrb[0].mxu0
        %v5446 = vadd.f32 %v5333, %v5445
        %5447 = vmatprep.mubr.bf16.mxu0 %v3628
        %5448 = vmatmul.mubr.bf16.gmra.mrb[0].mxu0 %v3627
        %v5449 = vpop.f32.mrb[0].mxu0
        %v5450 = vadd.f32 %v5337, %v5449
        %v5451 = vpop.f32.mrb[0].mxu0
        %v5452 = vadd.f32 %v5339, %v5451
        %v5453 = vpop.f32.mrb[0].mxu0
        %v5454 = vadd.f32 %v5341, %v5453
        %v5455 = vpop.f32.mrb[0].mxu0
        %v5456 = vadd.f32 %v5343, %v5455
        %5457 = vmatprep.mubr.bf16.mxu0 %v3633
        %5458 = vmatmul.mubr.bf16.gmra.mrb[0].mxu0 %v3632
        %v5459 = vpop.f32.mrb[0].mxu0
        %v5460 = vadd.f32 %v5347, %v5459
        %v5461 = vpop.f32.mrb[0].mxu0
        %v5462 = vadd.f32 %v5349, %v5461
        %v5463 = vpop.f32.mrb[0].mxu0
        %v5464 = vadd.f32 %v5351, %v5463
        %v5465 = vpop.f32.mrb[0].mxu0
        %v5466 = vadd.f32 %v5353, %v5465
        %5467 = vdwg.mxu0
        %5468 = vmatprep.subr.bf16.mxu0 %v4650
        %5469 = vmatpush1.bf16.msra.mxu0 %v4649
        %5470 = vmatprep.subr.bf16.mxu0 %v4655
        %5471 = vmatpush1.bf16.msra.mxu0 %v4654
        %5472 = vmatprep.subr.bf16.mxu0 %v4660
        %5473 = vmatpush1.bf16.msra.mxu0 %v4659
        %5474 = vmatprep.subr.bf16.mxu0 %v4665
        %5475 = vmatpush1.bf16.msra.mxu0 %v4664
        %5476 = vmatprep.subr.bf16.mxu0 %v4670
        %5477 = vmatpush1.bf16.msra.mxu0 %v4669
        %5478 = vmatprep.subr.bf16.mxu0 %v4898
        %5479 = vmatpush1.bf16.msra.mxu0 %v4895
        %5480 = vmatprep.subr.bf16.mxu0 0
        %5481 = vmatpush1.bf16.msra.mxu0 0
        %5482 = vmatprep.subr.bf16.mxu0 0
        %5483 = vmatpush1.bf16.msra.mxu0 0
        %5484 = vmatprep.subr.bf16.mxu0 0
        %5485 = vmatpush1.bf16.msra.mxu0 0
        %5486 = vmatprep.subr.bf16.mxu0 0
        %5487 = vmatpush1.bf16.msra.mxu0 0
        %5488 = vmatprep.subr.bf16.mxu0 0
        %5489 = vmatpush1.bf16.msra.mxu0 0
        %5490 = vmatprep.subr.bf16.mxu0 0
        %5491 = vmatpush1.bf16.msra.mxu0 0
        %5492 = vmatprep.subr.bf16.mxu0 0
        %5493 = vmatpush1.bf16.msra.mxu0 0
        %5494 = vmatprep.subr.bf16.mxu0 0
        %5495 = vmatpush1.bf16.msra.mxu0 0
        %5496 = vmatprep.subr.bf16.mxu0 0
        %5497 = vmatpush1.bf16.msra.mxu0 0
        %5498 = vmatprep.subr.bf16.mxu0 0
        %5499 = vmatpush1.bf16.msra.mxu0 0
        %5500 = vmatprep.mubr.bf16.mxu0 0
        %5501 = vmatmul.mubr.bf16.gmra.mrb[0].mxu0 %v4864
        %v5502 = vpop.f32.mrb[0].mxu0
        %v5503 = vadd.f32 %v5390, %v5502
        %v5504 = vpop.f32.mrb[0].mxu0
        %v5505 = vadd.f32 %v5392, %v5504
        %v5506 = vpop.f32.mrb[0].mxu0
        %v5507 = vadd.f32 %v5394, %v5506
        %v5508 = vpop.f32.mrb[0].mxu0
        %v5509 = vadd.f32 %v5396, %v5508
        %5510 = vmatprep.mubr.bf16.mxu0 0
        %5511 = vmatmul.mubr.bf16.gmra.mrb[0].mxu0 %v4867
        %v5512 = vpop.f32.mrb[0].mxu0
        %v5513 = vadd.f32 %v5400, %v5512
        %v5514 = vpop.f32.mrb[0].mxu0
        %v5515 = vadd.f32 %v5402, %v5514
        %v5516 = vpop.f32.mrb[0].mxu0
        %v5517 = vadd.f32 %v5404, %v5516
        %v5518 = vpop.f32.mrb[0].mxu0
        %v5519 = vadd.f32 %v5406, %v5518
        %5520 = vmatprep.mubr.bf16.mxu0 0
        %5521 = vmatmul.mubr.bf16.gmra.mrb[0].mxu0 %v4870
        %v5522 = vpop.f32.mrb[0].mxu0
        %v5523 = vadd.f32 %v5410, %v5522
        %v5524 = vpop.f32.mrb[0].mxu0
        %v5525 = vadd.f32 %v5412, %v5524
        %v5526 = vpop.f32.mrb[0].mxu0
        %v5527 = vadd.f32 %v5414, %v5526
        %v5528 = vpop.f32.mrb[0].mxu0
        %v5529 = vadd.f32 %v5416, %v5528
        %5530 = vmatprep.mubr.bf16.mxu0 0
        %5531 = vmatmul.mubr.bf16.gmra.mrb[0].mxu0 %v4873
        %v5532 = vpop.f32.mrb[0].mxu0
        %v5533 = vadd.f32 %v5420, %v5532
        %v5534 = vpop.f32.mrb[0].mxu0
        %v5535 = vadd.f32 %v5422, %v5534
        %v5536 = vpop.f32.mrb[0].mxu0
        %v5537 = vadd.f32 %v5424, %v5536
        %v5538 = vpop.f32.mrb[0].mxu0
        %v5539 = vadd.f32 %v5426, %v5538
        %5540 = vmatprep.mubr.bf16.mxu0 0
        %5541 = vmatmul.mubr.bf16.gmra.mrb[0].mxu0 %v4876
        %v5542 = vpop.f32.mrb[0].mxu0
        %v5543 = vadd.f32 %v5430, %v5542
        %v5544 = vpop.f32.mrb[0].mxu0
        %v5545 = vadd.f32 %v5432, %v5544
        %v5546 = vpop.f32.mrb[0].mxu0
        %v5547 = vadd.f32 %v5434, %v5546
        %v5548 = vpop.f32.mrb[0].mxu0
        %v5549 = vadd.f32 %v5436, %v5548
        %5550 = vmatprep.mubr.bf16.mxu0 0
        %5551 = vmatmul.mubr.bf16.gmra.mrb[0].mxu0 %v4879
        %v5552 = vpop.f32.mrb[0].mxu0
        %v5553 = vadd.f32 %v5440, %v5552
        %v5554 = vpop.f32.mrb[0].mxu0
        %v5555 = vadd.f32 %v5442, %v5554
        %v5556 = vpop.f32.mrb[0].mxu0
        %v5557 = vadd.f32 %v5444, %v5556
        %v5558 = vpop.f32.mrb[0].mxu0
        %v5559 = vadd.f32 %v5446, %v5558
        %5560 = vmatprep.mubr.bf16.mxu0 0
        %5561 = vmatmul.mubr.bf16.gmra.mrb[0].mxu0 %v4882
        %v5562 = vpop.f32.mrb[0].mxu0
        %v5563 = vadd.f32 %v5450, %v5562
        %v5564 = vpop.f32.mrb[0].mxu0
        %v5565 = vadd.f32 %v5452, %v5564
        %v5566 = vpop.f32.mrb[0].mxu0
        %v5567 = vadd.f32 %v5454, %v5566
        %v5568 = vpop.f32.mrb[0].mxu0
        %v5569 = vadd.f32 %v5456, %v5568
        %5570 = vmatprep.mubr.bf16.mxu0 0
        %5571 = vmatmul.mubr.bf16.gmra.mrb[0].mxu0 %v4885
        %v5572 = vpop.f32.mrb[0].mxu0
        %v5573 = vadd.f32 %v5460, %v5572
        %v5574 = vpop.f32.mrb[0].mxu0
        %v5575 = vadd.f32 %v5462, %v5574
        %v5576 = vpop.f32.mrb[0].mxu0
        %v5577 = vadd.f32 %v5464, %v5576
        %v5578 = vpop.f32.mrb[0].mxu0
        %v5579 = vadd.f32 %v5466, %v5578
        %5580 = vdwg.mxu0
        %5581 = vmatprep.subr.bf16.mxu0 0
        %5582 = vmatpush1.bf16.msra.mxu0 %v4491
        %5583 = vmatprep.subr.bf16.mxu0 0
        %5584 = vmatpush1.bf16.msra.mxu0 %v4496
        %5585 = vmatprep.subr.bf16.mxu0 0
        %5586 = vmatpush1.bf16.msra.mxu0 %v4501
        %5587 = vmatprep.subr.bf16.mxu0 0
        %5588 = vmatpush1.bf16.msra.mxu0 %v4506
        %5589 = vmatprep.subr.bf16.mxu0 0
        %5590 = vmatpush1.bf16.msra.mxu0 %v4511
        %5591 = vmatprep.subr.bf16.mxu0 0
        %5592 = vmatpush1.bf16.msra.mxu0 %v4516
        %5593 = vmatprep.subr.bf16.mxu0 0
        %5594 = vmatpush1.bf16.msra.mxu0 %v4521
        %5595 = vmatprep.subr.bf16.mxu0 0
        %5596 = vmatpush1.bf16.msra.mxu0 %v4526
        %5597 = vmatprep.subr.bf16.mxu0 0
        %5598 = vmatpush1.bf16.msra.mxu0 %v4531
        %5599 = vmatprep.subr.bf16.mxu0 0
        %5600 = vmatpush1.bf16.msra.mxu0 %v4536
        %5601 = vmatprep.subr.bf16.mxu0 0
        %5602 = vmatpush1.bf16.msra.mxu0 %v4541
        %5603 = vmatprep.subr.bf16.mxu0 0
        %5604 = vmatpush1.bf16.msra.mxu0 %v4546
        %5605 = vmatprep.subr.bf16.mxu0 0
        %5606 = vmatpush1.bf16.msra.mxu0 %v4551
        %5607 = vmatprep.subr.bf16.mxu0 0
        %5608 = vmatpush1.bf16.msra.mxu0 %v4556
        %5609 = vmatprep.subr.bf16.mxu0 0
        %5610 = vmatpush1.bf16.msra.mxu0 %v4561
        %5611 = vmatprep.subr.bf16.mxu0 0
        %5612 = vmatpush1.bf16.msra.mxu0 %v4566
        %5613 = vmatprep.mubr.bf16.mxu0 %v3596
        %5614 = vmatmul.mubr.bf16.gmra.mrb[0].mxu0 %v3595
        %v5615 = vpop.f32.mrb[0].mxu0
        %v5616 = vadd.f32 %v3881, %v5615
        %v5617 = vpop.f32.mrb[0].mxu0
        %v5618 = vpop.f32.mrb[0].mxu0
        %v5619 = vadd.f32 %v3881, %v5618
        %v5620 = vpop.f32.mrb[0].mxu0
        %5621 = vmatprep.mubr.bf16.mxu0 %v3601
        %5622 = vmatmul.mubr.bf16.gmra.mrb[0].mxu0 %v3600
        %v5623 = vpop.f32.mrb[0].mxu0
        %v5624 = vadd.f32 %v3881, %v5623
        %v5625 = vpop.f32.mrb[0].mxu0
        %v5626 = vpop.f32.mrb[0].mxu0
        %v5627 = vadd.f32 %v3881, %v5626
        %v5628 = vpop.f32.mrb[0].mxu0
        %5629 = vmatprep.mubr.bf16.mxu0 %v3606
        %5630 = vmatmul.mubr.bf16.gmra.mrb[0].mxu0 %v3605
        %v5631 = vpop.f32.mrb[0].mxu0
        %v5632 = vadd.f32 %v3881, %v5631
        %v5633 = vpop.f32.mrb[0].mxu0
        %v5634 = vpop.f32.mrb[0].mxu0
        %v5635 = vadd.f32 %v3881, %v5634
        %v5636 = vpop.f32.mrb[0].mxu0
        %5637 = vmatprep.mubr.bf16.mxu0 %v3611
        %5638 = vmatmul.mubr.bf16.gmra.mrb[0].mxu0 %v3610
        %v5639 = vpop.f32.mrb[0].mxu0
        %v5640 = vadd.f32 %v3881, %v5639
        %v5641 = vpop.f32.mrb[0].mxu0
        %v5642 = vpop.f32.mrb[0].mxu0
        %v5643 = vadd.f32 %v3881, %v5642
        %v5644 = vpop.f32.mrb[0].mxu0
        %5645 = vmatprep.mubr.bf16.mxu0 %v3616
        %5646 = vmatmul.mubr.bf16.gmra.mrb[0].mxu0 %v3615
        %v5647 = vpop.f32.mrb[0].mxu0
        %v5648 = vadd.f32 %v3881, %v5647
        %v5649 = vpop.f32.mrb[0].mxu0
        %v5650 = vpop.f32.mrb[0].mxu0
        %v5651 = vadd.f32 %v3881, %v5650
        %v5652 = vpop.f32.mrb[0].mxu0
        %5653 = vmatprep.mubr.bf16.mxu0 %v3621
        %5654 = vmatmul.mubr.bf16.gmra.mrb[0].mxu0 %v3620
        %v5655 = vpop.f32.mrb[0].mxu0
        %v5656 = vadd.f32 %v3881, %v5655
        %v5657 = vpop.f32.mrb[0].mxu0
        %v5658 = vpop.f32.mrb[0].mxu0
        %v5659 = vadd.f32 %v3881, %v5658
        %v5660 = vpop.f32.mrb[0].mxu0
        %5661 = vmatprep.mubr.bf16.mxu0 %v3626
        %5662 = vmatmul.mubr.bf16.gmra.mrb[0].mxu0 %v3625
        %v5663 = vpop.f32.mrb[0].mxu0
        %v5664 = vadd.f32 %v3881, %v5663
        %v5665 = vpop.f32.mrb[0].mxu0
        %v5666 = vpop.f32.mrb[0].mxu0
        %v5667 = vadd.f32 %v3881, %v5666
        %v5668 = vpop.f32.mrb[0].mxu0
        %5669 = vmatprep.mubr.bf16.mxu0 %v3631
        %5670 = vmatmul.mubr.bf16.gmra.mrb[0].mxu0 %v3630
        %v5671 = vpop.f32.mrb[0].mxu0
        %v5672 = vadd.f32 %v3881, %v5671
        %v5673 = vpop.f32.mrb[0].mxu0
        %v5674 = vpop.f32.mrb[0].mxu0
        %v5675 = vadd.f32 %v3881, %v5674
        %v5676 = vpop.f32.mrb[0].mxu0
        %5677 = vdwg.mxu0
        %5678 = vmatprep.subr.bf16.mxu0 0
        %5679 = vmatpush1.bf16.msra.mxu0 %v4571
        %5680 = vmatprep.subr.bf16.mxu0 0
        %5681 = vmatpush1.bf16.msra.mxu0 %v4576
        %5682 = vmatprep.subr.bf16.mxu0 0
        %5683 = vmatpush1.bf16.msra.mxu0 %v4581
        %5684 = vmatprep.subr.bf16.mxu0 0
        %5685 = vmatpush1.bf16.msra.mxu0 %v4586
        %5686 = vmatprep.subr.bf16.mxu0 0
        %5687 = vmatpush1.bf16.msra.mxu0 %v4591
        %5688 = vmatprep.subr.bf16.mxu0 0
        %5689 = vmatpush1.bf16.msra.mxu0 %v4596
        %5690 = vmatprep.subr.bf16.mxu0 0
        %5691 = vmatpush1.bf16.msra.mxu0 %v4601
        %5692 = vmatprep.subr.bf16.mxu0 0
        %5693 = vmatpush1.bf16.msra.mxu0 %v4606
        %5694 = vmatprep.subr.bf16.mxu0 0
        %5695 = vmatpush1.bf16.msra.mxu0 %v4611
        %5696 = vmatprep.subr.bf16.mxu0 0
        %5697 = vmatpush1.bf16.msra.mxu0 %v4616
        %5698 = vmatprep.subr.bf16.mxu0 0
        %5699 = vmatpush1.bf16.msra.mxu0 %v4621
        %5700 = vmatprep.subr.bf16.mxu0 0
        %5701 = vmatpush1.bf16.msra.mxu0 %v4626
        %5702 = vmatprep.subr.bf16.mxu0 0
        %5703 = vmatpush1.bf16.msra.mxu0 %v4631
        %5704 = vmatprep.subr.bf16.mxu0 0
        %5705 = vmatpush1.bf16.msra.mxu0 %v4636
        %5706 = vmatprep.subr.bf16.mxu0 0
        %5707 = vmatpush1.bf16.msra.mxu0 %v4641
        %5708 = vmatprep.subr.bf16.mxu0 0
        %5709 = vmatpush1.bf16.msra.mxu0 %v4646
        %5710 = vmatprep.mubr.bf16.mxu0 %v3598
        %5711 = vmatmul.mubr.bf16.gmra.mrb[0].mxu0 %v3597
        %v5712 = vpop.f32.mrb[0].mxu0
        %v5713 = vadd.f32 %v5616, %v5712
        %v5714 = vpop.f32.mrb[0].mxu0
        %v5715 = vpop.f32.mrb[0].mxu0
        %v5716 = vadd.f32 %v5619, %v5715
        %v5717 = vpop.f32.mrb[0].mxu0
        %5718 = vmatprep.mubr.bf16.mxu0 %v3603
        %5719 = vmatmul.mubr.bf16.gmra.mrb[0].mxu0 %v3602
        %v5720 = vpop.f32.mrb[0].mxu0
        %v5721 = vadd.f32 %v5624, %v5720
        %v5722 = vpop.f32.mrb[0].mxu0
        %v5723 = vpop.f32.mrb[0].mxu0
        %v5724 = vadd.f32 %v5627, %v5723
        %v5725 = vpop.f32.mrb[0].mxu0
        %5726 = vmatprep.mubr.bf16.mxu0 %v3608
        %5727 = vmatmul.mubr.bf16.gmra.mrb[0].mxu0 %v3607
        %v5728 = vpop.f32.mrb[0].mxu0
        %v5729 = vadd.f32 %v5632, %v5728
        %v5730 = vpop.f32.mrb[0].mxu0
        %v5731 = vpop.f32.mrb[0].mxu0
        %v5732 = vadd.f32 %v5635, %v5731
        %v5733 = vpop.f32.mrb[0].mxu0
        %5734 = vmatprep.mubr.bf16.mxu0 %v3613
        %5735 = vmatmul.mubr.bf16.gmra.mrb[0].mxu0 %v3612
        %v5736 = vpop.f32.mrb[0].mxu0
        %v5737 = vadd.f32 %v5640, %v5736
        %v5738 = vpop.f32.mrb[0].mxu0
        %v5739 = vpop.f32.mrb[0].mxu0
        %v5740 = vadd.f32 %v5643, %v5739
        %v5741 = vpop.f32.mrb[0].mxu0
        %5742 = vmatprep.mubr.bf16.mxu0 %v3618
        %5743 = vmatmul.mubr.bf16.gmra.mrb[0].mxu0 %v3617
        %v5744 = vpop.f32.mrb[0].mxu0
        %v5745 = vadd.f32 %v5648, %v5744
        %v5746 = vpop.f32.mrb[0].mxu0
        %v5747 = vpop.f32.mrb[0].mxu0
        %v5748 = vadd.f32 %v5651, %v5747
        %v5749 = vpop.f32.mrb[0].mxu0
        %5750 = vmatprep.mubr.bf16.mxu0 %v3623
        %5751 = vmatmul.mubr.bf16.gmra.mrb[0].mxu0 %v3622
        %v5752 = vpop.f32.mrb[0].mxu0
        %v5753 = vadd.f32 %v5656, %v5752
        %v5754 = vpop.f32.mrb[0].mxu0
        %v5755 = vpop.f32.mrb[0].mxu0
        %v5756 = vadd.f32 %v5659, %v5755
        %v5757 = vpop.f32.mrb[0].mxu0
        %5758 = vmatprep.mubr.bf16.mxu0 %v3628
        %5759 = vmatmul.mubr.bf16.gmra.mrb[0].mxu0 %v3627
        %v5760 = vpop.f32.mrb[0].mxu0
        %v5761 = vadd.f32 %v5664, %v5760
        %v5762 = vpop.f32.mrb[0].mxu0
        %v5763 = vpop.f32.mrb[0].mxu0
        %v5764 = vadd.f32 %v5667, %v5763
        %v5765 = vpop.f32.mrb[0].mxu0
        %5766 = vmatprep.mubr.bf16.mxu0 %v3633
        %5767 = vmatmul.mubr.bf16.gmra.mrb[0].mxu0 %v3632
        %v5768 = vpop.f32.mrb[0].mxu0
        %v5769 = vadd.f32 %v5672, %v5768
        %v5770 = vpop.f32.mrb[0].mxu0
        %v5771 = vpop.f32.mrb[0].mxu0
        %v5772 = vadd.f32 %v5675, %v5771
        %v5773 = vpop.f32.mrb[0].mxu0
        %5774 = vdwg.mxu0
        %5775 = vmatprep.subr.bf16.mxu0 0
        %5776 = vmatpush1.bf16.msra.mxu0 %v4651
        %5777 = vmatprep.subr.bf16.mxu0 0
        %5778 = vmatpush1.bf16.msra.mxu0 %v4656
        %5779 = vmatprep.subr.bf16.mxu0 0
        %5780 = vmatpush1.bf16.msra.mxu0 %v4661
        %5781 = vmatprep.subr.bf16.mxu0 0
        %5782 = vmatpush1.bf16.msra.mxu0 %v4666
        %5783 = vmatprep.subr.bf16.mxu0 0
        %5784 = vmatpush1.bf16.msra.mxu0 %v4671
        %5785 = vmatprep.subr.bf16.mxu0 0
        %5786 = vmatpush1.bf16.msra.mxu0 %v4901
        %5787 = vmatprep.subr.bf16.mxu0 0
        %5788 = vmatpush1.bf16.msra.mxu0 0
        %5789 = vmatprep.subr.bf16.mxu0 0
        %5790 = vmatpush1.bf16.msra.mxu0 0
        %5791 = vmatprep.subr.bf16.mxu0 0
        %5792 = vmatpush1.bf16.msra.mxu0 0
        %5793 = vmatprep.subr.bf16.mxu0 0
        %5794 = vmatpush1.bf16.msra.mxu0 0
        %5795 = vmatprep.subr.bf16.mxu0 0
        %5796 = vmatpush1.bf16.msra.mxu0 0
        %5797 = vmatprep.subr.bf16.mxu0 0
        %5798 = vmatpush1.bf16.msra.mxu0 0
        %5799 = vmatprep.subr.bf16.mxu0 0
        %5800 = vmatpush1.bf16.msra.mxu0 0
        %5801 = vmatprep.subr.bf16.mxu0 0
        %5802 = vmatpush1.bf16.msra.mxu0 0
        %5803 = vmatprep.subr.bf16.mxu0 0
        %5804 = vmatpush1.bf16.msra.mxu0 0
        %5805 = vmatprep.subr.bf16.mxu0 0
        %5806 = vmatpush1.bf16.msra.mxu0 0
        %5807 = vmatprep.mubr.bf16.mxu0 0
        %5808 = vmatmul.mubr.bf16.gmra.mrb[0].mxu0 %v4864
        %v5809 = vpop.f32.mrb[0].mxu0
        %v5810 = vadd.f32 %v5713, %v5809
        %v5811 = vpop.f32.mrb[0].mxu0
        %v5812 = vpop.f32.mrb[0].mxu0
        %v5813 = vadd.f32 %v5716, %v5812
        %v5814 = vpop.f32.mrb[0].mxu0
        %5815 = vmatprep.mubr.bf16.mxu0 0
        %5816 = vmatmul.mubr.bf16.gmra.mrb[0].mxu0 %v4867
        %v5817 = vpop.f32.mrb[0].mxu0
        %v5818 = vadd.f32 %v5721, %v5817
        %v5819 = vpop.f32.mrb[0].mxu0
        %v5820 = vpop.f32.mrb[0].mxu0
        %v5821 = vadd.f32 %v5724, %v5820
        %v5822 = vpop.f32.mrb[0].mxu0
        %5823 = vmatprep.mubr.bf16.mxu0 0
        %5824 = vmatmul.mubr.bf16.gmra.mrb[0].mxu0 %v4870
        %v5825 = vpop.f32.mrb[0].mxu0
        %v5826 = vadd.f32 %v5729, %v5825
        %v5827 = vpop.f32.mrb[0].mxu0
        %v5828 = vpop.f32.mrb[0].mxu0
        %v5829 = vadd.f32 %v5732, %v5828
        %v5830 = vpop.f32.mrb[0].mxu0
        %5831 = vmatprep.mubr.bf16.mxu0 0
        %5832 = vmatmul.mubr.bf16.gmra.mrb[0].mxu0 %v4873
        %v5833 = vpop.f32.mrb[0].mxu0
        %v5834 = vadd.f32 %v5737, %v5833
        %v5835 = vpop.f32.mrb[0].mxu0
        %v5836 = vpop.f32.mrb[0].mxu0
        %v5837 = vadd.f32 %v5740, %v5836
        %v5838 = vpop.f32.mrb[0].mxu0
        %5839 = vmatprep.mubr.bf16.mxu0 0
        %5840 = vmatmul.mubr.bf16.gmra.mrb[0].mxu0 %v4876
        %v5841 = vpop.f32.mrb[0].mxu0
        %v5842 = vadd.f32 %v5745, %v5841
        %v5843 = vpop.f32.mrb[0].mxu0
        %v5844 = vpop.f32.mrb[0].mxu0
        %v5845 = vadd.f32 %v5748, %v5844
        %v5846 = vpop.f32.mrb[0].mxu0
        %5847 = vmatprep.mubr.bf16.mxu0 0
        %5848 = vmatmul.mubr.bf16.gmra.mrb[0].mxu0 %v4879
        %v5849 = vpop.f32.mrb[0].mxu0
        %v5850 = vadd.f32 %v5753, %v5849
        %v5851 = vpop.f32.mrb[0].mxu0
        %v5852 = vpop.f32.mrb[0].mxu0
        %v5853 = vadd.f32 %v5756, %v5852
        %v5854 = vpop.f32.mrb[0].mxu0
        %5855 = vmatprep.mubr.bf16.mxu0 0
        %5856 = vmatmul.mubr.bf16.gmra.mrb[0].mxu0 %v4882
        %v5857 = vpop.f32.mrb[0].mxu0
        %v5858 = vadd.f32 %v5761, %v5857
        %v5859 = vpop.f32.mrb[0].mxu0
        %v5860 = vpop.f32.mrb[0].mxu0
        %v5861 = vadd.f32 %v5764, %v5860
        %v5862 = vpop.f32.mrb[0].mxu0
        %5863 = vmatprep.mubr.bf16.mxu0 0
        %5864 = vmatmul.mubr.bf16.gmra.mrb[0].mxu0 %v4885
        %v5865 = vpop.f32.mrb[0].mxu0
        %v5866 = vadd.f32 %v5769, %v5865
        %v5867 = vpop.f32.mrb[0].mxu0
        %v5868 = vpop.f32.mrb[0].mxu0
        %v5869 = vadd.f32 %v5772, %v5868
        %v5870 = vpop.f32.mrb[0].mxu0
        %5871 = vdwg.mxu0
        %v5872 = vmul.f32 %v5164, 0.01
        %v5873 = vmul.f32 %v5166, 0.01
        %v5874 = vmul.f32 %v5503, 0.01
        %v5875 = vmul.f32 %v5505, 0.01
        %v5876 = vmul.f32 %v5810, 0.01
        %v5877 = vmul.f32 %v5168, 0.01
        %v5878 = vmul.f32 %v5170, 0.01
        %v5879 = vmul.f32 %v5507, 0.01
        %v5880 = vmul.f32 %v5509, 0.01
        %v5881 = vmul.f32 %v5813, 0.01
        %v5882 = vmul.f32 %v5174, 0.01
        %v5883 = vmul.f32 %v5176, 0.01
        %v5884 = vmul.f32 %v5513, 0.01
        %v5885 = vmul.f32 %v5515, 0.01
        %v5886 = vmul.f32 %v5818, 0.01
        %v5887 = vmul.f32 %v5178, 0.01
        %v5888 = vmul.f32 %v5180, 0.01
        %v5889 = vmul.f32 %v5517, 0.01
        %v5890 = vmul.f32 %v5519, 0.01
        %v5891 = vmul.f32 %v5821, 0.01
        %v5892 = vmul.f32 %v5184, 0.01
        %v5893 = vmul.f32 %v5186, 0.01
        %v5894 = vmul.f32 %v5523, 0.01
        %v5895 = vmul.f32 %v5525, 0.01
        %v5896 = vmul.f32 %v5826, 0.01
        %v5897 = vmul.f32 %v5188, 0.01
        %v5898 = vmul.f32 %v5190, 0.01
        %v5899 = vmul.f32 %v5527, 0.01
        %v5900 = vmul.f32 %v5529, 0.01
        %v5901 = vmul.f32 %v5829, 0.01
        %v5902 = vmul.f32 %v5194, 0.01
        %v5903 = vmul.f32 %v5196, 0.01
        %v5904 = vmul.f32 %v5533, 0.01
        %v5905 = vmul.f32 %v5535, 0.01
        %v5906 = vmul.f32 %v5834, 0.01
        %v5907 = vmul.f32 %v5198, 0.01
        %v5908 = vmul.f32 %v5200, 0.01
        %v5909 = vmul.f32 %v5537, 0.01
        %v5910 = vmul.f32 %v5539, 0.01
        %v5911 = vmul.f32 %v5837, 0.01
        %v5912 = vmul.f32 %v5204, 0.01
        %v5913 = vmul.f32 %v5206, 0.01
        %v5914 = vmul.f32 %v5543, 0.01
        %v5915 = vmul.f32 %v5545, 0.01
        %v5916 = vmul.f32 %v5842, 0.01
        %v5917 = vmul.f32 %v5208, 0.01
        %v5918 = vmul.f32 %v5210, 0.01
        %v5919 = vmul.f32 %v5547, 0.01
        %v5920 = vmul.f32 %v5549, 0.01
        %v5921 = vmul.f32 %v5845, 0.01
        %v5922 = vmul.f32 %v5214, 0.01
        %v5923 = vmul.f32 %v5216, 0.01
        %v5924 = vmul.f32 %v5553, 0.01
        %v5925 = vmul.f32 %v5555, 0.01
        %v5926 = vmul.f32 %v5850, 0.01
        %v5927 = vmul.f32 %v5218, 0.01
        %v5928 = vmul.f32 %v5220, 0.01
        %v5929 = vmul.f32 %v5557, 0.01
        %v5930 = vmul.f32 %v5559, 0.01
        %v5931 = vmul.f32 %v5853, 0.01
        %v5932 = vmul.f32 %v5224, 0.01
        %v5933 = vmul.f32 %v5226, 0.01
        %v5934 = vmul.f32 %v5563, 0.01
        %v5935 = vmul.f32 %v5565, 0.01
        %v5936 = vmul.f32 %v5858, 0.01
        %v5937 = vmul.f32 %v5228, 0.01
        %v5938 = vmul.f32 %v5230, 0.01
        %v5939 = vmul.f32 %v5567, 0.01
        %v5940 = vmul.f32 %v5569, 0.01
        %v5941 = vmul.f32 %v5861, 0.01
        %v5942 = vmul.f32 %v5234, 0.01
        %v5943 = vmul.f32 %v5236, 0.01
        %v5944 = vmul.f32 %v5573, 0.01
        %v5945 = vmul.f32 %v5575, 0.01
        %v5946 = vmul.f32 %v5866, 0.01
        %v5947 = vmul.f32 %v5238, 0.01
        %v5948 = vmul.f32 %v5240, 0.01
        %v5949 = vmul.f32 %v5577, 0.01
        %v5950 = vmul.f32 %v5579, 0.01
        %v5951 = vmul.f32 %v5869, 0.01
        %v5952 = vmax.f32 %v5164, %v5872
        %v5953 = vmax.f32 %v5166, %v5873
        %v5954 = vmax.f32 %v5503, %v5874
        %v5955 = vmax.f32 %v5505, %v5875
        %v5956 = vmax.f32 %v5810, %v5876
        %v5957 = vmax.f32 %v5168, %v5877
        %v5958 = vmax.f32 %v5170, %v5878
        %v5959 = vmax.f32 %v5507, %v5879
        %v5960 = vmax.f32 %v5509, %v5880
        %v5961 = vmax.f32 %v5813, %v5881
        %v5962 = vmax.f32 %v5174, %v5882
        %v5963 = vmax.f32 %v5176, %v5883
        %v5964 = vmax.f32 %v5513, %v5884
        %v5965 = vmax.f32 %v5515, %v5885
        %v5966 = vmax.f32 %v5818, %v5886
        %v5967 = vmax.f32 %v5178, %v5887
        %v5968 = vmax.f32 %v5180, %v5888
        %v5969 = vmax.f32 %v5517, %v5889
        %v5970 = vmax.f32 %v5519, %v5890
        %v5971 = vmax.f32 %v5821, %v5891
        %v5972 = vmax.f32 %v5184, %v5892
        %v5973 = vmax.f32 %v5186, %v5893
        %v5974 = vmax.f32 %v5523, %v5894
        %v5975 = vmax.f32 %v5525, %v5895
        %v5976 = vmax.f32 %v5826, %v5896
        %v5977 = vmax.f32 %v5188, %v5897
        %v5978 = vmax.f32 %v5190, %v5898
        %v5979 = vmax.f32 %v5527, %v5899
        %v5980 = vmax.f32 %v5529, %v5900
        %v5981 = vmax.f32 %v5829, %v5901
        %v5982 = vmax.f32 %v5194, %v5902
        %v5983 = vmax.f32 %v5196, %v5903
        %v5984 = vmax.f32 %v5533, %v5904
        %v5985 = vmax.f32 %v5535, %v5905
        %v5986 = vmax.f32 %v5834, %v5906
        %v5987 = vmax.f32 %v5198, %v5907
        %v5988 = vmax.f32 %v5200, %v5908
        %v5989 = vmax.f32 %v5537, %v5909
        %v5990 = vmax.f32 %v5539, %v5910
        %v5991 = vmax.f32 %v5837, %v5911
        %v5992 = vmax.f32 %v5204, %v5912
        %v5993 = vmax.f32 %v5206, %v5913
        %v5994 = vmax.f32 %v5543, %v5914
        %v5995 = vmax.f32 %v5545, %v5915
        %v5996 = vmax.f32 %v5842, %v5916
        %v5997 = vmax.f32 %v5208, %v5917
        %v5998 = vmax.f32 %v5210, %v5918
        %v5999 = vmax.f32 %v5547, %v5919
        %v6000 = vmax.f32 %v5549, %v5920
        %v6001 = vmax.f32 %v5845, %v5921
        %v6002 = vmax.f32 %v5214, %v5922
        %v6003 = vmax.f32 %v5216, %v5923
        %v6004 = vmax.f32 %v5553, %v5924
        %v6005 = vmax.f32 %v5555, %v5925
        %v6006 = vmax.f32 %v5850, %v5926
        %v6007 = vmax.f32 %v5218, %v5927
        %v6008 = vmax.f32 %v5220, %v5928
        %v6009 = vmax.f32 %v5557, %v5929
        %v6010 = vmax.f32 %v5559, %v5930
        %v6011 = vmax.f32 %v5853, %v5931
        %v6012 = vmax.f32 %v5224, %v5932
        %v6013 = vmax.f32 %v5226, %v5933
        %v6014 = vmax.f32 %v5563, %v5934
        %v6015 = vmax.f32 %v5565, %v5935
        %v6016 = vmax.f32 %v5858, %v5936
        %v6017 = vmax.f32 %v5228, %v5937
        %v6018 = vmax.f32 %v5230, %v5938
        %v6019 = vmax.f32 %v5567, %v5939
        %v6020 = vmax.f32 %v5569, %v5940
        %v6021 = vmax.f32 %v5861, %v5941
        %v6022 = vmax.f32 %v5234, %v5942
        %v6023 = vmax.f32 %v5236, %v5943
        %v6024 = vmax.f32 %v5573, %v5944
        %v6025 = vmax.f32 %v5575, %v5945
        %v6026 = vmax.f32 %v5866, %v5946
        %v6027 = vmax.f32 %v5238, %v5947
        %v6028 = vmax.f32 %v5240, %v5948
        %v6029 = vmax.f32 %v5577, %v5949
        %v6030 = vmax.f32 %v5579, %v5950
        %v6031 = vmax.f32 %v5869, %v5951
        %v6032 = vpack.c.bf16 %v5957, %v5952
        %v6033 = vpack.c.bf16 %v5958, %v5953
        %v6034 = vpack.c.bf16 %v5959, %v5954
        %v6035 = vpack.c.bf16 %v5960, %v5955
        %v6036 = vpack.c.bf16 %v5961, %v5956
        %v6037 = vpack.c.bf16 %v5967, %v5962
        %v6038 = vpack.c.bf16 %v5968, %v5963
        %v6039 = vpack.c.bf16 %v5969, %v5964
        %v6040 = vpack.c.bf16 %v5970, %v5965
        %v6041 = vpack.c.bf16 %v5971, %v5966
        %v6042 = vpack.c.bf16 %v5977, %v5972
        %v6043 = vpack.c.bf16 %v5978, %v5973
        %v6044 = vpack.c.bf16 %v5979, %v5974
        %v6045 = vpack.c.bf16 %v5980, %v5975
        %v6046 = vpack.c.bf16 %v5981, %v5976
        %v6047 = vpack.c.bf16 %v5987, %v5982
        %v6048 = vpack.c.bf16 %v5988, %v5983
        %v6049 = vpack.c.bf16 %v5989, %v5984
        %v6050 = vpack.c.bf16 %v5990, %v5985
        %v6051 = vpack.c.bf16 %v5991, %v5986
        %v6052 = vpack.c.bf16 %v5997, %v5992
        %v6053 = vpack.c.bf16 %v5998, %v5993
        %v6054 = vpack.c.bf16 %v5999, %v5994
        %v6055 = vpack.c.bf16 %v6000, %v5995
        %v6056 = vpack.c.bf16 %v6001, %v5996
        %v6057 = vpack.c.bf16 %v6007, %v6002
        %v6058 = vpack.c.bf16 %v6008, %v6003
        %v6059 = vpack.c.bf16 %v6009, %v6004
        %v6060 = vpack.c.bf16 %v6010, %v6005
        %v6061 = vpack.c.bf16 %v6011, %v6006
        %v6062 = vpack.c.bf16 %v6017, %v6012
        %v6063 = vpack.c.bf16 %v6018, %v6013
        %v6064 = vpack.c.bf16 %v6019, %v6014
        %v6065 = vpack.c.bf16 %v6020, %v6015
        %v6066 = vpack.c.bf16 %v6021, %v6016
        %v6067 = vpack.c.bf16 %v6027, %v6022
        %v6068 = vpack.c.bf16 %v6028, %v6023
        %v6069 = vpack.c.bf16 %v6029, %v6024
        %v6070 = vpack.c.bf16 %v6030, %v6025
        %v6071 = vpack.c.bf16 %v6031, %v6026
        %v6072 = vld [vmem:[#allocation2] sm:$0xff]
        %v6073 = vld [vmem:[#allocation2 + $0x8] sm:$0xff]
        %v6074 = vld [vmem:[#allocation2 + $0x10] sm:$0xf]
        %v6075 = vld [vmem:[#allocation2 + $0x14] sm:$0xff]
        %v6076 = vld [vmem:[#allocation2 + $0x1c] sm:$0xff]
        %v6077 = vld [vmem:[#allocation2 + $0x24] sm:$0xf]
        %v6078 = vld [vmem:[#allocation2 + $0x28] sm:$0xff]
        %v6079 = vld [vmem:[#allocation2 + $0x30] sm:$0xff]
        %v6080 = vld [vmem:[#allocation2 + $0x38] sm:$0xf]
        %v6081 = vld [vmem:[#allocation2 + $0x3c] sm:$0xff]
        %v6082 = vld [vmem:[#allocation2 + $0x44] sm:$0xff]
        %v6083 = vld [vmem:[#allocation2 + $0x4c] sm:$0xf]
        %v6084 = vld [vmem:[#allocation2 + $0x50] sm:$0xff]
        %v6085 = vld [vmem:[#allocation2 + $0x58] sm:$0xff]
        %v6086 = vld [vmem:[#allocation2 + $0x60] sm:$0xf]
        %v6087 = vld [vmem:[#allocation2 + $0x64] sm:$0xff]
        %v6088 = vld [vmem:[#allocation2 + $0x6c] sm:$0xff]
        %v6089 = vld [vmem:[#allocation2 + $0x74] sm:$0xf]
        %v6090 = vld [vmem:[#allocation2 + $0x78] sm:$0xff]
        %v6091 = vld [vmem:[#allocation2 + $0x80] sm:$0xff]
        %v6092 = vld [vmem:[#allocation2 + $0x88] sm:$0xf]
        %v6093 = vld [vmem:[#allocation2 + $0x8c] sm:$0xff]
        %v6094 = vld [vmem:[#allocation2 + $0x94] sm:$0xff]
        %v6095 = vld [vmem:[#allocation2 + $0x9c] sm:$0xf]
        %v6096 = vld [vmem:[#allocation2 + $0xa0] sm:$0xff]
        %v6097 = vld [vmem:[#allocation2 + $0xa8] sm:$0xff]
        %v6098 = vld [vmem:[#allocation2 + $0xb0] sm:$0xf]
        %v6099 = vld [vmem:[#allocation2 + $0xb4] sm:$0xff]
        %v6100 = vld [vmem:[#allocation2 + $0xbc] sm:$0xff]
        %v6101 = vld [vmem:[#allocation2 + $0xc4] sm:$0xf]
        %v6102 = vld [vmem:[#allocation2 + $0xc8] sm:$0xff]
        %v6103 = vld [vmem:[#allocation2 + $0xd0] sm:$0xff]
        %v6104 = vld [vmem:[#allocation2 + $0xd8] sm:$0xf]
        %v6105 = vld [vmem:[#allocation2 + $0xdc] sm:$0xff]
        %v6106 = vld [vmem:[#allocation2 + $0xe4] sm:$0xff]
        %v6107 = vld [vmem:[#allocation2 + $0xec] sm:$0xf]
        %v6108 = vld [vmem:[#allocation2 + $0xf0] sm:$0xff]
        %v6109 = vld [vmem:[#allocation2 + $0xf8] sm:$0xff]
        %v6110 = vld [vmem:[#allocation2 + $0x100] sm:$0xf]
        %v6111 = vld [vmem:[#allocation2 + $0x104] sm:$0xff]
        %v6112 = vld [vmem:[#allocation2 + $0x10c] sm:$0xff]
        %v6113 = vld [vmem:[#allocation2 + $0x114] sm:$0xf]
        %v6114 = vld [vmem:[#allocation2 + $0x118] sm:$0xff]
        %v6115 = vld [vmem:[#allocation2 + $0x120] sm:$0xff]
        %v6116 = vld [vmem:[#allocation2 + $0x128] sm:$0xf]
        %v6117 = vld [vmem:[#allocation2 + $0x12c] sm:$0xff]
        %v6118 = vld [vmem:[#allocation2 + $0x134] sm:$0xff]
        %v6119 = vld [vmem:[#allocation2 + $0x13c] sm:$0xf]
        %v6120 = vld [vmem:[#allocation2 + $0x140] sm:$0xff]
        %v6121 = vld [vmem:[#allocation2 + $0x148] sm:$0xff]
        %v6122 = vld [vmem:[#allocation2 + $0x150] sm:$0xf]
        %v6123 = vld [vmem:[#allocation2 + $0x154] sm:$0xff]
        %v6124 = vld [vmem:[#allocation2 + $0x15c] sm:$0xff]
        %v6125 = vld [vmem:[#allocation2 + $0x164] sm:$0xf]
        %v6126 = vld [vmem:[#allocation2 + $0x168] sm:$0xff]
        %v6127 = vld [vmem:[#allocation2 + $0x170] sm:$0xff]
        %v6128 = vld [vmem:[#allocation2 + $0x178] sm:$0xf]
        %v6129 = vld [vmem:[#allocation2 + $0x17c] sm:$0xff]
        %v6130 = vld [vmem:[#allocation2 + $0x184] sm:$0xff]
        %v6131 = vld [vmem:[#allocation2 + $0x18c] sm:$0xf]
        %v6132 = vld [vmem:[#allocation2 + $0x190] sm:$0xff]
        %v6133 = vld [vmem:[#allocation2 + $0x198] sm:$0xff]
        %v6134 = vld [vmem:[#allocation2 + $0x1a0] sm:$0xf]
        %v6135 = vld [vmem:[#allocation2 + $0x1a4] sm:$0xff]
        %v6136 = vld [vmem:[#allocation2 + $0x1ac] sm:$0xff]
        %v6137 = vld [vmem:[#allocation2 + $0x1b4] sm:$0xf]
        %v6138 = vld [vmem:[#allocation2 + $0x1b8] sm:$0xff]
        %v6139 = vld [vmem:[#allocation2 + $0x1c0] sm:$0xff]
        %v6140 = vld [vmem:[#allocation2 + $0x1c8] sm:$0xf]
        %v6141 = vld [vmem:[#allocation2 + $0x1cc] sm:$0xff]
        %v6142 = vld [vmem:[#allocation2 + $0x1d4] sm:$0xff]
        %v6143 = vld [vmem:[#allocation2 + $0x1dc] sm:$0xf]
        %v6144 = vld [vmem:[#allocation2 + $0x1e0] sm:$0xff]
        %v6145 = vld [vmem:[#allocation2 + $0x1e8] sm:$0xff]
        %v6146 = vld [vmem:[#allocation2 + $0x1f0] sm:$0xf]
        %v6147 = vld [vmem:[#allocation2 + $0x1f4] sm:$0xff]
        %v6148 = vld [vmem:[#allocation2 + $0x1fc] sm:$0xff]
        %v6149 = vld [vmem:[#allocation2 + $0x204] sm:$0xf]
        %v6150 = vld [vmem:[#allocation2 + $0x208] sm:$0xff]
        %v6151 = vld [vmem:[#allocation2 + $0x210] sm:$0xff]
        %v6152 = vld [vmem:[#allocation2 + $0x218] sm:$0xf]
        %v6153 = vld [vmem:[#allocation2 + $0x21c] sm:$0xff]
        %v6154 = vld [vmem:[#allocation2 + $0x224] sm:$0xff]
        %v6155 = vld [vmem:[#allocation2 + $0x22c] sm:$0xf]
        %v6156 = vld [vmem:[#allocation2 + $0x230] sm:$0xff]
        %v6157 = vld [vmem:[#allocation2 + $0x238] sm:$0xff]
        %v6158 = vld [vmem:[#allocation2 + $0x240] sm:$0xf]
        %v6159 = vld [vmem:[#allocation2 + $0x244] sm:$0xff]
        %v6160 = vld [vmem:[#allocation2 + $0x24c] sm:$0xff]
        %v6161 = vld [vmem:[#allocation2 + $0x254] sm:$0xf]
        %v6162 = vld [vmem:[#allocation2 + $0x258] sm:$0xff]
        %v6163 = vld [vmem:[#allocation2 + $0x260] sm:$0xff]
        %v6164 = vld [vmem:[#allocation2 + $0x268] sm:$0xf]
        %v6165 = vld [vmem:[#allocation2 + $0x26c] sm:$0xff]
        %v6166 = vld [vmem:[#allocation2 + $0x274] sm:$0xff]
        %v6167 = vld [vmem:[#allocation2 + $0x27c] sm:$0xf]
        %v6168 = vld [vmem:[#allocation2 + $0x280] sm:$0xff]
        %v6169 = vld [vmem:[#allocation2 + $0x288] sm:$0xff]
        %v6170 = vld [vmem:[#allocation2 + $0x290] sm:$0xf]
        %v6171 = vld [vmem:[#allocation2 + $0x294] sm:$0xff]
        %v6172 = vld [vmem:[#allocation2 + $0x29c] sm:$0xff]
        %v6173 = vld [vmem:[#allocation2 + $0x2a4] sm:$0xf]
        %v6174 = vld [vmem:[#allocation2 + $0x2a8] sm:$0xff]
        %v6175 = vld [vmem:[#allocation2 + $0x2b0] sm:$0xff]
        %v6176 = vld [vmem:[#allocation2 + $0x2b8] sm:$0xf]
        %v6177 = vld [vmem:[#allocation2 + $0x2bc] sm:$0xff]
        %v6178 = vld [vmem:[#allocation2 + $0x2c4] sm:$0xff]
        %v6179 = vld [vmem:[#allocation2 + $0x2cc] sm:$0xf]
        %v6180 = vld [vmem:[#allocation2 + $0x2d0] sm:$0xff]
        %v6181 = vld [vmem:[#allocation2 + $0x2d8] sm:$0xff]
        %v6182 = vld [vmem:[#allocation2 + $0x2e0] sm:$0xf]
        %v6183 = vld [vmem:[#allocation2 + $0x2e4] sm:$0xff]
        %v6184 = vld [vmem:[#allocation2 + $0x2ec] sm:$0xff]
        %v6185 = vld [vmem:[#allocation2 + $0x2f4] sm:$0xf]
        %v6186 = vld [vmem:[#allocation2 + $0x2f8] sm:$0xff]
        %v6187 = vld [vmem:[#allocation2 + $0x300] sm:$0xff]
        %v6188 = vld [vmem:[#allocation2 + $0x308] sm:$0xf]
        %v6189 = vld [vmem:[#allocation2 + $0x30c] sm:$0xff]
        %v6190 = vld [vmem:[#allocation2 + $0x314] sm:$0xff]
        %v6191 = vld [vmem:[#allocation2 + $0x31c] sm:$0xf]
        %v6192 = vld [vmem:[#allocation2 + $0x320] sm:$0xff]
        %v6193 = vld [vmem:[#allocation2 + $0x328] sm:$0xff]
        %v6194 = vld [vmem:[#allocation2 + $0x330] sm:$0xf]
        %v6195 = vld [vmem:[#allocation2 + $0x334] sm:$0xff]
        %v6196 = vld [vmem:[#allocation2 + $0x33c] sm:$0xff]
        %v6197 = vld [vmem:[#allocation2 + $0x344] sm:$0xf]
        %v6198 = vld [vmem:[#allocation2 + $0x348] sm:$0xff]
        %v6199 = vld [vmem:[#allocation2 + $0x350] sm:$0xff]
        %v6200 = vld [vmem:[#allocation2 + $0x358] sm:$0xf]
        %v6201 = vld [vmem:[#allocation2 + $0x35c] sm:$0xff]
        %v6202 = vld [vmem:[#allocation2 + $0x364] sm:$0xff]
        %v6203 = vld [vmem:[#allocation2 + $0x36c] sm:$0xf]
        %v6204 = vld [vmem:[#allocation2 + $0x370] sm:$0xff]
        %v6205 = vld [vmem:[#allocation2 + $0x378] sm:$0xff]
        %v6206 = vld [vmem:[#allocation2 + $0x380] sm:$0xf]
        %v6207 = vld [vmem:[#allocation2 + $0x384] sm:$0xff]
        %v6208 = vld [vmem:[#allocation2 + $0x38c] sm:$0xff]
        %v6209 = vld [vmem:[#allocation2 + $0x394] sm:$0xf]
        %v6210 = vld [vmem:[#allocation2 + $0x398] sm:$0xff]
        %v6211 = vld [vmem:[#allocation2 + $0x3a0] sm:$0xff]
        %v6212 = vld [vmem:[#allocation2 + $0x3a8] sm:$0xf]
        %v6213 = vld [vmem:[#allocation2 + $0x3ac] sm:$0xff]
        %v6214 = vld [vmem:[#allocation2 + $0x3b4] sm:$0xff]
        %v6215 = vld [vmem:[#allocation2 + $0x3bc] sm:$0xf]
        %v6216 = vld [vmem:[#allocation2 + $0x3c0] sm:$0xff]
        %v6217 = vld [vmem:[#allocation2 + $0x3c8] sm:$0xff]
        %v6218 = vld [vmem:[#allocation2 + $0x3d0] sm:$0xf]
        %v6219 = vld [vmem:[#allocation2 + $0x3d4] sm:$0xff]
        %v6220 = vld [vmem:[#allocation2 + $0x3dc] sm:$0xff]
        %v6221 = vld [vmem:[#allocation2 + $0x3e4] sm:$0xf]
        %v6222 = vld [vmem:[#allocation2 + $0x3e8] sm:$0xff]
        %v6223 = vld [vmem:[#allocation2 + $0x3f0] sm:$0xff]
        %v6224 = vld [vmem:[#allocation2 + $0x3f8] sm:$0xf]
        %v6225 = vld [vmem:[#allocation2 + $0x3fc] sm:$0xff]
        %v6226 = vld [vmem:[#allocation2 + $0x404] sm:$0xff]
        %v6227 = vld [vmem:[#allocation2 + $0x40c] sm:$0xf]
        %v6228 = vld [vmem:[#allocation2 + $0x410] sm:$0xff]
        %v6229 = vld [vmem:[#allocation2 + $0x418] sm:$0xff]
        %v6230 = vld [vmem:[#allocation2 + $0x420] sm:$0xf]
        %v6231 = vld [vmem:[#allocation2 + $0x424] sm:$0xff]
        %v6232 = vld [vmem:[#allocation2 + $0x42c] sm:$0xff]
        %v6233 = vld [vmem:[#allocation2 + $0x434] sm:$0xf]
        %v6234 = vld [vmem:[#allocation2 + $0x438] sm:$0xff]
        %v6235 = vld [vmem:[#allocation2 + $0x440] sm:$0xff]
        %v6236 = vld [vmem:[#allocation2 + $0x448] sm:$0xf]
        %v6237 = vld [vmem:[#allocation2 + $0x44c] sm:$0xff]
        %v6238 = vld [vmem:[#allocation2 + $0x454] sm:$0xff]
        %v6239 = vld [vmem:[#allocation2 + $0x45c] sm:$0xf]
        %v6240 = vld [vmem:[#allocation2 + $0x460] sm:$0xff]
        %v6241 = vld [vmem:[#allocation2 + $0x468] sm:$0xff]
        %v6242 = vld [vmem:[#allocation2 + $0x470] sm:$0xf]
        %v6243 = vld [vmem:[#allocation2 + $0x474] sm:$0xff]
        %v6244 = vld [vmem:[#allocation2 + $0x47c] sm:$0xff]
        %v6245 = vld [vmem:[#allocation2 + $0x484] sm:$0xf]
        %v6246 = vld [vmem:[#allocation2 + $0x488] sm:$0xff]
        %v6247 = vld [vmem:[#allocation2 + $0x490] sm:$0xff]
        %v6248 = vld [vmem:[#allocation2 + $0x498] sm:$0xf]
        %v6249 = vld [vmem:[#allocation2 + $0x49c] sm:$0xff]
        %v6250 = vld [vmem:[#allocation2 + $0x4a4] sm:$0xff]
        %v6251 = vld [vmem:[#allocation2 + $0x4ac] sm:$0xf]
        %v6252 = vld [vmem:[#allocation2 + $0x4b0] sm:$0xff]
        %v6253 = vld [vmem:[#allocation2 + $0x4b8] sm:$0xff]
        %v6254 = vld [vmem:[#allocation2 + $0x4c0] sm:$0xf]
        %v6255 = vld [vmem:[#allocation2 + $0x4c4] sm:$0xff]
        %v6256 = vld [vmem:[#allocation2 + $0x4cc] sm:$0xff]
        %v6257 = vld [vmem:[#allocation2 + $0x4d4] sm:$0xf]
        %v6258 = vld [vmem:[#allocation2 + $0x4d8] sm:$0xff]
        %v6259 = vld [vmem:[#allocation2 + $0x4e0] sm:$0xff]
        %v6260 = vld [vmem:[#allocation2 + $0x4e8] sm:$0xf]
        %v6261 = vld [vmem:[#allocation2 + $0x4ec] sm:$0xff]
        %v6262 = vld [vmem:[#allocation2 + $0x4f4] sm:$0xff]
        %v6263 = vld [vmem:[#allocation2 + $0x4fc] sm:$0xf]
        %v6264 = vld [vmem:[#allocation2 + $0x500] sm:$0xff]
        %v6265 = vld [vmem:[#allocation2 + $0x508] sm:$0xff]
        %v6266 = vld [vmem:[#allocation2 + $0x510] sm:$0xf]
        %v6267 = vld [vmem:[#allocation2 + $0x514] sm:$0xff]
        %v6268 = vld [vmem:[#allocation2 + $0x51c] sm:$0xff]
        %v6269 = vld [vmem:[#allocation2 + $0x524] sm:$0xf]
        %v6270 = vld [vmem:[#allocation2 + $0x528] sm:$0xff]
        %v6271 = vld [vmem:[#allocation2 + $0x530] sm:$0xff]
        %v6272 = vld [vmem:[#allocation2 + $0x538] sm:$0xf]
        %v6273 = vld [vmem:[#allocation2 + $0x53c] sm:$0xff]
        %v6274 = vld [vmem:[#allocation2 + $0x544] sm:$0xff]
        %v6275 = vld [vmem:[#allocation2 + $0x54c] sm:$0xf]
        %v6276 = vld [vmem:[#allocation2 + $0x550] sm:$0xff]
        %v6277 = vld [vmem:[#allocation2 + $0x558] sm:$0xff]
        %v6278 = vld [vmem:[#allocation2 + $0x560] sm:$0xf]
        %v6279 = vld [vmem:[#allocation2 + $0x564] sm:$0xff]
        %v6280 = vld [vmem:[#allocation2 + $0x56c] sm:$0xff]
        %v6281 = vld [vmem:[#allocation2 + $0x574] sm:$0xf]
        %v6282 = vld [vmem:[#allocation2 + $0x578] sm:$0xff]
        %v6283 = vld [vmem:[#allocation2 + $0x580] sm:$0xff]
        %v6284 = vld [vmem:[#allocation2 + $0x588] sm:$0xf]
        %v6285 = vld [vmem:[#allocation2 + $0x58c] sm:$0xff]
        %v6286 = vld [vmem:[#allocation2 + $0x594] sm:$0xff]
        %v6287 = vld [vmem:[#allocation2 + $0x59c] sm:$0xf]
        %v6288 = vld [vmem:[#allocation2 + $0x5a0] sm:$0xff]
        %v6289 = vld [vmem:[#allocation2 + $0x5a8] sm:$0xff]
        %v6290 = vld [vmem:[#allocation2 + $0x5b0] sm:$0xf]
        %v6291 = vld [vmem:[#allocation2 + $0x5b4] sm:$0xff]
        %v6292 = vld [vmem:[#allocation2 + $0x5bc] sm:$0xff]
        %v6293 = vld [vmem:[#allocation2 + $0x5c4] sm:$0xf]
        %v6294 = vld [vmem:[#allocation2 + $0x5c8] sm:$0xff]
        %v6295 = vld [vmem:[#allocation2 + $0x5d0] sm:$0xff]
        %v6296 = vld [vmem:[#allocation2 + $0x5d8] sm:$0xf]
        %v6297 = vld [vmem:[%s6] sm:$0x1f]
        %v6299 = vlaneseq
        %v6300 = vshrl.u32 %v6299, 7
        %v6301 = vsub.s32 0, %v6300
        %v6302 = vrot.slane %v6297, %v6301
        %v6303 = vlaneseq
        %v6304 = vshrl.u32 %v6303, 7
        %v6305 = vsub.s32 1, %v6304
        %v6306 = vrot.slane %v6297, %v6305
        %v6307 = vlaneseq
        %v6308 = vshrl.u32 %v6307, 7
        %v6309 = vsub.s32 2, %v6308
        %v6310 = vrot.slane %v6297, %v6309
        %v6311 = vlaneseq
        %v6312 = vshrl.u32 %v6311, 7
        %v6313 = vsub.s32 3, %v6312
        %v6314 = vrot.slane %v6297, %v6313
        %v6315 = vlaneseq
        %v6316 = vshrl.u32 %v6315, 7
        %v6317 = vsub.s32 4, %v6316
        %v6318 = vrot.slane %v6297, %v6317
        %v6549 = vunpack.c.l.b16 %v6072
        %v6550 = vunpack.c.h.b16 %v6072
        %v6551 = vunpack.c.l.b16 %v6073
        %v6552 = vunpack.c.h.b16 %v6073
        %v6553 = vunpack.c.l.b16 %v6074
        %v6554 = vunpack.c.l.b16 %v6075
        %v6555 = vunpack.c.h.b16 %v6075
        %v6556 = vunpack.c.l.b16 %v6076
        %v6557 = vunpack.c.h.b16 %v6076
        %v6558 = vunpack.c.l.b16 %v6077
        %v6559 = vunpack.c.l.b16 %v6078
        %v6560 = vunpack.c.h.b16 %v6078
        %v6561 = vunpack.c.l.b16 %v6079
        %v6562 = vunpack.c.h.b16 %v6079
        %v6563 = vunpack.c.l.b16 %v6080
        %v6564 = vunpack.c.l.b16 %v6081
        %v6565 = vunpack.c.h.b16 %v6081
        %v6566 = vunpack.c.l.b16 %v6082
        %v6567 = vunpack.c.h.b16 %v6082
        %v6568 = vunpack.c.l.b16 %v6083
        %v6569 = vunpack.c.l.b16 %v6084
        %v6570 = vunpack.c.h.b16 %v6084
        %v6571 = vunpack.c.l.b16 %v6085
        %v6572 = vunpack.c.h.b16 %v6085
        %v6573 = vunpack.c.l.b16 %v6086
        %v6574 = vunpack.c.l.b16 %v6087
        %v6575 = vunpack.c.h.b16 %v6087
        %v6576 = vunpack.c.l.b16 %v6088
        %v6577 = vunpack.c.h.b16 %v6088
        %v6578 = vunpack.c.l.b16 %v6089
        %v6579 = vunpack.c.l.b16 %v6090
        %v6580 = vunpack.c.h.b16 %v6090
        %v6581 = vunpack.c.l.b16 %v6091
        %v6582 = vunpack.c.h.b16 %v6091
        %v6583 = vunpack.c.l.b16 %v6092
        %v6584 = vunpack.c.l.b16 %v6093
        %v6585 = vunpack.c.h.b16 %v6093
        %v6586 = vunpack.c.l.b16 %v6094
        %v6587 = vunpack.c.h.b16 %v6094
        %v6588 = vunpack.c.l.b16 %v6095
        %v6589 = vunpack.c.l.b16 %v6096
        %v6590 = vunpack.c.h.b16 %v6096
        %v6591 = vunpack.c.l.b16 %v6097
        %v6592 = vunpack.c.h.b16 %v6097
        %v6593 = vunpack.c.l.b16 %v6098
        %v6594 = vunpack.c.l.b16 %v6099
        %v6595 = vunpack.c.h.b16 %v6099
        %v6596 = vunpack.c.l.b16 %v6100
        %v6597 = vunpack.c.h.b16 %v6100
        %v6598 = vunpack.c.l.b16 %v6101
        %v6599 = vunpack.c.l.b16 %v6102
        %v6600 = vunpack.c.h.b16 %v6102
        %v6601 = vunpack.c.l.b16 %v6103
        %v6602 = vunpack.c.h.b16 %v6103
        %v6603 = vunpack.c.l.b16 %v6104
        %v6604 = vunpack.c.l.b16 %v6105
        %v6605 = vunpack.c.h.b16 %v6105
        %v6606 = vunpack.c.l.b16 %v6106
        %v6607 = vunpack.c.h.b16 %v6106
        %v6608 = vunpack.c.l.b16 %v6107
        %v6609 = vunpack.c.l.b16 %v6108
        %v6610 = vunpack.c.h.b16 %v6108
        %v6611 = vunpack.c.l.b16 %v6109
        %v6612 = vunpack.c.h.b16 %v6109
        %v6613 = vunpack.c.l.b16 %v6110
        %v6614 = vunpack.c.l.b16 %v6111
        %v6615 = vunpack.c.h.b16 %v6111
        %v6616 = vunpack.c.l.b16 %v6112
        %v6617 = vunpack.c.h.b16 %v6112
        %v6618 = vunpack.c.l.b16 %v6113
        %v6619 = vunpack.c.l.b16 %v6114
        %v6620 = vunpack.c.h.b16 %v6114
        %v6621 = vunpack.c.l.b16 %v6115
        %v6622 = vunpack.c.h.b16 %v6115
        %v6623 = vunpack.c.l.b16 %v6116
        %v6624 = vunpack.c.l.b16 %v6117
        %v6625 = vunpack.c.h.b16 %v6117
        %v6626 = vunpack.c.l.b16 %v6118
        %v6627 = vunpack.c.h.b16 %v6118
        %v6628 = vunpack.c.l.b16 %v6119
        %v6629 = vunpack.c.l.b16 %v6120
        %v6630 = vunpack.c.h.b16 %v6120
        %v6631 = vunpack.c.l.b16 %v6121
        %v6632 = vunpack.c.h.b16 %v6121
        %v6633 = vunpack.c.l.b16 %v6122
        %v6634 = vunpack.c.l.b16 %v6123
        %v6635 = vunpack.c.h.b16 %v6123
        %v6636 = vunpack.c.l.b16 %v6124
        %v6637 = vunpack.c.h.b16 %v6124
        %v6638 = vunpack.c.l.b16 %v6125
        %v6639 = vunpack.c.l.b16 %v6126
        %v6640 = vunpack.c.h.b16 %v6126
        %v6641 = vunpack.c.l.b16 %v6127
        %v6642 = vunpack.c.h.b16 %v6127
        %v6643 = vunpack.c.l.b16 %v6128
        %v6644 = vunpack.c.l.b16 %v6129
        %v6645 = vunpack.c.h.b16 %v6129
        %v6646 = vunpack.c.l.b16 %v6130
        %v6647 = vunpack.c.h.b16 %v6130
        %v6648 = vunpack.c.l.b16 %v6131
        %v6649 = vunpack.c.l.b16 %v6132
        %v6650 = vunpack.c.h.b16 %v6132
        %v6651 = vunpack.c.l.b16 %v6133
        %v6652 = vunpack.c.h.b16 %v6133
        %v6653 = vunpack.c.l.b16 %v6134
        %v6654 = vunpack.c.l.b16 %v6135
        %v6655 = vunpack.c.h.b16 %v6135
        %v6656 = vunpack.c.l.b16 %v6136
        %v6657 = vunpack.c.h.b16 %v6136
        %v6658 = vunpack.c.l.b16 %v6137
        %v6659 = vunpack.c.l.b16 %v6138
        %v6660 = vunpack.c.h.b16 %v6138
        %v6661 = vunpack.c.l.b16 %v6139
        %v6662 = vunpack.c.h.b16 %v6139
        %v6663 = vunpack.c.l.b16 %v6140
        %v6664 = vunpack.c.l.b16 %v6141
        %v6665 = vunpack.c.h.b16 %v6141
        %v6666 = vunpack.c.l.b16 %v6142
        %v6667 = vunpack.c.h.b16 %v6142
        %v6668 = vunpack.c.l.b16 %v6143
        %v6669 = vunpack.c.l.b16 %v6144
        %v6670 = vunpack.c.h.b16 %v6144
        %v6671 = vunpack.c.l.b16 %v6145
        %v6672 = vunpack.c.h.b16 %v6145
        %v6673 = vunpack.c.l.b16 %v6146
        %v6674 = vunpack.c.l.b16 %v6147
        %v6675 = vunpack.c.h.b16 %v6147
        %v6676 = vunpack.c.l.b16 %v6148
        %v6677 = vunpack.c.h.b16 %v6148
        %v6678 = vunpack.c.l.b16 %v6149
        %v6679 = vunpack.c.l.b16 %v6150
        %v6680 = vunpack.c.h.b16 %v6150
        %v6681 = vunpack.c.l.b16 %v6151
        %v6682 = vunpack.c.h.b16 %v6151
        %v6683 = vunpack.c.l.b16 %v6152
        %v6684 = vunpack.c.l.b16 %v6153
        %v6685 = vunpack.c.h.b16 %v6153
        %v6686 = vunpack.c.l.b16 %v6154
        %v6687 = vunpack.c.h.b16 %v6154
        %v6688 = vunpack.c.l.b16 %v6155
        %v6689 = vunpack.c.l.b16 %v6156
        %v6690 = vunpack.c.h.b16 %v6156
        %v6691 = vunpack.c.l.b16 %v6157
        %v6692 = vunpack.c.h.b16 %v6157
        %v6693 = vunpack.c.l.b16 %v6158
        %v6694 = vunpack.c.l.b16 %v6159
        %v6695 = vunpack.c.h.b16 %v6159
        %v6696 = vunpack.c.l.b16 %v6160
        %v6697 = vunpack.c.h.b16 %v6160
        %v6698 = vunpack.c.l.b16 %v6161
        %v6699 = vunpack.c.l.b16 %v6162
        %v6700 = vunpack.c.h.b16 %v6162
        %v6701 = vunpack.c.l.b16 %v6163
        %v6702 = vunpack.c.h.b16 %v6163
        %v6703 = vunpack.c.l.b16 %v6164
        %v6704 = vunpack.c.l.b16 %v6165
        %v6705 = vunpack.c.h.b16 %v6165
        %v6706 = vunpack.c.l.b16 %v6166
        %v6707 = vunpack.c.h.b16 %v6166
        %v6708 = vunpack.c.l.b16 %v6167
        %v6709 = vunpack.c.l.b16 %v6168
        %v6710 = vunpack.c.h.b16 %v6168
        %v6711 = vunpack.c.l.b16 %v6169
        %v6712 = vunpack.c.h.b16 %v6169
        %v6713 = vunpack.c.l.b16 %v6170
        %v6714 = vunpack.c.l.b16 %v6171
        %v6715 = vunpack.c.h.b16 %v6171
        %v6716 = vunpack.c.l.b16 %v6172
        %v6717 = vunpack.c.h.b16 %v6172
        %v6718 = vunpack.c.l.b16 %v6173
        %v6719 = vunpack.c.l.b16 %v6174
        %v6720 = vunpack.c.h.b16 %v6174
        %v6721 = vunpack.c.l.b16 %v6175
        %v6722 = vunpack.c.h.b16 %v6175
        %v6723 = vunpack.c.l.b16 %v6176
        %v6724 = vunpack.c.l.b16 %v6177
        %v6725 = vunpack.c.h.b16 %v6177
        %v6726 = vunpack.c.l.b16 %v6178
        %v6727 = vunpack.c.h.b16 %v6178
        %v6728 = vunpack.c.l.b16 %v6179
        %v6729 = vunpack.c.l.b16 %v6180
        %v6730 = vunpack.c.h.b16 %v6180
        %v6731 = vunpack.c.l.b16 %v6181
        %v6732 = vunpack.c.h.b16 %v6181
        %v6733 = vunpack.c.l.b16 %v6182
        %v6734 = vunpack.c.l.b16 %v6183
        %v6735 = vunpack.c.h.b16 %v6183
        %v6736 = vunpack.c.l.b16 %v6184
        %v6737 = vunpack.c.h.b16 %v6184
        %v6738 = vunpack.c.l.b16 %v6185
        %v6739 = vunpack.c.l.b16 %v6186
        %v6740 = vunpack.c.h.b16 %v6186
        %v6741 = vunpack.c.l.b16 %v6187
        %v6742 = vunpack.c.h.b16 %v6187
        %v6743 = vunpack.c.l.b16 %v6188
        %v6744 = vunpack.c.l.b16 %v6189
        %v6745 = vunpack.c.h.b16 %v6189
        %v6746 = vunpack.c.l.b16 %v6190
        %v6747 = vunpack.c.h.b16 %v6190
        %v6748 = vunpack.c.l.b16 %v6191
        %v6749 = vunpack.c.l.b16 %v6192
        %v6750 = vunpack.c.h.b16 %v6192
        %v6751 = vunpack.c.l.b16 %v6193
        %v6752 = vunpack.c.h.b16 %v6193
        %v6753 = vunpack.c.l.b16 %v6194
        %v6754 = vunpack.c.l.b16 %v6195
        %v6755 = vunpack.c.h.b16 %v6195
        %v6756 = vunpack.c.l.b16 %v6196
        %v6757 = vunpack.c.h.b16 %v6196
        %v6758 = vunpack.c.l.b16 %v6197
        %v6759 = vunpack.c.l.b16 %v6198
        %v6760 = vunpack.c.h.b16 %v6198
        %v6761 = vunpack.c.l.b16 %v6199
        %v6762 = vunpack.c.h.b16 %v6199
        %v6763 = vunpack.c.l.b16 %v6200
        %v6764 = vunpack.c.l.b16 %v6201
        %v6765 = vunpack.c.h.b16 %v6201
        %v6766 = vunpack.c.l.b16 %v6202
        %v6767 = vunpack.c.h.b16 %v6202
        %v6768 = vunpack.c.l.b16 %v6203
        %v6769 = vunpack.c.l.b16 %v6204
        %v6770 = vunpack.c.h.b16 %v6204
        %v6771 = vunpack.c.l.b16 %v6205
        %v6772 = vunpack.c.h.b16 %v6205
        %v6773 = vunpack.c.l.b16 %v6206
        %v6774 = vunpack.c.l.b16 %v6207
        %v6775 = vunpack.c.h.b16 %v6207
        %v6776 = vunpack.c.l.b16 %v6208
        %v6777 = vunpack.c.h.b16 %v6208
        %v6778 = vunpack.c.l.b16 %v6209
        %v6779 = vunpack.c.l.b16 %v6210
        %v6780 = vunpack.c.h.b16 %v6210
        %v6781 = vunpack.c.l.b16 %v6211
        %v6782 = vunpack.c.h.b16 %v6211
        %v6783 = vunpack.c.l.b16 %v6212
        %v6784 = vunpack.c.l.b16 %v6213
        %v6785 = vunpack.c.h.b16 %v6213
        %v6786 = vunpack.c.l.b16 %v6214
        %v6787 = vunpack.c.h.b16 %v6214
        %v6788 = vunpack.c.l.b16 %v6215
        %v6789 = vunpack.c.l.b16 %v6216
        %v6790 = vunpack.c.h.b16 %v6216
        %v6791 = vunpack.c.l.b16 %v6217
        %v6792 = vunpack.c.h.b16 %v6217
        %v6793 = vunpack.c.l.b16 %v6218
        %v6794 = vunpack.c.l.b16 %v6219
        %v6795 = vunpack.c.h.b16 %v6219
        %v6796 = vunpack.c.l.b16 %v6220
        %v6797 = vunpack.c.h.b16 %v6220
        %v6798 = vunpack.c.l.b16 %v6221
        %v6799 = vunpack.c.l.b16 %v6222
        %v6800 = vunpack.c.h.b16 %v6222
        %v6801 = vunpack.c.l.b16 %v6223
        %v6802 = vunpack.c.h.b16 %v6223
        %v6803 = vunpack.c.l.b16 %v6224
        %v6804 = vunpack.c.l.b16 %v6225
        %v6805 = vunpack.c.h.b16 %v6225
        %v6806 = vunpack.c.l.b16 %v6226
        %v6807 = vunpack.c.h.b16 %v6226
        %v6808 = vunpack.c.l.b16 %v6227
        %v6809 = vunpack.c.l.b16 %v6228
        %v6810 = vunpack.c.h.b16 %v6228
        %v6811 = vunpack.c.l.b16 %v6229
        %v6812 = vunpack.c.h.b16 %v6229
        %v6813 = vunpack.c.l.b16 %v6230
        %v6814 = vunpack.c.l.b16 %v6231
        %v6815 = vunpack.c.h.b16 %v6231
        %v6816 = vunpack.c.l.b16 %v6232
        %v6817 = vunpack.c.h.b16 %v6232
        %v6818 = vunpack.c.l.b16 %v6233
        %v6819 = vunpack.c.l.b16 %v6234
        %v6820 = vunpack.c.h.b16 %v6234
        %v6821 = vunpack.c.l.b16 %v6235
        %v6822 = vunpack.c.h.b16 %v6235
        %v6823 = vunpack.c.l.b16 %v6236
        %v6824 = vunpack.c.l.b16 %v6237
        %v6825 = vunpack.c.h.b16 %v6237
        %v6826 = vunpack.c.l.b16 %v6238
        %v6827 = vunpack.c.h.b16 %v6238
        %v6828 = vunpack.c.l.b16 %v6239
        %v6829 = vunpack.c.l.b16 %v6240
        %v6830 = vunpack.c.h.b16 %v6240
        %v6831 = vunpack.c.l.b16 %v6241
        %v6832 = vunpack.c.h.b16 %v6241
        %v6833 = vunpack.c.l.b16 %v6242
        %v6834 = vunpack.c.l.b16 %v6243
        %v6835 = vunpack.c.h.b16 %v6243
        %v6836 = vunpack.c.l.b16 %v6244
        %v6837 = vunpack.c.h.b16 %v6244
        %v6838 = vunpack.c.l.b16 %v6245
        %v6839 = vunpack.c.l.b16 %v6246
        %v6840 = vunpack.c.h.b16 %v6246
        %v6841 = vunpack.c.l.b16 %v6247
        %v6842 = vunpack.c.h.b16 %v6247
        %v6843 = vunpack.c.l.b16 %v6248
        %v6844 = vunpack.c.l.b16 %v6249
        %v6845 = vunpack.c.h.b16 %v6249
        %v6846 = vunpack.c.l.b16 %v6250
        %v6847 = vunpack.c.h.b16 %v6250
        %v6848 = vunpack.c.l.b16 %v6251
        %v6849 = vunpack.c.l.b16 %v6252
        %v6850 = vunpack.c.h.b16 %v6252
        %v6851 = vunpack.c.l.b16 %v6253
        %v6852 = vunpack.c.h.b16 %v6253
        %v6853 = vunpack.c.l.b16 %v6254
        %v6854 = vunpack.c.l.b16 %v6255
        %v6855 = vunpack.c.h.b16 %v6255
        %v6856 = vunpack.c.l.b16 %v6256
        %v6857 = vunpack.c.h.b16 %v6256
        %v6858 = vunpack.c.l.b16 %v6257
        %v6859 = vunpack.c.l.b16 %v6258
        %v6860 = vunpack.c.h.b16 %v6258
        %v6861 = vunpack.c.l.b16 %v6259
        %v6862 = vunpack.c.h.b16 %v6259
        %v6863 = vunpack.c.l.b16 %v6260
        %v6864 = vunpack.c.l.b16 %v6261
        %v6865 = vunpack.c.h.b16 %v6261
        %v6866 = vunpack.c.l.b16 %v6262
        %v6867 = vunpack.c.h.b16 %v6262
        %v6868 = vunpack.c.l.b16 %v6263
        %v6869 = vunpack.c.l.b16 %v6264
        %v6870 = vunpack.c.h.b16 %v6264
        %v6871 = vunpack.c.l.b16 %v6265
        %v6872 = vunpack.c.h.b16 %v6265
        %v6873 = vunpack.c.l.b16 %v6266
        %v6874 = vunpack.c.l.b16 %v6267
        %v6875 = vunpack.c.h.b16 %v6267
        %v6876 = vunpack.c.l.b16 %v6268
        %v6877 = vunpack.c.h.b16 %v6268
        %v6878 = vunpack.c.l.b16 %v6269
        %v6879 = vunpack.c.l.b16 %v6270
        %v6880 = vunpack.c.h.b16 %v6270
        %v6881 = vunpack.c.l.b16 %v6271
        %v6882 = vunpack.c.h.b16 %v6271
        %v6883 = vunpack.c.l.b16 %v6272
        %v6884 = vunpack.c.l.b16 %v6273
        %v6885 = vunpack.c.h.b16 %v6273
        %v6886 = vunpack.c.l.b16 %v6274
        %v6887 = vunpack.c.h.b16 %v6274
        %v6888 = vunpack.c.l.b16 %v6275
        %v6889 = vunpack.c.l.b16 %v6276
        %v6890 = vunpack.c.h.b16 %v6276
        %v6891 = vunpack.c.l.b16 %v6277
        %v6892 = vunpack.c.h.b16 %v6277
        %v6893 = vunpack.c.l.b16 %v6278
        %v6894 = vunpack.c.l.b16 %v6279
        %v6895 = vunpack.c.h.b16 %v6279
        %v6896 = vunpack.c.l.b16 %v6280
        %v6897 = vunpack.c.h.b16 %v6280
        %v6898 = vunpack.c.l.b16 %v6281
        %v6899 = vunpack.c.l.b16 %v6282
        %v6900 = vunpack.c.h.b16 %v6282
        %v6901 = vunpack.c.l.b16 %v6283
        %v6902 = vunpack.c.h.b16 %v6283
        %v6903 = vunpack.c.l.b16 %v6284
        %v6904 = vunpack.c.l.b16 %v6285
        %v6905 = vunpack.c.h.b16 %v6285
        %v6906 = vunpack.c.l.b16 %v6286
        %v6907 = vunpack.c.h.b16 %v6286
        %v6908 = vunpack.c.l.b16 %v6287
        %v6909 = vunpack.c.l.b16 %v6288
        %v6910 = vunpack.c.h.b16 %v6288
        %v6911 = vunpack.c.l.b16 %v6289
        %v6912 = vunpack.c.h.b16 %v6289
        %v6913 = vunpack.c.l.b16 %v6290
        %v6914 = vunpack.c.l.b16 %v6291
        %v6915 = vunpack.c.h.b16 %v6291
        %v6916 = vunpack.c.l.b16 %v6292
        %v6917 = vunpack.c.h.b16 %v6292
        %v6918 = vunpack.c.l.b16 %v6293
        %v6919 = vunpack.c.l.b16 %v6294
        %v6920 = vunpack.c.h.b16 %v6294
        %v6921 = vunpack.c.l.b16 %v6295
        %v6922 = vunpack.c.h.b16 %v6295
        %v6923 = vunpack.c.l.b16 %v6296
        %v6924 = vpack.c.b16 %v6554, %v6549
        %v6925 = vpack.c.b16 %v6555, %v6550
        %v6926 = vpack.c.b16 %v6556, %v6551
        %v6927 = vpack.c.b16 %v6557, %v6552
        %v6928 = vpack.c.b16 %v6558, %v6553
        %v6929 = vpack.c.b16 %v6564, %v6559
        %v6930 = vpack.c.b16 %v6565, %v6560
        %v6931 = vpack.c.b16 %v6566, %v6561
        %v6932 = vpack.c.b16 %v6567, %v6562
        %v6933 = vpack.c.b16 %v6568, %v6563
        %v6934 = vpack.c.b16 %v6574, %v6569
        %v6935 = vpack.c.b16 %v6575, %v6570
        %v6936 = vpack.c.b16 %v6576, %v6571
        %v6937 = vpack.c.b16 %v6577, %v6572
        %v6938 = vpack.c.b16 %v6578, %v6573
        %v6939 = vpack.c.b16 %v6584, %v6579
        %v6940 = vpack.c.b16 %v6585, %v6580
        %v6941 = vpack.c.b16 %v6586, %v6581
        %v6942 = vpack.c.b16 %v6587, %v6582
        %v6943 = vpack.c.b16 %v6588, %v6583
        %v6944 = vpack.c.b16 %v6594, %v6589
        %v6945 = vpack.c.b16 %v6595, %v6590
        %v6946 = vpack.c.b16 %v6596, %v6591
        %v6947 = vpack.c.b16 %v6597, %v6592
        %v6948 = vpack.c.b16 %v6598, %v6593
        %v6949 = vpack.c.b16 %v6604, %v6599
        %v6950 = vpack.c.b16 %v6605, %v6600
        %v6951 = vpack.c.b16 %v6606, %v6601
        %v6952 = vpack.c.b16 %v6607, %v6602
        %v6953 = vpack.c.b16 %v6608, %v6603
        %v6954 = vpack.c.b16 %v6614, %v6609
        %v6955 = vpack.c.b16 %v6615, %v6610
        %v6956 = vpack.c.b16 %v6616, %v6611
        %v6957 = vpack.c.b16 %v6617, %v6612
        %v6958 = vpack.c.b16 %v6618, %v6613
        %v6959 = vpack.c.b16 %v6624, %v6619
        %v6960 = vpack.c.b16 %v6625, %v6620
        %v6961 = vpack.c.b16 %v6626, %v6621
        %v6962 = vpack.c.b16 %v6627, %v6622
        %v6963 = vpack.c.b16 %v6628, %v6623
        %v6964 = vpack.c.b16 %v6634, %v6629
        %v6965 = vpack.c.b16 %v6635, %v6630
        %v6966 = vpack.c.b16 %v6636, %v6631
        %v6967 = vpack.c.b16 %v6637, %v6632
        %v6968 = vpack.c.b16 %v6638, %v6633
        %v6969 = vpack.c.b16 %v6644, %v6639
        %v6970 = vpack.c.b16 %v6645, %v6640
        %v6971 = vpack.c.b16 %v6646, %v6641
        %v6972 = vpack.c.b16 %v6647, %v6642
        %v6973 = vpack.c.b16 %v6648, %v6643
        %v6974 = vpack.c.b16 %v6654, %v6649
        %v6975 = vpack.c.b16 %v6655, %v6650
        %v6976 = vpack.c.b16 %v6656, %v6651
        %v6977 = vpack.c.b16 %v6657, %v6652
        %v6978 = vpack.c.b16 %v6658, %v6653
        %v6979 = vpack.c.b16 %v6664, %v6659
        %v6980 = vpack.c.b16 %v6665, %v6660
        %v6981 = vpack.c.b16 %v6666, %v6661
        %v6982 = vpack.c.b16 %v6667, %v6662
        %v6983 = vpack.c.b16 %v6668, %v6663
        %v6984 = vpack.c.b16 %v6674, %v6669
        %v6985 = vpack.c.b16 %v6675, %v6670
        %v6986 = vpack.c.b16 %v6676, %v6671
        %v6987 = vpack.c.b16 %v6677, %v6672
        %v6988 = vpack.c.b16 %v6678, %v6673
        %v6989 = vpack.c.b16 %v6684, %v6679
        %v6990 = vpack.c.b16 %v6685, %v6680
        %v6991 = vpack.c.b16 %v6686, %v6681
        %v6992 = vpack.c.b16 %v6687, %v6682
        %v6993 = vpack.c.b16 %v6688, %v6683
        %v6994 = vpack.c.b16 %v6694, %v6689
        %v6995 = vpack.c.b16 %v6695, %v6690
        %v6996 = vpack.c.b16 %v6696, %v6691
        %v6997 = vpack.c.b16 %v6697, %v6692
        %v6998 = vpack.c.b16 %v6698, %v6693
        %v6999 = vpack.c.b16 %v6704, %v6699
        %v7000 = vpack.c.b16 %v6705, %v6700
        %v7001 = vpack.c.b16 %v6706, %v6701
        %v7002 = vpack.c.b16 %v6707, %v6702
        %v7003 = vpack.c.b16 %v6708, %v6703
        %v7004 = vpack.c.b16 %v6714, %v6709
        %v7005 = vpack.c.b16 %v6715, %v6710
        %v7006 = vpack.c.b16 %v6716, %v6711
        %v7007 = vpack.c.b16 %v6717, %v6712
        %v7008 = vpack.c.b16 %v6718, %v6713
        %v7009 = vpack.c.b16 %v6724, %v6719
        %v7010 = vpack.c.b16 %v6725, %v6720
        %v7011 = vpack.c.b16 %v6726, %v6721
        %v7012 = vpack.c.b16 %v6727, %v6722
        %v7013 = vpack.c.b16 %v6728, %v6723
        %v7014 = vpack.c.b16 %v6734, %v6729
        %v7015 = vpack.c.b16 %v6735, %v6730
        %v7016 = vpack.c.b16 %v6736, %v6731
        %v7017 = vpack.c.b16 %v6737, %v6732
        %v7018 = vpack.c.b16 %v6738, %v6733
        %v7019 = vpack.c.b16 %v6744, %v6739
        %v7020 = vpack.c.b16 %v6745, %v6740
        %v7021 = vpack.c.b16 %v6746, %v6741
        %v7022 = vpack.c.b16 %v6747, %v6742
        %v7023 = vpack.c.b16 %v6748, %v6743
        %v7024 = vpack.c.b16 %v6754, %v6749
        %v7025 = vpack.c.b16 %v6755, %v6750
        %v7026 = vpack.c.b16 %v6756, %v6751
        %v7027 = vpack.c.b16 %v6757, %v6752
        %v7028 = vpack.c.b16 %v6758, %v6753
        %v7029 = vpack.c.b16 %v6764, %v6759
        %v7030 = vpack.c.b16 %v6765, %v6760
        %v7031 = vpack.c.b16 %v6766, %v6761
        %v7032 = vpack.c.b16 %v6767, %v6762
        %v7033 = vpack.c.b16 %v6768, %v6763
        %v7034 = vpack.c.b16 %v6774, %v6769
        %v7035 = vpack.c.b16 %v6775, %v6770
        %v7036 = vpack.c.b16 %v6776, %v6771
        %v7037 = vpack.c.b16 %v6777, %v6772
        %v7038 = vpack.c.b16 %v6778, %v6773
        %v7039 = vpack.c.b16 %v6784, %v6779
        %v7040 = vpack.c.b16 %v6785, %v6780
        %v7041 = vpack.c.b16 %v6786, %v6781
        %v7042 = vpack.c.b16 %v6787, %v6782
        %v7043 = vpack.c.b16 %v6788, %v6783
        %v7044 = vpack.c.b16 %v6794, %v6789
        %v7045 = vpack.c.b16 %v6795, %v6790
        %v7046 = vpack.c.b16 %v6796, %v6791
        %v7047 = vpack.c.b16 %v6797, %v6792
        %v7048 = vpack.c.b16 %v6798, %v6793
        %v7049 = vpack.c.b16 %v6804, %v6799
        %v7050 = vpack.c.b16 %v6805, %v6800
        %v7051 = vpack.c.b16 %v6806, %v6801
        %v7052 = vpack.c.b16 %v6807, %v6802
        %v7053 = vpack.c.b16 %v6808, %v6803
        %v7054 = vpack.c.b16 %v6814, %v6809
        %v7055 = vpack.c.b16 %v6815, %v6810
        %v7056 = vpack.c.b16 %v6816, %v6811
        %v7057 = vpack.c.b16 %v6817, %v6812
        %v7058 = vpack.c.b16 %v6818, %v6813
        %v7059 = vpack.c.b16 %v6824, %v6819
        %v7060 = vpack.c.b16 %v6825, %v6820
        %v7061 = vpack.c.b16 %v6826, %v6821
        %v7062 = vpack.c.b16 %v6827, %v6822
        %v7063 = vpack.c.b16 %v6828, %v6823
        %v7064 = vpack.c.b16 %v6834, %v6829
        %v7065 = vpack.c.b16 %v6835, %v6830
        %v7066 = vpack.c.b16 %v6836, %v6831
        %v7067 = vpack.c.b16 %v6837, %v6832
        %v7068 = vpack.c.b16 %v6838, %v6833
        %v7069 = vpack.c.b16 %v6844, %v6839
        %v7070 = vpack.c.b16 %v6845, %v6840
        %v7071 = vpack.c.b16 %v6846, %v6841
        %v7072 = vpack.c.b16 %v6847, %v6842
        %v7073 = vpack.c.b16 %v6848, %v6843
        %v7074 = vpack.c.b16 %v6854, %v6849
        %v7075 = vpack.c.b16 %v6855, %v6850
        %v7076 = vpack.c.b16 %v6856, %v6851
        %v7077 = vpack.c.b16 %v6857, %v6852
        %v7078 = vpack.c.b16 %v6858, %v6853
        %v7079 = vpack.c.b16 %v6864, %v6859
        %v7080 = vpack.c.b16 %v6865, %v6860
        %v7081 = vpack.c.b16 %v6866, %v6861
        %v7082 = vpack.c.b16 %v6867, %v6862
        %v7083 = vpack.c.b16 %v6868, %v6863
        %v7084 = vpack.c.b16 %v6874, %v6869
        %v7085 = vpack.c.b16 %v6875, %v6870
        %v7086 = vpack.c.b16 %v6876, %v6871
        %v7087 = vpack.c.b16 %v6877, %v6872
        %v7088 = vpack.c.b16 %v6878, %v6873
        %v7089 = vpack.c.b16 %v6884, %v6879
        %v7090 = vpack.c.b16 %v6885, %v6880
        %v7091 = vpack.c.b16 %v6886, %v6881
        %v7092 = vpack.c.b16 %v6887, %v6882
        %v7093 = vpack.c.b16 %v6888, %v6883
        %v7094 = vpack.c.b16 %v6894, %v6889
        %v7095 = vpack.c.b16 %v6895, %v6890
        %v7096 = vpack.c.b16 %v6896, %v6891
        %v7097 = vpack.c.b16 %v6897, %v6892
        %v7098 = vpack.c.b16 %v6898, %v6893
        %v7099 = vpack.c.b16 %v6904, %v6899
        %v7100 = vpack.c.b16 %v6905, %v6900
        %v7101 = vpack.c.b16 %v6906, %v6901
        %v7102 = vpack.c.b16 %v6907, %v6902
        %v7103 = vpack.c.b16 %v6908, %v6903
        %v7104 = vpack.c.b16 %v6914, %v6909
        %v7105 = vpack.c.b16 %v6915, %v6910
        %v7106 = vpack.c.b16 %v6916, %v6911
        %v7107 = vpack.c.b16 %v6917, %v6912
        %v7108 = vpack.c.b16 %v6918, %v6913
        %v7109 = vpack.c.b16 %v6919, %v6919
        %v7110 = vpack.c.b16 %v6920, %v6920
        %v7111 = vpack.c.b16 %v6921, %v6921
        %v7112 = vpack.c.b16 %v6922, %v6922
        %v7113 = vpack.c.b16 %v6923, %v6923
        %v7300 = vsel %vm4862, %v6036, 0
        %v7303 = vsel %vm4862, %v6041, 0
        %v7306 = vsel %vm4862, %v6046, 0
        %v7309 = vsel %vm4862, %v6051, 0
        %v7312 = vsel %vm4862, %v6056, 0
        %v7315 = vsel %vm4862, %v6061, 0
        %v7318 = vsel %vm4862, %v6066, 0
        %v7321 = vsel %vm4862, %v6071, 0
        %v7324 = vsel %vm4887, %v7109, 0
        %v7327 = vsel %vm4887, %v7110, 0
        %v7330 = vsel %vm4887, %v7111, 0
        %v7333 = vsel %vm4887, %v7112, 0
        %v7336 = vsel %vm4887, %v7113, 0
        %7338 = vmatprep.subr.bf16.mxu0 %v6925
        %7339 = vmatpush1.bf16.msra.mxu0 %v6924
        %7340 = vmatprep.subr.bf16.mxu0 %v6930
        %7341 = vmatpush1.bf16.msra.mxu0 %v6929
        %7342 = vmatprep.subr.bf16.mxu0 %v6935
        %7343 = vmatpush1.bf16.msra.mxu0 %v6934
        %7344 = vmatprep.subr.bf16.mxu0 %v6940
        %7345 = vmatpush1.bf16.msra.mxu0 %v6939
        %7346 = vmatprep.subr.bf16.mxu0 %v6945
        %7347 = vmatpush1.bf16.msra.mxu0 %v6944
        %7348 = vmatprep.subr.bf16.mxu0 %v6950
        %7349 = vmatpush1.bf16.msra.mxu0 %v6949
        %7350 = vmatprep.subr.bf16.mxu0 %v6955
        %7351 = vmatpush1.bf16.msra.mxu0 %v6954
        %7352 = vmatprep.subr.bf16.mxu0 %v6960
        %7353 = vmatpush1.bf16.msra.mxu0 %v6959
        %7354 = vmatprep.subr.bf16.mxu0 %v6965
        %7355 = vmatpush1.bf16.msra.mxu0 %v6964
        %7356 = vmatprep.subr.bf16.mxu0 %v6970
        %7357 = vmatpush1.bf16.msra.mxu0 %v6969
        %7358 = vmatprep.subr.bf16.mxu0 %v6975
        %7359 = vmatpush1.bf16.msra.mxu0 %v6974
        %7360 = vmatprep.subr.bf16.mxu0 %v6980
        %7361 = vmatpush1.bf16.msra.mxu0 %v6979
        %7362 = vmatprep.subr.bf16.mxu0 %v6985
        %7363 = vmatpush1.bf16.msra.mxu0 %v6984
        %7364 = vmatprep.subr.bf16.mxu0 %v6990
        %7365 = vmatpush1.bf16.msra.mxu0 %v6989
        %7366 = vmatprep.subr.bf16.mxu0 %v6995
        %7367 = vmatpush1.bf16.msra.mxu0 %v6994
        %7368 = vmatprep.subr.bf16.mxu0 %v7000
        %7369 = vmatpush1.bf16.msra.mxu0 %v6999
        %7370 = vmatprep.mubr.bf16.mxu0 %v6033
        %7371 = vmatmul.mubr.bf16.gmra.mrb[0].mxu0 %v6032
        %v7372 = vpop.f32.mrb[0].mxu0
        %v7373 = vadd.f32 %v6302, %v7372
        %v7374 = vpop.f32.mrb[0].mxu0
        %v7375 = vadd.f32 %v6306, %v7374
        %v7376 = vpop.f32.mrb[0].mxu0
        %v7377 = vadd.f32 %v6302, %v7376
        %v7378 = vpop.f32.mrb[0].mxu0
        %v7379 = vadd.f32 %v6306, %v7378
        %7380 = vmatprep.mubr.bf16.mxu0 %v6038
        %7381 = vmatmul.mubr.bf16.gmra.mrb[0].mxu0 %v6037
        %v7382 = vpop.f32.mrb[0].mxu0
        %v7383 = vadd.f32 %v6302, %v7382
        %v7384 = vpop.f32.mrb[0].mxu0
        %v7385 = vadd.f32 %v6306, %v7384
        %v7386 = vpop.f32.mrb[0].mxu0
        %v7387 = vadd.f32 %v6302, %v7386
        %v7388 = vpop.f32.mrb[0].mxu0
        %v7389 = vadd.f32 %v6306, %v7388
        %7390 = vmatprep.mubr.bf16.mxu0 %v6043
        %7391 = vmatmul.mubr.bf16.gmra.mrb[0].mxu0 %v6042
        %v7392 = vpop.f32.mrb[0].mxu0
        %v7393 = vadd.f32 %v6302, %v7392
        %v7394 = vpop.f32.mrb[0].mxu0
        %v7395 = vadd.f32 %v6306, %v7394
        %v7396 = vpop.f32.mrb[0].mxu0
        %v7397 = vadd.f32 %v6302, %v7396
        %v7398 = vpop.f32.mrb[0].mxu0
        %v7399 = vadd.f32 %v6306, %v7398
        %7400 = vmatprep.mubr.bf16.mxu0 %v6048
        %7401 = vmatmul.mubr.bf16.gmra.mrb[0].mxu0 %v6047
        %v7402 = vpop.f32.mrb[0].mxu0
        %v7403 = vadd.f32 %v6302, %v7402
        %v7404 = vpop.f32.mrb[0].mxu0
        %v7405 = vadd.f32 %v6306, %v7404
        %v7406 = vpop.f32.mrb[0].mxu0
        %v7407 = vadd.f32 %v6302, %v7406
        %v7408 = vpop.f32.mrb[0].mxu0
        %v7409 = vadd.f32 %v6306, %v7408
        %7410 = vmatprep.mubr.bf16.mxu0 %v6053
        %7411 = vmatmul.mubr.bf16.gmra.mrb[0].mxu0 %v6052
        %v7412 = vpop.f32.mrb[0].mxu0
        %v7413 = vadd.f32 %v6302, %v7412
        %v7414 = vpop.f32.mrb[0].mxu0
        %v7415 = vadd.f32 %v6306, %v7414
        %v7416 = vpop.f32.mrb[0].mxu0
        %v7417 = vadd.f32 %v6302, %v7416
        %v7418 = vpop.f32.mrb[0].mxu0
        %v7419 = vadd.f32 %v6306, %v7418
        %7420 = vmatprep.mubr.bf16.mxu0 %v6058
        %7421 = vmatmul.mubr.bf16.gmra.mrb[0].mxu0 %v6057
        %v7422 = vpop.f32.mrb[0].mxu0
        %v7423 = vadd.f32 %v6302, %v7422
        %v7424 = vpop.f32.mrb[0].mxu0
        %v7425 = vadd.f32 %v6306, %v7424
        %v7426 = vpop.f32.mrb[0].mxu0
        %v7427 = vadd.f32 %v6302, %v7426
        %v7428 = vpop.f32.mrb[0].mxu0
        %v7429 = vadd.f32 %v6306, %v7428
        %7430 = vmatprep.mubr.bf16.mxu0 %v6063
        %7431 = vmatmul.mubr.bf16.gmra.mrb[0].mxu0 %v6062
        %v7432 = vpop.f32.mrb[0].mxu0
        %v7433 = vadd.f32 %v6302, %v7432
        %v7434 = vpop.f32.mrb[0].mxu0
        %v7435 = vadd.f32 %v6306, %v7434
        %v7436 = vpop.f32.mrb[0].mxu0
        %v7437 = vadd.f32 %v6302, %v7436
        %v7438 = vpop.f32.mrb[0].mxu0
        %v7439 = vadd.f32 %v6306, %v7438
        %7440 = vmatprep.mubr.bf16.mxu0 %v6068
        %7441 = vmatmul.mubr.bf16.gmra.mrb[0].mxu0 %v6067
        %v7442 = vpop.f32.mrb[0].mxu0
        %v7443 = vadd.f32 %v6302, %v7442
        %v7444 = vpop.f32.mrb[0].mxu0
        %v7445 = vadd.f32 %v6306, %v7444
        %v7446 = vpop.f32.mrb[0].mxu0
        %v7447 = vadd.f32 %v6302, %v7446
        %v7448 = vpop.f32.mrb[0].mxu0
        %v7449 = vadd.f32 %v6306, %v7448
        %7450 = vdwg.mxu0
        %7451 = vmatprep.subr.bf16.mxu0 %v7005
        %7452 = vmatpush1.bf16.msra.mxu0 %v7004
        %7453 = vmatprep.subr.bf16.mxu0 %v7010
        %7454 = vmatpush1.bf16.msra.mxu0 %v7009
        %7455 = vmatprep.subr.bf16.mxu0 %v7015
        %7456 = vmatpush1.bf16.msra.mxu0 %v7014
        %7457 = vmatprep.subr.bf16.mxu0 %v7020
        %7458 = vmatpush1.bf16.msra.mxu0 %v7019
        %7459 = vmatprep.subr.bf16.mxu0 %v7025
        %7460 = vmatpush1.bf16.msra.mxu0 %v7024
        %7461 = vmatprep.subr.bf16.mxu0 %v7030
        %7462 = vmatpush1.bf16.msra.mxu0 %v7029
        %7463 = vmatprep.subr.bf16.mxu0 %v7035
        %7464 = vmatpush1.bf16.msra.mxu0 %v7034
        %7465 = vmatprep.subr.bf16.mxu0 %v7040
        %7466 = vmatpush1.bf16.msra.mxu0 %v7039
        %7467 = vmatprep.subr.bf16.mxu0 %v7045
        %7468 = vmatpush1.bf16.msra.mxu0 %v7044
        %7469 = vmatprep.subr.bf16.mxu0 %v7050
        %7470 = vmatpush1.bf16.msra.mxu0 %v7049
        %7471 = vmatprep.subr.bf16.mxu0 %v7055
        %7472 = vmatpush1.bf16.msra.mxu0 %v7054
        %7473 = vmatprep.subr.bf16.mxu0 %v7060
        %7474 = vmatpush1.bf16.msra.mxu0 %v7059
        %7475 = vmatprep.subr.bf16.mxu0 %v7065
        %7476 = vmatpush1.bf16.msra.mxu0 %v7064
        %7477 = vmatprep.subr.bf16.mxu0 %v7070
        %7478 = vmatpush1.bf16.msra.mxu0 %v7069
        %7479 = vmatprep.subr.bf16.mxu0 %v7075
        %7480 = vmatpush1.bf16.msra.mxu0 %v7074
        %7481 = vmatprep.subr.bf16.mxu0 %v7080
        %7482 = vmatpush1.bf16.msra.mxu0 %v7079
        %7483 = vmatprep.mubr.bf16.mxu0 %v6035
        %7484 = vmatmul.mubr.bf16.gmra.mrb[0].mxu0 %v6034
        %v7485 = vpop.f32.mrb[0].mxu0
        %v7486 = vadd.f32 %v7373, %v7485
        %v7487 = vpop.f32.mrb[0].mxu0
        %v7488 = vadd.f32 %v7375, %v7487
        %v7489 = vpop.f32.mrb[0].mxu0
        %v7490 = vadd.f32 %v7377, %v7489
        %v7491 = vpop.f32.mrb[0].mxu0
        %v7492 = vadd.f32 %v7379, %v7491
        %7493 = vmatprep.mubr.bf16.mxu0 %v6040
        %7494 = vmatmul.mubr.bf16.gmra.mrb[0].mxu0 %v6039
        %v7495 = vpop.f32.mrb[0].mxu0
        %v7496 = vadd.f32 %v7383, %v7495
        %v7497 = vpop.f32.mrb[0].mxu0
        %v7498 = vadd.f32 %v7385, %v7497
        %v7499 = vpop.f32.mrb[0].mxu0
        %v7500 = vadd.f32 %v7387, %v7499
        %v7501 = vpop.f32.mrb[0].mxu0
        %v7502 = vadd.f32 %v7389, %v7501
        %7503 = vmatprep.mubr.bf16.mxu0 %v6045
        %7504 = vmatmul.mubr.bf16.gmra.mrb[0].mxu0 %v6044
        %v7505 = vpop.f32.mrb[0].mxu0
        %v7506 = vadd.f32 %v7393, %v7505
        %v7507 = vpop.f32.mrb[0].mxu0
        %v7508 = vadd.f32 %v7395, %v7507
        %v7509 = vpop.f32.mrb[0].mxu0
        %v7510 = vadd.f32 %v7397, %v7509
        %v7511 = vpop.f32.mrb[0].mxu0
        %v7512 = vadd.f32 %v7399, %v7511
        %7513 = vmatprep.mubr.bf16.mxu0 %v6050
        %7514 = vmatmul.mubr.bf16.gmra.mrb[0].mxu0 %v6049
        %v7515 = vpop.f32.mrb[0].mxu0
        %v7516 = vadd.f32 %v7403, %v7515
        %v7517 = vpop.f32.mrb[0].mxu0
        %v7518 = vadd.f32 %v7405, %v7517
        %v7519 = vpop.f32.mrb[0].mxu0
        %v7520 = vadd.f32 %v7407, %v7519
        %v7521 = vpop.f32.mrb[0].mxu0
        %v7522 = vadd.f32 %v7409, %v7521
        %7523 = vmatprep.mubr.bf16.mxu0 %v6055
        %7524 = vmatmul.mubr.bf16.gmra.mrb[0].mxu0 %v6054
        %v7525 = vpop.f32.mrb[0].mxu0
        %v7526 = vadd.f32 %v7413, %v7525
        %v7527 = vpop.f32.mrb[0].mxu0
        %v7528 = vadd.f32 %v7415, %v7527
        %v7529 = vpop.f32.mrb[0].mxu0
        %v7530 = vadd.f32 %v7417, %v7529
        %v7531 = vpop.f32.mrb[0].mxu0
        %v7532 = vadd.f32 %v7419, %v7531
        %7533 = vmatprep.mubr.bf16.mxu0 %v6060
        %7534 = vmatmul.mubr.bf16.gmra.mrb[0].mxu0 %v6059
        %v7535 = vpop.f32.mrb[0].mxu0
        %v7536 = vadd.f32 %v7423, %v7535
        %v7537 = vpop.f32.mrb[0].mxu0
        %v7538 = vadd.f32 %v7425, %v7537
        %v7539 = vpop.f32.mrb[0].mxu0
        %v7540 = vadd.f32 %v7427, %v7539
        %v7541 = vpop.f32.mrb[0].mxu0
        %v7542 = vadd.f32 %v7429, %v7541
        %7543 = vmatprep.mubr.bf16.mxu0 %v6065
        %7544 = vmatmul.mubr.bf16.gmra.mrb[0].mxu0 %v6064
        %v7545 = vpop.f32.mrb[0].mxu0
        %v7546 = vadd.f32 %v7433, %v7545
        %v7547 = vpop.f32.mrb[0].mxu0
        %v7548 = vadd.f32 %v7435, %v7547
        %v7549 = vpop.f32.mrb[0].mxu0
        %v7550 = vadd.f32 %v7437, %v7549
        %v7551 = vpop.f32.mrb[0].mxu0
        %v7552 = vadd.f32 %v7439, %v7551
        %7553 = vmatprep.mubr.bf16.mxu0 %v6070
        %7554 = vmatmul.mubr.bf16.gmra.mrb[0].mxu0 %v6069
        %v7555 = vpop.f32.mrb[0].mxu0
        %v7556 = vadd.f32 %v7443, %v7555
        %v7557 = vpop.f32.mrb[0].mxu0
        %v7558 = vadd.f32 %v7445, %v7557
        %v7559 = vpop.f32.mrb[0].mxu0
        %v7560 = vadd.f32 %v7447, %v7559
        %v7561 = vpop.f32.mrb[0].mxu0
        %v7562 = vadd.f32 %v7449, %v7561
        %7563 = vdwg.mxu0
        %7564 = vmatprep.subr.bf16.mxu0 %v7085
        %7565 = vmatpush1.bf16.msra.mxu0 %v7084
        %7566 = vmatprep.subr.bf16.mxu0 %v7090
        %7567 = vmatpush1.bf16.msra.mxu0 %v7089
        %7568 = vmatprep.subr.bf16.mxu0 %v7095
        %7569 = vmatpush1.bf16.msra.mxu0 %v7094
        %7570 = vmatprep.subr.bf16.mxu0 %v7100
        %7571 = vmatpush1.bf16.msra.mxu0 %v7099
        %7572 = vmatprep.subr.bf16.mxu0 %v7105
        %7573 = vmatpush1.bf16.msra.mxu0 %v7104
        %7574 = vmatprep.subr.bf16.mxu0 %v7327
        %7575 = vmatpush1.bf16.msra.mxu0 %v7324
        %7576 = vmatprep.subr.bf16.mxu0 0
        %7577 = vmatpush1.bf16.msra.mxu0 0
        %7578 = vmatprep.subr.bf16.mxu0 0
        %7579 = vmatpush1.bf16.msra.mxu0 0
        %7580 = vmatprep.subr.bf16.mxu0 0
        %7581 = vmatpush1.bf16.msra.mxu0 0
        %7582 = vmatprep.subr.bf16.mxu0 0
        %7583 = vmatpush1.bf16.msra.mxu0 0
        %7584 = vmatprep.subr.bf16.mxu0 0
        %7585 = vmatpush1.bf16.msra.mxu0 0
        %7586 = vmatprep.subr.bf16.mxu0 0
        %7587 = vmatpush1.bf16.msra.mxu0 0
        %7588 = vmatprep.subr.bf16.mxu0 0
        %7589 = vmatpush1.bf16.msra.mxu0 0
        %7590 = vmatprep.subr.bf16.mxu0 0
        %7591 = vmatpush1.bf16.msra.mxu0 0
        %7592 = vmatprep.subr.bf16.mxu0 0
        %7593 = vmatpush1.bf16.msra.mxu0 0
        %7594 = vmatprep.subr.bf16.mxu0 0
        %7595 = vmatpush1.bf16.msra.mxu0 0
        %7596 = vmatprep.mubr.bf16.mxu0 0
        %7597 = vmatmul.mubr.bf16.gmra.mrb[0].mxu0 %v7300
        %v7598 = vpop.f32.mrb[0].mxu0
        %v7599 = vadd.f32 %v7486, %v7598
        %v7600 = vpop.f32.mrb[0].mxu0
        %v7601 = vadd.f32 %v7488, %v7600
        %v7602 = vpop.f32.mrb[0].mxu0
        %v7603 = vadd.f32 %v7490, %v7602
        %v7604 = vpop.f32.mrb[0].mxu0
        %v7605 = vadd.f32 %v7492, %v7604
        %7606 = vmatprep.mubr.bf16.mxu0 0
        %7607 = vmatmul.mubr.bf16.gmra.mrb[0].mxu0 %v7303
        %v7608 = vpop.f32.mrb[0].mxu0
        %v7609 = vadd.f32 %v7496, %v7608
        %v7610 = vpop.f32.mrb[0].mxu0
        %v7611 = vadd.f32 %v7498, %v7610
        %v7612 = vpop.f32.mrb[0].mxu0
        %v7613 = vadd.f32 %v7500, %v7612
        %v7614 = vpop.f32.mrb[0].mxu0
        %v7615 = vadd.f32 %v7502, %v7614
        %7616 = vmatprep.mubr.bf16.mxu0 0
        %7617 = vmatmul.mubr.bf16.gmra.mrb[0].mxu0 %v7306
        %v7618 = vpop.f32.mrb[0].mxu0
        %v7619 = vadd.f32 %v7506, %v7618
        %v7620 = vpop.f32.mrb[0].mxu0
        %v7621 = vadd.f32 %v7508, %v7620
        %v7622 = vpop.f32.mrb[0].mxu0
        %v7623 = vadd.f32 %v7510, %v7622
        %v7624 = vpop.f32.mrb[0].mxu0
        %v7625 = vadd.f32 %v7512, %v7624
        %7626 = vmatprep.mubr.bf16.mxu0 0
        %7627 = vmatmul.mubr.bf16.gmra.mrb[0].mxu0 %v7309
        %v7628 = vpop.f32.mrb[0].mxu0
        %v7629 = vadd.f32 %v7516, %v7628
        %v7630 = vpop.f32.mrb[0].mxu0
        %v7631 = vadd.f32 %v7518, %v7630
        %v7632 = vpop.f32.mrb[0].mxu0
        %v7633 = vadd.f32 %v7520, %v7632
        %v7634 = vpop.f32.mrb[0].mxu0
        %v7635 = vadd.f32 %v7522, %v7634
        %7636 = vmatprep.mubr.bf16.mxu0 0
        %7637 = vmatmul.mubr.bf16.gmra.mrb[0].mxu0 %v7312
        %v7638 = vpop.f32.mrb[0].mxu0
        %v7639 = vadd.f32 %v7526, %v7638
        %v7640 = vpop.f32.mrb[0].mxu0
        %v7641 = vadd.f32 %v7528, %v7640
        %v7642 = vpop.f32.mrb[0].mxu0
        %v7643 = vadd.f32 %v7530, %v7642
        %v7644 = vpop.f32.mrb[0].mxu0
        %v7645 = vadd.f32 %v7532, %v7644
        %7646 = vmatprep.mubr.bf16.mxu0 0
        %7647 = vmatmul.mubr.bf16.gmra.mrb[0].mxu0 %v7315
        %v7648 = vpop.f32.mrb[0].mxu0
        %v7649 = vadd.f32 %v7536, %v7648
        %v7650 = vpop.f32.mrb[0].mxu0
        %v7651 = vadd.f32 %v7538, %v7650
        %v7652 = vpop.f32.mrb[0].mxu0
        %v7653 = vadd.f32 %v7540, %v7652
        %v7654 = vpop.f32.mrb[0].mxu0
        %v7655 = vadd.f32 %v7542, %v7654
        %7656 = vmatprep.mubr.bf16.mxu0 0
        %7657 = vmatmul.mubr.bf16.gmra.mrb[0].mxu0 %v7318
        %v7658 = vpop.f32.mrb[0].mxu0
        %v7659 = vadd.f32 %v7546, %v7658
        %v7660 = vpop.f32.mrb[0].mxu0
        %v7661 = vadd.f32 %v7548, %v7660
        %v7662 = vpop.f32.mrb[0].mxu0
        %v7663 = vadd.f32 %v7550, %v7662
        %v7664 = vpop.f32.mrb[0].mxu0
        %v7665 = vadd.f32 %v7552, %v7664
        %7666 = vmatprep.mubr.bf16.mxu0 0
        %7667 = vmatmul.mubr.bf16.gmra.mrb[0].mxu0 %v7321
        %v7668 = vpop.f32.mrb[0].mxu0
        %v7669 = vadd.f32 %v7556, %v7668
        %v7670 = vpop.f32.mrb[0].mxu0
        %v7671 = vadd.f32 %v7558, %v7670
        %v7672 = vpop.f32.mrb[0].mxu0
        %v7673 = vadd.f32 %v7560, %v7672
        %v7674 = vpop.f32.mrb[0].mxu0
        %v7675 = vadd.f32 %v7562, %v7674
        %7676 = vdwg.mxu0
        %7677 = vmatprep.subr.bf16.mxu0 %v6927
        %7678 = vmatpush1.bf16.msra.mxu0 %v6926
        %7679 = vmatprep.subr.bf16.mxu0 %v6932
        %7680 = vmatpush1.bf16.msra.mxu0 %v6931
        %7681 = vmatprep.subr.bf16.mxu0 %v6937
        %7682 = vmatpush1.bf16.msra.mxu0 %v6936
        %7683 = vmatprep.subr.bf16.mxu0 %v6942
        %7684 = vmatpush1.bf16.msra.mxu0 %v6941
        %7685 = vmatprep.subr.bf16.mxu0 %v6947
        %7686 = vmatpush1.bf16.msra.mxu0 %v6946
        %7687 = vmatprep.subr.bf16.mxu0 %v6952
        %7688 = vmatpush1.bf16.msra.mxu0 %v6951
        %7689 = vmatprep.subr.bf16.mxu0 %v6957
        %7690 = vmatpush1.bf16.msra.mxu0 %v6956
        %7691 = vmatprep.subr.bf16.mxu0 %v6962
        %7692 = vmatpush1.bf16.msra.mxu0 %v6961
        %7693 = vmatprep.subr.bf16.mxu0 %v6967
        %7694 = vmatpush1.bf16.msra.mxu0 %v6966
        %7695 = vmatprep.subr.bf16.mxu0 %v6972
        %7696 = vmatpush1.bf16.msra.mxu0 %v6971
        %7697 = vmatprep.subr.bf16.mxu0 %v6977
        %7698 = vmatpush1.bf16.msra.mxu0 %v6976
        %7699 = vmatprep.subr.bf16.mxu0 %v6982
        %7700 = vmatpush1.bf16.msra.mxu0 %v6981
        %7701 = vmatprep.subr.bf16.mxu0 %v6987
        %7702 = vmatpush1.bf16.msra.mxu0 %v6986
        %7703 = vmatprep.subr.bf16.mxu0 %v6992
        %7704 = vmatpush1.bf16.msra.mxu0 %v6991
        %7705 = vmatprep.subr.bf16.mxu0 %v6997
        %7706 = vmatpush1.bf16.msra.mxu0 %v6996
        %7707 = vmatprep.subr.bf16.mxu0 %v7002
        %7708 = vmatpush1.bf16.msra.mxu0 %v7001
        %7709 = vmatprep.mubr.bf16.mxu0 %v6033
        %7710 = vmatmul.mubr.bf16.gmra.mrb[0].mxu0 %v6032
        %v7711 = vpop.f32.mrb[0].mxu0
        %v7712 = vadd.f32 %v6310, %v7711
        %v7713 = vpop.f32.mrb[0].mxu0
        %v7714 = vadd.f32 %v6314, %v7713
        %v7715 = vpop.f32.mrb[0].mxu0
        %v7716 = vadd.f32 %v6310, %v7715
        %v7717 = vpop.f32.mrb[0].mxu0
        %v7718 = vadd.f32 %v6314, %v7717
        %7719 = vmatprep.mubr.bf16.mxu0 %v6038
        %7720 = vmatmul.mubr.bf16.gmra.mrb[0].mxu0 %v6037
        %v7721 = vpop.f32.mrb[0].mxu0
        %v7722 = vadd.f32 %v6310, %v7721
        %v7723 = vpop.f32.mrb[0].mxu0
        %v7724 = vadd.f32 %v6314, %v7723
        %v7725 = vpop.f32.mrb[0].mxu0
        %v7726 = vadd.f32 %v6310, %v7725
        %v7727 = vpop.f32.mrb[0].mxu0
        %v7728 = vadd.f32 %v6314, %v7727
        %7729 = vmatprep.mubr.bf16.mxu0 %v6043
        %7730 = vmatmul.mubr.bf16.gmra.mrb[0].mxu0 %v6042
        %v7731 = vpop.f32.mrb[0].mxu0
        %v7732 = vadd.f32 %v6310, %v7731
        %v7733 = vpop.f32.mrb[0].mxu0
        %v7734 = vadd.f32 %v6314, %v7733
        %v7735 = vpop.f32.mrb[0].mxu0
        %v7736 = vadd.f32 %v6310, %v7735
        %v7737 = vpop.f32.mrb[0].mxu0
        %v7738 = vadd.f32 %v6314, %v7737
        %7739 = vmatprep.mubr.bf16.mxu0 %v6048
        %7740 = vmatmul.mubr.bf16.gmra.mrb[0].mxu0 %v6047
        %v7741 = vpop.f32.mrb[0].mxu0
        %v7742 = vadd.f32 %v6310, %v7741
        %v7743 = vpop.f32.mrb[0].mxu0
        %v7744 = vadd.f32 %v6314, %v7743
        %v7745 = vpop.f32.mrb[0].mxu0
        %v7746 = vadd.f32 %v6310, %v7745
        %v7747 = vpop.f32.mrb[0].mxu0
        %v7748 = vadd.f32 %v6314, %v7747
        %7749 = vmatprep.mubr.bf16.mxu0 %v6053
        %7750 = vmatmul.mubr.bf16.gmra.mrb[0].mxu0 %v6052
        %v7751 = vpop.f32.mrb[0].mxu0
        %v7752 = vadd.f32 %v6310, %v7751
        %v7753 = vpop.f32.mrb[0].mxu0
        %v7754 = vadd.f32 %v6314, %v7753
        %v7755 = vpop.f32.mrb[0].mxu0
        %v7756 = vadd.f32 %v6310, %v7755
        %v7757 = vpop.f32.mrb[0].mxu0
        %v7758 = vadd.f32 %v6314, %v7757
        %7759 = vmatprep.mubr.bf16.mxu0 %v6058
        %7760 = vmatmul.mubr.bf16.gmra.mrb[0].mxu0 %v6057
        %v7761 = vpop.f32.mrb[0].mxu0
        %v7762 = vadd.f32 %v6310, %v7761
        %v7763 = vpop.f32.mrb[0].mxu0
        %v7764 = vadd.f32 %v6314, %v7763
        %v7765 = vpop.f32.mrb[0].mxu0
        %v7766 = vadd.f32 %v6310, %v7765
        %v7767 = vpop.f32.mrb[0].mxu0
        %v7768 = vadd.f32 %v6314, %v7767
        %7769 = vmatprep.mubr.bf16.mxu0 %v6063
        %7770 = vmatmul.mubr.bf16.gmra.mrb[0].mxu0 %v6062
        %v7771 = vpop.f32.mrb[0].mxu0
        %v7772 = vadd.f32 %v6310, %v7771
        %v7773 = vpop.f32.mrb[0].mxu0
        %v7774 = vadd.f32 %v6314, %v7773
        %v7775 = vpop.f32.mrb[0].mxu0
        %v7776 = vadd.f32 %v6310, %v7775
        %v7777 = vpop.f32.mrb[0].mxu0
        %v7778 = vadd.f32 %v6314, %v7777
        %7779 = vmatprep.mubr.bf16.mxu0 %v6068
        %7780 = vmatmul.mubr.bf16.gmra.mrb[0].mxu0 %v6067
        %v7781 = vpop.f32.mrb[0].mxu0
        %v7782 = vadd.f32 %v6310, %v7781
        %v7783 = vpop.f32.mrb[0].mxu0
        %v7784 = vadd.f32 %v6314, %v7783
        %v7785 = vpop.f32.mrb[0].mxu0
        %v7786 = vadd.f32 %v6310, %v7785
        %v7787 = vpop.f32.mrb[0].mxu0
        %v7788 = vadd.f32 %v6314, %v7787
        %7789 = vdwg.mxu0
        %7790 = vmatprep.subr.bf16.mxu0 %v7007
        %7791 = vmatpush1.bf16.msra.mxu0 %v7006
        %7792 = vmatprep.subr.bf16.mxu0 %v7012
        %7793 = vmatpush1.bf16.msra.mxu0 %v7011
        %7794 = vmatprep.subr.bf16.mxu0 %v7017
        %7795 = vmatpush1.bf16.msra.mxu0 %v7016
        %7796 = vmatprep.subr.bf16.mxu0 %v7022
        %7797 = vmatpush1.bf16.msra.mxu0 %v7021
        %7798 = vmatprep.subr.bf16.mxu0 %v7027
        %7799 = vmatpush1.bf16.msra.mxu0 %v7026
        %7800 = vmatprep.subr.bf16.mxu0 %v7032
        %7801 = vmatpush1.bf16.msra.mxu0 %v7031
        %7802 = vmatprep.subr.bf16.mxu0 %v7037
        %7803 = vmatpush1.bf16.msra.mxu0 %v7036
        %7804 = vmatprep.subr.bf16.mxu0 %v7042
        %7805 = vmatpush1.bf16.msra.mxu0 %v7041
        %7806 = vmatprep.subr.bf16.mxu0 %v7047
        %7807 = vmatpush1.bf16.msra.mxu0 %v7046
        %7808 = vmatprep.subr.bf16.mxu0 %v7052
        %7809 = vmatpush1.bf16.msra.mxu0 %v7051
        %7810 = vmatprep.subr.bf16.mxu0 %v7057
        %7811 = vmatpush1.bf16.msra.mxu0 %v7056
        %7812 = vmatprep.subr.bf16.mxu0 %v7062
        %7813 = vmatpush1.bf16.msra.mxu0 %v7061
        %7814 = vmatprep.subr.bf16.mxu0 %v7067
        %7815 = vmatpush1.bf16.msra.mxu0 %v7066
        %7816 = vmatprep.subr.bf16.mxu0 %v7072
        %7817 = vmatpush1.bf16.msra.mxu0 %v7071
        %7818 = vmatprep.subr.bf16.mxu0 %v7077
        %7819 = vmatpush1.bf16.msra.mxu0 %v7076
        %7820 = vmatprep.subr.bf16.mxu0 %v7082
        %7821 = vmatpush1.bf16.msra.mxu0 %v7081
        %7822 = vmatprep.mubr.bf16.mxu0 %v6035
        %7823 = vmatmul.mubr.bf16.gmra.mrb[0].mxu0 %v6034
        %v7824 = vpop.f32.mrb[0].mxu0
        %v7825 = vadd.f32 %v7712, %v7824
        %v7826 = vpop.f32.mrb[0].mxu0
        %v7827 = vadd.f32 %v7714, %v7826
        %v7828 = vpop.f32.mrb[0].mxu0
        %v7829 = vadd.f32 %v7716, %v7828
        %v7830 = vpop.f32.mrb[0].mxu0
        %v7831 = vadd.f32 %v7718, %v7830
        %7832 = vmatprep.mubr.bf16.mxu0 %v6040
        %7833 = vmatmul.mubr.bf16.gmra.mrb[0].mxu0 %v6039
        %v7834 = vpop.f32.mrb[0].mxu0
        %v7835 = vadd.f32 %v7722, %v7834
        %v7836 = vpop.f32.mrb[0].mxu0
        %v7837 = vadd.f32 %v7724, %v7836
        %v7838 = vpop.f32.mrb[0].mxu0
        %v7839 = vadd.f32 %v7726, %v7838
        %v7840 = vpop.f32.mrb[0].mxu0
        %v7841 = vadd.f32 %v7728, %v7840
        %7842 = vmatprep.mubr.bf16.mxu0 %v6045
        %7843 = vmatmul.mubr.bf16.gmra.mrb[0].mxu0 %v6044
        %v7844 = vpop.f32.mrb[0].mxu0
        %v7845 = vadd.f32 %v7732, %v7844
        %v7846 = vpop.f32.mrb[0].mxu0
        %v7847 = vadd.f32 %v7734, %v7846
        %v7848 = vpop.f32.mrb[0].mxu0
        %v7849 = vadd.f32 %v7736, %v7848
        %v7850 = vpop.f32.mrb[0].mxu0
        %v7851 = vadd.f32 %v7738, %v7850
        %7852 = vmatprep.mubr.bf16.mxu0 %v6050
        %7853 = vmatmul.mubr.bf16.gmra.mrb[0].mxu0 %v6049
        %v7854 = vpop.f32.mrb[0].mxu0
        %v7855 = vadd.f32 %v7742, %v7854
        %v7856 = vpop.f32.mrb[0].mxu0
        %v7857 = vadd.f32 %v7744, %v7856
        %v7858 = vpop.f32.mrb[0].mxu0
        %v7859 = vadd.f32 %v7746, %v7858
        %v7860 = vpop.f32.mrb[0].mxu0
        %v7861 = vadd.f32 %v7748, %v7860
        %7862 = vmatprep.mubr.bf16.mxu0 %v6055
        %7863 = vmatmul.mubr.bf16.gmra.mrb[0].mxu0 %v6054
        %v7864 = vpop.f32.mrb[0].mxu0
        %v7865 = vadd.f32 %v7752, %v7864
        %v7866 = vpop.f32.mrb[0].mxu0
        %v7867 = vadd.f32 %v7754, %v7866
        %v7868 = vpop.f32.mrb[0].mxu0
        %v7869 = vadd.f32 %v7756, %v7868
        %v7870 = vpop.f32.mrb[0].mxu0
        %v7871 = vadd.f32 %v7758, %v7870
        %7872 = vmatprep.mubr.bf16.mxu0 %v6060
        %7873 = vmatmul.mubr.bf16.gmra.mrb[0].mxu0 %v6059
        %v7874 = vpop.f32.mrb[0].mxu0
        %v7875 = vadd.f32 %v7762, %v7874
        %v7876 = vpop.f32.mrb[0].mxu0
        %v7877 = vadd.f32 %v7764, %v7876
        %v7878 = vpop.f32.mrb[0].mxu0
        %v7879 = vadd.f32 %v7766, %v7878
        %v7880 = vpop.f32.mrb[0].mxu0
        %v7881 = vadd.f32 %v7768, %v7880
        %7882 = vmatprep.mubr.bf16.mxu0 %v6065
        %7883 = vmatmul.mubr.bf16.gmra.mrb[0].mxu0 %v6064
        %v7884 = vpop.f32.mrb[0].mxu0
        %v7885 = vadd.f32 %v7772, %v7884
        %v7886 = vpop.f32.mrb[0].mxu0
        %v7887 = vadd.f32 %v7774, %v7886
        %v7888 = vpop.f32.mrb[0].mxu0
        %v7889 = vadd.f32 %v7776, %v7888
        %v7890 = vpop.f32.mrb[0].mxu0
        %v7891 = vadd.f32 %v7778, %v7890
        %7892 = vmatprep.mubr.bf16.mxu0 %v6070
        %7893 = vmatmul.mubr.bf16.gmra.mrb[0].mxu0 %v6069
        %v7894 = vpop.f32.mrb[0].mxu0
        %v7895 = vadd.f32 %v7782, %v7894
        %v7896 = vpop.f32.mrb[0].mxu0
        %v7897 = vadd.f32 %v7784, %v7896
        %v7898 = vpop.f32.mrb[0].mxu0
        %v7899 = vadd.f32 %v7786, %v7898
        %v7900 = vpop.f32.mrb[0].mxu0
        %v7901 = vadd.f32 %v7788, %v7900
        %7902 = vdwg.mxu0
        %7903 = vmatprep.subr.bf16.mxu0 %v7087
        %7904 = vmatpush1.bf16.msra.mxu0 %v7086
        %7905 = vmatprep.subr.bf16.mxu0 %v7092
        %7906 = vmatpush1.bf16.msra.mxu0 %v7091
        %7907 = vmatprep.subr.bf16.mxu0 %v7097
        %7908 = vmatpush1.bf16.msra.mxu0 %v7096
        %7909 = vmatprep.subr.bf16.mxu0 %v7102
        %7910 = vmatpush1.bf16.msra.mxu0 %v7101
        %7911 = vmatprep.subr.bf16.mxu0 %v7107
        %7912 = vmatpush1.bf16.msra.mxu0 %v7106
        %7913 = vmatprep.subr.bf16.mxu0 %v7333
        %7914 = vmatpush1.bf16.msra.mxu0 %v7330
        %7915 = vmatprep.subr.bf16.mxu0 0
        %7916 = vmatpush1.bf16.msra.mxu0 0
        %7917 = vmatprep.subr.bf16.mxu0 0
        %7918 = vmatpush1.bf16.msra.mxu0 0
        %7919 = vmatprep.subr.bf16.mxu0 0
        %7920 = vmatpush1.bf16.msra.mxu0 0
        %7921 = vmatprep.subr.bf16.mxu0 0
        %7922 = vmatpush1.bf16.msra.mxu0 0
        %7923 = vmatprep.subr.bf16.mxu0 0
        %7924 = vmatpush1.bf16.msra.mxu0 0
        %7925 = vmatprep.subr.bf16.mxu0 0
        %7926 = vmatpush1.bf16.msra.mxu0 0
        %7927 = vmatprep.subr.bf16.mxu0 0
        %7928 = vmatpush1.bf16.msra.mxu0 0
        %7929 = vmatprep.subr.bf16.mxu0 0
        %7930 = vmatpush1.bf16.msra.mxu0 0
        %7931 = vmatprep.subr.bf16.mxu0 0
        %7932 = vmatpush1.bf16.msra.mxu0 0
        %7933 = vmatprep.subr.bf16.mxu0 0
        %7934 = vmatpush1.bf16.msra.mxu0 0
        %7935 = vmatprep.mubr.bf16.mxu0 0
        %7936 = vmatmul.mubr.bf16.gmra.mrb[0].mxu0 %v7300
        %v7937 = vpop.f32.mrb[0].mxu0
        %v7938 = vadd.f32 %v7825, %v7937
        %v7939 = vpop.f32.mrb[0].mxu0
        %v7940 = vadd.f32 %v7827, %v7939
        %v7941 = vpop.f32.mrb[0].mxu0
        %v7942 = vadd.f32 %v7829, %v7941
        %v7943 = vpop.f32.mrb[0].mxu0
        %v7944 = vadd.f32 %v7831, %v7943
        %7945 = vmatprep.mubr.bf16.mxu0 0
        %7946 = vmatmul.mubr.bf16.gmra.mrb[0].mxu0 %v7303
        %v7947 = vpop.f32.mrb[0].mxu0
        %v7948 = vadd.f32 %v7835, %v7947
        %v7949 = vpop.f32.mrb[0].mxu0
        %v7950 = vadd.f32 %v7837, %v7949
        %v7951 = vpop.f32.mrb[0].mxu0
        %v7952 = vadd.f32 %v7839, %v7951
        %v7953 = vpop.f32.mrb[0].mxu0
        %v7954 = vadd.f32 %v7841, %v7953
        %7955 = vmatprep.mubr.bf16.mxu0 0
        %7956 = vmatmul.mubr.bf16.gmra.mrb[0].mxu0 %v7306
        %v7957 = vpop.f32.mrb[0].mxu0
        %v7958 = vadd.f32 %v7845, %v7957
        %v7959 = vpop.f32.mrb[0].mxu0
        %v7960 = vadd.f32 %v7847, %v7959
        %v7961 = vpop.f32.mrb[0].mxu0
        %v7962 = vadd.f32 %v7849, %v7961
        %v7963 = vpop.f32.mrb[0].mxu0
        %v7964 = vadd.f32 %v7851, %v7963
        %7965 = vmatprep.mubr.bf16.mxu0 0
        %7966 = vmatmul.mubr.bf16.gmra.mrb[0].mxu0 %v7309
        %v7967 = vpop.f32.mrb[0].mxu0
        %v7968 = vadd.f32 %v7855, %v7967
        %v7969 = vpop.f32.mrb[0].mxu0
        %v7970 = vadd.f32 %v7857, %v7969
        %v7971 = vpop.f32.mrb[0].mxu0
        %v7972 = vadd.f32 %v7859, %v7971
        %v7973 = vpop.f32.mrb[0].mxu0
        %v7974 = vadd.f32 %v7861, %v7973
        %7975 = vmatprep.mubr.bf16.mxu0 0
        %7976 = vmatmul.mubr.bf16.gmra.mrb[0].mxu0 %v7312
        %v7977 = vpop.f32.mrb[0].mxu0
        %v7978 = vadd.f32 %v7865, %v7977
        %v7979 = vpop.f32.mrb[0].mxu0
        %v7980 = vadd.f32 %v7867, %v7979
        %v7981 = vpop.f32.mrb[0].mxu0
        %v7982 = vadd.f32 %v7869, %v7981
        %v7983 = vpop.f32.mrb[0].mxu0
        %v7984 = vadd.f32 %v7871, %v7983
        %7985 = vmatprep.mubr.bf16.mxu0 0
        %7986 = vmatmul.mubr.bf16.gmra.mrb[0].mxu0 %v7315
        %v7987 = vpop.f32.mrb[0].mxu0
        %v7988 = vadd.f32 %v7875, %v7987
        %v7989 = vpop.f32.mrb[0].mxu0
        %v7990 = vadd.f32 %v7877, %v7989
        %v7991 = vpop.f32.mrb[0].mxu0
        %v7992 = vadd.f32 %v7879, %v7991
        %v7993 = vpop.f32.mrb[0].mxu0
        %v7994 = vadd.f32 %v7881, %v7993
        %7995 = vmatprep.mubr.bf16.mxu0 0
        %7996 = vmatmul.mubr.bf16.gmra.mrb[0].mxu0 %v7318
        %v7997 = vpop.f32.mrb[0].mxu0
        %v7998 = vadd.f32 %v7885, %v7997
        %v7999 = vpop.f32.mrb[0].mxu0
        %v8000 = vadd.f32 %v7887, %v7999
        %v8001 = vpop.f32.mrb[0].mxu0
        %v8002 = vadd.f32 %v7889, %v8001
        %v8003 = vpop.f32.mrb[0].mxu0
        %v8004 = vadd.f32 %v7891, %v8003
        %8005 = vmatprep.mubr.bf16.mxu0 0
        %8006 = vmatmul.mubr.bf16.gmra.mrb[0].mxu0 %v7321
        %v8007 = vpop.f32.mrb[0].mxu0
        %v8008 = vadd.f32 %v7895, %v8007
        %v8009 = vpop.f32.mrb[0].mxu0
        %v8010 = vadd.f32 %v7897, %v8009
        %v8011 = vpop.f32.mrb[0].mxu0
        %v8012 = vadd.f32 %v7899, %v8011
        %v8013 = vpop.f32.mrb[0].mxu0
        %v8014 = vadd.f32 %v7901, %v8013
        %8015 = vdwg.mxu0
        %8016 = vmatprep.subr.bf16.mxu0 0
        %8017 = vmatpush1.bf16.msra.mxu0 %v6928
        %8018 = vmatprep.subr.bf16.mxu0 0
        %8019 = vmatpush1.bf16.msra.mxu0 %v6933
        %8020 = vmatprep.subr.bf16.mxu0 0
        %8021 = vmatpush1.bf16.msra.mxu0 %v6938
        %8022 = vmatprep.subr.bf16.mxu0 0
        %8023 = vmatpush1.bf16.msra.mxu0 %v6943
        %8024 = vmatprep.subr.bf16.mxu0 0
        %8025 = vmatpush1.bf16.msra.mxu0 %v6948
        %8026 = vmatprep.subr.bf16.mxu0 0
        %8027 = vmatpush1.bf16.msra.mxu0 %v6953
        %8028 = vmatprep.subr.bf16.mxu0 0
        %8029 = vmatpush1.bf16.msra.mxu0 %v6958
        %8030 = vmatprep.subr.bf16.mxu0 0
        %8031 = vmatpush1.bf16.msra.mxu0 %v6963
        %8032 = vmatprep.subr.bf16.mxu0 0
        %8033 = vmatpush1.bf16.msra.mxu0 %v6968
        %8034 = vmatprep.subr.bf16.mxu0 0
        %8035 = vmatpush1.bf16.msra.mxu0 %v6973
        %8036 = vmatprep.subr.bf16.mxu0 0
        %8037 = vmatpush1.bf16.msra.mxu0 %v6978
        %8038 = vmatprep.subr.bf16.mxu0 0
        %8039 = vmatpush1.bf16.msra.mxu0 %v6983
        %8040 = vmatprep.subr.bf16.mxu0 0
        %8041 = vmatpush1.bf16.msra.mxu0 %v6988
        %8042 = vmatprep.subr.bf16.mxu0 0
        %8043 = vmatpush1.bf16.msra.mxu0 %v6993
        %8044 = vmatprep.subr.bf16.mxu0 0
        %8045 = vmatpush1.bf16.msra.mxu0 %v6998
        %8046 = vmatprep.subr.bf16.mxu0 0
        %8047 = vmatpush1.bf16.msra.mxu0 %v7003
        %8048 = vmatprep.mubr.bf16.mxu0 %v6033
        %8049 = vmatmul.mubr.bf16.gmra.mrb[0].mxu0 %v6032
        %v8050 = vpop.f32.mrb[0].mxu0
        %v8051 = vadd.f32 %v6318, %v8050
        %v8052 = vpop.f32.mrb[0].mxu0
        %v8053 = vpop.f32.mrb[0].mxu0
        %v8054 = vadd.f32 %v6318, %v8053
        %v8055 = vpop.f32.mrb[0].mxu0
        %8056 = vmatprep.mubr.bf16.mxu0 %v6038
        %8057 = vmatmul.mubr.bf16.gmra.mrb[0].mxu0 %v6037
        %v8058 = vpop.f32.mrb[0].mxu0
        %v8059 = vadd.f32 %v6318, %v8058
        %v8060 = vpop.f32.mrb[0].mxu0
        %v8061 = vpop.f32.mrb[0].mxu0
        %v8062 = vadd.f32 %v6318, %v8061
        %v8063 = vpop.f32.mrb[0].mxu0
        %8064 = vmatprep.mubr.bf16.mxu0 %v6043
        %8065 = vmatmul.mubr.bf16.gmra.mrb[0].mxu0 %v6042
        %v8066 = vpop.f32.mrb[0].mxu0
        %v8067 = vadd.f32 %v6318, %v8066
        %v8068 = vpop.f32.mrb[0].mxu0
        %v8069 = vpop.f32.mrb[0].mxu0
        %v8070 = vadd.f32 %v6318, %v8069
        %v8071 = vpop.f32.mrb[0].mxu0
        %8072 = vmatprep.mubr.bf16.mxu0 %v6048
        %8073 = vmatmul.mubr.bf16.gmra.mrb[0].mxu0 %v6047
        %v8074 = vpop.f32.mrb[0].mxu0
        %v8075 = vadd.f32 %v6318, %v8074
        %v8076 = vpop.f32.mrb[0].mxu0
        %v8077 = vpop.f32.mrb[0].mxu0
        %v8078 = vadd.f32 %v6318, %v8077
        %v8079 = vpop.f32.mrb[0].mxu0
        %8080 = vmatprep.mubr.bf16.mxu0 %v6053
        %8081 = vmatmul.mubr.bf16.gmra.mrb[0].mxu0 %v6052
        %v8082 = vpop.f32.mrb[0].mxu0
        %v8083 = vadd.f32 %v6318, %v8082
        %v8084 = vpop.f32.mrb[0].mxu0
        %v8085 = vpop.f32.mrb[0].mxu0
        %v8086 = vadd.f32 %v6318, %v8085
        %v8087 = vpop.f32.mrb[0].mxu0
        %8088 = vmatprep.mubr.bf16.mxu0 %v6058
        %8089 = vmatmul.mubr.bf16.gmra.mrb[0].mxu0 %v6057
        %v8090 = vpop.f32.mrb[0].mxu0
        %v8091 = vadd.f32 %v6318, %v8090
        %v8092 = vpop.f32.mrb[0].mxu0
        %v8093 = vpop.f32.mrb[0].mxu0
        %v8094 = vadd.f32 %v6318, %v8093
        %v8095 = vpop.f32.mrb[0].mxu0
        %8096 = vmatprep.mubr.bf16.mxu0 %v6063
        %8097 = vmatmul.mubr.bf16.gmra.mrb[0].mxu0 %v6062
        %v8098 = vpop.f32.mrb[0].mxu0
        %v8099 = vadd.f32 %v6318, %v8098
        %v8100 = vpop.f32.mrb[0].mxu0
        %v8101 = vpop.f32.mrb[0].mxu0
        %v8102 = vadd.f32 %v6318, %v8101
        %v8103 = vpop.f32.mrb[0].mxu0
        %8104 = vmatprep.mubr.bf16.mxu0 %v6068
        %8105 = vmatmul.mubr.bf16.gmra.mrb[0].mxu0 %v6067
        %v8106 = vpop.f32.mrb[0].mxu0
        %v8107 = vadd.f32 %v6318, %v8106
        %v8108 = vpop.f32.mrb[0].mxu0
        %v8109 = vpop.f32.mrb[0].mxu0
        %v8110 = vadd.f32 %v6318, %v8109
        %v8111 = vpop.f32.mrb[0].mxu0
        %8112 = vdwg.mxu0
        %8113 = vmatprep.subr.bf16.mxu0 0
        %8114 = vmatpush1.bf16.msra.mxu0 %v7008
        %8115 = vmatprep.subr.bf16.mxu0 0
        %8116 = vmatpush1.bf16.msra.mxu0 %v7013
        %8117 = vmatprep.subr.bf16.mxu0 0
        %8118 = vmatpush1.bf16.msra.mxu0 %v7018
        %8119 = vmatprep.subr.bf16.mxu0 0
        %8120 = vmatpush1.bf16.msra.mxu0 %v7023
        %8121 = vmatprep.subr.bf16.mxu0 0
        %8122 = vmatpush1.bf16.msra.mxu0 %v7028
        %8123 = vmatprep.subr.bf16.mxu0 0
        %8124 = vmatpush1.bf16.msra.mxu0 %v7033
        %8125 = vmatprep.subr.bf16.mxu0 0
        %8126 = vmatpush1.bf16.msra.mxu0 %v7038
        %8127 = vmatprep.subr.bf16.mxu0 0
        %8128 = vmatpush1.bf16.msra.mxu0 %v7043
        %8129 = vmatprep.subr.bf16.mxu0 0
        %8130 = vmatpush1.bf16.msra.mxu0 %v7048
        %8131 = vmatprep.subr.bf16.mxu0 0
        %8132 = vmatpush1.bf16.msra.mxu0 %v7053
        %8133 = vmatprep.subr.bf16.mxu0 0
        %8134 = vmatpush1.bf16.msra.mxu0 %v7058
        %8135 = vmatprep.subr.bf16.mxu0 0
        %8136 = vmatpush1.bf16.msra.mxu0 %v7063
        %8137 = vmatprep.subr.bf16.mxu0 0
        %8138 = vmatpush1.bf16.msra.mxu0 %v7068
        %8139 = vmatprep.subr.bf16.mxu0 0
        %8140 = vmatpush1.bf16.msra.mxu0 %v7073
        %8141 = vmatprep.subr.bf16.mxu0 0
        %8142 = vmatpush1.bf16.msra.mxu0 %v7078
        %8143 = vmatprep.subr.bf16.mxu0 0
        %8144 = vmatpush1.bf16.msra.mxu0 %v7083
        %8145 = vmatprep.mubr.bf16.mxu0 %v6035
        %8146 = vmatmul.mubr.bf16.gmra.mrb[0].mxu0 %v6034
        %v8147 = vpop.f32.mrb[0].mxu0
        %v8148 = vadd.f32 %v8051, %v8147
        %v8149 = vpop.f32.mrb[0].mxu0
        %v8150 = vpop.f32.mrb[0].mxu0
        %v8151 = vadd.f32 %v8054, %v8150
        %v8152 = vpop.f32.mrb[0].mxu0
        %8153 = vmatprep.mubr.bf16.mxu0 %v6040
        %8154 = vmatmul.mubr.bf16.gmra.mrb[0].mxu0 %v6039
        %v8155 = vpop.f32.mrb[0].mxu0
        %v8156 = vadd.f32 %v8059, %v8155
        %v8157 = vpop.f32.mrb[0].mxu0
        %v8158 = vpop.f32.mrb[0].mxu0
        %v8159 = vadd.f32 %v8062, %v8158
        %v8160 = vpop.f32.mrb[0].mxu0
        %8161 = vmatprep.mubr.bf16.mxu0 %v6045
        %8162 = vmatmul.mubr.bf16.gmra.mrb[0].mxu0 %v6044
        %v8163 = vpop.f32.mrb[0].mxu0
        %v8164 = vadd.f32 %v8067, %v8163
        %v8165 = vpop.f32.mrb[0].mxu0
        %v8166 = vpop.f32.mrb[0].mxu0
        %v8167 = vadd.f32 %v8070, %v8166
        %v8168 = vpop.f32.mrb[0].mxu0
        %8169 = vmatprep.mubr.bf16.mxu0 %v6050
        %8170 = vmatmul.mubr.bf16.gmra.mrb[0].mxu0 %v6049
        %v8171 = vpop.f32.mrb[0].mxu0
        %v8172 = vadd.f32 %v8075, %v8171
        %v8173 = vpop.f32.mrb[0].mxu0
        %v8174 = vpop.f32.mrb[0].mxu0
        %v8175 = vadd.f32 %v8078, %v8174
        %v8176 = vpop.f32.mrb[0].mxu0
        %8177 = vmatprep.mubr.bf16.mxu0 %v6055
        %8178 = vmatmul.mubr.bf16.gmra.mrb[0].mxu0 %v6054
        %v8179 = vpop.f32.mrb[0].mxu0
        %v8180 = vadd.f32 %v8083, %v8179
        %v8181 = vpop.f32.mrb[0].mxu0
        %v8182 = vpop.f32.mrb[0].mxu0
        %v8183 = vadd.f32 %v8086, %v8182
        %v8184 = vpop.f32.mrb[0].mxu0
        %8185 = vmatprep.mubr.bf16.mxu0 %v6060
        %8186 = vmatmul.mubr.bf16.gmra.mrb[0].mxu0 %v6059
        %v8187 = vpop.f32.mrb[0].mxu0
        %v8188 = vadd.f32 %v8091, %v8187
        %v8189 = vpop.f32.mrb[0].mxu0
        %v8190 = vpop.f32.mrb[0].mxu0
        %v8191 = vadd.f32 %v8094, %v8190
        %v8192 = vpop.f32.mrb[0].mxu0
        %8193 = vmatprep.mubr.bf16.mxu0 %v6065
        %8194 = vmatmul.mubr.bf16.gmra.mrb[0].mxu0 %v6064
        %v8195 = vpop.f32.mrb[0].mxu0
        %v8196 = vadd.f32 %v8099, %v8195
        %v8197 = vpop.f32.mrb[0].mxu0
        %v8198 = vpop.f32.mrb[0].mxu0
        %v8199 = vadd.f32 %v8102, %v8198
        %v8200 = vpop.f32.mrb[0].mxu0
        %8201 = vmatprep.mubr.bf16.mxu0 %v6070
        %8202 = vmatmul.mubr.bf16.gmra.mrb[0].mxu0 %v6069
        %v8203 = vpop.f32.mrb[0].mxu0
        %v8204 = vadd.f32 %v8107, %v8203
        %v8205 = vpop.f32.mrb[0].mxu0
        %v8206 = vpop.f32.mrb[0].mxu0
        %v8207 = vadd.f32 %v8110, %v8206
        %v8208 = vpop.f32.mrb[0].mxu0
        %8209 = vdwg.mxu0
        %8210 = vmatprep.subr.bf16.mxu0 0
        %8211 = vmatpush1.bf16.msra.mxu0 %v7088
        %8212 = vmatprep.subr.bf16.mxu0 0
        %8213 = vmatpush1.bf16.msra.mxu0 %v7093
        %8214 = vmatprep.subr.bf16.mxu0 0
        %8215 = vmatpush1.bf16.msra.mxu0 %v7098
        %8216 = vmatprep.subr.bf16.mxu0 0
        %8217 = vmatpush1.bf16.msra.mxu0 %v7103
        %8218 = vmatprep.subr.bf16.mxu0 0
        %8219 = vmatpush1.bf16.msra.mxu0 %v7108
        %8220 = vmatprep.subr.bf16.mxu0 0
        %8221 = vmatpush1.bf16.msra.mxu0 %v7336
        %8222 = vmatprep.subr.bf16.mxu0 0
        %8223 = vmatpush1.bf16.msra.mxu0 0
        %8224 = vmatprep.subr.bf16.mxu0 0
        %8225 = vmatpush1.bf16.msra.mxu0 0
        %8226 = vmatprep.subr.bf16.mxu0 0
        %8227 = vmatpush1.bf16.msra.mxu0 0
        %8228 = vmatprep.subr.bf16.mxu0 0
        %8229 = vmatpush1.bf16.msra.mxu0 0
        %8230 = vmatprep.subr.bf16.mxu0 0
        %8231 = vmatpush1.bf16.msra.mxu0 0
        %8232 = vmatprep.subr.bf16.mxu0 0
        %8233 = vmatpush1.bf16.msra.mxu0 0
        %8234 = vmatprep.subr.bf16.mxu0 0
        %8235 = vmatpush1.bf16.msra.mxu0 0
        %8236 = vmatprep.subr.bf16.mxu0 0
        %8237 = vmatpush1.bf16.msra.mxu0 0
        %8238 = vmatprep.subr.bf16.mxu0 0
        %8239 = vmatpush1.bf16.msra.mxu0 0
        %8240 = vmatprep.subr.bf16.mxu0 0
        %8241 = vmatpush1.bf16.msra.mxu0 0
        %8242 = vmatprep.mubr.bf16.mxu0 0
        %8243 = vmatmul.mubr.bf16.gmra.mrb[0].mxu0 %v7300
        %v8244 = vpop.f32.mrb[0].mxu0
        %v8245 = vadd.f32 %v8148, %v8244
        %v8246 = vpop.f32.mrb[0].mxu0
        %v8247 = vpop.f32.mrb[0].mxu0
        %v8248 = vadd.f32 %v8151, %v8247
        %v8249 = vpop.f32.mrb[0].mxu0
        %8250 = vmatprep.mubr.bf16.mxu0 0
        %8251 = vmatmul.mubr.bf16.gmra.mrb[0].mxu0 %v7303
        %v8252 = vpop.f32.mrb[0].mxu0
        %v8253 = vadd.f32 %v8156, %v8252
        %v8254 = vpop.f32.mrb[0].mxu0
        %v8255 = vpop.f32.mrb[0].mxu0
        %v8256 = vadd.f32 %v8159, %v8255
        %v8257 = vpop.f32.mrb[0].mxu0
        %8258 = vmatprep.mubr.bf16.mxu0 0
        %8259 = vmatmul.mubr.bf16.gmra.mrb[0].mxu0 %v7306
        %v8260 = vpop.f32.mrb[0].mxu0
        %v8261 = vadd.f32 %v8164, %v8260
        %v8262 = vpop.f32.mrb[0].mxu0
        %v8263 = vpop.f32.mrb[0].mxu0
        %v8264 = vadd.f32 %v8167, %v8263
        %v8265 = vpop.f32.mrb[0].mxu0
        %8266 = vmatprep.mubr.bf16.mxu0 0
        %8267 = vmatmul.mubr.bf16.gmra.mrb[0].mxu0 %v7309
        %v8268 = vpop.f32.mrb[0].mxu0
        %v8269 = vadd.f32 %v8172, %v8268
        %v8270 = vpop.f32.mrb[0].mxu0
        %v8271 = vpop.f32.mrb[0].mxu0
        %v8272 = vadd.f32 %v8175, %v8271
        %v8273 = vpop.f32.mrb[0].mxu0
        %8274 = vmatprep.mubr.bf16.mxu0 0
        %8275 = vmatmul.mubr.bf16.gmra.mrb[0].mxu0 %v7312
        %v8276 = vpop.f32.mrb[0].mxu0
        %v8277 = vadd.f32 %v8180, %v8276
        %v8278 = vpop.f32.mrb[0].mxu0
        %v8279 = vpop.f32.mrb[0].mxu0
        %v8280 = vadd.f32 %v8183, %v8279
        %v8281 = vpop.f32.mrb[0].mxu0
        %8282 = vmatprep.mubr.bf16.mxu0 0
        %8283 = vmatmul.mubr.bf16.gmra.mrb[0].mxu0 %v7315
        %v8284 = vpop.f32.mrb[0].mxu0
        %v8285 = vadd.f32 %v8188, %v8284
        %v8286 = vpop.f32.mrb[0].mxu0
        %v8287 = vpop.f32.mrb[0].mxu0
        %v8288 = vadd.f32 %v8191, %v8287
        %v8289 = vpop.f32.mrb[0].mxu0
        %8290 = vmatprep.mubr.bf16.mxu0 0
        %8291 = vmatmul.mubr.bf16.gmra.mrb[0].mxu0 %v7318
        %v8292 = vpop.f32.mrb[0].mxu0
        %v8293 = vadd.f32 %v8196, %v8292
        %v8294 = vpop.f32.mrb[0].mxu0
        %v8295 = vpop.f32.mrb[0].mxu0
        %v8296 = vadd.f32 %v8199, %v8295
        %v8297 = vpop.f32.mrb[0].mxu0
        %8298 = vmatprep.mubr.bf16.mxu0 0
        %8299 = vmatmul.mubr.bf16.gmra.mrb[0].mxu0 %v7321
        %v8300 = vpop.f32.mrb[0].mxu0
        %v8301 = vadd.f32 %v8204, %v8300
        %v8302 = vpop.f32.mrb[0].mxu0
        %v8303 = vpop.f32.mrb[0].mxu0
        %v8304 = vadd.f32 %v8207, %v8303
        %v8305 = vpop.f32.mrb[0].mxu0
        %8306 = vdwg.mxu0
        %v8307 = vmul.f32 %v7599, 0.01
        %v8308 = vmul.f32 %v7601, 0.01
        %v8309 = vmul.f32 %v7938, 0.01
        %v8310 = vmul.f32 %v7940, 0.01
        %v8311 = vmul.f32 %v8245, 0.01
        %v8312 = vmul.f32 %v7603, 0.01
        %v8313 = vmul.f32 %v7605, 0.01
        %v8314 = vmul.f32 %v7942, 0.01
        %v8315 = vmul.f32 %v7944, 0.01
        %v8316 = vmul.f32 %v8248, 0.01
        %v8317 = vmul.f32 %v7609, 0.01
        %v8318 = vmul.f32 %v7611, 0.01
        %v8319 = vmul.f32 %v7948, 0.01
        %v8320 = vmul.f32 %v7950, 0.01
        %v8321 = vmul.f32 %v8253, 0.01
        %v8322 = vmul.f32 %v7613, 0.01
        %v8323 = vmul.f32 %v7615, 0.01
        %v8324 = vmul.f32 %v7952, 0.01
        %v8325 = vmul.f32 %v7954, 0.01
        %v8326 = vmul.f32 %v8256, 0.01
        %v8327 = vmul.f32 %v7619, 0.01
        %v8328 = vmul.f32 %v7621, 0.01
        %v8329 = vmul.f32 %v7958, 0.01
        %v8330 = vmul.f32 %v7960, 0.01
        %v8331 = vmul.f32 %v8261, 0.01
        %v8332 = vmul.f32 %v7623, 0.01
        %v8333 = vmul.f32 %v7625, 0.01
        %v8334 = vmul.f32 %v7962, 0.01
        %v8335 = vmul.f32 %v7964, 0.01
        %v8336 = vmul.f32 %v8264, 0.01
        %v8337 = vmul.f32 %v7629, 0.01
        %v8338 = vmul.f32 %v7631, 0.01
        %v8339 = vmul.f32 %v7968, 0.01
        %v8340 = vmul.f32 %v7970, 0.01
        %v8341 = vmul.f32 %v8269, 0.01
        %v8342 = vmul.f32 %v7633, 0.01
        %v8343 = vmul.f32 %v7635, 0.01
        %v8344 = vmul.f32 %v7972, 0.01
        %v8345 = vmul.f32 %v7974, 0.01
        %v8346 = vmul.f32 %v8272, 0.01
        %v8347 = vmul.f32 %v7639, 0.01
        %v8348 = vmul.f32 %v7641, 0.01
        %v8349 = vmul.f32 %v7978, 0.01
        %v8350 = vmul.f32 %v7980, 0.01
        %v8351 = vmul.f32 %v8277, 0.01
        %v8352 = vmul.f32 %v7643, 0.01
        %v8353 = vmul.f32 %v7645, 0.01
        %v8354 = vmul.f32 %v7982, 0.01
        %v8355 = vmul.f32 %v7984, 0.01
        %v8356 = vmul.f32 %v8280, 0.01
        %v8357 = vmul.f32 %v7649, 0.01
        %v8358 = vmul.f32 %v7651, 0.01
        %v8359 = vmul.f32 %v7988, 0.01
        %v8360 = vmul.f32 %v7990, 0.01
        %v8361 = vmul.f32 %v8285, 0.01
        %v8362 = vmul.f32 %v7653, 0.01
        %v8363 = vmul.f32 %v7655, 0.01
        %v8364 = vmul.f32 %v7992, 0.01
        %v8365 = vmul.f32 %v7994, 0.01
        %v8366 = vmul.f32 %v8288, 0.01
        %v8367 = vmul.f32 %v7659, 0.01
        %v8368 = vmul.f32 %v7661, 0.01
        %v8369 = vmul.f32 %v7998, 0.01
        %v8370 = vmul.f32 %v8000, 0.01
        %v8371 = vmul.f32 %v8293, 0.01
        %v8372 = vmul.f32 %v7663, 0.01
        %v8373 = vmul.f32 %v7665, 0.01
        %v8374 = vmul.f32 %v8002, 0.01
        %v8375 = vmul.f32 %v8004, 0.01
        %v8376 = vmul.f32 %v8296, 0.01
        %v8377 = vmul.f32 %v7669, 0.01
        %v8378 = vmul.f32 %v7671, 0.01
        %v8379 = vmul.f32 %v8008, 0.01
        %v8380 = vmul.f32 %v8010, 0.01
        %v8381 = vmul.f32 %v8301, 0.01
        %v8382 = vmul.f32 %v7673, 0.01
        %v8383 = vmul.f32 %v7675, 0.01
        %v8384 = vmul.f32 %v8012, 0.01
        %v8385 = vmul.f32 %v8014, 0.01
        %v8386 = vmul.f32 %v8304, 0.01
        %v8387 = vmax.f32 %v7599, %v8307
        %v8388 = vmax.f32 %v7601, %v8308
        %v8389 = vmax.f32 %v7938, %v8309
        %v8390 = vmax.f32 %v7940, %v8310
        %v8391 = vmax.f32 %v8245, %v8311
        %v8392 = vmax.f32 %v7603, %v8312
        %v8393 = vmax.f32 %v7605, %v8313
        %v8394 = vmax.f32 %v7942, %v8314
        %v8395 = vmax.f32 %v7944, %v8315
        %v8396 = vmax.f32 %v8248, %v8316
        %v8397 = vmax.f32 %v7609, %v8317
        %v8398 = vmax.f32 %v7611, %v8318
        %v8399 = vmax.f32 %v7948, %v8319
        %v8400 = vmax.f32 %v7950, %v8320
        %v8401 = vmax.f32 %v8253, %v8321
        %v8402 = vmax.f32 %v7613, %v8322
        %v8403 = vmax.f32 %v7615, %v8323
        %v8404 = vmax.f32 %v7952, %v8324
        %v8405 = vmax.f32 %v7954, %v8325
        %v8406 = vmax.f32 %v8256, %v8326
        %v8407 = vmax.f32 %v7619, %v8327
        %v8408 = vmax.f32 %v7621, %v8328
        %v8409 = vmax.f32 %v7958, %v8329
        %v8410 = vmax.f32 %v7960, %v8330
        %v8411 = vmax.f32 %v8261, %v8331
        %v8412 = vmax.f32 %v7623, %v8332
        %v8413 = vmax.f32 %v7625, %v8333
        %v8414 = vmax.f32 %v7962, %v8334
        %v8415 = vmax.f32 %v7964, %v8335
        %v8416 = vmax.f32 %v8264, %v8336
        %v8417 = vmax.f32 %v7629, %v8337
        %v8418 = vmax.f32 %v7631, %v8338
        %v8419 = vmax.f32 %v7968, %v8339
        %v8420 = vmax.f32 %v7970, %v8340
        %v8421 = vmax.f32 %v8269, %v8341
        %v8422 = vmax.f32 %v7633, %v8342
        %v8423 = vmax.f32 %v7635, %v8343
        %v8424 = vmax.f32 %v7972, %v8344
        %v8425 = vmax.f32 %v7974, %v8345
        %v8426 = vmax.f32 %v8272, %v8346
        %v8427 = vmax.f32 %v7639, %v8347
        %v8428 = vmax.f32 %v7641, %v8348
        %v8429 = vmax.f32 %v7978, %v8349
        %v8430 = vmax.f32 %v7980, %v8350
        %v8431 = vmax.f32 %v8277, %v8351
        %v8432 = vmax.f32 %v7643, %v8352
        %v8433 = vmax.f32 %v7645, %v8353
        %v8434 = vmax.f32 %v7982, %v8354
        %v8435 = vmax.f32 %v7984, %v8355
        %v8436 = vmax.f32 %v8280, %v8356
        %v8437 = vmax.f32 %v7649, %v8357
        %v8438 = vmax.f32 %v7651, %v8358
        %v8439 = vmax.f32 %v7988, %v8359
        %v8440 = vmax.f32 %v7990, %v8360
        %v8441 = vmax.f32 %v8285, %v8361
        %v8442 = vmax.f32 %v7653, %v8362
        %v8443 = vmax.f32 %v7655, %v8363
        %v8444 = vmax.f32 %v7992, %v8364
        %v8445 = vmax.f32 %v7994, %v8365
        %v8446 = vmax.f32 %v8288, %v8366
        %v8447 = vmax.f32 %v7659, %v8367
        %v8448 = vmax.f32 %v7661, %v8368
        %v8449 = vmax.f32 %v7998, %v8369
        %v8450 = vmax.f32 %v8000, %v8370
        %v8451 = vmax.f32 %v8293, %v8371
        %v8452 = vmax.f32 %v7663, %v8372
        %v8453 = vmax.f32 %v7665, %v8373
        %v8454 = vmax.f32 %v8002, %v8374
        %v8455 = vmax.f32 %v8004, %v8375
        %v8456 = vmax.f32 %v8296, %v8376
        %v8457 = vmax.f32 %v7669, %v8377
        %v8458 = vmax.f32 %v7671, %v8378
        %v8459 = vmax.f32 %v8008, %v8379
        %v8460 = vmax.f32 %v8010, %v8380
        %v8461 = vmax.f32 %v8301, %v8381
        %v8462 = vmax.f32 %v7673, %v8382
        %v8463 = vmax.f32 %v7675, %v8383
        %v8464 = vmax.f32 %v8012, %v8384
        %v8465 = vmax.f32 %v8014, %v8385
        %v8466 = vmax.f32 %v8304, %v8386
        %v8467 = vpack.c.bf16 %v8392, %v8387
        %v8468 = vpack.c.bf16 %v8393, %v8388
        %v8469 = vpack.c.bf16 %v8394, %v8389
        %v8470 = vpack.c.bf16 %v8395, %v8390
        %v8471 = vpack.c.bf16 %v8396, %v8391
        %v8472 = vpack.c.bf16 %v8402, %v8397
        %v8473 = vpack.c.bf16 %v8403, %v8398
        %v8474 = vpack.c.bf16 %v8404, %v8399
        %v8475 = vpack.c.bf16 %v8405, %v8400
        %v8476 = vpack.c.bf16 %v8406, %v8401
        %v8477 = vpack.c.bf16 %v8412, %v8407
        %v8478 = vpack.c.bf16 %v8413, %v8408
        %v8479 = vpack.c.bf16 %v8414, %v8409
        %v8480 = vpack.c.bf16 %v8415, %v8410
        %v8481 = vpack.c.bf16 %v8416, %v8411
        %v8482 = vpack.c.bf16 %v8422, %v8417
        %v8483 = vpack.c.bf16 %v8423, %v8418
        %v8484 = vpack.c.bf16 %v8424, %v8419
        %v8485 = vpack.c.bf16 %v8425, %v8420
        %v8486 = vpack.c.bf16 %v8426, %v8421
        %v8487 = vpack.c.bf16 %v8432, %v8427
        %v8488 = vpack.c.bf16 %v8433, %v8428
        %v8489 = vpack.c.bf16 %v8434, %v8429
        %v8490 = vpack.c.bf16 %v8435, %v8430
        %v8491 = vpack.c.bf16 %v8436, %v8431
        %v8492 = vpack.c.bf16 %v8442, %v8437
        %v8493 = vpack.c.bf16 %v8443, %v8438
        %v8494 = vpack.c.bf16 %v8444, %v8439
        %v8495 = vpack.c.bf16 %v8445, %v8440
        %v8496 = vpack.c.bf16 %v8446, %v8441
        %v8497 = vpack.c.bf16 %v8452, %v8447
        %v8498 = vpack.c.bf16 %v8453, %v8448
        %v8499 = vpack.c.bf16 %v8454, %v8449
        %v8500 = vpack.c.bf16 %v8455, %v8450
        %v8501 = vpack.c.bf16 %v8456, %v8451
        %v8502 = vpack.c.bf16 %v8462, %v8457
        %v8503 = vpack.c.bf16 %v8463, %v8458
        %v8504 = vpack.c.bf16 %v8464, %v8459
        %v8505 = vpack.c.bf16 %v8465, %v8460
        %v8506 = vpack.c.bf16 %v8466, %v8461
        %v8507 = vld [vmem:[%s7] sm:$0xf]
        %v8508 = vld [vmem:[%s7 + $0x4] sm:$0xf]
        %v8509 = vld [vmem:[%s7 + $0x8] sm:$0xf]
        %v8510 = vld [vmem:[%s7 + $0xc] sm:$0xf]
        %v8511 = vld [vmem:[%s7 + $0x10] sm:$0xf]
        %v8512 = vld [vmem:[%s7 + $0x14] sm:$0xf]
        %v8513 = vld [vmem:[%s7 + $0x18] sm:$0xf]
        %v8514 = vld [vmem:[%s7 + $0x1c] sm:$0xf]
        %v8515 = vld [vmem:[%s7 + $0x20] sm:$0xf]
        %v8516 = vld [vmem:[%s7 + $0x24] sm:$0xf]
        %v8517 = vld [vmem:[%s7 + $0x28] sm:$0xf]
        %v8518 = vld [vmem:[%s7 + $0x2c] sm:$0xf]
        %v8519 = vld [vmem:[%s7 + $0x30] sm:$0xf]
        %v8520 = vld [vmem:[%s7 + $0x34] sm:$0xf]
        %v8521 = vld [vmem:[%s7 + $0x38] sm:$0xf]
        %v8522 = vld [vmem:[%s7 + $0x3c] sm:$0xf]
        %v8523 = vld [vmem:[%s7 + $0x40] sm:$0xf]
        %v8524 = vld [vmem:[%s7 + $0x44] sm:$0xf]
        %v8525 = vld [vmem:[%s7 + $0x48] sm:$0xf]
        %v8526 = vld [vmem:[%s7 + $0x4c] sm:$0xf]
        %v8527 = vld [vmem:[%s7 + $0x50] sm:$0xf]
        %v8528 = vld [vmem:[%s7 + $0x54] sm:$0xf]
        %v8529 = vld [vmem:[%s7 + $0x58] sm:$0xf]
        %v8530 = vld [vmem:[%s7 + $0x5c] sm:$0xf]
        %v8531 = vld [vmem:[%s7 + $0x60] sm:$0xf]
        %v8532 = vld [vmem:[%s7 + $0x64] sm:$0xf]
        %v8533 = vld [vmem:[%s7 + $0x68] sm:$0xf]
        %v8534 = vld [vmem:[%s7 + $0x6c] sm:$0xf]
        %v8535 = vld [vmem:[%s7 + $0x70] sm:$0xf]
        %v8536 = vld [vmem:[%s7 + $0x74] sm:$0xf]
        %v8537 = vld [vmem:[%s7 + $0x78] sm:$0xf]
        %v8538 = vld [vmem:[%s7 + $0x7c] sm:$0xf]
        %v8539 = vld [vmem:[%s7 + $0x80] sm:$0xf]
        %v8540 = vld [vmem:[%s7 + $0x84] sm:$0xf]
        %v8541 = vld [vmem:[%s7 + $0x88] sm:$0xf]
        %v8542 = vld [vmem:[%s7 + $0x8c] sm:$0xf]
        %v8543 = vld [vmem:[%s7 + $0x90] sm:$0xf]
        %v8544 = vld [vmem:[%s7 + $0x94] sm:$0xf]
        %v8545 = vld [vmem:[%s7 + $0x98] sm:$0xf]
        %v8546 = vld [vmem:[%s7 + $0x9c] sm:$0xf]
        %v8547 = vld [vmem:[%s7 + $0xa0] sm:$0xf]
        %v8548 = vld [vmem:[%s7 + $0xa4] sm:$0xf]
        %v8549 = vld [vmem:[%s7 + $0xa8] sm:$0xf]
        %v8550 = vld [vmem:[%s7 + $0xac] sm:$0xf]
        %v8551 = vld [vmem:[%s7 + $0xb0] sm:$0xf]
        %v8552 = vld [vmem:[%s7 + $0xb4] sm:$0xf]
        %v8553 = vld [vmem:[%s7 + $0xb8] sm:$0xf]
        %v8554 = vld [vmem:[%s7 + $0xbc] sm:$0xf]
        %v8555 = vld [vmem:[%s7 + $0xc0] sm:$0xf]
        %v8556 = vld [vmem:[%s7 + $0xc4] sm:$0xf]
        %v8557 = vld [vmem:[%s7 + $0xc8] sm:$0xf]
        %v8558 = vld [vmem:[%s7 + $0xcc] sm:$0xf]
        %v8559 = vld [vmem:[%s7 + $0xd0] sm:$0xf]
        %v8560 = vld [vmem:[%s7 + $0xd4] sm:$0xf]
        %v8561 = vld [vmem:[%s7 + $0xd8] sm:$0xf]
        %v8562 = vld [vmem:[%s7 + $0xdc] sm:$0xf]
        %v8563 = vld [vmem:[%s7 + $0xe0] sm:$0xf]
        %v8564 = vld [vmem:[%s7 + $0xe4] sm:$0xf]
        %v8565 = vld [vmem:[%s7 + $0xe8] sm:$0xf]
        %v8566 = vld [vmem:[%s7 + $0xec] sm:$0xf]
        %v8567 = vld [vmem:[%s7 + $0xf0] sm:$0xf]
        %v8568 = vld [vmem:[%s7 + $0xf4] sm:$0xf]
        %v8569 = vld [vmem:[%s7 + $0xf8] sm:$0xf]
        %v8570 = vld [vmem:[%s7 + $0xfc] sm:$0xf]
        %v8571 = vld [vmem:[%s7 + $0x100] sm:$0xf]
        %v8572 = vld [vmem:[%s7 + $0x104] sm:$0xf]
        %v8573 = vld [vmem:[%s7 + $0x108] sm:$0xf]
        %v8574 = vld [vmem:[%s7 + $0x10c] sm:$0xf]
        %v8575 = vld [vmem:[%s7 + $0x110] sm:$0xf]
        %v8576 = vld [vmem:[%s7 + $0x114] sm:$0xf]
        %v8577 = vld [vmem:[%s7 + $0x118] sm:$0xf]
        %v8578 = vld [vmem:[%s7 + $0x11c] sm:$0xf]
        %v8579 = vld [vmem:[%s7 + $0x120] sm:$0xf]
        %v8580 = vld [vmem:[%s7 + $0x124] sm:$0xf]
        %v8581 = vld [vmem:[%s7 + $0x128] sm:$0xf]
        %v8582 = vld [vmem:[%s8] sm:$0x1]
        %v8584 = vlaneseq
        %v8585 = vshrl.u32 %v8584, 7
        %v8586 = vsub.s32 0, %v8585
        %v8587 = vrot.slane %v8582, %v8586
        %v8664 = vunpack.c.l.b16 %v8507
        %v8665 = vunpack.c.l.b16 %v8508
        %v8666 = vunpack.c.l.b16 %v8509
        %v8667 = vunpack.c.l.b16 %v8510
        %v8668 = vunpack.c.l.b16 %v8511
        %v8669 = vunpack.c.l.b16 %v8512
        %v8670 = vunpack.c.l.b16 %v8513
        %v8671 = vunpack.c.l.b16 %v8514
        %v8672 = vunpack.c.l.b16 %v8515
        %v8673 = vunpack.c.l.b16 %v8516
        %v8674 = vunpack.c.l.b16 %v8517
        %v8675 = vunpack.c.l.b16 %v8518
        %v8676 = vunpack.c.l.b16 %v8519
        %v8677 = vunpack.c.l.b16 %v8520
        %v8678 = vunpack.c.l.b16 %v8521
        %v8679 = vunpack.c.l.b16 %v8522
        %v8680 = vunpack.c.l.b16 %v8523
        %v8681 = vunpack.c.l.b16 %v8524
        %v8682 = vunpack.c.l.b16 %v8525
        %v8683 = vunpack.c.l.b16 %v8526
        %v8684 = vunpack.c.l.b16 %v8527
        %v8685 = vunpack.c.l.b16 %v8528
        %v8686 = vunpack.c.l.b16 %v8529
        %v8687 = vunpack.c.l.b16 %v8530
        %v8688 = vunpack.c.l.b16 %v8531
        %v8689 = vunpack.c.l.b16 %v8532
        %v8690 = vunpack.c.l.b16 %v8533
        %v8691 = vunpack.c.l.b16 %v8534
        %v8692 = vunpack.c.l.b16 %v8535
        %v8693 = vunpack.c.l.b16 %v8536
        %v8694 = vunpack.c.l.b16 %v8537
        %v8695 = vunpack.c.l.b16 %v8538
        %v8696 = vunpack.c.l.b16 %v8539
        %v8697 = vunpack.c.l.b16 %v8540
        %v8698 = vunpack.c.l.b16 %v8541
        %v8699 = vunpack.c.l.b16 %v8542
        %v8700 = vunpack.c.l.b16 %v8543
        %v8701 = vunpack.c.l.b16 %v8544
        %v8702 = vunpack.c.l.b16 %v8545
        %v8703 = vunpack.c.l.b16 %v8546
        %v8704 = vunpack.c.l.b16 %v8547
        %v8705 = vunpack.c.l.b16 %v8548
        %v8706 = vunpack.c.l.b16 %v8549
        %v8707 = vunpack.c.l.b16 %v8550
        %v8708 = vunpack.c.l.b16 %v8551
        %v8709 = vunpack.c.l.b16 %v8552
        %v8710 = vunpack.c.l.b16 %v8553
        %v8711 = vunpack.c.l.b16 %v8554
        %v8712 = vunpack.c.l.b16 %v8555
        %v8713 = vunpack.c.l.b16 %v8556
        %v8714 = vunpack.c.l.b16 %v8557
        %v8715 = vunpack.c.l.b16 %v8558
        %v8716 = vunpack.c.l.b16 %v8559
        %v8717 = vunpack.c.l.b16 %v8560
        %v8718 = vunpack.c.l.b16 %v8561
        %v8719 = vunpack.c.l.b16 %v8562
        %v8720 = vunpack.c.l.b16 %v8563
        %v8721 = vunpack.c.l.b16 %v8564
        %v8722 = vunpack.c.l.b16 %v8565
        %v8723 = vunpack.c.l.b16 %v8566
        %v8724 = vunpack.c.l.b16 %v8567
        %v8725 = vunpack.c.l.b16 %v8568
        %v8726 = vunpack.c.l.b16 %v8569
        %v8727 = vunpack.c.l.b16 %v8570
        %v8728 = vunpack.c.l.b16 %v8571
        %v8729 = vunpack.c.l.b16 %v8572
        %v8730 = vunpack.c.l.b16 %v8573
        %v8731 = vunpack.c.l.b16 %v8574
        %v8732 = vunpack.c.l.b16 %v8575
        %v8733 = vunpack.c.l.b16 %v8576
        %v8734 = vunpack.c.l.b16 %v8577
        %v8735 = vunpack.c.l.b16 %v8578
        %v8736 = vunpack.c.l.b16 %v8579
        %v8737 = vunpack.c.l.b16 %v8580
        %v8738 = vunpack.c.l.b16 %v8581
        %v8739 = vpack.c.b16 %v8665, %v8664
        %v8740 = vpack.c.b16 %v8667, %v8666
        %v8741 = vpack.c.b16 %v8669, %v8668
        %v8742 = vpack.c.b16 %v8671, %v8670
        %v8743 = vpack.c.b16 %v8673, %v8672
        %v8744 = vpack.c.b16 %v8675, %v8674
        %v8745 = vpack.c.b16 %v8677, %v8676
        %v8746 = vpack.c.b16 %v8679, %v8678
        %v8747 = vpack.c.b16 %v8681, %v8680
        %v8748 = vpack.c.b16 %v8683, %v8682
        %v8749 = vpack.c.b16 %v8685, %v8684
        %v8750 = vpack.c.b16 %v8687, %v8686
        %v8751 = vpack.c.b16 %v8689, %v8688
        %v8752 = vpack.c.b16 %v8691, %v8690
        %v8753 = vpack.c.b16 %v8693, %v8692
        %v8754 = vpack.c.b16 %v8695, %v8694
        %v8755 = vpack.c.b16 %v8697, %v8696
        %v8756 = vpack.c.b16 %v8699, %v8698
        %v8757 = vpack.c.b16 %v8701, %v8700
        %v8758 = vpack.c.b16 %v8703, %v8702
        %v8759 = vpack.c.b16 %v8705, %v8704
        %v8760 = vpack.c.b16 %v8707, %v8706
        %v8761 = vpack.c.b16 %v8709, %v8708
        %v8762 = vpack.c.b16 %v8711, %v8710
        %v8763 = vpack.c.b16 %v8713, %v8712
        %v8764 = vpack.c.b16 %v8715, %v8714
        %v8765 = vpack.c.b16 %v8717, %v8716
        %v8766 = vpack.c.b16 %v8719, %v8718
        %v8767 = vpack.c.b16 %v8721, %v8720
        %v8768 = vpack.c.b16 %v8723, %v8722
        %v8769 = vpack.c.b16 %v8725, %v8724
        %v8770 = vpack.c.b16 %v8727, %v8726
        %v8771 = vpack.c.b16 %v8729, %v8728
        %v8772 = vpack.c.b16 %v8731, %v8730
        %v8773 = vpack.c.b16 %v8733, %v8732
        %v8774 = vpack.c.b16 %v8735, %v8734
        %v8775 = vpack.c.b16 %v8737, %v8736
        %v8776 = vpack.c.b16 %v8738, %v8738
        %v8815 = vsel %vm4862, %v8471, 0
        %v8818 = vsel %vm4862, %v8476, 0
        %v8821 = vsel %vm4862, %v8481, 0
        %v8824 = vsel %vm4862, %v8486, 0
        %v8827 = vsel %vm4862, %v8491, 0
        %v8830 = vsel %vm4862, %v8496, 0
        %v8833 = vsel %vm4862, %v8501, 0
        %v8836 = vsel %vm4862, %v8506, 0
        %v8839 = vsel %vm4887, %v8776, 0
        %8841 = vmatprep.subr.bf16.mxu0 0
        %8842 = vmatpush1.bf16.msra.mxu0 %v8739
        %8843 = vmatprep.subr.bf16.mxu0 0
        %8844 = vmatpush1.bf16.msra.mxu0 %v8740
        %8845 = vmatprep.subr.bf16.mxu0 0
        %8846 = vmatpush1.bf16.msra.mxu0 %v8741
        %8847 = vmatprep.subr.bf16.mxu0 0
        %8848 = vmatpush1.bf16.msra.mxu0 %v8742
        %8849 = vmatprep.subr.bf16.mxu0 0
        %8850 = vmatpush1.bf16.msra.mxu0 %v8743
        %8851 = vmatprep.subr.bf16.mxu0 0
        %8852 = vmatpush1.bf16.msra.mxu0 %v8744
        %8853 = vmatprep.subr.bf16.mxu0 0
        %8854 = vmatpush1.bf16.msra.mxu0 %v8745
        %8855 = vmatprep.subr.bf16.mxu0 0
        %8856 = vmatpush1.bf16.msra.mxu0 %v8746
        %8857 = vmatprep.subr.bf16.mxu0 0
        %8858 = vmatpush1.bf16.msra.mxu0 %v8747
        %8859 = vmatprep.subr.bf16.mxu0 0
        %8860 = vmatpush1.bf16.msra.mxu0 %v8748
        %8861 = vmatprep.subr.bf16.mxu0 0
        %8862 = vmatpush1.bf16.msra.mxu0 %v8749
        %8863 = vmatprep.subr.bf16.mxu0 0
        %8864 = vmatpush1.bf16.msra.mxu0 %v8750
        %8865 = vmatprep.subr.bf16.mxu0 0
        %8866 = vmatpush1.bf16.msra.mxu0 %v8751
        %8867 = vmatprep.subr.bf16.mxu0 0
        %8868 = vmatpush1.bf16.msra.mxu0 %v8752
        %8869 = vmatprep.subr.bf16.mxu0 0
        %8870 = vmatpush1.bf16.msra.mxu0 %v8753
        %8871 = vmatprep.subr.bf16.mxu0 0
        %8872 = vmatpush1.bf16.msra.mxu0 %v8754
        %8873 = vmatprep.mubr.bf16.mxu0 %v8468
        %8874 = vmatmul.mubr.bf16.gmra.mrb[0].mxu0 %v8467
        %v8875 = vpop.f32.mrb[0].mxu0
        %v8876 = vadd.f32 %v8587, %v8875
        %v8877 = vpop.f32.mrb[0].mxu0
        %v8878 = vpop.f32.mrb[0].mxu0
        %v8879 = vadd.f32 %v8587, %v8878
        %v8880 = vpop.f32.mrb[0].mxu0
        %8881 = vmatprep.mubr.bf16.mxu0 %v8473
        %8882 = vmatmul.mubr.bf16.gmra.mrb[0].mxu0 %v8472
        %v8883 = vpop.f32.mrb[0].mxu0
        %v8884 = vadd.f32 %v8587, %v8883
        %v8885 = vpop.f32.mrb[0].mxu0
        %v8886 = vpop.f32.mrb[0].mxu0
        %v8887 = vadd.f32 %v8587, %v8886
        %v8888 = vpop.f32.mrb[0].mxu0
        %8889 = vmatprep.mubr.bf16.mxu0 %v8478
        %8890 = vmatmul.mubr.bf16.gmra.mrb[0].mxu0 %v8477
        %v8891 = vpop.f32.mrb[0].mxu0
        %v8892 = vadd.f32 %v8587, %v8891
        %v8893 = vpop.f32.mrb[0].mxu0
        %v8894 = vpop.f32.mrb[0].mxu0
        %v8895 = vadd.f32 %v8587, %v8894
        %v8896 = vpop.f32.mrb[0].mxu0
        %8897 = vmatprep.mubr.bf16.mxu0 %v8483
        %8898 = vmatmul.mubr.bf16.gmra.mrb[0].mxu0 %v8482
        %v8899 = vpop.f32.mrb[0].mxu0
        %v8900 = vadd.f32 %v8587, %v8899
        %v8901 = vpop.f32.mrb[0].mxu0
        %v8902 = vpop.f32.mrb[0].mxu0
        %v8903 = vadd.f32 %v8587, %v8902
        %v8904 = vpop.f32.mrb[0].mxu0
        %8905 = vmatprep.mubr.bf16.mxu0 %v8488
        %8906 = vmatmul.mubr.bf16.gmra.mrb[0].mxu0 %v8487
        %v8907 = vpop.f32.mrb[0].mxu0
        %v8908 = vadd.f32 %v8587, %v8907
        %v8909 = vpop.f32.mrb[0].mxu0
        %v8910 = vpop.f32.mrb[0].mxu0
        %v8911 = vadd.f32 %v8587, %v8910
        %v8912 = vpop.f32.mrb[0].mxu0
        %8913 = vmatprep.mubr.bf16.mxu0 %v8493
        %8914 = vmatmul.mubr.bf16.gmra.mrb[0].mxu0 %v8492
        %v8915 = vpop.f32.mrb[0].mxu0
        %v8916 = vadd.f32 %v8587, %v8915
        %v8917 = vpop.f32.mrb[0].mxu0
        %v8918 = vpop.f32.mrb[0].mxu0
        %v8919 = vadd.f32 %v8587, %v8918
        %v8920 = vpop.f32.mrb[0].mxu0
        %8921 = vmatprep.mubr.bf16.mxu0 %v8498
        %8922 = vmatmul.mubr.bf16.gmra.mrb[0].mxu0 %v8497
        %v8923 = vpop.f32.mrb[0].mxu0
        %v8924 = vadd.f32 %v8587, %v8923
        %v8925 = vpop.f32.mrb[0].mxu0
        %v8926 = vpop.f32.mrb[0].mxu0
        %v8927 = vadd.f32 %v8587, %v8926
        %v8928 = vpop.f32.mrb[0].mxu0
        %8929 = vmatprep.mubr.bf16.mxu0 %v8503
        %8930 = vmatmul.mubr.bf16.gmra.mrb[0].mxu0 %v8502
        %v8931 = vpop.f32.mrb[0].mxu0
        %v8932 = vadd.f32 %v8587, %v8931
        %v8933 = vpop.f32.mrb[0].mxu0
        %v8934 = vpop.f32.mrb[0].mxu0
        %v8935 = vadd.f32 %v8587, %v8934
        %v8936 = vpop.f32.mrb[0].mxu0
        %8937 = vdwg.mxu0
        %8938 = vmatprep.subr.bf16.mxu0 0
        %8939 = vmatpush1.bf16.msra.mxu0 %v8755
        %8940 = vmatprep.subr.bf16.mxu0 0
        %8941 = vmatpush1.bf16.msra.mxu0 %v8756
        %8942 = vmatprep.subr.bf16.mxu0 0
        %8943 = vmatpush1.bf16.msra.mxu0 %v8757
        %8944 = vmatprep.subr.bf16.mxu0 0
        %8945 = vmatpush1.bf16.msra.mxu0 %v8758
        %8946 = vmatprep.subr.bf16.mxu0 0
        %8947 = vmatpush1.bf16.msra.mxu0 %v8759
        %8948 = vmatprep.subr.bf16.mxu0 0
        %8949 = vmatpush1.bf16.msra.mxu0 %v8760
        %8950 = vmatprep.subr.bf16.mxu0 0
        %8951 = vmatpush1.bf16.msra.mxu0 %v8761
        %8952 = vmatprep.subr.bf16.mxu0 0
        %8953 = vmatpush1.bf16.msra.mxu0 %v8762
        %8954 = vmatprep.subr.bf16.mxu0 0
        %8955 = vmatpush1.bf16.msra.mxu0 %v8763
        %8956 = vmatprep.subr.bf16.mxu0 0
        %8957 = vmatpush1.bf16.msra.mxu0 %v8764
        %8958 = vmatprep.subr.bf16.mxu0 0
        %8959 = vmatpush1.bf16.msra.mxu0 %v8765
        %8960 = vmatprep.subr.bf16.mxu0 0
        %8961 = vmatpush1.bf16.msra.mxu0 %v8766
        %8962 = vmatprep.subr.bf16.mxu0 0
        %8963 = vmatpush1.bf16.msra.mxu0 %v8767
        %8964 = vmatprep.subr.bf16.mxu0 0
        %8965 = vmatpush1.bf16.msra.mxu0 %v8768
        %8966 = vmatprep.subr.bf16.mxu0 0
        %8967 = vmatpush1.bf16.msra.mxu0 %v8769
        %8968 = vmatprep.subr.bf16.mxu0 0
        %8969 = vmatpush1.bf16.msra.mxu0 %v8770
        %8970 = vmatprep.mubr.bf16.mxu0 %v8470
        %8971 = vmatmul.mubr.bf16.gmra.mrb[0].mxu0 %v8469
        %v8972 = vpop.f32.mrb[0].mxu0
        %v8973 = vadd.f32 %v8876, %v8972
        %v8974 = vpop.f32.mrb[0].mxu0
        %v8975 = vpop.f32.mrb[0].mxu0
        %v8976 = vadd.f32 %v8879, %v8975
        %v8977 = vpop.f32.mrb[0].mxu0
        %8978 = vmatprep.mubr.bf16.mxu0 %v8475
        %8979 = vmatmul.mubr.bf16.gmra.mrb[0].mxu0 %v8474
        %v8980 = vpop.f32.mrb[0].mxu0
        %v8981 = vadd.f32 %v8884, %v8980
        %v8982 = vpop.f32.mrb[0].mxu0
        %v8983 = vpop.f32.mrb[0].mxu0
        %v8984 = vadd.f32 %v8887, %v8983
        %v8985 = vpop.f32.mrb[0].mxu0
        %8986 = vmatprep.mubr.bf16.mxu0 %v8480
        %8987 = vmatmul.mubr.bf16.gmra.mrb[0].mxu0 %v8479
        %v8988 = vpop.f32.mrb[0].mxu0
        %v8989 = vadd.f32 %v8892, %v8988
        %v8990 = vpop.f32.mrb[0].mxu0
        %v8991 = vpop.f32.mrb[0].mxu0
        %v8992 = vadd.f32 %v8895, %v8991
        %v8993 = vpop.f32.mrb[0].mxu0
        %8994 = vmatprep.mubr.bf16.mxu0 %v8485
        %8995 = vmatmul.mubr.bf16.gmra.mrb[0].mxu0 %v8484
        %v8996 = vpop.f32.mrb[0].mxu0
        %v8997 = vadd.f32 %v8900, %v8996
        %v8998 = vpop.f32.mrb[0].mxu0
        %v8999 = vpop.f32.mrb[0].mxu0
        %v9000 = vadd.f32 %v8903, %v8999
        %v9001 = vpop.f32.mrb[0].mxu0
        %9002 = vmatprep.mubr.bf16.mxu0 %v8490
        %9003 = vmatmul.mubr.bf16.gmra.mrb[0].mxu0 %v8489
        %v9004 = vpop.f32.mrb[0].mxu0
        %v9005 = vadd.f32 %v8908, %v9004
        %v9006 = vpop.f32.mrb[0].mxu0
        %v9007 = vpop.f32.mrb[0].mxu0
        %v9008 = vadd.f32 %v8911, %v9007
        %v9009 = vpop.f32.mrb[0].mxu0
        %9010 = vmatprep.mubr.bf16.mxu0 %v8495
        %9011 = vmatmul.mubr.bf16.gmra.mrb[0].mxu0 %v8494
        %v9012 = vpop.f32.mrb[0].mxu0
        %v9013 = vadd.f32 %v8916, %v9012
        %v9014 = vpop.f32.mrb[0].mxu0
        %v9015 = vpop.f32.mrb[0].mxu0
        %v9016 = vadd.f32 %v8919, %v9015
        %v9017 = vpop.f32.mrb[0].mxu0
        %9018 = vmatprep.mubr.bf16.mxu0 %v8500
        %9019 = vmatmul.mubr.bf16.gmra.mrb[0].mxu0 %v8499
        %v9020 = vpop.f32.mrb[0].mxu0
        %v9021 = vadd.f32 %v8924, %v9020
        %v9022 = vpop.f32.mrb[0].mxu0
        %v9023 = vpop.f32.mrb[0].mxu0
        %v9024 = vadd.f32 %v8927, %v9023
        %v9025 = vpop.f32.mrb[0].mxu0
        %9026 = vmatprep.mubr.bf16.mxu0 %v8505
        %9027 = vmatmul.mubr.bf16.gmra.mrb[0].mxu0 %v8504
        %v9028 = vpop.f32.mrb[0].mxu0
        %v9029 = vadd.f32 %v8932, %v9028
        %v9030 = vpop.f32.mrb[0].mxu0
        %v9031 = vpop.f32.mrb[0].mxu0
        %v9032 = vadd.f32 %v8935, %v9031
        %v9033 = vpop.f32.mrb[0].mxu0
        %9034 = vdwg.mxu0
        %9035 = vmatprep.subr.bf16.mxu0 0
        %9036 = vmatpush1.bf16.msra.mxu0 %v8771
        %9037 = vmatprep.subr.bf16.mxu0 0
        %9038 = vmatpush1.bf16.msra.mxu0 %v8772
        %9039 = vmatprep.subr.bf16.mxu0 0
        %9040 = vmatpush1.bf16.msra.mxu0 %v8773
        %9041 = vmatprep.subr.bf16.mxu0 0
        %9042 = vmatpush1.bf16.msra.mxu0 %v8774
        %9043 = vmatprep.subr.bf16.mxu0 0
        %9044 = vmatpush1.bf16.msra.mxu0 %v8775
        %9045 = vmatprep.subr.bf16.mxu0 0
        %9046 = vmatpush1.bf16.msra.mxu0 %v8839
        %9047 = vmatprep.subr.bf16.mxu0 0
        %9048 = vmatpush1.bf16.msra.mxu0 0
        %9049 = vmatprep.subr.bf16.mxu0 0
        %9050 = vmatpush1.bf16.msra.mxu0 0
        %9051 = vmatprep.subr.bf16.mxu0 0
        %9052 = vmatpush1.bf16.msra.mxu0 0
        %9053 = vmatprep.subr.bf16.mxu0 0
        %9054 = vmatpush1.bf16.msra.mxu0 0
        %9055 = vmatprep.subr.bf16.mxu0 0
        %9056 = vmatpush1.bf16.msra.mxu0 0
        %9057 = vmatprep.subr.bf16.mxu0 0
        %9058 = vmatpush1.bf16.msra.mxu0 0
        %9059 = vmatprep.subr.bf16.mxu0 0
        %9060 = vmatpush1.bf16.msra.mxu0 0
        %9061 = vmatprep.subr.bf16.mxu0 0
        %9062 = vmatpush1.bf16.msra.mxu0 0
        %9063 = vmatprep.subr.bf16.mxu0 0
        %9064 = vmatpush1.bf16.msra.mxu0 0
        %9065 = vmatprep.subr.bf16.mxu0 0
        %9066 = vmatpush1.bf16.msra.mxu0 0
        %9067 = vmatprep.mubr.bf16.mxu0 0
        %9068 = vmatmul.mubr.bf16.gmra.mrb[0].mxu0 %v8815
        %v9069 = vpop.f32.mrb[0].mxu0
        %v9070 = vadd.f32 %v8973, %v9069
        %v9071 = vpop.f32.mrb[0].mxu0
        %v9072 = vpop.f32.mrb[0].mxu0
        %v9073 = vadd.f32 %v8976, %v9072
        %v9074 = vpop.f32.mrb[0].mxu0
        %9075 = vmatprep.mubr.bf16.mxu0 0
        %9076 = vmatmul.mubr.bf16.gmra.mrb[0].mxu0 %v8818
        %v9077 = vpop.f32.mrb[0].mxu0
        %v9078 = vadd.f32 %v8981, %v9077
        %v9079 = vpop.f32.mrb[0].mxu0
        %v9080 = vpop.f32.mrb[0].mxu0
        %v9081 = vadd.f32 %v8984, %v9080
        %v9082 = vpop.f32.mrb[0].mxu0
        %9083 = vmatprep.mubr.bf16.mxu0 0
        %9084 = vmatmul.mubr.bf16.gmra.mrb[0].mxu0 %v8821
        %v9085 = vpop.f32.mrb[0].mxu0
        %v9086 = vadd.f32 %v8989, %v9085
        %v9087 = vpop.f32.mrb[0].mxu0
        %v9088 = vpop.f32.mrb[0].mxu0
        %v9089 = vadd.f32 %v8992, %v9088
        %v9090 = vpop.f32.mrb[0].mxu0
        %9091 = vmatprep.mubr.bf16.mxu0 0
        %9092 = vmatmul.mubr.bf16.gmra.mrb[0].mxu0 %v8824
        %v9093 = vpop.f32.mrb[0].mxu0
        %v9094 = vadd.f32 %v8997, %v9093
        %v9095 = vpop.f32.mrb[0].mxu0
        %v9096 = vpop.f32.mrb[0].mxu0
        %v9097 = vadd.f32 %v9000, %v9096
        %v9098 = vpop.f32.mrb[0].mxu0
        %9099 = vmatprep.mubr.bf16.mxu0 0
        %9100 = vmatmul.mubr.bf16.gmra.mrb[0].mxu0 %v8827
        %v9101 = vpop.f32.mrb[0].mxu0
        %v9102 = vadd.f32 %v9005, %v9101
        %v9103 = vpop.f32.mrb[0].mxu0
        %v9104 = vpop.f32.mrb[0].mxu0
        %v9105 = vadd.f32 %v9008, %v9104
        %v9106 = vpop.f32.mrb[0].mxu0
        %9107 = vmatprep.mubr.bf16.mxu0 0
        %9108 = vmatmul.mubr.bf16.gmra.mrb[0].mxu0 %v8830
        %v9109 = vpop.f32.mrb[0].mxu0
        %v9110 = vadd.f32 %v9013, %v9109
        %v9111 = vpop.f32.mrb[0].mxu0
        %v9112 = vpop.f32.mrb[0].mxu0
        %v9113 = vadd.f32 %v9016, %v9112
        %v9114 = vpop.f32.mrb[0].mxu0
        %9115 = vmatprep.mubr.bf16.mxu0 0
        %9116 = vmatmul.mubr.bf16.gmra.mrb[0].mxu0 %v8833
        %v9117 = vpop.f32.mrb[0].mxu0
        %v9118 = vadd.f32 %v9021, %v9117
        %v9119 = vpop.f32.mrb[0].mxu0
        %v9120 = vpop.f32.mrb[0].mxu0
        %v9121 = vadd.f32 %v9024, %v9120
        %v9122 = vpop.f32.mrb[0].mxu0
        %9123 = vmatprep.mubr.bf16.mxu0 0
        %9124 = vmatmul.mubr.bf16.gmra.mrb[0].mxu0 %v8836
        %v9125 = vpop.f32.mrb[0].mxu0
        %v9126 = vadd.f32 %v9029, %v9125
        %v9127 = vpop.f32.mrb[0].mxu0
        %v9128 = vpop.f32.mrb[0].mxu0
        %v9129 = vadd.f32 %v9032, %v9128
        %v9130 = vpop.f32.mrb[0].mxu0
        %9131 = vdwg.mxu0
        %vm9132 = vcmask 80896
        %9133 = vst.msk [vmem:[%s352] sm:$0xff] %vm9132, %v9070
        %9134 = vst.msk [vmem:[%s352 + $0x8] sm:$0xff] %vm9132, %v9073
        %9135 = vst.msk [vmem:[%s352 + $0x10] sm:$0xff] %vm9132, %v9078
        %9136 = vst.msk [vmem:[%s352 + $0x18] sm:$0xff] %vm9132, %v9081
        %9137 = vst.msk [vmem:[%s352 + $0x20] sm:$0xff] %vm9132, %v9086
        %9138 = vst.msk [vmem:[%s352 + $0x28] sm:$0xff] %vm9132, %v9089
        %9139 = vst.msk [vmem:[%s352 + $0x30] sm:$0xff] %vm9132, %v9094
        %9140 = vst.msk [vmem:[%s352 + $0x38] sm:$0xff] %vm9132, %v9097
        %9141 = vst.msk [vmem:[%s352 + $0x40] sm:$0xff] %vm9132, %v9102
        %9142 = vst.msk [vmem:[%s352 + $0x48] sm:$0xff] %vm9132, %v9105
        %9143 = vst.msk [vmem:[%s352 + $0x50] sm:$0xff] %vm9132, %v9110
        %9144 = vst.msk [vmem:[%s352 + $0x58] sm:$0xff] %vm9132, %v9113
        %9145 = vst.msk [vmem:[%s352 + $0x60] sm:$0xff] %vm9132, %v9118
        %9146 = vst.msk [vmem:[%s352 + $0x68] sm:$0xff] %vm9132, %v9121
        %9147 = vst.msk [vmem:[%s352 + $0x70] sm:$0xff] %vm9132, %v9126
        %9148 = vst.msk [vmem:[%s352 + $0x78] sm:$0xff] %vm9132, %v9129
        %s9149 = smul.u32 16, %s21
        %p9150 = scmp.lt.s32.totalorder %s9149, 31
        %s9151 = scalar_select %p9150, %s9149, 31
        %s9152 = smul.addr %s9151, 8
        %s9153 = scalar_lea.vmem %s9, %s9152
        // Predicated region
        $region61: #{tpu_custom_call.1} parent=55 // pred_check
          %p9154 = pneg %p233
        $region62: #{tpu_custom_call.1} parent=55 // pred_check_branch
          %9156 = sbr.rel (%p9154) target = $region64
        $region63: #{tpu_custom_call.1} parent=55 // pred_region
          %s9157 = smul.u32 16, %s21
        $region64: #{tpu_custom_call.1} parent=55 // pred_fallthru
          _
      $region56: #{tpu_custom_call.1} parent=5 // pred_fallthru
        _
      %p9158 = scmp.le.s32.totalorder 2, %s16
      // Predicated region
      $region65: #{tpu_custom_call.1} parent=5 // pred_check
        %p9159 = pneg %p9158
      $region66: #{tpu_custom_call.1} parent=5 // pred_check_branch
        %9161 = sbr.rel (%p9159) target = $region68
      $region67: #{tpu_custom_call.1} parent=5 // pred_region
        %s9162 = ssub.s32 %s16, 2
        // Predicated region
        $region69: #{tpu_custom_call.1} parent=67 // pred_check
          %p9163 = pneg %p239
        $region70: #{tpu_custom_call.1} parent=67 // pred_check_branch
          %9165 = sbr.rel (%p9163) target = $region72
        $region71: #{tpu_custom_call.1} parent=67 // pred_region
          %s9166 = smul.u32 16, %s22
          %p9167 = scmp.lt.s32.totalorder %s9166, 31
          %s9168 = scalar_select %p9167, %s9166, 31
          %s9169 = smul.addr %s9168, 8
          %s9170 = scalar_lea.vmem %s9, %s9169
        $region72: #{tpu_custom_call.1} parent=67 // pred_fallthru
          _
      $region68: #{tpu_custom_call.1} parent=5 // pred_fallthru
        _
    $region6: #{tpu_custom_call.1} parent=1 // loop_footer
      %s20 = sadd.s32 1, %s16
    $region7: #{tpu_custom_call.1} parent=1 // loop_footer_branch
      %15 = sbr.rel target = $region3
    $region8: #{tpu_custom_call.1} parent=1 // loop_exit
      _
    %9171 = vsyncpa [#allocation3], 1
    %s9172 = scalar_lea.sflag [#allocation3], 1
    %9173 = vsyncpa %s9172, 1

</llo_original>
